<compile_context>
chip_gen: v7x
topology: tpu7x:2x2x1
jax: 0.10.0
libtpu: 0.0.40
codegen_flags: <defaults>
</compile_context>

<pallas_src>
import functools

import numpy as np
import jax
import jax.numpy as jnp
from jax import lax
from jax.experimental import pallas as pl
from jax.experimental.pallas import tpu as pltpu

_BN_EPS = 1e-5  # nn.BatchNorm2d default


def _make_shift_matrices(H, W):
    """[9, HW, HW] 0/1 matrices so (A @ S[t])[c, y*W+x] = A[c, (y+sy)*W+(x+sx)]
    with zero padding, tap t = ky*3 + kx, (sy, sx) = (ky-1, kx-1) -- matching
    nn.Conv2d(kernel=3, stride=1, padding=1) cross-correlation."""
    HW = H * W
    ys, xs = np.meshgrid(np.arange(H), np.arange(W), indexing="ij")
    p = (ys * W + xs).reshape(-1)
    mats = np.zeros((9, HW, HW), np.float32)
    for t in range(9):
        sy, sx = t // 3 - 1, t % 3 - 1
        yy, xx = ys + sy, xs + sx
        valid = ((yy >= 0) & (yy < H) & (xx >= 0) & (xx < W)).reshape(-1)
        q = (yy * W + xx).reshape(-1)
        mats[t, q[valid], p[valid]] = 1.0
    return jnp.asarray(mats)


def _csp_kernel(x_ref, w1_ref, b1_ref, wm1_ref, bm1_ref, wm2_ref, bm2_ref,
                w3_ref, t1_ref, w2_ref, t2_ref, w4a_ref, w4b_ref, b4_ref,
                smat_ref, o_ref, *, n, shortcut):
    # One grid step = one image.  Everything is [channels, H*W]: channels on
    # sublanes, spatial on lanes (lane-dense loads/stores, HW % 128 == 0 here).
    def mm(a, b):
        return jnp.dot(a, b, preferred_element_type=jnp.float32)

    def silu(v):
        return v * jax.nn.sigmoid(v)

    def leaky(v):                      # LeakyReLU(0.1); 0.1 > 0 so max() works
        return jnp.maximum(v, 0.1 * v)

    x = x_ref[0]                                           # [c1, HW]

    # cv1 = Conv(c1, c_, 1): 1x1 conv (BN folded into w1/b1) + SiLU
    y = silu(mm(w1_ref[...], x) + b1_ref[...])             # [c_, HW]

    # m = Sequential(Bottleneck(c_, c_, shortcut, e=1.0) x n)
    for j in range(n):
        a = silu(mm(wm1_ref[j], y) + bm1_ref[j])           # 1x1 conv + BN + SiLU
        # 3x3 conv (pad=1) as 9 shifted taps; shift via precomputed matrices.
        acc = mm(wm2_ref[j * 9], mm(a, smat_ref[0]))
        for t in range(1, 9):
            acc = acc + mm(wm2_ref[j * 9 + t], mm(a, smat_ref[t]))
        bo = silu(acc + bm2_ref[j])                        # BN (folded) + SiLU
        y = y + bo if shortcut else bo

    # y1 = cv3(m(cv1(x))), y2 = cv2(x).  The outer BatchNorm's scale is folded
    # into w3/w2 (both convs are bias-free); its shift is t1/t2.  LeakyReLU.
    z1 = leaky(mm(w3_ref[...], y) + t1_ref[...])           # [c_, HW]
    z2 = leaky(mm(w2_ref[...], x) + t2_ref[...])           # [c_, HW]

    # cv4 = Conv(2*c_, c2, 1): the channel concat is a split matmul.
    o = silu(mm(w4a_ref[...], z1) + mm(w4b_ref[...], z2) + b4_ref[...])
    o_ref[0] = o.astype(o_ref.dtype)


def bottleneck_csp_forward(x_nchw, ops, n, shortcut):
    bs, c1, H, W = x_nchw.shape
    HW = H * W
    c_ = ops["w1"].shape[0]
    c2 = ops["w4a"].shape[0]
    smat = _make_shift_matrices(H, W)

    # NCHW -> [bs, C, H*W]; pure reshape (no transpose), spatial ends up on lanes.
    x = x_nchw.reshape(bs, c1, HW)

    def full(shape):
        return pl.BlockSpec(shape, lambda b, _s=shape: (0,) * len(_s))

    kernel = functools.partial(_csp_kernel, n=n, shortcut=shortcut)
    out = pl.pallas_call(
        kernel,
        out_shape=jax.ShapeDtypeStruct((bs, c2, HW), jnp.float32),
        grid=(bs,),
        in_specs=[
            pl.BlockSpec((1, c1, HW), lambda b: (b, 0, 0)),  # x (per-image tile)
            full((c_, c1)),           # w1   (cv1 conv, BN-folded)
            full((c_, 1)),            # b1
            full((n, c_, c_)),        # wm1  (bottleneck cv1, BN-folded)
            full((n, c_, 1)),         # bm1
            full((n * 9, c_, c_)),    # wm2  (bottleneck 3x3 taps, BN-folded)
            full((n, c_, 1)),         # bm2
            full((c_, c_)),           # w3   (cv3, outer-BN scale folded in)
            full((c_, 1)),            # t1   (outer-BN shift, y1 half)
            full((c_, c1)),           # w2   (cv2, outer-BN scale folded in)
            full((c_, 1)),            # t2   (outer-BN shift, y2 half)
            full((c2, c_)),           # w4a  (cv4 columns for y1 half)
            full((c2, c_)),           # w4b  (cv4 columns for y2 half)
            full((c2, 1)),            # b4
            full((9, HW, HW)),        # shift matrices for the 3x3 taps
        ],
        out_specs=pl.BlockSpec((1, c2, HW), lambda b: (b, 0, 0)),
        compiler_params=pltpu.CompilerParams(
            dimension_semantics=("parallel",)),
    )(x, ops["w1"], ops["b1"], ops["wm1"], ops["bm1"], ops["wm2"], ops["bm2"],
      ops["w3"], ops["t1"], ops["w2"], ops["t2"],
      ops["w4a"], ops["w4b"], ops["b4"], smat)

    return out.reshape(bs, c2, H, W)


class BottleneckCSPPallas:
    """JAX/Pallas port of BottleneckCSP (inference; BatchNorm uses running stats)."""

    def __init__(self, c1, c2, n=1, shortcut=True, g=1, e=0.5, key=None):
        assert g == 1, "TODO(synk): grouped 3x3 conv (g > 1) not implemented"
        self.c1, self.c2, self.n, self.shortcut = c1, c2, n, shortcut
        c_ = int(c2 * e)
        self.c_ = c_
        if key is None:
            key = jax.random.PRNGKey(0)
        keys = iter(jax.random.split(key, 32 + 16 * n))

        def conv_w(co, ci, k):
            scale = 1.0 / float(np.sqrt(ci * k * k))
            return scale * jax.random.normal(next(keys), (co, ci, k, k), jnp.float32)

        def bn_p(c):
            gamma = 1.0 + 0.1 * jax.random.normal(next(keys), (c,), jnp.float32)
            beta = 0.1 * jax.random.normal(next(keys), (c,), jnp.float32)
            mean = 0.1 * jax.random.normal(next(keys), (c,), jnp.float32)
            var = 1.0 + 0.1 * jax.random.uniform(next(keys), (c,), jnp.float32)
            return (gamma, beta, mean, var)

        p = {}
        p["cv1_w"], p["cv1_bn"] = conv_w(c_, c1, 1), bn_p(c_)
        p["cv2_w"] = conv_w(c_, c1, 1)        # plain conv, bias=False, no BN/act
        p["cv3_w"] = conv_w(c_, c_, 1)        # plain conv, bias=False, no BN/act
        p["cv4_w"], p["cv4_bn"] = conv_w(c2, 2 * c_, 1), bn_p(c2)
        p["bn"] = bn_p(2 * c_)                # BN applied to concat(y1, y2)
        p["m_cv1_w"] = jnp.stack([conv_w(c_, c_, 1) for _ in range(n)])
        p["m_cv1_bn"] = [bn_p(c_) for _ in range(n)]
        p["m_cv2_w"] = jnp.stack([conv_w(c_, c_, 3) for _ in range(n)])
        p["m_cv2_bn"] = [bn_p(c_) for _ in range(n)]
        self.params = p
        self.ops = self._fold(p)

    # ---- host-side BN folding into conv weights / biases -------------------
    def _fold(self, p):
        c_, n = self.c_, self.n
        eps = _BN_EPS

        def fold(w, bn):
            gamma, beta, mean, var = bn
            s = gamma / jnp.sqrt(var + eps)
            return w * s[:, None, None, None], beta - mean * s

        def col(v):
            return v.reshape(-1, 1)

        ops = {}
        w1, b1 = fold(p["cv1_w"], p["cv1_bn"])
        ops["w1"], ops["b1"] = w1[:, :, 0, 0], col(b1)

        wm1_l, bm1_l, wm2_l, bm2_l = [], [], [], []
        for j in range(n):
            wa, ba = fold(p["m_cv1_w"][j], p["m_cv1_bn"][j])
            wm1_l.append(wa[:, :, 0, 0])
            bm1_l.append(col(ba))
            wb, bb = fold(p["m_cv2_w"][j], p["m_cv2_bn"][j])
            # [c_, c_, 3, 3] -> [9, c_, c_], tap index t = ky*3 + kx
            wm2_l.append(jnp.transpose(wb, (2, 3, 0, 1)).reshape(9, c_, c_))
            bm2_l.append(col(bb))
        ops["wm1"] = jnp.stack(wm1_l)                 # [n, c_, c_]
        ops["bm1"] = jnp.stack(bm1_l)                 # [n, c_, 1]
        ops["wm2"] = jnp.concatenate(wm2_l, axis=0)   # [n*9, c_, c_]
        ops["bm2"] = jnp.stack(bm2_l)                 # [n, c_, 1]

        # outer BN (on concat(y1, y2)) folded into cv3 / cv2 (bias-free convs)
        gamma, beta, mean, var = p["bn"]
        s = gamma / jnp.sqrt(var + eps)
        t = beta - mean * s
        ops["w3"] = p["cv3_w"][:, :, 0, 0] * s[:c_, None]
        ops["t1"] = col(t[:c_])
        ops["w2"] = p["cv2_w"][:, :, 0, 0] * s[c_:, None]
        ops["t2"] = col(t[c_:])

        w4, b4 = fold(p["cv4_w"], p["cv4_bn"])
        w4 = w4[:, :, 0, 0]
        ops["w4a"], ops["w4b"], ops["b4"] = w4[:, :c_], w4[:, c_:], col(b4)
        return ops

    def __call__(self, x_nchw):
        return bottleneck_csp_forward(x_nchw, self.ops, self.n, self.shortcut)

    # ---- pure-JAX (XLA) reference for validation ---------------------------
    def reference(self, x):
        p = self.params
        eps = _BN_EPS

        def conv(v, w):
            return lax.conv_general_dilated(
                v, w, (1, 1), "SAME",
                dimension_numbers=("NCHW", "OIHW", "NCHW"),
                precision=lax.Precision.HIGHEST)

        def bn(v, pr):
            gamma, beta, mean, var = pr
            s = gamma / jnp.sqrt(var + eps)
            return v * s[None, :, None, None] + (beta - mean * s)[None, :, None, None]

        silu = lambda v: v * jax.nn.sigmoid(v)
        leaky = lambda v: jnp.maximum(v, 0.1 * v)

        y = silu(bn(conv(x, p["cv1_w"]), p["cv1_bn"]))
        for j in range(self.n):
            a = silu(bn(conv(y, p["m_cv1_w"][j]), p["m_cv1_bn"][j]))
            b = silu(bn(conv(a, p["m_cv2_w"][j]), p["m_cv2_bn"][j]))
            y = y + b if self.shortcut else b
        y1 = conv(y, p["cv3_w"])
        y2 = conv(x, p["cv2_w"])
        z = leaky(bn(jnp.concatenate([y1, y2], axis=1), p["bn"]))
        return silu(bn(conv(z, p["cv4_w"]), p["cv4_bn"]))


if __name__ == "__main__":
    bs, c1, c2, H, W, n = 2, 64, 64, 16, 16, 2
    key = jax.random.PRNGKey(0)
    k_param, k_x = jax.random.split(key)

    mod = BottleneckCSPPallas(c1, c2, n=n, shortcut=True, key=k_param)
    x = jax.random.normal(k_x, (bs, c1, H, W), jnp.float32)

    out = jax.block_until_ready(mod(x))
    assert out.shape == (bs, c2, H, W)

    ref = jax.block_until_ready(mod.reference(x))
    max_err = float(jnp.max(jnp.abs(out - ref)))
    assert np.allclose(np.asarray(out), np.asarray(ref), atol=2e-2, rtol=2e-2), max_err

    print("KERNEL_OK")
</pallas_src>

<mosaic_0001>
module attributes {stable_mosaic.version = 11 : i64} {
  func.func @_csp_kernel(%arg0: i32, %arg1: memref<1x64x256xf32, #tpu.memory_space<vmem>>, %arg2: memref<32x64xf32, #tpu.memory_space<vmem>>, %arg3: memref<32x1xf32, #tpu.memory_space<vmem>>, %arg4: memref<2x32x32xf32, #tpu.memory_space<vmem>>, %arg5: memref<2x32x1xf32, #tpu.memory_space<vmem>>, %arg6: memref<18x32x32xf32, #tpu.memory_space<vmem>>, %arg7: memref<2x32x1xf32, #tpu.memory_space<vmem>>, %arg8: memref<32x32xf32, #tpu.memory_space<vmem>>, %arg9: memref<32x1xf32, #tpu.memory_space<vmem>>, %arg10: memref<32x64xf32, #tpu.memory_space<vmem>>, %arg11: memref<32x1xf32, #tpu.memory_space<vmem>>, %arg12: memref<64x32xf32, #tpu.memory_space<vmem>>, %arg13: memref<64x32xf32, #tpu.memory_space<vmem>>, %arg14: memref<64x1xf32, #tpu.memory_space<vmem>>, %arg15: memref<9x256x256xf32, #tpu.memory_space<vmem>>, %arg16: memref<1x64x256xf32, #tpu.memory_space<vmem>>) attributes {dimension_semantics = [#tpu.dimension_semantics<parallel>], iteration_bounds = array<i64: 2>, scalar_prefetch = 0 : i64, scratch_operands = 0 : i64, tpu.core_type = #tpu.core_type<tc>, window_params = [{transform_indices = @transform_0, window_bounds = array<i64: 1, 64, 256>}, {pipeline_mode = #tpu.pipeline_mode<synchronous>, transform_indices = @transform_1, window_bounds = array<i64: 32, 64>}, {pipeline_mode = #tpu.pipeline_mode<synchronous>, transform_indices = @transform_2, window_bounds = array<i64: 32, 1>}, {pipeline_mode = #tpu.pipeline_mode<synchronous>, transform_indices = @transform_3, window_bounds = array<i64: 2, 32, 32>}, {pipeline_mode = #tpu.pipeline_mode<synchronous>, transform_indices = @transform_4, window_bounds = array<i64: 2, 32, 1>}, {pipeline_mode = #tpu.pipeline_mode<synchronous>, transform_indices = @transform_5, window_bounds = array<i64: 18, 32, 32>}, {pipeline_mode = #tpu.pipeline_mode<synchronous>, transform_indices = @transform_6, window_bounds = array<i64: 2, 32, 1>}, {pipeline_mode = #tpu.pipeline_mode<synchronous>, transform_indices = @transform_7, window_bounds = array<i64: 32, 32>}, {pipeline_mode = #tpu.pipeline_mode<synchronous>, transform_indices = @transform_8, window_bounds = array<i64: 32, 1>}, {pipeline_mode = #tpu.pipeline_mode<synchronous>, transform_indices = @transform_9, window_bounds = array<i64: 32, 64>}, {pipeline_mode = #tpu.pipeline_mode<synchronous>, transform_indices = @transform_10, window_bounds = array<i64: 32, 1>}, {pipeline_mode = #tpu.pipeline_mode<synchronous>, transform_indices = @transform_11, window_bounds = array<i64: 64, 32>}, {pipeline_mode = #tpu.pipeline_mode<synchronous>, transform_indices = @transform_12, window_bounds = array<i64: 64, 32>}, {pipeline_mode = #tpu.pipeline_mode<synchronous>, transform_indices = @transform_13, window_bounds = array<i64: 64, 1>}, {pipeline_mode = #tpu.pipeline_mode<synchronous>, transform_indices = @transform_14, window_bounds = array<i64: 9, 256, 256>}, {transform_indices = @transform_15, window_bounds = array<i64: 1, 64, 256>}]} {
    %c0 = arith.constant 0 : index
    %c0_0 = arith.constant 0 : index
    %c0_1 = arith.constant 0 : index
    %0 = vector.load %arg1[%c0, %c0_0, %c0_1] : memref<1x64x256xf32, #tpu.memory_space<vmem>>, vector<1x64x256xf32>
    %1 = vector.shape_cast %0 : vector<1x64x256xf32> to vector<64x256xf32>
    %c0_2 = arith.constant 0 : index
    %c0_3 = arith.constant 0 : index
    %2 = vector.load %arg2[%c0_2, %c0_3] : memref<32x64xf32, #tpu.memory_space<vmem>>, vector<32x64xf32>
    %cst = arith.constant dense<0.000000e+00> : vector<32x256xf32>
    %3 = tpu.matmul %2, %1, %cst {dimension_numbers = #tpu.dot_dimension_numbers<[1], [0], [0], [1], [0, 0, 1, 1], [], []>} : vector<32x64xf32>, vector<64x256xf32>, vector<32x256xf32> -> vector<32x256xf32>
    %c0_4 = arith.constant 0 : index
    %c0_5 = arith.constant 0 : index
    %4 = vector.load %arg3[%c0_4, %c0_5] : memref<32x1xf32, #tpu.memory_space<vmem>>, vector<32x1xf32>
    %5 = vector.broadcast %4 : vector<32x1xf32> to vector<32x256xf32>
    %6 = arith.addf %3, %5 : vector<32x256xf32>
    %7 = arith.negf %6 : vector<32x256xf32>
    %8 = math.exp %7 : vector<32x256xf32>
    %cst_6 = arith.constant 1.000000e+00 : f32
    %9 = vector.broadcast %cst_6 : f32 to vector<32x256xf32>
    %10 = arith.addf %9, %8 : vector<32x256xf32>
    %11 = arith.divf %9, %10 : vector<32x256xf32>
    %12 = arith.mulf %6, %11 : vector<32x256xf32>
    %c0_7 = arith.constant 0 : index
    %c0_8 = arith.constant 0 : index
    %c0_9 = arith.constant 0 : index
    %13 = vector.load %arg4[%c0_7, %c0_8, %c0_9] : memref<2x32x32xf32, #tpu.memory_space<vmem>>, vector<1x32x32xf32>
    %14 = vector.shape_cast %13 : vector<1x32x32xf32> to vector<32x32xf32>
    %cst_10 = arith.constant dense<0.000000e+00> : vector<32x256xf32>
    %15 = tpu.matmul %14, %12, %cst_10 {dimension_numbers = #tpu.dot_dimension_numbers<[1], [0], [0], [1], [0, 0, 1, 1], [], []>} : vector<32x32xf32>, vector<32x256xf32>, vector<32x256xf32> -> vector<32x256xf32>
    %c0_11 = arith.constant 0 : index
    %c0_12 = arith.constant 0 : index
    %c0_13 = arith.constant 0 : index
    %16 = vector.load %arg5[%c0_11, %c0_12, %c0_13] : memref<2x32x1xf32, #tpu.memory_space<vmem>>, vector<1x32x1xf32>
    %17 = vector.shape_cast %16 : vector<1x32x1xf32> to vector<32x1xf32>
    %18 = vector.broadcast %17 : vector<32x1xf32> to vector<32x256xf32>
    %19 = arith.addf %15, %18 : vector<32x256xf32>
    %20 = arith.negf %19 : vector<32x256xf32>
    %21 = math.exp %20 : vector<32x256xf32>
    %cst_14 = arith.constant 1.000000e+00 : f32
    %22 = vector.broadcast %cst_14 : f32 to vector<32x256xf32>
    %23 = arith.addf %22, %21 : vector<32x256xf32>
    %24 = arith.divf %22, %23 : vector<32x256xf32>
    %25 = arith.mulf %19, %24 : vector<32x256xf32>
    %c0_15 = arith.constant 0 : index
    %c0_16 = arith.constant 0 : index
    %c0_17 = arith.constant 0 : index
    %26 = vector.load %arg6[%c0_15, %c0_16, %c0_17] : memref<18x32x32xf32, #tpu.memory_space<vmem>>, vector<1x32x32xf32>
    %27 = vector.shape_cast %26 : vector<1x32x32xf32> to vector<32x32xf32>
    %c0_18 = arith.constant 0 : index
    %c0_19 = arith.constant 0 : index
    %c0_20 = arith.constant 0 : index
    %28 = vector.load %arg15[%c0_18, %c0_19, %c0_20] : memref<9x256x256xf32, #tpu.memory_space<vmem>>, vector<1x256x256xf32>
    %29 = vector.shape_cast %28 : vector<1x256x256xf32> to vector<256x256xf32>
    %cst_21 = arith.constant dense<0.000000e+00> : vector<32x256xf32>
    %30 = tpu.matmul %25, %29, %cst_21 {dimension_numbers = #tpu.dot_dimension_numbers<[1], [0], [0], [1], [0, 0, 1, 1], [], []>} : vector<32x256xf32>, vector<256x256xf32>, vector<32x256xf32> -> vector<32x256xf32>
    %cst_22 = arith.constant dense<0.000000e+00> : vector<32x256xf32>
    %31 = tpu.matmul %27, %30, %cst_22 {dimension_numbers = #tpu.dot_dimension_numbers<[1], [0], [0], [1], [0, 0, 1, 1], [], []>} : vector<32x32xf32>, vector<32x256xf32>, vector<32x256xf32> -> vector<32x256xf32>
    %c1 = arith.constant 1 : index
    %c0_23 = arith.constant 0 : index
    %c0_24 = arith.constant 0 : index
    %32 = vector.load %arg6[%c1, %c0_23, %c0_24] : memref<18x32x32xf32, #tpu.memory_space<vmem>>, vector<1x32x32xf32>
    %33 = vector.shape_cast %32 : vector<1x32x32xf32> to vector<32x32xf32>
    %c1_25 = arith.constant 1 : index
    %c0_26 = arith.constant 0 : index
    %c0_27 = arith.constant 0 : index
    %34 = vector.load %arg15[%c1_25, %c0_26, %c0_27] : memref<9x256x256xf32, #tpu.memory_space<vmem>>, vector<1x256x256xf32>
    %35 = vector.shape_cast %34 : vector<1x256x256xf32> to vector<256x256xf32>
    %cst_28 = arith.constant dense<0.000000e+00> : vector<32x256xf32>
    %36 = tpu.matmul %25, %35, %cst_28 {dimension_numbers = #tpu.dot_dimension_numbers<[1], [0], [0], [1], [0, 0, 1, 1], [], []>} : vector<32x256xf32>, vector<256x256xf32>, vector<32x256xf32> -> vector<32x256xf32>
    %cst_29 = arith.constant dense<0.000000e+00> : vector<32x256xf32>
    %37 = tpu.matmul %33, %36, %cst_29 {dimension_numbers = #tpu.dot_dimension_numbers<[1], [0], [0], [1], [0, 0, 1, 1], [], []>} : vector<32x32xf32>, vector<32x256xf32>, vector<32x256xf32> -> vector<32x256xf32>
    %38 = arith.addf %31, %37 : vector<32x256xf32>
    %c2 = arith.constant 2 : index
    %c0_30 = arith.constant 0 : index
    %c0_31 = arith.constant 0 : index
    %39 = vector.load %arg6[%c2, %c0_30, %c0_31] : memref<18x32x32xf32, #tpu.memory_space<vmem>>, vector<1x32x32xf32>
    %40 = vector.shape_cast %39 : vector<1x32x32xf32> to vector<32x32xf32>
    %c2_32 = arith.constant 2 : index
    %c0_33 = arith.constant 0 : index
    %c0_34 = arith.constant 0 : index
    %41 = vector.load %arg15[%c2_32, %c0_33, %c0_34] : memref<9x256x256xf32, #tpu.memory_space<vmem>>, vector<1x256x256xf32>
    %42 = vector.shape_cast %41 : vector<1x256x256xf32> to vector<256x256xf32>
    %cst_35 = arith.constant dense<0.000000e+00> : vector<32x256xf32>
    %43 = tpu.matmul %25, %42, %cst_35 {dimension_numbers = #tpu.dot_dimension_numbers<[1], [0], [0], [1], [0, 0, 1, 1], [], []>} : vector<32x256xf32>, vector<256x256xf32>, vector<32x256xf32> -> vector<32x256xf32>
    %cst_36 = arith.constant dense<0.000000e+00> : vector<32x256xf32>
    %44 = tpu.matmul %40, %43, %cst_36 {dimension_numbers = #tpu.dot_dimension_numbers<[1], [0], [0], [1], [0, 0, 1, 1], [], []>} : vector<32x32xf32>, vector<32x256xf32>, vector<32x256xf32> -> vector<32x256xf32>
    %45 = arith.addf %38, %44 : vector<32x256xf32>
    %c3 = arith.constant 3 : index
    %c0_37 = arith.constant 0 : index
    %c0_38 = arith.constant 0 : index
    %46 = vector.load %arg6[%c3, %c0_37, %c0_38] : memref<18x32x32xf32, #tpu.memory_space<vmem>>, vector<1x32x32xf32>
    %47 = vector.shape_cast %46 : vector<1x32x32xf32> to vector<32x32xf32>
    %c3_39 = arith.constant 3 : index
    %c0_40 = arith.constant 0 : index
    %c0_41 = arith.constant 0 : index
    %48 = vector.load %arg15[%c3_39, %c0_40, %c0_41] : memref<9x256x256xf32, #tpu.memory_space<vmem>>, vector<1x256x256xf32>
    %49 = vector.shape_cast %48 : vector<1x256x256xf32> to vector<256x256xf32>
    %cst_42 = arith.constant dense<0.000000e+00> : vector<32x256xf32>
    %50 = tpu.matmul %25, %49, %cst_42 {dimension_numbers = #tpu.dot_dimension_numbers<[1], [0], [0], [1], [0, 0, 1, 1], [], []>} : vector<32x256xf32>, vector<256x256xf32>, vector<32x256xf32> -> vector<32x256xf32>
    %cst_43 = arith.constant dense<0.000000e+00> : vector<32x256xf32>
    %51 = tpu.matmul %47, %50, %cst_43 {dimension_numbers = #tpu.dot_dimension_numbers<[1], [0], [0], [1], [0, 0, 1, 1], [], []>} : vector<32x32xf32>, vector<32x256xf32>, vector<32x256xf32> -> vector<32x256xf32>
    %52 = arith.addf %45, %51 : vector<32x256xf32>
    %c4 = arith.constant 4 : index
    %c0_44 = arith.constant 0 : index
    %c0_45 = arith.constant 0 : index
    %53 = vector.load %arg6[%c4, %c0_44, %c0_45] : memref<18x32x32xf32, #tpu.memory_space<vmem>>, vector<1x32x32xf32>
    %54 = vector.shape_cast %53 : vector<1x32x32xf32> to vector<32x32xf32>
    %c4_46 = arith.constant 4 : index
    %c0_47 = arith.constant 0 : index
    %c0_48 = arith.constant 0 : index
    %55 = vector.load %arg15[%c4_46, %c0_47, %c0_48] : memref<9x256x256xf32, #tpu.memory_space<vmem>>, vector<1x256x256xf32>
    %56 = vector.shape_cast %55 : vector<1x256x256xf32> to vector<256x256xf32>
    %cst_49 = arith.constant dense<0.000000e+00> : vector<32x256xf32>
    %57 = tpu.matmul %25, %56, %cst_49 {dimension_numbers = #tpu.dot_dimension_numbers<[1], [0], [0], [1], [0, 0, 1, 1], [], []>} : vector<32x256xf32>, vector<256x256xf32>, vector<32x256xf32> -> vector<32x256xf32>
    %cst_50 = arith.constant dense<0.000000e+00> : vector<32x256xf32>
    %58 = tpu.matmul %54, %57, %cst_50 {dimension_numbers = #tpu.dot_dimension_numbers<[1], [0], [0], [1], [0, 0, 1, 1], [], []>} : vector<32x32xf32>, vector<32x256xf32>, vector<32x256xf32> -> vector<32x256xf32>
    %59 = arith.addf %52, %58 : vector<32x256xf32>
    %c5 = arith.constant 5 : index
    %c0_51 = arith.constant 0 : index
    %c0_52 = arith.constant 0 : index
    %60 = vector.load %arg6[%c5, %c0_51, %c0_52] : memref<18x32x32xf32, #tpu.memory_space<vmem>>, vector<1x32x32xf32>
    %61 = vector.shape_cast %60 : vector<1x32x32xf32> to vector<32x32xf32>
    %c5_53 = arith.constant 5 : index
    %c0_54 = arith.constant 0 : index
    %c0_55 = arith.constant 0 : index
    %62 = vector.load %arg15[%c5_53, %c0_54, %c0_55] : memref<9x256x256xf32, #tpu.memory_space<vmem>>, vector<1x256x256xf32>
    %63 = vector.shape_cast %62 : vector<1x256x256xf32> to vector<256x256xf32>
    %cst_56 = arith.constant dense<0.000000e+00> : vector<32x256xf32>
    %64 = tpu.matmul %25, %63, %cst_56 {dimension_numbers = #tpu.dot_dimension_numbers<[1], [0], [0], [1], [0, 0, 1, 1], [], []>} : vector<32x256xf32>, vector<256x256xf32>, vector<32x256xf32> -> vector<32x256xf32>
    %cst_57 = arith.constant dense<0.000000e+00> : vector<32x256xf32>
    %65 = tpu.matmul %61, %64, %cst_57 {dimension_numbers = #tpu.dot_dimension_numbers<[1], [0], [0], [1], [0, 0, 1, 1], [], []>} : vector<32x32xf32>, vector<32x256xf32>, vector<32x256xf32> -> vector<32x256xf32>
    %66 = arith.addf %59, %65 : vector<32x256xf32>
    %c6 = arith.constant 6 : index
    %c0_58 = arith.constant 0 : index
    %c0_59 = arith.constant 0 : index
    %67 = vector.load %arg6[%c6, %c0_58, %c0_59] : memref<18x32x32xf32, #tpu.memory_space<vmem>>, vector<1x32x32xf32>
    %68 = vector.shape_cast %67 : vector<1x32x32xf32> to vector<32x32xf32>
    %c6_60 = arith.constant 6 : index
    %c0_61 = arith.constant 0 : index
    %c0_62 = arith.constant 0 : index
    %69 = vector.load %arg15[%c6_60, %c0_61, %c0_62] : memref<9x256x256xf32, #tpu.memory_space<vmem>>, vector<1x256x256xf32>
    %70 = vector.shape_cast %69 : vector<1x256x256xf32> to vector<256x256xf32>
    %cst_63 = arith.constant dense<0.000000e+00> : vector<32x256xf32>
    %71 = tpu.matmul %25, %70, %cst_63 {dimension_numbers = #tpu.dot_dimension_numbers<[1], [0], [0], [1], [0, 0, 1, 1], [], []>} : vector<32x256xf32>, vector<256x256xf32>, vector<32x256xf32> -> vector<32x256xf32>
    %cst_64 = arith.constant dense<0.000000e+00> : vector<32x256xf32>
    %72 = tpu.matmul %68, %71, %cst_64 {dimension_numbers = #tpu.dot_dimension_numbers<[1], [0], [0], [1], [0, 0, 1, 1], [], []>} : vector<32x32xf32>, vector<32x256xf32>, vector<32x256xf32> -> vector<32x256xf32>
    %73 = arith.addf %66, %72 : vector<32x256xf32>
    %c7 = arith.constant 7 : index
    %c0_65 = arith.constant 0 : index
    %c0_66 = arith.constant 0 : index
    %74 = vector.load %arg6[%c7, %c0_65, %c0_66] : memref<18x32x32xf32, #tpu.memory_space<vmem>>, vector<1x32x32xf32>
    %75 = vector.shape_cast %74 : vector<1x32x32xf32> to vector<32x32xf32>
    %c7_67 = arith.constant 7 : index
    %c0_68 = arith.constant 0 : index
    %c0_69 = arith.constant 0 : index
    %76 = vector.load %arg15[%c7_67, %c0_68, %c0_69] : memref<9x256x256xf32, #tpu.memory_space<vmem>>, vector<1x256x256xf32>
    %77 = vector.shape_cast %76 : vector<1x256x256xf32> to vector<256x256xf32>
    %cst_70 = arith.constant dense<0.000000e+00> : vector<32x256xf32>
    %78 = tpu.matmul %25, %77, %cst_70 {dimension_numbers = #tpu.dot_dimension_numbers<[1], [0], [0], [1], [0, 0, 1, 1], [], []>} : vector<32x256xf32>, vector<256x256xf32>, vector<32x256xf32> -> vector<32x256xf32>
    %cst_71 = arith.constant dense<0.000000e+00> : vector<32x256xf32>
    %79 = tpu.matmul %75, %78, %cst_71 {dimension_numbers = #tpu.dot_dimension_numbers<[1], [0], [0], [1], [0, 0, 1, 1], [], []>} : vector<32x32xf32>, vector<32x256xf32>, vector<32x256xf32> -> vector<32x256xf32>
    %80 = arith.addf %73, %79 : vector<32x256xf32>
    %c8 = arith.constant 8 : index
    %c0_72 = arith.constant 0 : index
    %c0_73 = arith.constant 0 : index
    %81 = vector.load %arg6[%c8, %c0_72, %c0_73] : memref<18x32x32xf32, #tpu.memory_space<vmem>>, vector<1x32x32xf32>
    %82 = vector.shape_cast %81 : vector<1x32x32xf32> to vector<32x32xf32>
    %c8_74 = arith.constant 8 : index
    %c0_75 = arith.constant 0 : index
    %c0_76 = arith.constant 0 : index
    %83 = vector.load %arg15[%c8_74, %c0_75, %c0_76] : memref<9x256x256xf32, #tpu.memory_space<vmem>>, vector<1x256x256xf32>
    %84 = vector.shape_cast %83 : vector<1x256x256xf32> to vector<256x256xf32>
    %cst_77 = arith.constant dense<0.000000e+00> : vector<32x256xf32>
    %85 = tpu.matmul %25, %84, %cst_77 {dimension_numbers = #tpu.dot_dimension_numbers<[1], [0], [0], [1], [0, 0, 1, 1], [], []>} : vector<32x256xf32>, vector<256x256xf32>, vector<32x256xf32> -> vector<32x256xf32>
    %cst_78 = arith.constant dense<0.000000e+00> : vector<32x256xf32>
    %86 = tpu.matmul %82, %85, %cst_78 {dimension_numbers = #tpu.dot_dimension_numbers<[1], [0], [0], [1], [0, 0, 1, 1], [], []>} : vector<32x32xf32>, vector<32x256xf32>, vector<32x256xf32> -> vector<32x256xf32>
    %87 = arith.addf %80, %86 : vector<32x256xf32>
    %c0_79 = arith.constant 0 : index
    %c0_80 = arith.constant 0 : index
    %c0_81 = arith.constant 0 : index
    %88 = vector.load %arg7[%c0_79, %c0_80, %c0_81] : memref<2x32x1xf32, #tpu.memory_space<vmem>>, vector<1x32x1xf32>
    %89 = vector.shape_cast %88 : vector<1x32x1xf32> to vector<32x1xf32>
    %90 = vector.broadcast %89 : vector<32x1xf32> to vector<32x256xf32>
    %91 = arith.addf %87, %90 : vector<32x256xf32>
    %92 = arith.negf %91 : vector<32x256xf32>
    %93 = math.exp %92 : vector<32x256xf32>
    %cst_82 = arith.constant 1.000000e+00 : f32
    %94 = vector.broadcast %cst_82 : f32 to vector<32x256xf32>
    %95 = arith.addf %94, %93 : vector<32x256xf32>
    %96 = arith.divf %94, %95 : vector<32x256xf32>
    %97 = arith.mulf %91, %96 : vector<32x256xf32>
    %98 = arith.addf %12, %97 : vector<32x256xf32>
    %c1_83 = arith.constant 1 : index
    %c0_84 = arith.constant 0 : index
    %c0_85 = arith.constant 0 : index
    %99 = vector.load %arg4[%c1_83, %c0_84, %c0_85] : memref<2x32x32xf32, #tpu.memory_space<vmem>>, vector<1x32x32xf32>
    %100 = vector.shape_cast %99 : vector<1x32x32xf32> to vector<32x32xf32>
    %cst_86 = arith.constant dense<0.000000e+00> : vector<32x256xf32>
    %101 = tpu.matmul %100, %98, %cst_86 {dimension_numbers = #tpu.dot_dimension_numbers<[1], [0], [0], [1], [0, 0, 1, 1], [], []>} : vector<32x32xf32>, vector<32x256xf32>, vector<32x256xf32> -> vector<32x256xf32>
    %c1_87 = arith.constant 1 : index
    %c0_88 = arith.constant 0 : index
    %c0_89 = arith.constant 0 : index
    %102 = vector.load %arg5[%c1_87, %c0_88, %c0_89] : memref<2x32x1xf32, #tpu.memory_space<vmem>>, vector<1x32x1xf32>
    %103 = vector.shape_cast %102 : vector<1x32x1xf32> to vector<32x1xf32>
    %104 = vector.broadcast %103 : vector<32x1xf32> to vector<32x256xf32>
    %105 = arith.addf %101, %104 : vector<32x256xf32>
    %106 = arith.negf %105 : vector<32x256xf32>
    %107 = math.exp %106 : vector<32x256xf32>
    %cst_90 = arith.constant 1.000000e+00 : f32
    %108 = vector.broadcast %cst_90 : f32 to vector<32x256xf32>
    %109 = arith.addf %108, %107 : vector<32x256xf32>
    %110 = arith.divf %108, %109 : vector<32x256xf32>
    %111 = arith.mulf %105, %110 : vector<32x256xf32>
    %c9 = arith.constant 9 : index
    %c0_91 = arith.constant 0 : index
    %c0_92 = arith.constant 0 : index
    %112 = vector.load %arg6[%c9, %c0_91, %c0_92] : memref<18x32x32xf32, #tpu.memory_space<vmem>>, vector<1x32x32xf32>
    %113 = vector.shape_cast %112 : vector<1x32x32xf32> to vector<32x32xf32>
    %c0_93 = arith.constant 0 : index
    %c0_94 = arith.constant 0 : index
    %c0_95 = arith.constant 0 : index
    %114 = vector.load %arg15[%c0_93, %c0_94, %c0_95] : memref<9x256x256xf32, #tpu.memory_space<vmem>>, vector<1x256x256xf32>
    %115 = vector.shape_cast %114 : vector<1x256x256xf32> to vector<256x256xf32>
    %cst_96 = arith.constant dense<0.000000e+00> : vector<32x256xf32>
    %116 = tpu.matmul %111, %115, %cst_96 {dimension_numbers = #tpu.dot_dimension_numbers<[1], [0], [0], [1], [0, 0, 1, 1], [], []>} : vector<32x256xf32>, vector<256x256xf32>, vector<32x256xf32> -> vector<32x256xf32>
    %cst_97 = arith.constant dense<0.000000e+00> : vector<32x256xf32>
    %117 = tpu.matmul %113, %116, %cst_97 {dimension_numbers = #tpu.dot_dimension_numbers<[1], [0], [0], [1], [0, 0, 1, 1], [], []>} : vector<32x32xf32>, vector<32x256xf32>, vector<32x256xf32> -> vector<32x256xf32>
    %c10 = arith.constant 10 : index
    %c0_98 = arith.constant 0 : index
    %c0_99 = arith.constant 0 : index
    %118 = vector.load %arg6[%c10, %c0_98, %c0_99] : memref<18x32x32xf32, #tpu.memory_space<vmem>>, vector<1x32x32xf32>
    %119 = vector.shape_cast %118 : vector<1x32x32xf32> to vector<32x32xf32>
    %c1_100 = arith.constant 1 : index
    %c0_101 = arith.constant 0 : index
    %c0_102 = arith.constant 0 : index
    %120 = vector.load %arg15[%c1_100, %c0_101, %c0_102] : memref<9x256x256xf32, #tpu.memory_space<vmem>>, vector<1x256x256xf32>
    %121 = vector.shape_cast %120 : vector<1x256x256xf32> to vector<256x256xf32>
    %cst_103 = arith.constant dense<0.000000e+00> : vector<32x256xf32>
    %122 = tpu.matmul %111, %121, %cst_103 {dimension_numbers = #tpu.dot_dimension_numbers<[1], [0], [0], [1], [0, 0, 1, 1], [], []>} : vector<32x256xf32>, vector<256x256xf32>, vector<32x256xf32> -> vector<32x256xf32>
    %cst_104 = arith.constant dense<0.000000e+00> : vector<32x256xf32>
    %123 = tpu.matmul %119, %122, %cst_104 {dimension_numbers = #tpu.dot_dimension_numbers<[1], [0], [0], [1], [0, 0, 1, 1], [], []>} : vector<32x32xf32>, vector<32x256xf32>, vector<32x256xf32> -> vector<32x256xf32>
    %124 = arith.addf %117, %123 : vector<32x256xf32>
    %c11 = arith.constant 11 : index
    %c0_105 = arith.constant 0 : index
    %c0_106 = arith.constant 0 : index
    %125 = vector.load %arg6[%c11, %c0_105, %c0_106] : memref<18x32x32xf32, #tpu.memory_space<vmem>>, vector<1x32x32xf32>
    %126 = vector.shape_cast %125 : vector<1x32x32xf32> to vector<32x32xf32>
    %c2_107 = arith.constant 2 : index
    %c0_108 = arith.constant 0 : index
    %c0_109 = arith.constant 0 : index
    %127 = vector.load %arg15[%c2_107, %c0_108, %c0_109] : memref<9x256x256xf32, #tpu.memory_space<vmem>>, vector<1x256x256xf32>
    %128 = vector.shape_cast %127 : vector<1x256x256xf32> to vector<256x256xf32>
    %cst_110 = arith.constant dense<0.000000e+00> : vector<32x256xf32>
    %129 = tpu.matmul %111, %128, %cst_110 {dimension_numbers = #tpu.dot_dimension_numbers<[1], [0], [0], [1], [0, 0, 1, 1], [], []>} : vector<32x256xf32>, vector<256x256xf32>, vector<32x256xf32> -> vector<32x256xf32>
    %cst_111 = arith.constant dense<0.000000e+00> : vector<32x256xf32>
    %130 = tpu.matmul %126, %129, %cst_111 {dimension_numbers = #tpu.dot_dimension_numbers<[1], [0], [0], [1], [0, 0, 1, 1], [], []>} : vector<32x32xf32>, vector<32x256xf32>, vector<32x256xf32> -> vector<32x256xf32>
    %131 = arith.addf %124, %130 : vector<32x256xf32>
    %c12 = arith.constant 12 : index
    %c0_112 = arith.constant 0 : index
    %c0_113 = arith.constant 0 : index
    %132 = vector.load %arg6[%c12, %c0_112, %c0_113] : memref<18x32x32xf32, #tpu.memory_space<vmem>>, vector<1x32x32xf32>
    %133 = vector.shape_cast %132 : vector<1x32x32xf32> to vector<32x32xf32>
    %c3_114 = arith.constant 3 : index
    %c0_115 = arith.constant 0 : index
    %c0_116 = arith.constant 0 : index
    %134 = vector.load %arg15[%c3_114, %c0_115, %c0_116] : memref<9x256x256xf32, #tpu.memory_space<vmem>>, vector<1x256x256xf32>
    %135 = vector.shape_cast %134 : vector<1x256x256xf32> to vector<256x256xf32>
    %cst_117 = arith.constant dense<0.000000e+00> : vector<32x256xf32>
    %136 = tpu.matmul %111, %135, %cst_117 {dimension_numbers = #tpu.dot_dimension_numbers<[1], [0], [0], [1], [0, 0, 1, 1], [], []>} : vector<32x256xf32>, vector<256x256xf32>, vector<32x256xf32> -> vector<32x256xf32>
    %cst_118 = arith.constant dense<0.000000e+00> : vector<32x256xf32>
    %137 = tpu.matmul %133, %136, %cst_118 {dimension_numbers = #tpu.dot_dimension_numbers<[1], [0], [0], [1], [0, 0, 1, 1], [], []>} : vector<32x32xf32>, vector<32x256xf32>, vector<32x256xf32> -> vector<32x256xf32>
    %138 = arith.addf %131, %137 : vector<32x256xf32>
    %c13 = arith.constant 13 : index
    %c0_119 = arith.constant 0 : index
    %c0_120 = arith.constant 0 : index
    %139 = vector.load %arg6[%c13, %c0_119, %c0_120] : memref<18x32x32xf32, #tpu.memory_space<vmem>>, vector<1x32x32xf32>
    %140 = vector.shape_cast %139 : vector<1x32x32xf32> to vector<32x32xf32>
    %c4_121 = arith.constant 4 : index
    %c0_122 = arith.constant 0 : index
    %c0_123 = arith.constant 0 : index
    %141 = vector.load %arg15[%c4_121, %c0_122, %c0_123] : memref<9x256x256xf32, #tpu.memory_space<vmem>>, vector<1x256x256xf32>
    %142 = vector.shape_cast %141 : vector<1x256x256xf32> to vector<256x256xf32>
    %cst_124 = arith.constant dense<0.000000e+00> : vector<32x256xf32>
    %143 = tpu.matmul %111, %142, %cst_124 {dimension_numbers = #tpu.dot_dimension_numbers<[1], [0], [0], [1], [0, 0, 1, 1], [], []>} : vector<32x256xf32>, vector<256x256xf32>, vector<32x256xf32> -> vector<32x256xf32>
    %cst_125 = arith.constant dense<0.000000e+00> : vector<32x256xf32>
    %144 = tpu.matmul %140, %143, %cst_125 {dimension_numbers = #tpu.dot_dimension_numbers<[1], [0], [0], [1], [0, 0, 1, 1], [], []>} : vector<32x32xf32>, vector<32x256xf32>, vector<32x256xf32> -> vector<32x256xf32>
    %145 = arith.addf %138, %144 : vector<32x256xf32>
    %c14 = arith.constant 14 : index
    %c0_126 = arith.constant 0 : index
    %c0_127 = arith.constant 0 : index
    %146 = vector.load %arg6[%c14, %c0_126, %c0_127] : memref<18x32x32xf32, #tpu.memory_space<vmem>>, vector<1x32x32xf32>
    %147 = vector.shape_cast %146 : vector<1x32x32xf32> to vector<32x32xf32>
    %c5_128 = arith.constant 5 : index
    %c0_129 = arith.constant 0 : index
    %c0_130 = arith.constant 0 : index
    %148 = vector.load %arg15[%c5_128, %c0_129, %c0_130] : memref<9x256x256xf32, #tpu.memory_space<vmem>>, vector<1x256x256xf32>
    %149 = vector.shape_cast %148 : vector<1x256x256xf32> to vector<256x256xf32>
    %cst_131 = arith.constant dense<0.000000e+00> : vector<32x256xf32>
    %150 = tpu.matmul %111, %149, %cst_131 {dimension_numbers = #tpu.dot_dimension_numbers<[1], [0], [0], [1], [0, 0, 1, 1], [], []>} : vector<32x256xf32>, vector<256x256xf32>, vector<32x256xf32> -> vector<32x256xf32>
    %cst_132 = arith.constant dense<0.000000e+00> : vector<32x256xf32>
    %151 = tpu.matmul %147, %150, %cst_132 {dimension_numbers = #tpu.dot_dimension_numbers<[1], [0], [0], [1], [0, 0, 1, 1], [], []>} : vector<32x32xf32>, vector<32x256xf32>, vector<32x256xf32> -> vector<32x256xf32>
    %152 = arith.addf %145, %151 : vector<32x256xf32>
    %c15 = arith.constant 15 : index
    %c0_133 = arith.constant 0 : index
    %c0_134 = arith.constant 0 : index
    %153 = vector.load %arg6[%c15, %c0_133, %c0_134] : memref<18x32x32xf32, #tpu.memory_space<vmem>>, vector<1x32x32xf32>
    %154 = vector.shape_cast %153 : vector<1x32x32xf32> to vector<32x32xf32>
    %c6_135 = arith.constant 6 : index
    %c0_136 = arith.constant 0 : index
    %c0_137 = arith.constant 0 : index
    %155 = vector.load %arg15[%c6_135, %c0_136, %c0_137] : memref<9x256x256xf32, #tpu.memory_space<vmem>>, vector<1x256x256xf32>
    %156 = vector.shape_cast %155 : vector<1x256x256xf32> to vector<256x256xf32>
    %cst_138 = arith.constant dense<0.000000e+00> : vector<32x256xf32>
    %157 = tpu.matmul %111, %156, %cst_138 {dimension_numbers = #tpu.dot_dimension_numbers<[1], [0], [0], [1], [0, 0, 1, 1], [], []>} : vector<32x256xf32>, vector<256x256xf32>, vector<32x256xf32> -> vector<32x256xf32>
    %cst_139 = arith.constant dense<0.000000e+00> : vector<32x256xf32>
    %158 = tpu.matmul %154, %157, %cst_139 {dimension_numbers = #tpu.dot_dimension_numbers<[1], [0], [0], [1], [0, 0, 1, 1], [], []>} : vector<32x32xf32>, vector<32x256xf32>, vector<32x256xf32> -> vector<32x256xf32>
    %159 = arith.addf %152, %158 : vector<32x256xf32>
    %c16 = arith.constant 16 : index
    %c0_140 = arith.constant 0 : index
    %c0_141 = arith.constant 0 : index
    %160 = vector.load %arg6[%c16, %c0_140, %c0_141] : memref<18x32x32xf32, #tpu.memory_space<vmem>>, vector<1x32x32xf32>
    %161 = vector.shape_cast %160 : vector<1x32x32xf32> to vector<32x32xf32>
    %c7_142 = arith.constant 7 : index
    %c0_143 = arith.constant 0 : index
    %c0_144 = arith.constant 0 : index
    %162 = vector.load %arg15[%c7_142, %c0_143, %c0_144] : memref<9x256x256xf32, #tpu.memory_space<vmem>>, vector<1x256x256xf32>
    %163 = vector.shape_cast %162 : vector<1x256x256xf32> to vector<256x256xf32>
    %cst_145 = arith.constant dense<0.000000e+00> : vector<32x256xf32>
    %164 = tpu.matmul %111, %163, %cst_145 {dimension_numbers = #tpu.dot_dimension_numbers<[1], [0], [0], [1], [0, 0, 1, 1], [], []>} : vector<32x256xf32>, vector<256x256xf32>, vector<32x256xf32> -> vector<32x256xf32>
    %cst_146 = arith.constant dense<0.000000e+00> : vector<32x256xf32>
    %165 = tpu.matmul %161, %164, %cst_146 {dimension_numbers = #tpu.dot_dimension_numbers<[1], [0], [0], [1], [0, 0, 1, 1], [], []>} : vector<32x32xf32>, vector<32x256xf32>, vector<32x256xf32> -> vector<32x256xf32>
    %166 = arith.addf %159, %165 : vector<32x256xf32>
    %c17 = arith.constant 17 : index
    %c0_147 = arith.constant 0 : index
    %c0_148 = arith.constant 0 : index
    %167 = vector.load %arg6[%c17, %c0_147, %c0_148] : memref<18x32x32xf32, #tpu.memory_space<vmem>>, vector<1x32x32xf32>
    %168 = vector.shape_cast %167 : vector<1x32x32xf32> to vector<32x32xf32>
    %c8_149 = arith.constant 8 : index
    %c0_150 = arith.constant 0 : index
    %c0_151 = arith.constant 0 : index
    %169 = vector.load %arg15[%c8_149, %c0_150, %c0_151] : memref<9x256x256xf32, #tpu.memory_space<vmem>>, vector<1x256x256xf32>
    %170 = vector.shape_cast %169 : vector<1x256x256xf32> to vector<256x256xf32>
    %cst_152 = arith.constant dense<0.000000e+00> : vector<32x256xf32>
    %171 = tpu.matmul %111, %170, %cst_152 {dimension_numbers = #tpu.dot_dimension_numbers<[1], [0], [0], [1], [0, 0, 1, 1], [], []>} : vector<32x256xf32>, vector<256x256xf32>, vector<32x256xf32> -> vector<32x256xf32>
    %cst_153 = arith.constant dense<0.000000e+00> : vector<32x256xf32>
    %172 = tpu.matmul %168, %171, %cst_153 {dimension_numbers = #tpu.dot_dimension_numbers<[1], [0], [0], [1], [0, 0, 1, 1], [], []>} : vector<32x32xf32>, vector<32x256xf32>, vector<32x256xf32> -> vector<32x256xf32>
    %173 = arith.addf %166, %172 : vector<32x256xf32>
    %c1_154 = arith.constant 1 : index
    %c0_155 = arith.constant 0 : index
    %c0_156 = arith.constant 0 : index
    %174 = vector.load %arg7[%c1_154, %c0_155, %c0_156] : memref<2x32x1xf32, #tpu.memory_space<vmem>>, vector<1x32x1xf32>
    %175 = vector.shape_cast %174 : vector<1x32x1xf32> to vector<32x1xf32>
    %176 = vector.broadcast %175 : vector<32x1xf32> to vector<32x256xf32>
    %177 = arith.addf %173, %176 : vector<32x256xf32>
    %178 = arith.negf %177 : vector<32x256xf32>
    %179 = math.exp %178 : vector<32x256xf32>
    %cst_157 = arith.constant 1.000000e+00 : f32
    %180 = vector.broadcast %cst_157 : f32 to vector<32x256xf32>
    %181 = arith.addf %180, %179 : vector<32x256xf32>
    %182 = arith.divf %180, %181 : vector<32x256xf32>
    %183 = arith.mulf %177, %182 : vector<32x256xf32>
    %184 = arith.addf %98, %183 : vector<32x256xf32>
    %c0_158 = arith.constant 0 : index
    %c0_159 = arith.constant 0 : index
    %185 = vector.load %arg8[%c0_158, %c0_159] : memref<32x32xf32, #tpu.memory_space<vmem>>, vector<32x32xf32>
    %cst_160 = arith.constant dense<0.000000e+00> : vector<32x256xf32>
    %186 = tpu.matmul %185, %184, %cst_160 {dimension_numbers = #tpu.dot_dimension_numbers<[1], [0], [0], [1], [0, 0, 1, 1], [], []>} : vector<32x32xf32>, vector<32x256xf32>, vector<32x256xf32> -> vector<32x256xf32>
    %c0_161 = arith.constant 0 : index
    %c0_162 = arith.constant 0 : index
    %187 = vector.load %arg9[%c0_161, %c0_162] : memref<32x1xf32, #tpu.memory_space<vmem>>, vector<32x1xf32>
    %188 = vector.broadcast %187 : vector<32x1xf32> to vector<32x256xf32>
    %189 = arith.addf %186, %188 : vector<32x256xf32>
    %cst_163 = arith.constant 1.000000e-01 : f32
    %190 = vector.broadcast %cst_163 : f32 to vector<32x256xf32>
    %191 = arith.mulf %190, %189 : vector<32x256xf32>
    %192 = arith.maximumf %189, %191 : vector<32x256xf32>
    %c0_164 = arith.constant 0 : index
    %c0_165 = arith.constant 0 : index
    %193 = vector.load %arg10[%c0_164, %c0_165] : memref<32x64xf32, #tpu.memory_space<vmem>>, vector<32x64xf32>
    %cst_166 = arith.constant dense<0.000000e+00> : vector<32x256xf32>
    %194 = tpu.matmul %193, %1, %cst_166 {dimension_numbers = #tpu.dot_dimension_numbers<[1], [0], [0], [1], [0, 0, 1, 1], [], []>} : vector<32x64xf32>, vector<64x256xf32>, vector<32x256xf32> -> vector<32x256xf32>
    %c0_167 = arith.constant 0 : index
    %c0_168 = arith.constant 0 : index
    %195 = vector.load %arg11[%c0_167, %c0_168] : memref<32x1xf32, #tpu.memory_space<vmem>>, vector<32x1xf32>
    %196 = vector.broadcast %195 : vector<32x1xf32> to vector<32x256xf32>
    %197 = arith.addf %194, %196 : vector<32x256xf32>
    %cst_169 = arith.constant 1.000000e-01 : f32
    %198 = vector.broadcast %cst_169 : f32 to vector<32x256xf32>
    %199 = arith.mulf %198, %197 : vector<32x256xf32>
    %200 = arith.maximumf %197, %199 : vector<32x256xf32>
    %c0_170 = arith.constant 0 : index
    %c0_171 = arith.constant 0 : index
    %201 = vector.load %arg12[%c0_170, %c0_171] : memref<64x32xf32, #tpu.memory_space<vmem>>, vector<64x32xf32>
    %cst_172 = arith.constant dense<0.000000e+00> : vector<64x256xf32>
    %202 = tpu.matmul %201, %192, %cst_172 {dimension_numbers = #tpu.dot_dimension_numbers<[1], [0], [0], [1], [0, 0, 1, 1], [], []>} : vector<64x32xf32>, vector<32x256xf32>, vector<64x256xf32> -> vector<64x256xf32>
    %c0_173 = arith.constant 0 : index
    %c0_174 = arith.constant 0 : index
    %203 = vector.load %arg13[%c0_173, %c0_174] : memref<64x32xf32, #tpu.memory_space<vmem>>, vector<64x32xf32>
    %cst_175 = arith.constant dense<0.000000e+00> : vector<64x256xf32>
    %204 = tpu.matmul %203, %200, %cst_175 {dimension_numbers = #tpu.dot_dimension_numbers<[1], [0], [0], [1], [0, 0, 1, 1], [], []>} : vector<64x32xf32>, vector<32x256xf32>, vector<64x256xf32> -> vector<64x256xf32>
    %205 = arith.addf %202, %204 : vector<64x256xf32>
    %c0_176 = arith.constant 0 : index
    %c0_177 = arith.constant 0 : index
    %206 = vector.load %arg14[%c0_176, %c0_177] : memref<64x1xf32, #tpu.memory_space<vmem>>, vector<64x1xf32>
    %207 = vector.broadcast %206 : vector<64x1xf32> to vector<64x256xf32>
    %208 = arith.addf %205, %207 : vector<64x256xf32>
    %209 = arith.negf %208 : vector<64x256xf32>
    %210 = math.exp %209 : vector<64x256xf32>
    %cst_178 = arith.constant 1.000000e+00 : f32
    %211 = vector.broadcast %cst_178 : f32 to vector<64x256xf32>
    %212 = arith.addf %211, %210 : vector<64x256xf32>
    %213 = arith.divf %211, %212 : vector<64x256xf32>
    %214 = arith.mulf %208, %213 : vector<64x256xf32>
    %c0_179 = arith.constant 0 : index
    %c0_180 = arith.constant 0 : index
    %c0_181 = arith.constant 0 : index
    %215 = vector.load %arg16[%c0_179, %c0_180, %c0_181] : memref<1x64x256xf32, #tpu.memory_space<vmem>>, vector<1x64x256xf32>
    %216 = vector.shape_cast %215 : vector<1x64x256xf32> to vector<64x256xf32>
    %217 = vector.shape_cast %214 : vector<64x256xf32> to vector<1x64x256xf32>
    tpu.vector_store %arg16[%c0_179, %c0_180, %c0_181], %217 {strides = array<i32>} : memref<1x64x256xf32, #tpu.memory_space<vmem>>, vector<1x64x256xf32>,
    return
  }
  func.func @transform_0(%arg0: i32) -> (i32, i32, i32) {
    %c0_i32 = arith.constant 0 : i32
    %c0_i32_0 = arith.constant 0 : i32
    %c0_i32_1 = arith.constant 0 : i32
    return %arg0, %c0_i32, %c0_i32_0 : i32, i32, i32
  }
  func.func @transform_1(%arg0: i32) -> (i32, i32) {
    %c0_i32 = arith.constant 0 : i32
    %c0_i32_0 = arith.constant 0 : i32
    %c0_i32_1 = arith.constant 0 : i32
    return %c0_i32, %c0_i32_0 : i32, i32
  }
  func.func @transform_2(%arg0: i32) -> (i32, i32) {
    %c0_i32 = arith.constant 0 : i32
    %c0_i32_0 = arith.constant 0 : i32
    %c0_i32_1 = arith.constant 0 : i32
    return %c0_i32, %c0_i32_0 : i32, i32
  }
  func.func @transform_3(%arg0: i32) -> (i32, i32, i32) {
    %c0_i32 = arith.constant 0 : i32
    %c0_i32_0 = arith.constant 0 : i32
    %c0_i32_1 = arith.constant 0 : i32
    %c0_i32_2 = arith.constant 0 : i32
    return %c0_i32, %c0_i32_0, %c0_i32_1 : i32, i32, i32
  }
  func.func @transform_4(%arg0: i32) -> (i32, i32, i32) {
    %c0_i32 = arith.constant 0 : i32
    %c0_i32_0 = arith.constant 0 : i32
    %c0_i32_1 = arith.constant 0 : i32
    %c0_i32_2 = arith.constant 0 : i32
    return %c0_i32, %c0_i32_0, %c0_i32_1 : i32, i32, i32
  }
  func.func @transform_5(%arg0: i32) -> (i32, i32, i32) {
    %c0_i32 = arith.constant 0 : i32
    %c0_i32_0 = arith.constant 0 : i32
    %c0_i32_1 = arith.constant 0 : i32
    %c0_i32_2 = arith.constant 0 : i32
    return %c0_i32, %c0_i32_0, %c0_i32_1 : i32, i32, i32
  }
  func.func @transform_6(%arg0: i32) -> (i32, i32, i32) {
    %c0_i32 = arith.constant 0 : i32
    %c0_i32_0 = arith.constant 0 : i32
    %c0_i32_1 = arith.constant 0 : i32
    %c0_i32_2 = arith.constant 0 : i32
    return %c0_i32, %c0_i32_0, %c0_i32_1 : i32, i32, i32
  }
  func.func @transform_7(%arg0: i32) -> (i32, i32) {
    %c0_i32 = arith.constant 0 : i32
    %c0_i32_0 = arith.constant 0 : i32
    %c0_i32_1 = arith.constant 0 : i32
    return %c0_i32, %c0_i32_0 : i32, i32
  }
  func.func @transform_8(%arg0: i32) -> (i32, i32) {
    %c0_i32 = arith.constant 0 : i32
    %c0_i32_0 = arith.constant 0 : i32
    %c0_i32_1 = arith.constant 0 : i32
    return %c0_i32, %c0_i32_0 : i32, i32
  }
  func.func @transform_9(%arg0: i32) -> (i32, i32) {
    %c0_i32 = arith.constant 0 : i32
    %c0_i32_0 = arith.constant 0 : i32
    %c0_i32_1 = arith.constant 0 : i32
    return %c0_i32, %c0_i32_0 : i32, i32
  }
  func.func @transform_10(%arg0: i32) -> (i32, i32) {
    %c0_i32 = arith.constant 0 : i32
    %c0_i32_0 = arith.constant 0 : i32
    %c0_i32_1 = arith.constant 0 : i32
    return %c0_i32, %c0_i32_0 : i32, i32
  }
  func.func @transform_11(%arg0: i32) -> (i32, i32) {
    %c0_i32 = arith.constant 0 : i32
    %c0_i32_0 = arith.constant 0 : i32
    %c0_i32_1 = arith.constant 0 : i32
    return %c0_i32, %c0_i32_0 : i32, i32
  }
  func.func @transform_12(%arg0: i32) -> (i32, i32) {
    %c0_i32 = arith.constant 0 : i32
    %c0_i32_0 = arith.constant 0 : i32
    %c0_i32_1 = arith.constant 0 : i32
    return %c0_i32, %c0_i32_0 : i32, i32
  }
  func.func @transform_13(%arg0: i32) -> (i32, i32) {
    %c0_i32 = arith.constant 0 : i32
    %c0_i32_0 = arith.constant 0 : i32
    %c0_i32_1 = arith.constant 0 : i32
    return %c0_i32, %c0_i32_0 : i32, i32
  }
  func.func @transform_14(%arg0: i32) -> (i32, i32, i32) {
    %c0_i32 = arith.constant 0 : i32
    %c0_i32_0 = arith.constant 0 : i32
    %c0_i32_1 = arith.constant 0 : i32
    %c0_i32_2 = arith.constant 0 : i32
    return %c0_i32, %c0_i32_0, %c0_i32_1 : i32, i32, i32
  }
  func.func @transform_15(%arg0: i32) -> (i32, i32, i32) {
    %c0_i32 = arith.constant 0 : i32
    %c0_i32_0 = arith.constant 0 : i32
    %c0_i32_1 = arith.constant 0 : i32
    return %arg0, %c0_i32, %c0_i32_0 : i32, i32, i32
  }
}

</mosaic_0001>

<llo_original>
// kernel: tpu_custom_call.1
$region0: #{tpu_custom_call.1}
  #allocation0 [shape = 'u32[]', space=smem, size = 0x4, offset = 0x4, fixed_abs, tag = 'smem constant byte address 0x4 - core index']
  #allocation1 [shape = 'u32[144,128]{1,0:T(1,128)}', space=vmem, size = 0x12000, scoped, tag = 'internal scratch']
  %s0 = inlined_call_operand.hbm [shape: f32[2,64,256], index: 0, kind: input, shape index: {}]
  %s1 = inlined_call_operand.hbm [shape: f32[32,64], index: 1, kind: input, shape index: {}]
  %s2 = inlined_call_operand.vmem [shape: f32[32,1], index: 2, kind: input, shape index: {}]
  %s3 = inlined_call_operand.hbm [shape: f32[2,32,32], index: 3, kind: input, shape index: {}]
  %s4 = inlined_call_operand.vmem [shape: f32[2,32,1], index: 4, kind: input, shape index: {}]
  %s5 = inlined_call_operand.hbm [shape: f32[18,32,32], index: 5, kind: input, shape index: {}]
  %s6 = inlined_call_operand.vmem [shape: f32[2,32,1], index: 6, kind: input, shape index: {}]
  %s7 = inlined_call_operand.hbm [shape: f32[32,32], index: 7, kind: input, shape index: {}]
  %s8 = inlined_call_operand.vmem [shape: f32[32,1], index: 8, kind: input, shape index: {}]
  %s9 = inlined_call_operand.hbm [shape: f32[32,64], index: 9, kind: input, shape index: {}]
  %s10 = inlined_call_operand.vmem [shape: f32[32,1], index: 10, kind: input, shape index: {}]
  %s11 = inlined_call_operand.vmem [shape: f32[64,32], index: 11, kind: input, shape index: {}]
  %s12 = inlined_call_operand.vmem [shape: f32[64,32], index: 12, kind: input, shape index: {}]
  %s13 = inlined_call_operand.vmem [shape: f32[64,1], index: 13, kind: input, shape index: {}]
  %s14 = inlined_call_operand.hbm [shape: f32[9,256,256], index: 14, kind: input, shape index: {}]
  %s15 = inlined_call_operand.hbm [shape: f32[2,64,256], index: 15, kind: output, shape index: {}]
  %s16 = sld [smem:[#allocation0]]
  $region121: #{tpu_custom_call.1} parent=0
    _
  %s18 = ssub.s32 1, %s16
  %s19 = scalar_select 0, %s18, %s16
  $region1: #{tpu_custom_call.1} parent=0
    #allocation2 [shape = 'u8[131072]{0}', space=vmem, size = 0x20000, scoped, tag = 'input window, operand 0']
    #allocation3 [shape = 's32[2]{0}', space=sflag, size = 0x8, scoped, tag = 'scoped memory for tpu_custom_call.1']
    #allocation4 [shape = 's32[2]{0}', space=sflag, size = 0x8, scoped, tag = 'scoped memory for tpu_custom_call.1']
    #allocation5 [shape = 'u8[16384]{0}', space=vmem, size = 0x4000, scoped, tag = 'input window, operand 1, single buffered']
    #allocation6 [shape = 's32[1]{0}', space=sflag, size = 0x4, scoped, tag = 'scoped memory for tpu_custom_call.1']
    #allocation7 [shape = 'u8[32768]{0}', space=vmem, size = 0x8000, scoped, tag = 'input window, operand 3, single buffered']
    #allocation8 [shape = 'u8[294912]{0}', space=vmem, size = 0x48000, scoped, tag = 'input window, operand 5, single buffered']
    #allocation9 [shape = 's32[1]{0}', space=sflag, size = 0x4, scoped, tag = 'scoped memory for tpu_custom_call.1']
    #allocation10 [shape = 'u8[16384]{0}', space=vmem, size = 0x4000, scoped, tag = 'input window, operand 7, single buffered']
    #allocation11 [shape = 'u8[16384]{0}', space=vmem, size = 0x4000, scoped, tag = 'input window, operand 9, single buffered']
    #allocation12 [shape = 's32[1]{0}', space=sflag, size = 0x4, scoped, tag = 'scoped memory for tpu_custom_call.1']
    #allocation13 [shape = 'u8[2359296]{0}', space=vmem, size = 0x240000, scoped, tag = 'input window, operand 14, single buffered']
    #allocation14 [shape = 'u8[131072]{0}', space=vmem, size = 0x20000, scoped, tag = 'output window, operand 0']
    %20 = vsyncpa [#allocation3], 0
    %s21 = scalar_lea.sflag [#allocation3], 1
    %22 = vsyncpa %s21, 0
    %23 = vsyncpa [#allocation6], 0
    %24 = vsyncpa [#allocation9], 0
    %25 = vsyncpa [#allocation12], 0
    %26 = vsyncpa [#allocation4], 0
    %s27 = scalar_lea.sflag [#allocation4], 1
    %28 = vsyncpa %s27, 0
    loop: start=0, step=1, limit=4
    $region2: #{tpu_custom_call.1} parent=1 // loop_pre_header
      _
    $region3: #{tpu_custom_call.1} parent=1 // loop_header
      %s30 = sphi 0, %s34
      %p31 = scmp.ge.s32.totalorder %s30, 4
      %s40 = sphi 0, %s42
      %s43 = sphi 0, %s40
      %s44 = sphi 0, %s43
      %s60 = sphi 0, %s44
      %s64 = sphi 0, %s64
      %s66 = sphi 0, %s64
      %s67 = sphi 0, %s66
      %s81 = sphi 0, %s67
      %s85 = sphi 0, %s85
      %s87 = sphi 0, %s85
      %s88 = sphi 0, %s87
      %s102 = sphi 0, %s88
      %s106 = sphi 0, %s106
      %s108 = sphi 0, %s106
      %s109 = sphi 0, %s108
      %s123 = sphi 0, %s109
      %s127 = sphi 0, %s127
      %s129 = sphi 0, %s127
      %s130 = sphi 0, %s129
      %s144 = sphi 0, %s130
      %s148 = sphi 0, %s148
      %s150 = sphi 0, %s148
      %s151 = sphi 0, %s150
      %s165 = sphi 0, %s151
      %s169 = sphi 0, %s169
      %s171 = sphi 0, %s169
      %s172 = sphi 0, %s171
      %s186 = sphi 0, %s172
      %s190 = sphi 0, %s190
      %s192 = sphi 0, %s190
      %s193 = sphi 0, %s192
      %s207 = sphi 0, %s193
      %s211 = sphi 0, %s211
      %s213 = sphi 0, %s211
      %s214 = sphi 0, %s213
      %s228 = sphi 0, %s214
      %s232 = sphi 0, %s232
      %s234 = sphi 0, %s232
      %s235 = sphi 0, %s234
      %s249 = sphi 0, %s235
      %s253 = sphi 0, %s253
      %s255 = sphi 0, %s253
      %s256 = sphi 0, %s255
      %s270 = sphi 0, %s256
      %s274 = sphi 0, %s274
      %s276 = sphi 0, %s274
      %s277 = sphi 0, %s276
      %s291 = sphi 0, %s277
      %s295 = sphi 0, %s295
      %s297 = sphi 0, %s295
      %s298 = sphi 0, %s297
      %s312 = sphi 0, %s298
      %s316 = sphi 0, %s316
      %s318 = sphi 0, %s316
      %s319 = sphi 0, %s318
      %s333 = sphi 0, %s319
      %s337 = sphi 0, %s337
      %s339 = sphi 0, %s337
      %s340 = sphi 0, %s339
      %s354 = sphi 0, %s340
      %s360 = sphi 0, %s362
      %s363 = sphi 0, %s360
      %s364 = sphi 0, %s363
      %s380 = sphi 0, %s364
    $region4: #{tpu_custom_call.1} parent=1 // loop_header_branch
      %33 = sbr.rel (%p31) target = $region8
    $region5: #{tpu_custom_call.1} parent=1 // loop_body
      %s35 = ssub.s32 %s30, 1
      %s36 = ssub.s32 %s30, 2
      %s37 = sadd.s32 %s30, 1
      %s38 = ssub.s32 %s30, %s37
      %p39 = scmp.eq.s32.totalorder %s38, 0
      %s41 = sadd.s32 %s40, 1
      %s42 = scalar_select %p39, %s40, %s41
      %p45 = pneg %p39
      %p46 = scmp.eq.s32.totalorder %s30, 1
      %p47 = por %p45, %p46
      %p48 = scmp.ne.s32.totalorder %s40, %s43
      %p49 = scmp.eq.s32.totalorder %s30, 0
      %p50 = por %p48, %p49
      %p51 = scmp.ne.s32.totalorder %s40, %s43
      %p52 = scmp.eq.s32.totalorder %s35, 1
      %p53 = por %p51, %p52
      %p54 = scmp.ne.s32.totalorder %s43, %s44
      %p55 = scmp.eq.s32.totalorder %s35, 0
      %p56 = por %p54, %p55
      %p57 = scmp.ne.s32.totalorder %s43, %s44
      %p58 = scmp.eq.s32.totalorder %s36, 1
      %p59 = por %p57, %p58
      %p61 = scmp.ne.s32.totalorder %s44, %s60
      %p62 = scmp.eq.s32.totalorder %s36, 0
      %p63 = por %p61, %p62
      %s65 = sadd.s32 %s64, 1
      %p68 = scmp.eq.s32.totalorder %s30, 1
      %p69 = scmp.ne.s32.totalorder %s64, %s66
      %p70 = scmp.eq.s32.totalorder %s30, 0
      %p71 = por %p69, %p70
      %p72 = scmp.ne.s32.totalorder %s64, %s66
      %p73 = scmp.eq.s32.totalorder %s35, 1
      %p74 = por %p72, %p73
      %p75 = scmp.ne.s32.totalorder %s66, %s67
      %p76 = scmp.eq.s32.totalorder %s35, 0
      %p77 = por %p75, %p76
      %p78 = scmp.ne.s32.totalorder %s66, %s67
      %p79 = scmp.eq.s32.totalorder %s36, 1
      %p80 = por %p78, %p79
      %p82 = scmp.ne.s32.totalorder %s67, %s81
      %p83 = scmp.eq.s32.totalorder %s36, 0
      %p84 = por %p82, %p83
      %s86 = sadd.s32 %s85, 1
      %p89 = scmp.eq.s32.totalorder %s30, 1
      %p90 = scmp.ne.s32.totalorder %s85, %s87
      %p91 = scmp.eq.s32.totalorder %s30, 0
      %p92 = por %p90, %p91
      %p93 = scmp.ne.s32.totalorder %s85, %s87
      %p94 = scmp.eq.s32.totalorder %s35, 1
      %p95 = por %p93, %p94
      %p96 = scmp.ne.s32.totalorder %s87, %s88
      %p97 = scmp.eq.s32.totalorder %s35, 0
      %p98 = por %p96, %p97
      %p99 = scmp.ne.s32.totalorder %s87, %s88
      %p100 = scmp.eq.s32.totalorder %s36, 1
      %p101 = por %p99, %p100
      %p103 = scmp.ne.s32.totalorder %s88, %s102
      %p104 = scmp.eq.s32.totalorder %s36, 0
      %p105 = por %p103, %p104
      %s107 = sadd.s32 %s106, 1
      %p110 = scmp.eq.s32.totalorder %s30, 1
      %p111 = scmp.ne.s32.totalorder %s106, %s108
      %p112 = scmp.eq.s32.totalorder %s30, 0
      %p113 = por %p111, %p112
      %p114 = scmp.ne.s32.totalorder %s106, %s108
      %p115 = scmp.eq.s32.totalorder %s35, 1
      %p116 = por %p114, %p115
      %p117 = scmp.ne.s32.totalorder %s108, %s109
      %p118 = scmp.eq.s32.totalorder %s35, 0
      %p119 = por %p117, %p118
      %p120 = scmp.ne.s32.totalorder %s108, %s109
      %p121 = scmp.eq.s32.totalorder %s36, 1
      %p122 = por %p120, %p121
      %p124 = scmp.ne.s32.totalorder %s109, %s123
      %p125 = scmp.eq.s32.totalorder %s36, 0
      %p126 = por %p124, %p125
      %s128 = sadd.s32 %s127, 1
      %p131 = scmp.eq.s32.totalorder %s30, 1
      %p132 = scmp.ne.s32.totalorder %s127, %s129
      %p133 = scmp.eq.s32.totalorder %s30, 0
      %p134 = por %p132, %p133
      %p135 = scmp.ne.s32.totalorder %s127, %s129
      %p136 = scmp.eq.s32.totalorder %s35, 1
      %p137 = por %p135, %p136
      %p138 = scmp.ne.s32.totalorder %s129, %s130
      %p139 = scmp.eq.s32.totalorder %s35, 0
      %p140 = por %p138, %p139
      %p141 = scmp.ne.s32.totalorder %s129, %s130
      %p142 = scmp.eq.s32.totalorder %s36, 1
      %p143 = por %p141, %p142
      %p145 = scmp.ne.s32.totalorder %s130, %s144
      %p146 = scmp.eq.s32.totalorder %s36, 0
      %p147 = por %p145, %p146
      %s149 = sadd.s32 %s148, 1
      %p152 = scmp.eq.s32.totalorder %s30, 1
      %p153 = scmp.ne.s32.totalorder %s148, %s150
      %p154 = scmp.eq.s32.totalorder %s30, 0
      %p155 = por %p153, %p154
      %p156 = scmp.ne.s32.totalorder %s148, %s150
      %p157 = scmp.eq.s32.totalorder %s35, 1
      %p158 = por %p156, %p157
      %p159 = scmp.ne.s32.totalorder %s150, %s151
      %p160 = scmp.eq.s32.totalorder %s35, 0
      %p161 = por %p159, %p160
      %p162 = scmp.ne.s32.totalorder %s150, %s151
      %p163 = scmp.eq.s32.totalorder %s36, 1
      %p164 = por %p162, %p163
      %p166 = scmp.ne.s32.totalorder %s151, %s165
      %p167 = scmp.eq.s32.totalorder %s36, 0
      %p168 = por %p166, %p167
      %s170 = sadd.s32 %s169, 1
      %p173 = scmp.eq.s32.totalorder %s30, 1
      %p174 = scmp.ne.s32.totalorder %s169, %s171
      %p175 = scmp.eq.s32.totalorder %s30, 0
      %p176 = por %p174, %p175
      %p177 = scmp.ne.s32.totalorder %s169, %s171
      %p178 = scmp.eq.s32.totalorder %s35, 1
      %p179 = por %p177, %p178
      %p180 = scmp.ne.s32.totalorder %s171, %s172
      %p181 = scmp.eq.s32.totalorder %s35, 0
      %p182 = por %p180, %p181
      %p183 = scmp.ne.s32.totalorder %s171, %s172
      %p184 = scmp.eq.s32.totalorder %s36, 1
      %p185 = por %p183, %p184
      %p187 = scmp.ne.s32.totalorder %s172, %s186
      %p188 = scmp.eq.s32.totalorder %s36, 0
      %p189 = por %p187, %p188
      %s191 = sadd.s32 %s190, 1
      %p194 = scmp.eq.s32.totalorder %s30, 1
      %p195 = scmp.ne.s32.totalorder %s190, %s192
      %p196 = scmp.eq.s32.totalorder %s30, 0
      %p197 = por %p195, %p196
      %p198 = scmp.ne.s32.totalorder %s190, %s192
      %p199 = scmp.eq.s32.totalorder %s35, 1
      %p200 = por %p198, %p199
      %p201 = scmp.ne.s32.totalorder %s192, %s193
      %p202 = scmp.eq.s32.totalorder %s35, 0
      %p203 = por %p201, %p202
      %p204 = scmp.ne.s32.totalorder %s192, %s193
      %p205 = scmp.eq.s32.totalorder %s36, 1
      %p206 = por %p204, %p205
      %p208 = scmp.ne.s32.totalorder %s193, %s207
      %p209 = scmp.eq.s32.totalorder %s36, 0
      %p210 = por %p208, %p209
      %s212 = sadd.s32 %s211, 1
      %p215 = scmp.eq.s32.totalorder %s30, 1
      %p216 = scmp.ne.s32.totalorder %s211, %s213
      %p217 = scmp.eq.s32.totalorder %s30, 0
      %p218 = por %p216, %p217
      %p219 = scmp.ne.s32.totalorder %s211, %s213
      %p220 = scmp.eq.s32.totalorder %s35, 1
      %p221 = por %p219, %p220
      %p222 = scmp.ne.s32.totalorder %s213, %s214
      %p223 = scmp.eq.s32.totalorder %s35, 0
      %p224 = por %p222, %p223
      %p225 = scmp.ne.s32.totalorder %s213, %s214
      %p226 = scmp.eq.s32.totalorder %s36, 1
      %p227 = por %p225, %p226
      %p229 = scmp.ne.s32.totalorder %s214, %s228
      %p230 = scmp.eq.s32.totalorder %s36, 0
      %p231 = por %p229, %p230
      %s233 = sadd.s32 %s232, 1
      %p236 = scmp.eq.s32.totalorder %s30, 1
      %p237 = scmp.ne.s32.totalorder %s232, %s234
      %p238 = scmp.eq.s32.totalorder %s30, 0
      %p239 = por %p237, %p238
      %p240 = scmp.ne.s32.totalorder %s232, %s234
      %p241 = scmp.eq.s32.totalorder %s35, 1
      %p242 = por %p240, %p241
      %p243 = scmp.ne.s32.totalorder %s234, %s235
      %p244 = scmp.eq.s32.totalorder %s35, 0
      %p245 = por %p243, %p244
      %p246 = scmp.ne.s32.totalorder %s234, %s235
      %p247 = scmp.eq.s32.totalorder %s36, 1
      %p248 = por %p246, %p247
      %p250 = scmp.ne.s32.totalorder %s235, %s249
      %p251 = scmp.eq.s32.totalorder %s36, 0
      %p252 = por %p250, %p251
      %s254 = sadd.s32 %s253, 1
      %p257 = scmp.eq.s32.totalorder %s30, 1
      %p258 = scmp.ne.s32.totalorder %s253, %s255
      %p259 = scmp.eq.s32.totalorder %s30, 0
      %p260 = por %p258, %p259
      %p261 = scmp.ne.s32.totalorder %s253, %s255
      %p262 = scmp.eq.s32.totalorder %s35, 1
      %p263 = por %p261, %p262
      %p264 = scmp.ne.s32.totalorder %s255, %s256
      %p265 = scmp.eq.s32.totalorder %s35, 0
      %p266 = por %p264, %p265
      %p267 = scmp.ne.s32.totalorder %s255, %s256
      %p268 = scmp.eq.s32.totalorder %s36, 1
      %p269 = por %p267, %p268
      %p271 = scmp.ne.s32.totalorder %s256, %s270
      %p272 = scmp.eq.s32.totalorder %s36, 0
      %p273 = por %p271, %p272
      %s275 = sadd.s32 %s274, 1
      %p278 = scmp.eq.s32.totalorder %s30, 1
      %p279 = scmp.ne.s32.totalorder %s274, %s276
      %p280 = scmp.eq.s32.totalorder %s30, 0
      %p281 = por %p279, %p280
      %p282 = scmp.ne.s32.totalorder %s274, %s276
      %p283 = scmp.eq.s32.totalorder %s35, 1
      %p284 = por %p282, %p283
      %p285 = scmp.ne.s32.totalorder %s276, %s277
      %p286 = scmp.eq.s32.totalorder %s35, 0
      %p287 = por %p285, %p286
      %p288 = scmp.ne.s32.totalorder %s276, %s277
      %p289 = scmp.eq.s32.totalorder %s36, 1
      %p290 = por %p288, %p289
      %p292 = scmp.ne.s32.totalorder %s277, %s291
      %p293 = scmp.eq.s32.totalorder %s36, 0
      %p294 = por %p292, %p293
      %s296 = sadd.s32 %s295, 1
      %p299 = scmp.eq.s32.totalorder %s30, 1
      %p300 = scmp.ne.s32.totalorder %s295, %s297
      %p301 = scmp.eq.s32.totalorder %s30, 0
      %p302 = por %p300, %p301
      %p303 = scmp.ne.s32.totalorder %s295, %s297
      %p304 = scmp.eq.s32.totalorder %s35, 1
      %p305 = por %p303, %p304
      %p306 = scmp.ne.s32.totalorder %s297, %s298
      %p307 = scmp.eq.s32.totalorder %s35, 0
      %p308 = por %p306, %p307
      %p309 = scmp.ne.s32.totalorder %s297, %s298
      %p310 = scmp.eq.s32.totalorder %s36, 1
      %p311 = por %p309, %p310
      %p313 = scmp.ne.s32.totalorder %s298, %s312
      %p314 = scmp.eq.s32.totalorder %s36, 0
      %p315 = por %p313, %p314
      %s317 = sadd.s32 %s316, 1
      %p320 = scmp.eq.s32.totalorder %s30, 1
      %p321 = scmp.ne.s32.totalorder %s316, %s318
      %p322 = scmp.eq.s32.totalorder %s30, 0
      %p323 = por %p321, %p322
      %p324 = scmp.ne.s32.totalorder %s316, %s318
      %p325 = scmp.eq.s32.totalorder %s35, 1
      %p326 = por %p324, %p325
      %p327 = scmp.ne.s32.totalorder %s318, %s319
      %p328 = scmp.eq.s32.totalorder %s35, 0
      %p329 = por %p327, %p328
      %p330 = scmp.ne.s32.totalorder %s318, %s319
      %p331 = scmp.eq.s32.totalorder %s36, 1
      %p332 = por %p330, %p331
      %p334 = scmp.ne.s32.totalorder %s319, %s333
      %p335 = scmp.eq.s32.totalorder %s36, 0
      %p336 = por %p334, %p335
      %s338 = sadd.s32 %s337, 1
      %p341 = scmp.eq.s32.totalorder %s30, 1
      %p342 = scmp.ne.s32.totalorder %s337, %s339
      %p343 = scmp.eq.s32.totalorder %s30, 0
      %p344 = por %p342, %p343
      %p345 = scmp.ne.s32.totalorder %s337, %s339
      %p346 = scmp.eq.s32.totalorder %s35, 1
      %p347 = por %p345, %p346
      %p348 = scmp.ne.s32.totalorder %s339, %s340
      %p349 = scmp.eq.s32.totalorder %s35, 0
      %p350 = por %p348, %p349
      %p351 = scmp.ne.s32.totalorder %s339, %s340
      %p352 = scmp.eq.s32.totalorder %s36, 1
      %p353 = por %p351, %p352
      %p355 = scmp.ne.s32.totalorder %s340, %s354
      %p356 = scmp.eq.s32.totalorder %s36, 0
      %p357 = por %p355, %p356
      %s358 = ssub.s32 %s30, %s37
      %p359 = scmp.eq.s32.totalorder %s358, 0
      %s361 = sadd.s32 %s360, 1
      %s362 = scalar_select %p359, %s360, %s361
      %p365 = pneg %p359
      %p366 = scmp.eq.s32.totalorder %s30, 1
      %p367 = por %p365, %p366
      %p368 = scmp.ne.s32.totalorder %s360, %s363
      %p369 = scmp.eq.s32.totalorder %s30, 0
      %p370 = por %p368, %p369
      %p371 = scmp.ne.s32.totalorder %s360, %s363
      %p372 = scmp.eq.s32.totalorder %s35, 1
      %p373 = por %p371, %p372
      %p374 = scmp.ne.s32.totalorder %s363, %s364
      %p375 = scmp.eq.s32.totalorder %s35, 0
      %p376 = por %p374, %p375
      %p377 = scmp.ne.s32.totalorder %s363, %s364
      %p378 = scmp.eq.s32.totalorder %s36, 1
      %p379 = por %p377, %p378
      %p381 = scmp.ne.s32.totalorder %s364, %s380
      %p382 = scmp.eq.s32.totalorder %s36, 0
      %p383 = por %p381, %p382
      %p384 = scmp.le.s32.totalorder 1, %s30
      %p385 = scmp.lt.s32.totalorder %s30, 3
      %p386 = pnand %p384, %p385
      %p387 = pneg %p386
      // Predicated region
      $region9: #{tpu_custom_call.1} parent=5 // pred_check
        _
      $region10: #{tpu_custom_call.1} parent=5 // pred_check_branch
        %389 = sbr.rel (%p386) target = $region12
      $region11: #{tpu_custom_call.1} parent=5 // pred_region
        %s390 = ssub.s32 %s30, 1
        // Predicated region
        $region13: #{tpu_custom_call.1} parent=11 // pred_check
          %p391 = pneg %p77
        $region14: #{tpu_custom_call.1} parent=11 // pred_check_branch
          %393 = sbr.rel (%p391) target = $region16
        $region15: #{tpu_custom_call.1} parent=11 // pred_region
          %s395 = ssub.s32 512, 512
          %396 = vsyncadd [#allocation6], %s395
          %s397 = sshll.u32 [#allocation5], 4
          %s398 = int_to_ptr.vmem [resolvable:$true] %s397
          %403 = dma.hbm_to_vmem [thread:$0]  %s1, 512, %s398, [#allocation6], 128, 128, 8
        $region16: #{tpu_custom_call.1} parent=11 // pred_fallthru
          _
        // Predicated region
        $region17: #{tpu_custom_call.1} parent=11 // pred_check
          %p404 = pneg %p98
        $region18: #{tpu_custom_call.1} parent=11 // pred_check_branch
          %406 = sbr.rel (%p404) target = $region20
        $region19: #{tpu_custom_call.1} parent=11 // pred_region
          _
        $region20: #{tpu_custom_call.1} parent=11 // pred_fallthru
          _
        // Predicated region
        $region21: #{tpu_custom_call.1} parent=11 // pred_check
          %p407 = pneg %p119
        $region22: #{tpu_custom_call.1} parent=11 // pred_check_branch
          %409 = sbr.rel (%p407) target = $region24
        $region23: #{tpu_custom_call.1} parent=11 // pred_region
          %s411 = ssub.s32 1024, 1024
          %412 = vsyncadd [#allocation6], %s411
          %s413 = sshll.u32 [#allocation7], 4
          %s414 = int_to_ptr.vmem [resolvable:$true] %s413
          %419 = dma.hbm_to_vmem [thread:$0]  %s3, 1024, %s414, [#allocation6], 128, 128, 8
        $region24: #{tpu_custom_call.1} parent=11 // pred_fallthru
          _
        // Predicated region
        $region25: #{tpu_custom_call.1} parent=11 // pred_check
          %p420 = pneg %p140
        $region26: #{tpu_custom_call.1} parent=11 // pred_check_branch
          %422 = sbr.rel (%p420) target = $region28
        $region27: #{tpu_custom_call.1} parent=11 // pred_region
          _
        $region28: #{tpu_custom_call.1} parent=11 // pred_fallthru
          _
        // Predicated region
        $region29: #{tpu_custom_call.1} parent=11 // pred_check
          %p423 = pneg %p161
        $region30: #{tpu_custom_call.1} parent=11 // pred_check_branch
          %425 = sbr.rel (%p423) target = $region32
        $region31: #{tpu_custom_call.1} parent=11 // pred_region
          %s427 = ssub.s32 9216, 9216
          %428 = vsyncadd [#allocation9], %s427
          %s429 = sshll.u32 [#allocation8], 4
          %s430 = int_to_ptr.vmem [resolvable:$true] %s429
          %435 = dma.hbm_to_vmem [thread:$0]  %s5, 9216, %s430, [#allocation9], 128, 128, 8
        $region32: #{tpu_custom_call.1} parent=11 // pred_fallthru
          _
        // Predicated region
        $region33: #{tpu_custom_call.1} parent=11 // pred_check
          %p436 = pneg %p182
        $region34: #{tpu_custom_call.1} parent=11 // pred_check_branch
          %438 = sbr.rel (%p436) target = $region36
        $region35: #{tpu_custom_call.1} parent=11 // pred_region
          _
        $region36: #{tpu_custom_call.1} parent=11 // pred_fallthru
          _
        // Predicated region
        $region37: #{tpu_custom_call.1} parent=11 // pred_check
          %p439 = pneg %p203
        $region38: #{tpu_custom_call.1} parent=11 // pred_check_branch
          %441 = sbr.rel (%p439) target = $region40
        $region39: #{tpu_custom_call.1} parent=11 // pred_region
          %s443 = ssub.s32 512, 512
          %444 = vsyncadd [#allocation9], %s443
          %s445 = sshll.u32 [#allocation10], 4
          %s446 = int_to_ptr.vmem [resolvable:$true] %s445
          %451 = dma.hbm_to_vmem [thread:$0]  %s7, 512, %s446, [#allocation9], 128, 128, 8
        $region40: #{tpu_custom_call.1} parent=11 // pred_fallthru
          _
        // Predicated region
        $region41: #{tpu_custom_call.1} parent=11 // pred_check
          %p452 = pneg %p224
        $region42: #{tpu_custom_call.1} parent=11 // pred_check_branch
          %454 = sbr.rel (%p452) target = $region44
        $region43: #{tpu_custom_call.1} parent=11 // pred_region
          _
        $region44: #{tpu_custom_call.1} parent=11 // pred_fallthru
          _
        // Predicated region
        $region45: #{tpu_custom_call.1} parent=11 // pred_check
          %p455 = pneg %p245
        $region46: #{tpu_custom_call.1} parent=11 // pred_check_branch
          %457 = sbr.rel (%p455) target = $region48
        $region47: #{tpu_custom_call.1} parent=11 // pred_region
          %s459 = ssub.s32 512, 512
          %460 = vsyncadd [#allocation12], %s459
          %s461 = sshll.u32 [#allocation11], 4
          %s462 = int_to_ptr.vmem [resolvable:$true] %s461
          %467 = dma.hbm_to_vmem [thread:$0]  %s9, 512, %s462, [#allocation12], 128, 128, 8
        $region48: #{tpu_custom_call.1} parent=11 // pred_fallthru
          _
        // Predicated region
        $region49: #{tpu_custom_call.1} parent=11 // pred_check
          %p468 = pneg %p266
        $region50: #{tpu_custom_call.1} parent=11 // pred_check_branch
          %470 = sbr.rel (%p468) target = $region52
        $region51: #{tpu_custom_call.1} parent=11 // pred_region
          _
        $region52: #{tpu_custom_call.1} parent=11 // pred_fallthru
          _
        // Predicated region
        $region53: #{tpu_custom_call.1} parent=11 // pred_check
          %p471 = pneg %p287
        $region54: #{tpu_custom_call.1} parent=11 // pred_check_branch
          %473 = sbr.rel (%p471) target = $region56
        $region55: #{tpu_custom_call.1} parent=11 // pred_region
          _
        $region56: #{tpu_custom_call.1} parent=11 // pred_fallthru
          _
        // Predicated region
        $region57: #{tpu_custom_call.1} parent=11 // pred_check
          %p474 = pneg %p308
        $region58: #{tpu_custom_call.1} parent=11 // pred_check_branch
          %476 = sbr.rel (%p474) target = $region60
        $region59: #{tpu_custom_call.1} parent=11 // pred_region
          _
        $region60: #{tpu_custom_call.1} parent=11 // pred_fallthru
          _
        // Predicated region
        $region61: #{tpu_custom_call.1} parent=11 // pred_check
          %p477 = pneg %p329
        $region62: #{tpu_custom_call.1} parent=11 // pred_check_branch
          %479 = sbr.rel (%p477) target = $region64
        $region63: #{tpu_custom_call.1} parent=11 // pred_region
          _
        $region64: #{tpu_custom_call.1} parent=11 // pred_fallthru
          _
        // Predicated region
        $region65: #{tpu_custom_call.1} parent=11 // pred_check
          %p480 = pneg %p350
        $region66: #{tpu_custom_call.1} parent=11 // pred_check_branch
          %482 = sbr.rel (%p480) target = $region68
        $region67: #{tpu_custom_call.1} parent=11 // pred_region
          %s484 = ssub.s32 73728, 73728
          %485 = vsyncadd [#allocation12], %s484
          %s486 = sshll.u32 [#allocation13], 4
          %s487 = int_to_ptr.vmem [resolvable:$true] %s486
          %492 = dma.hbm_to_vmem [thread:$0]  %s14, 73728, %s487, [#allocation12], 256, 256, 16
        $region68: #{tpu_custom_call.1} parent=11 // pred_fallthru
          _
      $region12: #{tpu_custom_call.1} parent=5 // pred_fallthru
        _
      %p493 = scmp.lt.s32.totalorder %s30, 2
      // Predicated region
      $region69: #{tpu_custom_call.1} parent=5 // pred_check
        %p494 = pneg %p493
      $region70: #{tpu_custom_call.1} parent=5 // pred_check_branch
        %496 = sbr.rel (%p494) target = $region72
      $region71: #{tpu_custom_call.1} parent=5 // pred_region
        // Predicated region
        $region73: #{tpu_custom_call.1} parent=71 // pred_check
          %p497 = pneg %p50
        $region74: #{tpu_custom_call.1} parent=71 // pred_check_branch
          %499 = sbr.rel (%p497) target = $region76
        $region75: #{tpu_custom_call.1} parent=71 // pred_region
          %s500 = sand.u32 %s40, 1
          %s501 = scalar_lea.sflag [#allocation3], %s500
          %s502 = sand.u32 %s40, 1
          %s503 = smul.addr %s502, 128
          %s504 = scalar_lea.vmem [#allocation2], %s503
          %s506 = ssub.s32 2048, 2048
          %507 = vsyncadd %s501, %s506
          %s508 = smul.addr %s30, 16
          %s509 = smul.addr %s508, 128
          %s510 = scalar_lea.hbm %s0, %s509
          %s511 = sshll.u32 %s504, 4
          %s512 = int_to_ptr.vmem [resolvable:$true] %s511
          %517 = dma.hbm_to_vmem [thread:$0]  %s510, 2048, %s512, %s501, 256, 256, 16
        $region76: #{tpu_custom_call.1} parent=71 // pred_fallthru
          _
      $region72: #{tpu_custom_call.1} parent=5 // pred_fallthru
        _
      %p518 = scmp.le.s32.totalorder 1, %s30
      %p519 = scmp.lt.s32.totalorder %s30, 3
      %p520 = pnand %p518, %p519
      %p521 = pneg %p520
      // Predicated region
      $region77: #{tpu_custom_call.1} parent=5 // pred_check
        _
      $region78: #{tpu_custom_call.1} parent=5 // pred_check_branch
        %523 = sbr.rel (%p520) target = $region80
      $region79: #{tpu_custom_call.1} parent=5 // pred_region
        %s524 = ssub.s32 %s30, 1
        %s525 = sand.u32 %s43, 1
        %s526 = scalar_lea.sflag [#allocation3], %s525
        %s527 = sand.u32 %s43, 1
        %s528 = smul.addr %s527, 128
        %s529 = scalar_lea.vmem [#allocation2], %s528
        // Predicated region
        $region81: #{tpu_custom_call.1} parent=79 // pred_check
          %p530 = pneg %p56
        $region82: #{tpu_custom_call.1} parent=79 // pred_check_branch
          %532 = sbr.rel (%p530) target = $region84
        $region83: #{tpu_custom_call.1} parent=79 // pred_region
          %533 = dma.done %s526, 2048
        $region84: #{tpu_custom_call.1} parent=79 // pred_fallthru
          _
        // Predicated region
        $region85: #{tpu_custom_call.1} parent=79 // pred_check
          %p534 = pneg %p77
        $region86: #{tpu_custom_call.1} parent=79 // pred_check_branch
          %536 = sbr.rel (%p534) target = $region88
        $region87: #{tpu_custom_call.1} parent=79 // pred_region
          %537 = dma.done [#allocation6], 512
        $region88: #{tpu_custom_call.1} parent=79 // pred_fallthru
          _
        // Predicated region
        $region89: #{tpu_custom_call.1} parent=79 // pred_check
          %p538 = pneg %p119
        $region90: #{tpu_custom_call.1} parent=79 // pred_check_branch
          %540 = sbr.rel (%p538) target = $region92
        $region91: #{tpu_custom_call.1} parent=79 // pred_region
          %541 = dma.done [#allocation6], 1024
        $region92: #{tpu_custom_call.1} parent=79 // pred_fallthru
          _
        // Predicated region
        $region93: #{tpu_custom_call.1} parent=79 // pred_check
          %p542 = pneg %p161
        $region94: #{tpu_custom_call.1} parent=79 // pred_check_branch
          %544 = sbr.rel (%p542) target = $region96
        $region95: #{tpu_custom_call.1} parent=79 // pred_region
          %545 = dma.done [#allocation9], 9216
        $region96: #{tpu_custom_call.1} parent=79 // pred_fallthru
          _
        // Predicated region
        $region97: #{tpu_custom_call.1} parent=79 // pred_check
          %p546 = pneg %p203
        $region98: #{tpu_custom_call.1} parent=79 // pred_check_branch
          %548 = sbr.rel (%p546) target = $region100
        $region99: #{tpu_custom_call.1} parent=79 // pred_region
          %549 = dma.done [#allocation9], 512
        $region100: #{tpu_custom_call.1} parent=79 // pred_fallthru
          _
        // Predicated region
        $region101: #{tpu_custom_call.1} parent=79 // pred_check
          %p550 = pneg %p245
        $region102: #{tpu_custom_call.1} parent=79 // pred_check_branch
          %552 = sbr.rel (%p550) target = $region104
        $region103: #{tpu_custom_call.1} parent=79 // pred_region
          %553 = dma.done [#allocation12], 512
        $region104: #{tpu_custom_call.1} parent=79 // pred_fallthru
          _
        // Predicated region
        $region105: #{tpu_custom_call.1} parent=79 // pred_check
          %p554 = pneg %p350
        $region106: #{tpu_custom_call.1} parent=79 // pred_check_branch
          %556 = sbr.rel (%p554) target = $region108
        $region107: #{tpu_custom_call.1} parent=79 // pred_region
          %557 = dma.done [#allocation12], 73728
        $region108: #{tpu_custom_call.1} parent=79 // pred_fallthru
          _
        %s558 = sand.u32 %s43, 1
        %s559 = scalar_lea.sflag [#allocation3], %s558
        %s560 = sand.u32 %s43, 1
        %s561 = smul.addr %s560, 128
        %s562 = scalar_lea.vmem [#allocation2], %s561
        %p563 = pneg %p56
        %p564 = pneg %p53
        %p565 = pneg %p77
        %p566 = pneg %p74
        %p567 = pneg %p98
        %p568 = pneg %p95
        %p569 = pneg %p119
        %p570 = pneg %p116
        %p571 = pneg %p140
        %p572 = pneg %p137
        %p573 = pneg %p161
        %p574 = pneg %p158
        %p575 = pneg %p182
        %p576 = pneg %p179
        %p577 = pneg %p203
        %p578 = pneg %p200
        %p579 = pneg %p224
        %p580 = pneg %p221
        %p581 = pneg %p245
        %p582 = pneg %p242
        %p583 = pneg %p266
        %p584 = pneg %p263
        %p585 = pneg %p287
        %p586 = pneg %p284
        %p587 = pneg %p308
        %p588 = pneg %p305
        %p589 = pneg %p329
        %p590 = pneg %p326
        %p591 = pneg %p350
        %p592 = pneg %p347
        %p593 = pneg %p376
        %p594 = pneg %p373
        %s595 = sand.u32 %s363, 1
        %s596 = scalar_lea.sflag [#allocation4], %s595
        %s597 = sand.u32 %s363, 1
        %s598 = smul.addr %s597, 128
        %s599 = scalar_lea.vmem [#allocation14], %s598
        %v600 = vld [vmem:[%s529] sm:$0xff]
        %v601 = vld [vmem:[%s529 + $0x8] sm:$0xff]
        %v602 = vld [vmem:[%s529 + $0x10] sm:$0xff]
        %v603 = vld [vmem:[%s529 + $0x18] sm:$0xff]
        %v604 = vld [vmem:[%s529 + $0x20] sm:$0xff]
        %v605 = vld [vmem:[%s529 + $0x28] sm:$0xff]
        %v606 = vld [vmem:[%s529 + $0x30] sm:$0xff]
        %v607 = vld [vmem:[%s529 + $0x38] sm:$0xff]
        %v608 = vld [vmem:[%s529 + $0x40] sm:$0xff]
        %v609 = vld [vmem:[%s529 + $0x48] sm:$0xff]
        %v610 = vld [vmem:[%s529 + $0x50] sm:$0xff]
        %v611 = vld [vmem:[%s529 + $0x58] sm:$0xff]
        %v612 = vld [vmem:[%s529 + $0x60] sm:$0xff]
        %v613 = vld [vmem:[%s529 + $0x68] sm:$0xff]
        %v614 = vld [vmem:[%s529 + $0x70] sm:$0xff]
        %v615 = vld [vmem:[%s529 + $0x78] sm:$0xff]
        %v616 = vld [vmem:[#allocation5] sm:$0xff]
        %v617 = vld [vmem:[#allocation5 + $0x8] sm:$0xff]
        %v618 = vld [vmem:[#allocation5 + $0x10] sm:$0xff]
        %v619 = vld [vmem:[#allocation5 + $0x18] sm:$0xff]
        %v620 = vld [vmem:[%s2] sm:$0xff]
        %v621 = vld [vmem:[%s2 + $0x8] sm:$0xff]
        %v622 = vld [vmem:[%s2 + $0x10] sm:$0xff]
        %v623 = vld [vmem:[%s2 + $0x18] sm:$0xff]
        %625 = vset.pattern.permute.xlu0 0
        %626 = vperm.xlu0 %625, %v620
        %v627 = vpop.permute.xlu0 %626
        %630 = vset.pattern.permute.xlu0 0
        %631 = vperm.xlu0 %630, %v621
        %v632 = vpop.permute.xlu0 %631
        %635 = vset.pattern.permute.xlu0 0
        %636 = vperm.xlu0 %635, %v622
        %v637 = vpop.permute.xlu0 %636
        %640 = vset.pattern.permute.xlu0 0
        %641 = vperm.xlu0 %640, %v623
        %v642 = vpop.permute.xlu0 %641
        %vm644 = vcmask 523264
        %v646 = vsel %vm644, %v616, 0
        %v649 = vsel %vm644, %v617, 0
        %v652 = vsel %vm644, %v618, 0
        %v655 = vsel %vm644, %v619, 0
        %657 = vmatprep.subr.mxu0 %v601
        %658 = vmatpush1.msra.mxu0 %v600
        %659 = vmatprep.subr.mxu0 %v603
        %660 = vmatpush1.msra.mxu0 %v602
        %661 = vmatprep.subr.mxu0 %v605
        %662 = vmatpush1.msra.mxu0 %v604
        %663 = vmatprep.subr.mxu0 %v607
        %664 = vmatpush1.msra.mxu0 %v606
        %665 = vmatprep.subr.mxu0 %v609
        %666 = vmatpush1.msra.mxu0 %v608
        %667 = vmatprep.subr.mxu0 %v611
        %668 = vmatpush1.msra.mxu0 %v610
        %669 = vmatprep.subr.mxu0 %v613
        %670 = vmatpush1.msra.mxu0 %v612
        %671 = vmatprep.subr.mxu0 %v615
        %672 = vmatpush1.msra.mxu0 %v614
        %673 = vmatprep.subr.mxu0 0.0
        %674 = vmatpush1.msra.mxu0 0.0
        %675 = vmatprep.subr.mxu0 0.0
        %676 = vmatpush1.msra.mxu0 0.0
        %677 = vmatprep.subr.mxu0 0.0
        %678 = vmatpush1.msra.mxu0 0.0
        %679 = vmatprep.subr.mxu0 0.0
        %680 = vmatpush1.msra.mxu0 0.0
        %681 = vmatprep.subr.mxu0 0.0
        %682 = vmatpush1.msra.mxu0 0.0
        %683 = vmatprep.subr.mxu0 0.0
        %684 = vmatpush1.msra.mxu0 0.0
        %685 = vmatprep.subr.mxu0 0.0
        %686 = vmatpush1.msra.mxu0 0.0
        %687 = vmatprep.subr.mxu0 0.0
        %688 = vmatpush1.msra.mxu0 0.0
        %689 = vmatprep.subr.mxu0 0.0
        %690 = vmatpush1.msra.mxu0 0.0
        %691 = vmatprep.subr.mxu0 0.0
        %692 = vmatpush1.msra.mxu0 0.0
        %693 = vmatprep.subr.mxu0 0.0
        %694 = vmatpush1.msra.mxu0 0.0
        %695 = vmatprep.subr.mxu0 0.0
        %696 = vmatpush1.msra.mxu0 0.0
        %697 = vmatprep.subr.mxu0 0.0
        %698 = vmatpush1.msra.mxu0 0.0
        %699 = vmatprep.subr.mxu0 0.0
        %700 = vmatpush1.msra.mxu0 0.0
        %701 = vmatprep.subr.mxu0 0.0
        %702 = vmatpush1.msra.mxu0 0.0
        %703 = vmatprep.subr.mxu0 0.0
        %704 = vmatpush1.msra.mxu0 0.0
        %705 = vmatprep.subr.mxu0 0.0
        %706 = vmatpush1.msra.mxu0 0.0
        %707 = vmatprep.subr.mxu0 0.0
        %708 = vmatpush1.msra.mxu0 0.0
        %709 = vmatprep.subr.mxu0 0.0
        %710 = vmatpush1.msra.mxu0 0.0
        %711 = vmatprep.subr.mxu0 0.0
        %712 = vmatpush1.msra.mxu0 0.0
        %713 = vmatprep.subr.mxu0 0.0
        %714 = vmatpush1.msra.mxu0 0.0
        %715 = vmatprep.subr.mxu0 0.0
        %716 = vmatpush1.msra.mxu0 0.0
        %717 = vmatprep.subr.mxu0 0.0
        %718 = vmatpush1.msra.mxu0 0.0
        %719 = vmatprep.subr.mxu0 0.0
        %720 = vmatpush1.msra.mxu0 0.0
        %721 = vmatprep.mubr.f32.mxu0 0.0
        %722 = vmatmul.mubr.f32.gmra.mrb[0].mxu0 %v646
        %v723 = vpop.f32.mrb[0].mxu0
        %v724 = vadd.f32 %v627, %v723
        %v725 = vpop.f32.mrb[0].mxu0
        %v726 = vadd.f32 %v627, %v725
        %727 = vmatprep.mubr.f32.mxu0 0.0
        %728 = vmatmul.mubr.f32.gmra.mrb[0].mxu0 %v649
        %v729 = vpop.f32.mrb[0].mxu0
        %v730 = vadd.f32 %v632, %v729
        %v731 = vpop.f32.mrb[0].mxu0
        %v732 = vadd.f32 %v632, %v731
        %733 = vmatprep.mubr.f32.mxu0 0.0
        %734 = vmatmul.mubr.f32.gmra.mrb[0].mxu0 %v652
        %v735 = vpop.f32.mrb[0].mxu0
        %v736 = vadd.f32 %v637, %v735
        %v737 = vpop.f32.mrb[0].mxu0
        %v738 = vadd.f32 %v637, %v737
        %739 = vmatprep.mubr.f32.mxu0 0.0
        %740 = vmatmul.mubr.f32.gmra.mrb[0].mxu0 %v655
        %v741 = vpop.f32.mrb[0].mxu0
        %v742 = vadd.f32 %v642, %v741
        %v743 = vpop.f32.mrb[0].mxu0
        %v744 = vadd.f32 %v642, %v743
        %745 = vdwg.mxu0
        %v746 = vxor.u32 %v724, 2147483648
        %v747 = vxor.u32 %v726, 2147483648
        %v748 = vxor.u32 %v730, 2147483648
        %v749 = vxor.u32 %v732, 2147483648
        %v750 = vxor.u32 %v736, 2147483648
        %v751 = vxor.u32 %v738, 2147483648
        %v752 = vxor.u32 %v742, 2147483648
        %v753 = vxor.u32 %v744, 2147483648
        %v754 = vmul.f32 %v746, 1.442695
        %v755 = vpow.pop %v754
        %v756 = vmul.f32 %v747, 1.442695
        %v757 = vpow.pop %v756
        %v758 = vmul.f32 %v748, 1.442695
        %v759 = vpow.pop %v758
        %v760 = vmul.f32 %v749, 1.442695
        %v761 = vpow.pop %v760
        %v762 = vmul.f32 %v750, 1.442695
        %v763 = vpow.pop %v762
        %v764 = vmul.f32 %v751, 1.442695
        %v765 = vpow.pop %v764
        %v766 = vmul.f32 %v752, 1.442695
        %v767 = vpow.pop %v766
        %v768 = vmul.f32 %v753, 1.442695
        %v769 = vpow.pop %v768
        %v770 = vadd.f32 %v755, 1.0
        %v771 = vadd.f32 %v757, 1.0
        %v772 = vadd.f32 %v759, 1.0
        %v773 = vadd.f32 %v761, 1.0
        %v774 = vadd.f32 %v763, 1.0
        %v775 = vadd.f32 %v765, 1.0
        %v776 = vadd.f32 %v767, 1.0
        %v777 = vadd.f32 %v769, 1.0
        %v778 = vrcp.pop %v770
        %v779 = vmul.f32 1.0, %v778
        %v780 = vrcp.pop %v771
        %v781 = vmul.f32 1.0, %v780
        %v782 = vrcp.pop %v772
        %v783 = vmul.f32 1.0, %v782
        %v784 = vrcp.pop %v773
        %v785 = vmul.f32 1.0, %v784
        %v786 = vrcp.pop %v774
        %v787 = vmul.f32 1.0, %v786
        %v788 = vrcp.pop %v775
        %v789 = vmul.f32 1.0, %v788
        %v790 = vrcp.pop %v776
        %v791 = vmul.f32 1.0, %v790
        %v792 = vrcp.pop %v777
        %v793 = vmul.f32 1.0, %v792
        %v794 = vmul.f32 %v724, %v779
        %v795 = vmul.f32 %v726, %v781
        %v796 = vmul.f32 %v730, %v783
        %v797 = vmul.f32 %v732, %v785
        %v798 = vmul.f32 %v736, %v787
        %v799 = vmul.f32 %v738, %v789
        %v800 = vmul.f32 %v742, %v791
        %v801 = vmul.f32 %v744, %v793
        %v802 = vld [vmem:[#allocation7] sm:$0xff]
        %v803 = vld [vmem:[#allocation7 + $0x8] sm:$0xff]
        %v804 = vld [vmem:[#allocation7 + $0x10] sm:$0xff]
        %v805 = vld [vmem:[#allocation7 + $0x18] sm:$0xff]
        %v806 = vld [vmem:[%s4] sm:$0xff]
        %v807 = vld [vmem:[%s4 + $0x8] sm:$0xff]
        %v808 = vld [vmem:[%s4 + $0x10] sm:$0xff]
        %v809 = vld [vmem:[%s4 + $0x18] sm:$0xff]
        %811 = vset.pattern.permute.xlu0 0
        %812 = vperm.xlu0 %811, %v806
        %v813 = vpop.permute.xlu0 %812
        %816 = vset.pattern.permute.xlu0 0
        %817 = vperm.xlu0 %816, %v807
        %v818 = vpop.permute.xlu0 %817
        %821 = vset.pattern.permute.xlu0 0
        %822 = vperm.xlu0 %821, %v808
        %v823 = vpop.permute.xlu0 %822
        %826 = vset.pattern.permute.xlu0 0
        %827 = vperm.xlu0 %826, %v809
        %v828 = vpop.permute.xlu0 %827
        %vm830 = vcmask 261120
        %v832 = vsel %vm830, %v802, 0
        %v835 = vsel %vm830, %v803, 0
        %v838 = vsel %vm830, %v804, 0
        %v841 = vsel %vm830, %v805, 0
        %843 = vmatprep.subr.mxu0 %v795
        %844 = vmatpush1.msra.mxu0 %v794
        %845 = vmatprep.subr.mxu0 %v797
        %846 = vmatpush1.msra.mxu0 %v796
        %847 = vmatprep.subr.mxu0 %v799
        %848 = vmatpush1.msra.mxu0 %v798
        %849 = vmatprep.subr.mxu0 %v801
        %850 = vmatpush1.msra.mxu0 %v800
        %851 = vmatprep.subr.mxu0 0.0
        %852 = vmatpush1.msra.mxu0 0.0
        %853 = vmatprep.subr.mxu0 0.0
        %854 = vmatpush1.msra.mxu0 0.0
        %855 = vmatprep.subr.mxu0 0.0
        %856 = vmatpush1.msra.mxu0 0.0
        %857 = vmatprep.subr.mxu0 0.0
        %858 = vmatpush1.msra.mxu0 0.0
        %859 = vmatprep.subr.mxu0 0.0
        %860 = vmatpush1.msra.mxu0 0.0
        %861 = vmatprep.subr.mxu0 0.0
        %862 = vmatpush1.msra.mxu0 0.0
        %863 = vmatprep.subr.mxu0 0.0
        %864 = vmatpush1.msra.mxu0 0.0
        %865 = vmatprep.subr.mxu0 0.0
        %866 = vmatpush1.msra.mxu0 0.0
        %867 = vmatprep.subr.mxu0 0.0
        %868 = vmatpush1.msra.mxu0 0.0
        %869 = vmatprep.subr.mxu0 0.0
        %870 = vmatpush1.msra.mxu0 0.0
        %871 = vmatprep.subr.mxu0 0.0
        %872 = vmatpush1.msra.mxu0 0.0
        %873 = vmatprep.subr.mxu0 0.0
        %874 = vmatpush1.msra.mxu0 0.0
        %875 = vmatprep.subr.mxu0 0.0
        %876 = vmatpush1.msra.mxu0 0.0
        %877 = vmatprep.subr.mxu0 0.0
        %878 = vmatpush1.msra.mxu0 0.0
        %879 = vmatprep.subr.mxu0 0.0
        %880 = vmatpush1.msra.mxu0 0.0
        %881 = vmatprep.subr.mxu0 0.0
        %882 = vmatpush1.msra.mxu0 0.0
        %883 = vmatprep.subr.mxu0 0.0
        %884 = vmatpush1.msra.mxu0 0.0
        %885 = vmatprep.subr.mxu0 0.0
        %886 = vmatpush1.msra.mxu0 0.0
        %887 = vmatprep.subr.mxu0 0.0
        %888 = vmatpush1.msra.mxu0 0.0
        %889 = vmatprep.subr.mxu0 0.0
        %890 = vmatpush1.msra.mxu0 0.0
        %891 = vmatprep.subr.mxu0 0.0
        %892 = vmatpush1.msra.mxu0 0.0
        %893 = vmatprep.subr.mxu0 0.0
        %894 = vmatpush1.msra.mxu0 0.0
        %895 = vmatprep.subr.mxu0 0.0
        %896 = vmatpush1.msra.mxu0 0.0
        %897 = vmatprep.subr.mxu0 0.0
        %898 = vmatpush1.msra.mxu0 0.0
        %899 = vmatprep.subr.mxu0 0.0
        %900 = vmatpush1.msra.mxu0 0.0
        %901 = vmatprep.subr.mxu0 0.0
        %902 = vmatpush1.msra.mxu0 0.0
        %903 = vmatprep.subr.mxu0 0.0
        %904 = vmatpush1.msra.mxu0 0.0
        %905 = vmatprep.subr.mxu0 0.0
        %906 = vmatpush1.msra.mxu0 0.0
        %907 = vmatprep.mubr.f32.mxu0 0.0
        %908 = vmatmul.mubr.f32.gmra.mrb[0].mxu0 %v832
        %v909 = vpop.f32.mrb[0].mxu0
        %v910 = vadd.f32 %v813, %v909
        %v911 = vpop.f32.mrb[0].mxu0
        %v912 = vadd.f32 %v813, %v911
        %913 = vmatprep.mubr.f32.mxu0 0.0
        %914 = vmatmul.mubr.f32.gmra.mrb[0].mxu0 %v835
        %v915 = vpop.f32.mrb[0].mxu0
        %v916 = vadd.f32 %v818, %v915
        %v917 = vpop.f32.mrb[0].mxu0
        %v918 = vadd.f32 %v818, %v917
        %919 = vmatprep.mubr.f32.mxu0 0.0
        %920 = vmatmul.mubr.f32.gmra.mrb[0].mxu0 %v838
        %v921 = vpop.f32.mrb[0].mxu0
        %v922 = vadd.f32 %v823, %v921
        %v923 = vpop.f32.mrb[0].mxu0
        %v924 = vadd.f32 %v823, %v923
        %925 = vmatprep.mubr.f32.mxu0 0.0
        %926 = vmatmul.mubr.f32.gmra.mrb[0].mxu0 %v841
        %v927 = vpop.f32.mrb[0].mxu0
        %v928 = vadd.f32 %v828, %v927
        %v929 = vpop.f32.mrb[0].mxu0
        %v930 = vadd.f32 %v828, %v929
        %931 = vdwg.mxu0
        %v932 = vxor.u32 %v910, 2147483648
        %v933 = vxor.u32 %v912, 2147483648
        %v934 = vxor.u32 %v916, 2147483648
        %v935 = vxor.u32 %v918, 2147483648
        %v936 = vxor.u32 %v922, 2147483648
        %v937 = vxor.u32 %v924, 2147483648
        %v938 = vxor.u32 %v928, 2147483648
        %v939 = vxor.u32 %v930, 2147483648
        %v940 = vmul.f32 %v932, 1.442695
        %v941 = vpow.pop %v940
        %v942 = vmul.f32 %v933, 1.442695
        %v943 = vpow.pop %v942
        %v944 = vmul.f32 %v934, 1.442695
        %v945 = vpow.pop %v944
        %v946 = vmul.f32 %v935, 1.442695
        %v947 = vpow.pop %v946
        %v948 = vmul.f32 %v936, 1.442695
        %v949 = vpow.pop %v948
        %v950 = vmul.f32 %v937, 1.442695
        %v951 = vpow.pop %v950
        %v952 = vmul.f32 %v938, 1.442695
        %v953 = vpow.pop %v952
        %v954 = vmul.f32 %v939, 1.442695
        %v955 = vpow.pop %v954
        %v956 = vadd.f32 %v941, 1.0
        %v957 = vadd.f32 %v943, 1.0
        %v958 = vadd.f32 %v945, 1.0
        %v959 = vadd.f32 %v947, 1.0
        %v960 = vadd.f32 %v949, 1.0
        %v961 = vadd.f32 %v951, 1.0
        %v962 = vadd.f32 %v953, 1.0
        %v963 = vadd.f32 %v955, 1.0
        %v964 = vrcp.pop %v956
        %v965 = vmul.f32 1.0, %v964
        %v966 = vrcp.pop %v957
        %v967 = vmul.f32 1.0, %v966
        %v968 = vrcp.pop %v958
        %v969 = vmul.f32 1.0, %v968
        %v970 = vrcp.pop %v959
        %v971 = vmul.f32 1.0, %v970
        %v972 = vrcp.pop %v960
        %v973 = vmul.f32 1.0, %v972
        %v974 = vrcp.pop %v961
        %v975 = vmul.f32 1.0, %v974
        %v976 = vrcp.pop %v962
        %v977 = vmul.f32 1.0, %v976
        %v978 = vrcp.pop %v963
        %v979 = vmul.f32 1.0, %v978
        %v980 = vmul.f32 %v910, %v965
        %v981 = vmul.f32 %v912, %v967
        %v982 = vmul.f32 %v916, %v969
        %v983 = vmul.f32 %v918, %v971
        %v984 = vmul.f32 %v922, %v973
        %v985 = vmul.f32 %v924, %v975
        %v986 = vmul.f32 %v928, %v977
        %v987 = vmul.f32 %v930, %v979
        %v988 = vld [vmem:[#allocation8] sm:$0xff]
        %v989 = vld [vmem:[#allocation8 + $0x8] sm:$0xff]
        %v990 = vld [vmem:[#allocation8 + $0x10] sm:$0xff]
        %v991 = vld [vmem:[#allocation8 + $0x18] sm:$0xff]
        %v992 = vld [vmem:[#allocation13] sm:$0xff]
        %v993 = vld [vmem:[#allocation13 + $0x8] sm:$0xff]
        %v994 = vld [vmem:[#allocation13 + $0x10] sm:$0xff]
        %v995 = vld [vmem:[#allocation13 + $0x18] sm:$0xff]
        %v996 = vld [vmem:[#allocation13 + $0x20] sm:$0xff]
        %v997 = vld [vmem:[#allocation13 + $0x28] sm:$0xff]
        %v998 = vld [vmem:[#allocation13 + $0x30] sm:$0xff]
        %v999 = vld [vmem:[#allocation13 + $0x38] sm:$0xff]
        %v1000 = vld [vmem:[#allocation13 + $0x40] sm:$0xff]
        %v1001 = vld [vmem:[#allocation13 + $0x48] sm:$0xff]
        %v1002 = vld [vmem:[#allocation13 + $0x50] sm:$0xff]
        %v1003 = vld [vmem:[#allocation13 + $0x58] sm:$0xff]
        %v1004 = vld [vmem:[#allocation13 + $0x60] sm:$0xff]
        %v1005 = vld [vmem:[#allocation13 + $0x68] sm:$0xff]
        %v1006 = vld [vmem:[#allocation13 + $0x70] sm:$0xff]
        %v1007 = vld [vmem:[#allocation13 + $0x78] sm:$0xff]
        %v1008 = vld [vmem:[#allocation13 + $0x80] sm:$0xff]
        %v1009 = vld [vmem:[#allocation13 + $0x88] sm:$0xff]
        %v1010 = vld [vmem:[#allocation13 + $0x90] sm:$0xff]
        %v1011 = vld [vmem:[#allocation13 + $0x98] sm:$0xff]
        %v1012 = vld [vmem:[#allocation13 + $0xa0] sm:$0xff]
        %v1013 = vld [vmem:[#allocation13 + $0xa8] sm:$0xff]
        %v1014 = vld [vmem:[#allocation13 + $0xb0] sm:$0xff]
        %v1015 = vld [vmem:[#allocation13 + $0xb8] sm:$0xff]
        %v1016 = vld [vmem:[#allocation13 + $0xc0] sm:$0xff]
        %v1017 = vld [vmem:[#allocation13 + $0xc8] sm:$0xff]
        %v1018 = vld [vmem:[#allocation13 + $0xd0] sm:$0xff]
        %v1019 = vld [vmem:[#allocation13 + $0xd8] sm:$0xff]
        %v1020 = vld [vmem:[#allocation13 + $0xe0] sm:$0xff]
        %v1021 = vld [vmem:[#allocation13 + $0xe8] sm:$0xff]
        %v1022 = vld [vmem:[#allocation13 + $0xf0] sm:$0xff]
        %v1023 = vld [vmem:[#allocation13 + $0xf8] sm:$0xff]
        %v1024 = vld [vmem:[#allocation13 + $0x100] sm:$0xff]
        %v1025 = vld [vmem:[#allocation13 + $0x108] sm:$0xff]
        %v1026 = vld [vmem:[#allocation13 + $0x110] sm:$0xff]
        %v1027 = vld [vmem:[#allocation13 + $0x118] sm:$0xff]
        %v1028 = vld [vmem:[#allocation13 + $0x120] sm:$0xff]
        %v1029 = vld [vmem:[#allocation13 + $0x128] sm:$0xff]
        %v1030 = vld [vmem:[#allocation13 + $0x130] sm:$0xff]
        %v1031 = vld [vmem:[#allocation13 + $0x138] sm:$0xff]
        %v1032 = vld [vmem:[#allocation13 + $0x140] sm:$0xff]
        %v1033 = vld [vmem:[#allocation13 + $0x148] sm:$0xff]
        %v1034 = vld [vmem:[#allocation13 + $0x150] sm:$0xff]
        %v1035 = vld [vmem:[#allocation13 + $0x158] sm:$0xff]
        %v1036 = vld [vmem:[#allocation13 + $0x160] sm:$0xff]
        %v1037 = vld [vmem:[#allocation13 + $0x168] sm:$0xff]
        %v1038 = vld [vmem:[#allocation13 + $0x170] sm:$0xff]
        %v1039 = vld [vmem:[#allocation13 + $0x178] sm:$0xff]
        %v1040 = vld [vmem:[#allocation13 + $0x180] sm:$0xff]
        %v1041 = vld [vmem:[#allocation13 + $0x188] sm:$0xff]
        %v1042 = vld [vmem:[#allocation13 + $0x190] sm:$0xff]
        %v1043 = vld [vmem:[#allocation13 + $0x198] sm:$0xff]
        %v1044 = vld [vmem:[#allocation13 + $0x1a0] sm:$0xff]
        %v1045 = vld [vmem:[#allocation13 + $0x1a8] sm:$0xff]
        %v1046 = vld [vmem:[#allocation13 + $0x1b0] sm:$0xff]
        %v1047 = vld [vmem:[#allocation13 + $0x1b8] sm:$0xff]
        %v1048 = vld [vmem:[#allocation13 + $0x1c0] sm:$0xff]
        %v1049 = vld [vmem:[#allocation13 + $0x1c8] sm:$0xff]
        %v1050 = vld [vmem:[#allocation13 + $0x1d0] sm:$0xff]
        %v1051 = vld [vmem:[#allocation13 + $0x1d8] sm:$0xff]
        %v1052 = vld [vmem:[#allocation13 + $0x1e0] sm:$0xff]
        %v1053 = vld [vmem:[#allocation13 + $0x1e8] sm:$0xff]
        %v1054 = vld [vmem:[#allocation13 + $0x1f0] sm:$0xff]
        %v1055 = vld [vmem:[#allocation13 + $0x1f8] sm:$0xff]
        %1056 = vmatprep.subr.mxu0 %v993
        %1057 = vmatpush1.msra.mxu0 %v992
        %1058 = vmatprep.subr.mxu0 %v995
        %1059 = vmatpush1.msra.mxu0 %v994
        %1060 = vmatprep.subr.mxu0 %v997
        %1061 = vmatpush1.msra.mxu0 %v996
        %1062 = vmatprep.subr.mxu0 %v999
        %1063 = vmatpush1.msra.mxu0 %v998
        %1064 = vmatprep.subr.mxu0 %v1001
        %1065 = vmatpush1.msra.mxu0 %v1000
        %1066 = vmatprep.subr.mxu0 %v1003
        %1067 = vmatpush1.msra.mxu0 %v1002
        %1068 = vmatprep.subr.mxu0 %v1005
        %1069 = vmatpush1.msra.mxu0 %v1004
        %1070 = vmatprep.subr.mxu0 %v1007
        %1071 = vmatpush1.msra.mxu0 %v1006
        %1072 = vmatprep.subr.mxu0 %v1009
        %1073 = vmatpush1.msra.mxu0 %v1008
        %1074 = vmatprep.subr.mxu0 %v1011
        %1075 = vmatpush1.msra.mxu0 %v1010
        %1076 = vmatprep.subr.mxu0 %v1013
        %1077 = vmatpush1.msra.mxu0 %v1012
        %1078 = vmatprep.subr.mxu0 %v1015
        %1079 = vmatpush1.msra.mxu0 %v1014
        %1080 = vmatprep.subr.mxu0 %v1017
        %1081 = vmatpush1.msra.mxu0 %v1016
        %1082 = vmatprep.subr.mxu0 %v1019
        %1083 = vmatpush1.msra.mxu0 %v1018
        %1084 = vmatprep.subr.mxu0 %v1021
        %1085 = vmatpush1.msra.mxu0 %v1020
        %1086 = vmatprep.subr.mxu0 %v1023
        %1087 = vmatpush1.msra.mxu0 %v1022
        %1088 = vmatprep.subr.mxu0 %v1025
        %1089 = vmatpush1.msra.mxu0 %v1024
        %1090 = vmatprep.subr.mxu0 %v1027
        %1091 = vmatpush1.msra.mxu0 %v1026
        %1092 = vmatprep.subr.mxu0 %v1029
        %1093 = vmatpush1.msra.mxu0 %v1028
        %1094 = vmatprep.subr.mxu0 %v1031
        %1095 = vmatpush1.msra.mxu0 %v1030
        %1096 = vmatprep.subr.mxu0 %v1033
        %1097 = vmatpush1.msra.mxu0 %v1032
        %1098 = vmatprep.subr.mxu0 %v1035
        %1099 = vmatpush1.msra.mxu0 %v1034
        %1100 = vmatprep.subr.mxu0 %v1037
        %1101 = vmatpush1.msra.mxu0 %v1036
        %1102 = vmatprep.subr.mxu0 %v1039
        %1103 = vmatpush1.msra.mxu0 %v1038
        %1104 = vmatprep.subr.mxu0 %v1041
        %1105 = vmatpush1.msra.mxu0 %v1040
        %1106 = vmatprep.subr.mxu0 %v1043
        %1107 = vmatpush1.msra.mxu0 %v1042
        %1108 = vmatprep.subr.mxu0 %v1045
        %1109 = vmatpush1.msra.mxu0 %v1044
        %1110 = vmatprep.subr.mxu0 %v1047
        %1111 = vmatpush1.msra.mxu0 %v1046
        %1112 = vmatprep.subr.mxu0 %v1049
        %1113 = vmatpush1.msra.mxu0 %v1048
        %1114 = vmatprep.subr.mxu0 %v1051
        %1115 = vmatpush1.msra.mxu0 %v1050
        %1116 = vmatprep.subr.mxu0 %v1053
        %1117 = vmatpush1.msra.mxu0 %v1052
        %1118 = vmatprep.subr.mxu0 %v1055
        %1119 = vmatpush1.msra.mxu0 %v1054
        %1120 = vmatprep.mubr.f32.mxu0 %v981
        %1121 = vmatmul.mubr.f32.gmra.mrb[0].mxu0 %v980
        %v1122 = vpop.f32.mrb[0].mxu0
        %v1123 = vadd.f32 0.0, %v1122
        %v1124 = vpop.f32.mrb[0].mxu0
        %v1125 = vadd.f32 0.0, %v1124
        %1126 = vmatprep.mubr.f32.mxu0 %v983
        %1127 = vmatmul.mubr.f32.gmra.mrb[0].mxu0 %v982
        %v1128 = vpop.f32.mrb[0].mxu0
        %v1129 = vadd.f32 0.0, %v1128
        %v1130 = vpop.f32.mrb[0].mxu0
        %v1131 = vadd.f32 0.0, %v1130
        %1132 = vmatprep.mubr.f32.mxu0 %v985
        %1133 = vmatmul.mubr.f32.gmra.mrb[0].mxu0 %v984
        %v1134 = vpop.f32.mrb[0].mxu0
        %v1135 = vadd.f32 0.0, %v1134
        %v1136 = vpop.f32.mrb[0].mxu0
        %v1137 = vadd.f32 0.0, %v1136
        %1138 = vmatprep.mubr.f32.mxu0 %v987
        %1139 = vmatmul.mubr.f32.gmra.mrb[0].mxu0 %v986
        %v1140 = vpop.f32.mrb[0].mxu0
        %v1141 = vadd.f32 0.0, %v1140
        %v1142 = vpop.f32.mrb[0].mxu0
        %v1143 = vadd.f32 0.0, %v1142
        %1144 = vdwg.mxu0
        %s1145 = scalar_lea.vmem [#allocation8], 32
        %v1146 = vld [vmem:[%s1145] sm:$0xff]
        %v1147 = vld [vmem:[%s1145 + $0x8] sm:$0xff]
        %v1148 = vld [vmem:[%s1145 + $0x10] sm:$0xff]
        %v1149 = vld [vmem:[%s1145 + $0x18] sm:$0xff]
        %s1150 = scalar_lea.vmem [#allocation13], 512
        %v1151 = vld [vmem:[%s1150] sm:$0xff]
        %v1152 = vld [vmem:[%s1150 + $0x8] sm:$0xff]
        %v1153 = vld [vmem:[%s1150 + $0x10] sm:$0xff]
        %v1154 = vld [vmem:[%s1150 + $0x18] sm:$0xff]
        %v1155 = vld [vmem:[%s1150 + $0x20] sm:$0xff]
        %v1156 = vld [vmem:[%s1150 + $0x28] sm:$0xff]
        %v1157 = vld [vmem:[%s1150 + $0x30] sm:$0xff]
        %v1158 = vld [vmem:[%s1150 + $0x38] sm:$0xff]
        %v1159 = vld [vmem:[%s1150 + $0x40] sm:$0xff]
        %v1160 = vld [vmem:[%s1150 + $0x48] sm:$0xff]
        %v1161 = vld [vmem:[%s1150 + $0x50] sm:$0xff]
        %v1162 = vld [vmem:[%s1150 + $0x58] sm:$0xff]
        %v1163 = vld [vmem:[%s1150 + $0x60] sm:$0xff]
        %v1164 = vld [vmem:[%s1150 + $0x68] sm:$0xff]
        %v1165 = vld [vmem:[%s1150 + $0x70] sm:$0xff]
        %v1166 = vld [vmem:[%s1150 + $0x78] sm:$0xff]
        %v1167 = vld [vmem:[%s1150 + $0x80] sm:$0xff]
        %v1168 = vld [vmem:[%s1150 + $0x88] sm:$0xff]
        %v1169 = vld [vmem:[%s1150 + $0x90] sm:$0xff]
        %v1170 = vld [vmem:[%s1150 + $0x98] sm:$0xff]
        %v1171 = vld [vmem:[%s1150 + $0xa0] sm:$0xff]
        %v1172 = vld [vmem:[%s1150 + $0xa8] sm:$0xff]
        %v1173 = vld [vmem:[%s1150 + $0xb0] sm:$0xff]
        %v1174 = vld [vmem:[%s1150 + $0xb8] sm:$0xff]
        %v1175 = vld [vmem:[%s1150 + $0xc0] sm:$0xff]
        %v1176 = vld [vmem:[%s1150 + $0xc8] sm:$0xff]
        %v1177 = vld [vmem:[%s1150 + $0xd0] sm:$0xff]
        %v1178 = vld [vmem:[%s1150 + $0xd8] sm:$0xff]
        %v1179 = vld [vmem:[%s1150 + $0xe0] sm:$0xff]
        %v1180 = vld [vmem:[%s1150 + $0xe8] sm:$0xff]
        %v1181 = vld [vmem:[%s1150 + $0xf0] sm:$0xff]
        %v1182 = vld [vmem:[%s1150 + $0xf8] sm:$0xff]
        %v1183 = vld [vmem:[%s1150 + $0x100] sm:$0xff]
        %v1184 = vld [vmem:[%s1150 + $0x108] sm:$0xff]
        %v1185 = vld [vmem:[%s1150 + $0x110] sm:$0xff]
        %v1186 = vld [vmem:[%s1150 + $0x118] sm:$0xff]
        %v1187 = vld [vmem:[%s1150 + $0x120] sm:$0xff]
        %v1188 = vld [vmem:[%s1150 + $0x128] sm:$0xff]
        %v1189 = vld [vmem:[%s1150 + $0x130] sm:$0xff]
        %v1190 = vld [vmem:[%s1150 + $0x138] sm:$0xff]
        %v1191 = vld [vmem:[%s1150 + $0x140] sm:$0xff]
        %v1192 = vld [vmem:[%s1150 + $0x148] sm:$0xff]
        %v1193 = vld [vmem:[%s1150 + $0x150] sm:$0xff]
        %v1194 = vld [vmem:[%s1150 + $0x158] sm:$0xff]
        %v1195 = vld [vmem:[%s1150 + $0x160] sm:$0xff]
        %v1196 = vld [vmem:[%s1150 + $0x168] sm:$0xff]
        %v1197 = vld [vmem:[%s1150 + $0x170] sm:$0xff]
        %v1198 = vld [vmem:[%s1150 + $0x178] sm:$0xff]
        %v1199 = vld [vmem:[%s1150 + $0x180] sm:$0xff]
        %v1200 = vld [vmem:[%s1150 + $0x188] sm:$0xff]
        %v1201 = vld [vmem:[%s1150 + $0x190] sm:$0xff]
        %v1202 = vld [vmem:[%s1150 + $0x198] sm:$0xff]
        %v1203 = vld [vmem:[%s1150 + $0x1a0] sm:$0xff]
        %v1204 = vld [vmem:[%s1150 + $0x1a8] sm:$0xff]
        %v1205 = vld [vmem:[%s1150 + $0x1b0] sm:$0xff]
        %v1206 = vld [vmem:[%s1150 + $0x1b8] sm:$0xff]
        %v1207 = vld [vmem:[%s1150 + $0x1c0] sm:$0xff]
        %v1208 = vld [vmem:[%s1150 + $0x1c8] sm:$0xff]
        %v1209 = vld [vmem:[%s1150 + $0x1d0] sm:$0xff]
        %v1210 = vld [vmem:[%s1150 + $0x1d8] sm:$0xff]
        %v1211 = vld [vmem:[%s1150 + $0x1e0] sm:$0xff]
        %v1212 = vld [vmem:[%s1150 + $0x1e8] sm:$0xff]
        %v1213 = vld [vmem:[%s1150 + $0x1f0] sm:$0xff]
        %v1214 = vld [vmem:[%s1150 + $0x1f8] sm:$0xff]
        %1215 = vmatprep.subr.mxu0 %v1152
        %1216 = vmatpush1.msra.mxu0 %v1151
        %1217 = vmatprep.subr.mxu0 %v1154
        %1218 = vmatpush1.msra.mxu0 %v1153
        %1219 = vmatprep.subr.mxu0 %v1156
        %1220 = vmatpush1.msra.mxu0 %v1155
        %1221 = vmatprep.subr.mxu0 %v1158
        %1222 = vmatpush1.msra.mxu0 %v1157
        %1223 = vmatprep.subr.mxu0 %v1160
        %1224 = vmatpush1.msra.mxu0 %v1159
        %1225 = vmatprep.subr.mxu0 %v1162
        %1226 = vmatpush1.msra.mxu0 %v1161
        %1227 = vmatprep.subr.mxu0 %v1164
        %1228 = vmatpush1.msra.mxu0 %v1163
        %1229 = vmatprep.subr.mxu0 %v1166
        %1230 = vmatpush1.msra.mxu0 %v1165
        %1231 = vmatprep.subr.mxu0 %v1168
        %1232 = vmatpush1.msra.mxu0 %v1167
        %1233 = vmatprep.subr.mxu0 %v1170
        %1234 = vmatpush1.msra.mxu0 %v1169
        %1235 = vmatprep.subr.mxu0 %v1172
        %1236 = vmatpush1.msra.mxu0 %v1171
        %1237 = vmatprep.subr.mxu0 %v1174
        %1238 = vmatpush1.msra.mxu0 %v1173
        %1239 = vmatprep.subr.mxu0 %v1176
        %1240 = vmatpush1.msra.mxu0 %v1175
        %1241 = vmatprep.subr.mxu0 %v1178
        %1242 = vmatpush1.msra.mxu0 %v1177
        %1243 = vmatprep.subr.mxu0 %v1180
        %1244 = vmatpush1.msra.mxu0 %v1179
        %1245 = vmatprep.subr.mxu0 %v1182
        %1246 = vmatpush1.msra.mxu0 %v1181
        %1247 = vmatprep.subr.mxu0 %v1184
        %1248 = vmatpush1.msra.mxu0 %v1183
        %1249 = vmatprep.subr.mxu0 %v1186
        %1250 = vmatpush1.msra.mxu0 %v1185
        %1251 = vmatprep.subr.mxu0 %v1188
        %1252 = vmatpush1.msra.mxu0 %v1187
        %1253 = vmatprep.subr.mxu0 %v1190
        %1254 = vmatpush1.msra.mxu0 %v1189
        %1255 = vmatprep.subr.mxu0 %v1192
        %1256 = vmatpush1.msra.mxu0 %v1191
        %1257 = vmatprep.subr.mxu0 %v1194
        %1258 = vmatpush1.msra.mxu0 %v1193
        %1259 = vmatprep.subr.mxu0 %v1196
        %1260 = vmatpush1.msra.mxu0 %v1195
        %1261 = vmatprep.subr.mxu0 %v1198
        %1262 = vmatpush1.msra.mxu0 %v1197
        %1263 = vmatprep.subr.mxu0 %v1200
        %1264 = vmatpush1.msra.mxu0 %v1199
        %1265 = vmatprep.subr.mxu0 %v1202
        %1266 = vmatpush1.msra.mxu0 %v1201
        %1267 = vmatprep.subr.mxu0 %v1204
        %1268 = vmatpush1.msra.mxu0 %v1203
        %1269 = vmatprep.subr.mxu0 %v1206
        %1270 = vmatpush1.msra.mxu0 %v1205
        %1271 = vmatprep.subr.mxu0 %v1208
        %1272 = vmatpush1.msra.mxu0 %v1207
        %1273 = vmatprep.subr.mxu0 %v1210
        %1274 = vmatpush1.msra.mxu0 %v1209
        %1275 = vmatprep.subr.mxu0 %v1212
        %1276 = vmatpush1.msra.mxu0 %v1211
        %1277 = vmatprep.subr.mxu0 %v1214
        %1278 = vmatpush1.msra.mxu0 %v1213
        %1279 = vmatprep.mubr.f32.mxu0 %v981
        %1280 = vmatmul.mubr.f32.gmra.mrb[0].mxu0 %v980
        %v1281 = vpop.f32.mrb[0].mxu0
        %v1282 = vadd.f32 0.0, %v1281
        %v1283 = vpop.f32.mrb[0].mxu0
        %v1284 = vadd.f32 0.0, %v1283
        %1285 = vmatprep.mubr.f32.mxu0 %v983
        %1286 = vmatmul.mubr.f32.gmra.mrb[0].mxu0 %v982
        %v1287 = vpop.f32.mrb[0].mxu0
        %v1288 = vadd.f32 0.0, %v1287
        %v1289 = vpop.f32.mrb[0].mxu0
        %v1290 = vadd.f32 0.0, %v1289
        %1291 = vmatprep.mubr.f32.mxu0 %v985
        %1292 = vmatmul.mubr.f32.gmra.mrb[0].mxu0 %v984
        %v1293 = vpop.f32.mrb[0].mxu0
        %v1294 = vadd.f32 0.0, %v1293
        %v1295 = vpop.f32.mrb[0].mxu0
        %v1296 = vadd.f32 0.0, %v1295
        %1297 = vmatprep.mubr.f32.mxu0 %v987
        %1298 = vmatmul.mubr.f32.gmra.mrb[0].mxu0 %v986
        %v1299 = vpop.f32.mrb[0].mxu0
        %v1300 = vadd.f32 0.0, %v1299
        %v1301 = vpop.f32.mrb[0].mxu0
        %v1302 = vadd.f32 0.0, %v1301
        %1303 = vdwg.mxu0
        %v1305 = vsel %vm830, %v1146, 0
        %v1308 = vsel %vm830, %v1147, 0
        %v1311 = vsel %vm830, %v1148, 0
        %v1314 = vsel %vm830, %v1149, 0
        %1316 = vmatprep.subr.mxu0 %v1284
        %1317 = vmatpush1.msra.mxu0 %v1282
        %1318 = vmatprep.subr.mxu0 %v1290
        %1319 = vmatpush1.msra.mxu0 %v1288
        %1320 = vmatprep.subr.mxu0 %v1296
        %1321 = vmatpush1.msra.mxu0 %v1294
        %1322 = vmatprep.subr.mxu0 %v1302
        %1323 = vmatpush1.msra.mxu0 %v1300
        %1324 = vmatprep.subr.mxu0 0.0
        %1325 = vmatpush1.msra.mxu0 0.0
        %1326 = vmatprep.subr.mxu0 0.0
        %1327 = vmatpush1.msra.mxu0 0.0
        %1328 = vmatprep.subr.mxu0 0.0
        %1329 = vmatpush1.msra.mxu0 0.0
        %1330 = vmatprep.subr.mxu0 0.0
        %1331 = vmatpush1.msra.mxu0 0.0
        %1332 = vmatprep.subr.mxu0 0.0
        %1333 = vmatpush1.msra.mxu0 0.0
        %1334 = vmatprep.subr.mxu0 0.0
        %1335 = vmatpush1.msra.mxu0 0.0
        %1336 = vmatprep.subr.mxu0 0.0
        %1337 = vmatpush1.msra.mxu0 0.0
        %1338 = vmatprep.subr.mxu0 0.0
        %1339 = vmatpush1.msra.mxu0 0.0
        %1340 = vmatprep.subr.mxu0 0.0
        %1341 = vmatpush1.msra.mxu0 0.0
        %1342 = vmatprep.subr.mxu0 0.0
        %1343 = vmatpush1.msra.mxu0 0.0
        %1344 = vmatprep.subr.mxu0 0.0
        %1345 = vmatpush1.msra.mxu0 0.0
        %1346 = vmatprep.subr.mxu0 0.0
        %1347 = vmatpush1.msra.mxu0 0.0
        %1348 = vmatprep.subr.mxu0 0.0
        %1349 = vmatpush1.msra.mxu0 0.0
        %1350 = vmatprep.subr.mxu0 0.0
        %1351 = vmatpush1.msra.mxu0 0.0
        %1352 = vmatprep.subr.mxu0 0.0
        %1353 = vmatpush1.msra.mxu0 0.0
        %1354 = vmatprep.subr.mxu0 0.0
        %1355 = vmatpush1.msra.mxu0 0.0
        %1356 = vmatprep.subr.mxu0 0.0
        %1357 = vmatpush1.msra.mxu0 0.0
        %1358 = vmatprep.subr.mxu0 0.0
        %1359 = vmatpush1.msra.mxu0 0.0
        %1360 = vmatprep.subr.mxu0 0.0
        %1361 = vmatpush1.msra.mxu0 0.0
        %1362 = vmatprep.subr.mxu0 0.0
        %1363 = vmatpush1.msra.mxu0 0.0
        %1364 = vmatprep.subr.mxu0 0.0
        %1365 = vmatpush1.msra.mxu0 0.0
        %1366 = vmatprep.subr.mxu0 0.0
        %1367 = vmatpush1.msra.mxu0 0.0
        %1368 = vmatprep.subr.mxu0 0.0
        %1369 = vmatpush1.msra.mxu0 0.0
        %1370 = vmatprep.subr.mxu0 0.0
        %1371 = vmatpush1.msra.mxu0 0.0
        %1372 = vmatprep.subr.mxu0 0.0
        %1373 = vmatpush1.msra.mxu0 0.0
        %1374 = vmatprep.subr.mxu0 0.0
        %1375 = vmatpush1.msra.mxu0 0.0
        %1376 = vmatprep.subr.mxu0 0.0
        %1377 = vmatpush1.msra.mxu0 0.0
        %1378 = vmatprep.subr.mxu0 0.0
        %1379 = vmatpush1.msra.mxu0 0.0
        %1380 = vmatprep.mubr.f32.mxu0 0.0
        %1381 = vmatmul.mubr.f32.gmra.mrb[0].mxu0 %v1305
        %v1382 = vpop.f32.mrb[0].mxu0
        %v1383 = vadd.f32 0.0, %v1382
        %v1384 = vpop.f32.mrb[0].mxu0
        %v1385 = vadd.f32 0.0, %v1384
        %1386 = vmatprep.mubr.f32.mxu0 0.0
        %1387 = vmatmul.mubr.f32.gmra.mrb[0].mxu0 %v1308
        %v1388 = vpop.f32.mrb[0].mxu0
        %v1389 = vadd.f32 0.0, %v1388
        %v1390 = vpop.f32.mrb[0].mxu0
        %v1391 = vadd.f32 0.0, %v1390
        %1392 = vmatprep.mubr.f32.mxu0 0.0
        %1393 = vmatmul.mubr.f32.gmra.mrb[0].mxu0 %v1311
        %v1394 = vpop.f32.mrb[0].mxu0
        %v1395 = vadd.f32 0.0, %v1394
        %v1396 = vpop.f32.mrb[0].mxu0
        %v1397 = vadd.f32 0.0, %v1396
        %1398 = vmatprep.mubr.f32.mxu0 0.0
        %1399 = vmatmul.mubr.f32.gmra.mrb[0].mxu0 %v1314
        %v1400 = vpop.f32.mrb[0].mxu0
        %v1401 = vadd.f32 0.0, %v1400
        %v1402 = vpop.f32.mrb[0].mxu0
        %v1403 = vadd.f32 0.0, %v1402
        %1404 = vdwg.mxu0
        %v1406 = vsel %vm830, %v988, 0
        %v1409 = vsel %vm830, %v989, 0
        %v1412 = vsel %vm830, %v990, 0
        %v1415 = vsel %vm830, %v991, 0
        %1417 = vmatprep.subr.mxu0 %v1125
        %1418 = vmatpush1.msra.mxu0 %v1123
        %1419 = vmatprep.subr.mxu0 %v1131
        %1420 = vmatpush1.msra.mxu0 %v1129
        %1421 = vmatprep.subr.mxu0 %v1137
        %1422 = vmatpush1.msra.mxu0 %v1135
        %1423 = vmatprep.subr.mxu0 %v1143
        %1424 = vmatpush1.msra.mxu0 %v1141
        %1425 = vmatprep.subr.mxu0 0.0
        %1426 = vmatpush1.msra.mxu0 0.0
        %1427 = vmatprep.subr.mxu0 0.0
        %1428 = vmatpush1.msra.mxu0 0.0
        %1429 = vmatprep.subr.mxu0 0.0
        %1430 = vmatpush1.msra.mxu0 0.0
        %1431 = vmatprep.subr.mxu0 0.0
        %1432 = vmatpush1.msra.mxu0 0.0
        %1433 = vmatprep.subr.mxu0 0.0
        %1434 = vmatpush1.msra.mxu0 0.0
        %1435 = vmatprep.subr.mxu0 0.0
        %1436 = vmatpush1.msra.mxu0 0.0
        %1437 = vmatprep.subr.mxu0 0.0
        %1438 = vmatpush1.msra.mxu0 0.0
        %1439 = vmatprep.subr.mxu0 0.0
        %1440 = vmatpush1.msra.mxu0 0.0
        %1441 = vmatprep.subr.mxu0 0.0
        %1442 = vmatpush1.msra.mxu0 0.0
        %1443 = vmatprep.subr.mxu0 0.0
        %1444 = vmatpush1.msra.mxu0 0.0
        %1445 = vmatprep.subr.mxu0 0.0
        %1446 = vmatpush1.msra.mxu0 0.0
        %1447 = vmatprep.subr.mxu0 0.0
        %1448 = vmatpush1.msra.mxu0 0.0
        %1449 = vmatprep.subr.mxu0 0.0
        %1450 = vmatpush1.msra.mxu0 0.0
        %1451 = vmatprep.subr.mxu0 0.0
        %1452 = vmatpush1.msra.mxu0 0.0
        %1453 = vmatprep.subr.mxu0 0.0
        %1454 = vmatpush1.msra.mxu0 0.0
        %1455 = vmatprep.subr.mxu0 0.0
        %1456 = vmatpush1.msra.mxu0 0.0
        %1457 = vmatprep.subr.mxu0 0.0
        %1458 = vmatpush1.msra.mxu0 0.0
        %1459 = vmatprep.subr.mxu0 0.0
        %1460 = vmatpush1.msra.mxu0 0.0
        %1461 = vmatprep.subr.mxu0 0.0
        %1462 = vmatpush1.msra.mxu0 0.0
        %1463 = vmatprep.subr.mxu0 0.0
        %1464 = vmatpush1.msra.mxu0 0.0
        %1465 = vmatprep.subr.mxu0 0.0
        %1466 = vmatpush1.msra.mxu0 0.0
        %1467 = vmatprep.subr.mxu0 0.0
        %1468 = vmatpush1.msra.mxu0 0.0
        %1469 = vmatprep.subr.mxu0 0.0
        %1470 = vmatpush1.msra.mxu0 0.0
        %1471 = vmatprep.subr.mxu0 0.0
        %1472 = vmatpush1.msra.mxu0 0.0
        %1473 = vmatprep.subr.mxu0 0.0
        %1474 = vmatpush1.msra.mxu0 0.0
        %1475 = vmatprep.subr.mxu0 0.0
        %1476 = vmatpush1.msra.mxu0 0.0
        %1477 = vmatprep.subr.mxu0 0.0
        %1478 = vmatpush1.msra.mxu0 0.0
        %1479 = vmatprep.subr.mxu0 0.0
        %1480 = vmatpush1.msra.mxu0 0.0
        %1481 = vmatprep.mubr.f32.mxu0 0.0
        %1482 = vmatmul.mubr.f32.gmra.mrb[0].mxu0 %v1406
        %v1483 = vpop.f32.mrb[0].mxu0
        %v1484 = vadd.f32 %v1383, %v1483
        %v1485 = vpop.f32.mrb[0].mxu0
        %v1486 = vadd.f32 %v1385, %v1485
        %1487 = vmatprep.mubr.f32.mxu0 0.0
        %1488 = vmatmul.mubr.f32.gmra.mrb[0].mxu0 %v1409
        %v1489 = vpop.f32.mrb[0].mxu0
        %v1490 = vadd.f32 %v1389, %v1489
        %v1491 = vpop.f32.mrb[0].mxu0
        %v1492 = vadd.f32 %v1391, %v1491
        %1493 = vmatprep.mubr.f32.mxu0 0.0
        %1494 = vmatmul.mubr.f32.gmra.mrb[0].mxu0 %v1412
        %v1495 = vpop.f32.mrb[0].mxu0
        %v1496 = vadd.f32 %v1395, %v1495
        %v1497 = vpop.f32.mrb[0].mxu0
        %v1498 = vadd.f32 %v1397, %v1497
        %1499 = vmatprep.mubr.f32.mxu0 0.0
        %1500 = vmatmul.mubr.f32.gmra.mrb[0].mxu0 %v1415
        %v1501 = vpop.f32.mrb[0].mxu0
        %v1502 = vadd.f32 %v1401, %v1501
        %v1503 = vpop.f32.mrb[0].mxu0
        %v1504 = vadd.f32 %v1403, %v1503
        %1505 = vdwg.mxu0
        %s1506 = scalar_lea.vmem [#allocation8], 64
        %v1507 = vld [vmem:[%s1506] sm:$0xff]
        %v1508 = vld [vmem:[%s1506 + $0x8] sm:$0xff]
        %v1509 = vld [vmem:[%s1506 + $0x10] sm:$0xff]
        %v1510 = vld [vmem:[%s1506 + $0x18] sm:$0xff]
        %s1511 = scalar_lea.vmem [#allocation13], 1024
        %v1512 = vld [vmem:[%s1511] sm:$0xff]
        %v1513 = vld [vmem:[%s1511 + $0x8] sm:$0xff]
        %v1514 = vld [vmem:[%s1511 + $0x10] sm:$0xff]
        %v1515 = vld [vmem:[%s1511 + $0x18] sm:$0xff]
        %v1516 = vld [vmem:[%s1511 + $0x20] sm:$0xff]
        %v1517 = vld [vmem:[%s1511 + $0x28] sm:$0xff]
        %v1518 = vld [vmem:[%s1511 + $0x30] sm:$0xff]
        %v1519 = vld [vmem:[%s1511 + $0x38] sm:$0xff]
        %v1520 = vld [vmem:[%s1511 + $0x40] sm:$0xff]
        %v1521 = vld [vmem:[%s1511 + $0x48] sm:$0xff]
        %v1522 = vld [vmem:[%s1511 + $0x50] sm:$0xff]
        %v1523 = vld [vmem:[%s1511 + $0x58] sm:$0xff]
        %v1524 = vld [vmem:[%s1511 + $0x60] sm:$0xff]
        %v1525 = vld [vmem:[%s1511 + $0x68] sm:$0xff]
        %v1526 = vld [vmem:[%s1511 + $0x70] sm:$0xff]
        %v1527 = vld [vmem:[%s1511 + $0x78] sm:$0xff]
        %v1528 = vld [vmem:[%s1511 + $0x80] sm:$0xff]
        %v1529 = vld [vmem:[%s1511 + $0x88] sm:$0xff]
        %v1530 = vld [vmem:[%s1511 + $0x90] sm:$0xff]
        %v1531 = vld [vmem:[%s1511 + $0x98] sm:$0xff]
        %v1532 = vld [vmem:[%s1511 + $0xa0] sm:$0xff]
        %v1533 = vld [vmem:[%s1511 + $0xa8] sm:$0xff]
        %v1534 = vld [vmem:[%s1511 + $0xb0] sm:$0xff]
        %v1535 = vld [vmem:[%s1511 + $0xb8] sm:$0xff]
        %v1536 = vld [vmem:[%s1511 + $0xc0] sm:$0xff]
        %v1537 = vld [vmem:[%s1511 + $0xc8] sm:$0xff]
        %v1538 = vld [vmem:[%s1511 + $0xd0] sm:$0xff]
        %v1539 = vld [vmem:[%s1511 + $0xd8] sm:$0xff]
        %v1540 = vld [vmem:[%s1511 + $0xe0] sm:$0xff]
        %v1541 = vld [vmem:[%s1511 + $0xe8] sm:$0xff]
        %v1542 = vld [vmem:[%s1511 + $0xf0] sm:$0xff]
        %v1543 = vld [vmem:[%s1511 + $0xf8] sm:$0xff]
        %v1544 = vld [vmem:[%s1511 + $0x100] sm:$0xff]
        %v1545 = vld [vmem:[%s1511 + $0x108] sm:$0xff]
        %v1546 = vld [vmem:[%s1511 + $0x110] sm:$0xff]
        %v1547 = vld [vmem:[%s1511 + $0x118] sm:$0xff]
        %v1548 = vld [vmem:[%s1511 + $0x120] sm:$0xff]
        %v1549 = vld [vmem:[%s1511 + $0x128] sm:$0xff]
        %v1550 = vld [vmem:[%s1511 + $0x130] sm:$0xff]
        %v1551 = vld [vmem:[%s1511 + $0x138] sm:$0xff]
        %v1552 = vld [vmem:[%s1511 + $0x140] sm:$0xff]
        %v1553 = vld [vmem:[%s1511 + $0x148] sm:$0xff]
        %v1554 = vld [vmem:[%s1511 + $0x150] sm:$0xff]
        %v1555 = vld [vmem:[%s1511 + $0x158] sm:$0xff]
        %v1556 = vld [vmem:[%s1511 + $0x160] sm:$0xff]
        %v1557 = vld [vmem:[%s1511 + $0x168] sm:$0xff]
        %v1558 = vld [vmem:[%s1511 + $0x170] sm:$0xff]
        %v1559 = vld [vmem:[%s1511 + $0x178] sm:$0xff]
        %v1560 = vld [vmem:[%s1511 + $0x180] sm:$0xff]
        %v1561 = vld [vmem:[%s1511 + $0x188] sm:$0xff]
        %v1562 = vld [vmem:[%s1511 + $0x190] sm:$0xff]
        %v1563 = vld [vmem:[%s1511 + $0x198] sm:$0xff]
        %v1564 = vld [vmem:[%s1511 + $0x1a0] sm:$0xff]
        %v1565 = vld [vmem:[%s1511 + $0x1a8] sm:$0xff]
        %v1566 = vld [vmem:[%s1511 + $0x1b0] sm:$0xff]
        %v1567 = vld [vmem:[%s1511 + $0x1b8] sm:$0xff]
        %v1568 = vld [vmem:[%s1511 + $0x1c0] sm:$0xff]
        %v1569 = vld [vmem:[%s1511 + $0x1c8] sm:$0xff]
        %v1570 = vld [vmem:[%s1511 + $0x1d0] sm:$0xff]
        %v1571 = vld [vmem:[%s1511 + $0x1d8] sm:$0xff]
        %v1572 = vld [vmem:[%s1511 + $0x1e0] sm:$0xff]
        %v1573 = vld [vmem:[%s1511 + $0x1e8] sm:$0xff]
        %v1574 = vld [vmem:[%s1511 + $0x1f0] sm:$0xff]
        %v1575 = vld [vmem:[%s1511 + $0x1f8] sm:$0xff]
        %1576 = vmatprep.subr.mxu0 %v1513
        %1577 = vmatpush1.msra.mxu0 %v1512
        %1578 = vmatprep.subr.mxu0 %v1515
        %1579 = vmatpush1.msra.mxu0 %v1514
        %1580 = vmatprep.subr.mxu0 %v1517
        %1581 = vmatpush1.msra.mxu0 %v1516
        %1582 = vmatprep.subr.mxu0 %v1519
        %1583 = vmatpush1.msra.mxu0 %v1518
        %1584 = vmatprep.subr.mxu0 %v1521
        %1585 = vmatpush1.msra.mxu0 %v1520
        %1586 = vmatprep.subr.mxu0 %v1523
        %1587 = vmatpush1.msra.mxu0 %v1522
        %1588 = vmatprep.subr.mxu0 %v1525
        %1589 = vmatpush1.msra.mxu0 %v1524
        %1590 = vmatprep.subr.mxu0 %v1527
        %1591 = vmatpush1.msra.mxu0 %v1526
        %1592 = vmatprep.subr.mxu0 %v1529
        %1593 = vmatpush1.msra.mxu0 %v1528
        %1594 = vmatprep.subr.mxu0 %v1531
        %1595 = vmatpush1.msra.mxu0 %v1530
        %1596 = vmatprep.subr.mxu0 %v1533
        %1597 = vmatpush1.msra.mxu0 %v1532
        %1598 = vmatprep.subr.mxu0 %v1535
        %1599 = vmatpush1.msra.mxu0 %v1534
        %1600 = vmatprep.subr.mxu0 %v1537
        %1601 = vmatpush1.msra.mxu0 %v1536
        %1602 = vmatprep.subr.mxu0 %v1539
        %1603 = vmatpush1.msra.mxu0 %v1538
        %1604 = vmatprep.subr.mxu0 %v1541
        %1605 = vmatpush1.msra.mxu0 %v1540
        %1606 = vmatprep.subr.mxu0 %v1543
        %1607 = vmatpush1.msra.mxu0 %v1542
        %1608 = vmatprep.subr.mxu0 %v1545
        %1609 = vmatpush1.msra.mxu0 %v1544
        %1610 = vmatprep.subr.mxu0 %v1547
        %1611 = vmatpush1.msra.mxu0 %v1546
        %1612 = vmatprep.subr.mxu0 %v1549
        %1613 = vmatpush1.msra.mxu0 %v1548
        %1614 = vmatprep.subr.mxu0 %v1551
        %1615 = vmatpush1.msra.mxu0 %v1550
        %1616 = vmatprep.subr.mxu0 %v1553
        %1617 = vmatpush1.msra.mxu0 %v1552
        %1618 = vmatprep.subr.mxu0 %v1555
        %1619 = vmatpush1.msra.mxu0 %v1554
        %1620 = vmatprep.subr.mxu0 %v1557
        %1621 = vmatpush1.msra.mxu0 %v1556
        %1622 = vmatprep.subr.mxu0 %v1559
        %1623 = vmatpush1.msra.mxu0 %v1558
        %1624 = vmatprep.subr.mxu0 %v1561
        %1625 = vmatpush1.msra.mxu0 %v1560
        %1626 = vmatprep.subr.mxu0 %v1563
        %1627 = vmatpush1.msra.mxu0 %v1562
        %1628 = vmatprep.subr.mxu0 %v1565
        %1629 = vmatpush1.msra.mxu0 %v1564
        %1630 = vmatprep.subr.mxu0 %v1567
        %1631 = vmatpush1.msra.mxu0 %v1566
        %1632 = vmatprep.subr.mxu0 %v1569
        %1633 = vmatpush1.msra.mxu0 %v1568
        %1634 = vmatprep.subr.mxu0 %v1571
        %1635 = vmatpush1.msra.mxu0 %v1570
        %1636 = vmatprep.subr.mxu0 %v1573
        %1637 = vmatpush1.msra.mxu0 %v1572
        %1638 = vmatprep.subr.mxu0 %v1575
        %1639 = vmatpush1.msra.mxu0 %v1574
        %1640 = vmatprep.mubr.f32.mxu0 %v981
        %1641 = vmatmul.mubr.f32.gmra.mrb[0].mxu0 %v980
        %v1642 = vpop.f32.mrb[0].mxu0
        %v1643 = vadd.f32 0.0, %v1642
        %v1644 = vpop.f32.mrb[0].mxu0
        %v1645 = vadd.f32 0.0, %v1644
        %1646 = vmatprep.mubr.f32.mxu0 %v983
        %1647 = vmatmul.mubr.f32.gmra.mrb[0].mxu0 %v982
        %v1648 = vpop.f32.mrb[0].mxu0
        %v1649 = vadd.f32 0.0, %v1648
        %v1650 = vpop.f32.mrb[0].mxu0
        %v1651 = vadd.f32 0.0, %v1650
        %1652 = vmatprep.mubr.f32.mxu0 %v985
        %1653 = vmatmul.mubr.f32.gmra.mrb[0].mxu0 %v984
        %v1654 = vpop.f32.mrb[0].mxu0
        %v1655 = vadd.f32 0.0, %v1654
        %v1656 = vpop.f32.mrb[0].mxu0
        %v1657 = vadd.f32 0.0, %v1656
        %1658 = vmatprep.mubr.f32.mxu0 %v987
        %1659 = vmatmul.mubr.f32.gmra.mrb[0].mxu0 %v986
        %v1660 = vpop.f32.mrb[0].mxu0
        %v1661 = vadd.f32 0.0, %v1660
        %v1662 = vpop.f32.mrb[0].mxu0
        %v1663 = vadd.f32 0.0, %v1662
        %1664 = vdwg.mxu0
        %v1666 = vsel %vm830, %v1507, 0
        %v1669 = vsel %vm830, %v1508, 0
        %v1672 = vsel %vm830, %v1509, 0
        %v1675 = vsel %vm830, %v1510, 0
        %1677 = vmatprep.subr.mxu0 %v1645
        %1678 = vmatpush1.msra.mxu0 %v1643
        %1679 = vmatprep.subr.mxu0 %v1651
        %1680 = vmatpush1.msra.mxu0 %v1649
        %1681 = vmatprep.subr.mxu0 %v1657
        %1682 = vmatpush1.msra.mxu0 %v1655
        %1683 = vmatprep.subr.mxu0 %v1663
        %1684 = vmatpush1.msra.mxu0 %v1661
        %1685 = vmatprep.subr.mxu0 0.0
        %1686 = vmatpush1.msra.mxu0 0.0
        %1687 = vmatprep.subr.mxu0 0.0
        %1688 = vmatpush1.msra.mxu0 0.0
        %1689 = vmatprep.subr.mxu0 0.0
        %1690 = vmatpush1.msra.mxu0 0.0
        %1691 = vmatprep.subr.mxu0 0.0
        %1692 = vmatpush1.msra.mxu0 0.0
        %1693 = vmatprep.subr.mxu0 0.0
        %1694 = vmatpush1.msra.mxu0 0.0
        %1695 = vmatprep.subr.mxu0 0.0
        %1696 = vmatpush1.msra.mxu0 0.0
        %1697 = vmatprep.subr.mxu0 0.0
        %1698 = vmatpush1.msra.mxu0 0.0
        %1699 = vmatprep.subr.mxu0 0.0
        %1700 = vmatpush1.msra.mxu0 0.0
        %1701 = vmatprep.subr.mxu0 0.0
        %1702 = vmatpush1.msra.mxu0 0.0
        %1703 = vmatprep.subr.mxu0 0.0
        %1704 = vmatpush1.msra.mxu0 0.0
        %1705 = vmatprep.subr.mxu0 0.0
        %1706 = vmatpush1.msra.mxu0 0.0
        %1707 = vmatprep.subr.mxu0 0.0
        %1708 = vmatpush1.msra.mxu0 0.0
        %1709 = vmatprep.subr.mxu0 0.0
        %1710 = vmatpush1.msra.mxu0 0.0
        %1711 = vmatprep.subr.mxu0 0.0
        %1712 = vmatpush1.msra.mxu0 0.0
        %1713 = vmatprep.subr.mxu0 0.0
        %1714 = vmatpush1.msra.mxu0 0.0
        %1715 = vmatprep.subr.mxu0 0.0
        %1716 = vmatpush1.msra.mxu0 0.0
        %1717 = vmatprep.subr.mxu0 0.0
        %1718 = vmatpush1.msra.mxu0 0.0
        %1719 = vmatprep.subr.mxu0 0.0
        %1720 = vmatpush1.msra.mxu0 0.0
        %1721 = vmatprep.subr.mxu0 0.0
        %1722 = vmatpush1.msra.mxu0 0.0
        %1723 = vmatprep.subr.mxu0 0.0
        %1724 = vmatpush1.msra.mxu0 0.0
        %1725 = vmatprep.subr.mxu0 0.0
        %1726 = vmatpush1.msra.mxu0 0.0
        %1727 = vmatprep.subr.mxu0 0.0
        %1728 = vmatpush1.msra.mxu0 0.0
        %1729 = vmatprep.subr.mxu0 0.0
        %1730 = vmatpush1.msra.mxu0 0.0
        %1731 = vmatprep.subr.mxu0 0.0
        %1732 = vmatpush1.msra.mxu0 0.0
        %1733 = vmatprep.subr.mxu0 0.0
        %1734 = vmatpush1.msra.mxu0 0.0
        %1735 = vmatprep.subr.mxu0 0.0
        %1736 = vmatpush1.msra.mxu0 0.0
        %1737 = vmatprep.subr.mxu0 0.0
        %1738 = vmatpush1.msra.mxu0 0.0
        %1739 = vmatprep.subr.mxu0 0.0
        %1740 = vmatpush1.msra.mxu0 0.0
        %1741 = vmatprep.mubr.f32.mxu0 0.0
        %1742 = vmatmul.mubr.f32.gmra.mrb[0].mxu0 %v1666
        %v1743 = vpop.f32.mrb[0].mxu0
        %v1744 = vadd.f32 0.0, %v1743
        %v1745 = vpop.f32.mrb[0].mxu0
        %v1746 = vadd.f32 0.0, %v1745
        %1747 = vmatprep.mubr.f32.mxu0 0.0
        %1748 = vmatmul.mubr.f32.gmra.mrb[0].mxu0 %v1669
        %v1749 = vpop.f32.mrb[0].mxu0
        %v1750 = vadd.f32 0.0, %v1749
        %v1751 = vpop.f32.mrb[0].mxu0
        %v1752 = vadd.f32 0.0, %v1751
        %1753 = vmatprep.mubr.f32.mxu0 0.0
        %1754 = vmatmul.mubr.f32.gmra.mrb[0].mxu0 %v1672
        %v1755 = vpop.f32.mrb[0].mxu0
        %v1756 = vadd.f32 0.0, %v1755
        %v1757 = vpop.f32.mrb[0].mxu0
        %v1758 = vadd.f32 0.0, %v1757
        %1759 = vmatprep.mubr.f32.mxu0 0.0
        %1760 = vmatmul.mubr.f32.gmra.mrb[0].mxu0 %v1675
        %v1761 = vpop.f32.mrb[0].mxu0
        %v1762 = vadd.f32 0.0, %v1761
        %v1763 = vpop.f32.mrb[0].mxu0
        %v1764 = vadd.f32 0.0, %v1763
        %1765 = vdwg.mxu0
        %v1766 = vadd.f32 %v1484, %v1744
        %v1767 = vadd.f32 %v1486, %v1746
        %v1768 = vadd.f32 %v1490, %v1750
        %v1769 = vadd.f32 %v1492, %v1752
        %v1770 = vadd.f32 %v1496, %v1756
        %v1771 = vadd.f32 %v1498, %v1758
        %v1772 = vadd.f32 %v1502, %v1762
        %v1773 = vadd.f32 %v1504, %v1764
        %s1774 = scalar_lea.vmem [#allocation8], 96
        %v1775 = vld [vmem:[%s1774] sm:$0xff]
        %v1776 = vld [vmem:[%s1774 + $0x8] sm:$0xff]
        %v1777 = vld [vmem:[%s1774 + $0x10] sm:$0xff]
        %v1778 = vld [vmem:[%s1774 + $0x18] sm:$0xff]
        %s1779 = scalar_lea.vmem [#allocation13], 1536
        %v1780 = vld [vmem:[%s1779] sm:$0xff]
        %v1781 = vld [vmem:[%s1779 + $0x8] sm:$0xff]
        %v1782 = vld [vmem:[%s1779 + $0x10] sm:$0xff]
        %v1783 = vld [vmem:[%s1779 + $0x18] sm:$0xff]
        %v1784 = vld [vmem:[%s1779 + $0x20] sm:$0xff]
        %v1785 = vld [vmem:[%s1779 + $0x28] sm:$0xff]
        %v1786 = vld [vmem:[%s1779 + $0x30] sm:$0xff]
        %v1787 = vld [vmem:[%s1779 + $0x38] sm:$0xff]
        %v1788 = vld [vmem:[%s1779 + $0x40] sm:$0xff]
        %v1789 = vld [vmem:[%s1779 + $0x48] sm:$0xff]
        %v1790 = vld [vmem:[%s1779 + $0x50] sm:$0xff]
        %v1791 = vld [vmem:[%s1779 + $0x58] sm:$0xff]
        %v1792 = vld [vmem:[%s1779 + $0x60] sm:$0xff]
        %v1793 = vld [vmem:[%s1779 + $0x68] sm:$0xff]
        %v1794 = vld [vmem:[%s1779 + $0x70] sm:$0xff]
        %v1795 = vld [vmem:[%s1779 + $0x78] sm:$0xff]
        %v1796 = vld [vmem:[%s1779 + $0x80] sm:$0xff]
        %v1797 = vld [vmem:[%s1779 + $0x88] sm:$0xff]
        %v1798 = vld [vmem:[%s1779 + $0x90] sm:$0xff]
        %v1799 = vld [vmem:[%s1779 + $0x98] sm:$0xff]
        %v1800 = vld [vmem:[%s1779 + $0xa0] sm:$0xff]
        %v1801 = vld [vmem:[%s1779 + $0xa8] sm:$0xff]
        %v1802 = vld [vmem:[%s1779 + $0xb0] sm:$0xff]
        %v1803 = vld [vmem:[%s1779 + $0xb8] sm:$0xff]
        %v1804 = vld [vmem:[%s1779 + $0xc0] sm:$0xff]
        %v1805 = vld [vmem:[%s1779 + $0xc8] sm:$0xff]
        %v1806 = vld [vmem:[%s1779 + $0xd0] sm:$0xff]
        %v1807 = vld [vmem:[%s1779 + $0xd8] sm:$0xff]
        %v1808 = vld [vmem:[%s1779 + $0xe0] sm:$0xff]
        %v1809 = vld [vmem:[%s1779 + $0xe8] sm:$0xff]
        %v1810 = vld [vmem:[%s1779 + $0xf0] sm:$0xff]
        %v1811 = vld [vmem:[%s1779 + $0xf8] sm:$0xff]
        %v1812 = vld [vmem:[%s1779 + $0x100] sm:$0xff]
        %v1813 = vld [vmem:[%s1779 + $0x108] sm:$0xff]
        %v1814 = vld [vmem:[%s1779 + $0x110] sm:$0xff]
        %v1815 = vld [vmem:[%s1779 + $0x118] sm:$0xff]
        %v1816 = vld [vmem:[%s1779 + $0x120] sm:$0xff]
        %v1817 = vld [vmem:[%s1779 + $0x128] sm:$0xff]
        %v1818 = vld [vmem:[%s1779 + $0x130] sm:$0xff]
        %v1819 = vld [vmem:[%s1779 + $0x138] sm:$0xff]
        %v1820 = vld [vmem:[%s1779 + $0x140] sm:$0xff]
        %v1821 = vld [vmem:[%s1779 + $0x148] sm:$0xff]
        %v1822 = vld [vmem:[%s1779 + $0x150] sm:$0xff]
        %v1823 = vld [vmem:[%s1779 + $0x158] sm:$0xff]
        %v1824 = vld [vmem:[%s1779 + $0x160] sm:$0xff]
        %v1825 = vld [vmem:[%s1779 + $0x168] sm:$0xff]
        %v1826 = vld [vmem:[%s1779 + $0x170] sm:$0xff]
        %v1827 = vld [vmem:[%s1779 + $0x178] sm:$0xff]
        %v1828 = vld [vmem:[%s1779 + $0x180] sm:$0xff]
        %v1829 = vld [vmem:[%s1779 + $0x188] sm:$0xff]
        %v1830 = vld [vmem:[%s1779 + $0x190] sm:$0xff]
        %v1831 = vld [vmem:[%s1779 + $0x198] sm:$0xff]
        %v1832 = vld [vmem:[%s1779 + $0x1a0] sm:$0xff]
        %v1833 = vld [vmem:[%s1779 + $0x1a8] sm:$0xff]
        %v1834 = vld [vmem:[%s1779 + $0x1b0] sm:$0xff]
        %v1835 = vld [vmem:[%s1779 + $0x1b8] sm:$0xff]
        %v1836 = vld [vmem:[%s1779 + $0x1c0] sm:$0xff]
        %v1837 = vld [vmem:[%s1779 + $0x1c8] sm:$0xff]
        %v1838 = vld [vmem:[%s1779 + $0x1d0] sm:$0xff]
        %v1839 = vld [vmem:[%s1779 + $0x1d8] sm:$0xff]
        %v1840 = vld [vmem:[%s1779 + $0x1e0] sm:$0xff]
        %v1841 = vld [vmem:[%s1779 + $0x1e8] sm:$0xff]
        %v1842 = vld [vmem:[%s1779 + $0x1f0] sm:$0xff]
        %v1843 = vld [vmem:[%s1779 + $0x1f8] sm:$0xff]
        %1844 = vmatprep.subr.mxu0 %v1781
        %1845 = vmatpush1.msra.mxu0 %v1780
        %1846 = vmatprep.subr.mxu0 %v1783
        %1847 = vmatpush1.msra.mxu0 %v1782
        %1848 = vmatprep.subr.mxu0 %v1785
        %1849 = vmatpush1.msra.mxu0 %v1784
        %1850 = vmatprep.subr.mxu0 %v1787
        %1851 = vmatpush1.msra.mxu0 %v1786
        %1852 = vmatprep.subr.mxu0 %v1789
        %1853 = vmatpush1.msra.mxu0 %v1788
        %1854 = vmatprep.subr.mxu0 %v1791
        %1855 = vmatpush1.msra.mxu0 %v1790
        %1856 = vmatprep.subr.mxu0 %v1793
        %1857 = vmatpush1.msra.mxu0 %v1792
        %1858 = vmatprep.subr.mxu0 %v1795
        %1859 = vmatpush1.msra.mxu0 %v1794
        %1860 = vmatprep.subr.mxu0 %v1797
        %1861 = vmatpush1.msra.mxu0 %v1796
        %1862 = vmatprep.subr.mxu0 %v1799
        %1863 = vmatpush1.msra.mxu0 %v1798
        %1864 = vmatprep.subr.mxu0 %v1801
        %1865 = vmatpush1.msra.mxu0 %v1800
        %1866 = vmatprep.subr.mxu0 %v1803
        %1867 = vmatpush1.msra.mxu0 %v1802
        %1868 = vmatprep.subr.mxu0 %v1805
        %1869 = vmatpush1.msra.mxu0 %v1804
        %1870 = vmatprep.subr.mxu0 %v1807
        %1871 = vmatpush1.msra.mxu0 %v1806
        %1872 = vmatprep.subr.mxu0 %v1809
        %1873 = vmatpush1.msra.mxu0 %v1808
        %1874 = vmatprep.subr.mxu0 %v1811
        %1875 = vmatpush1.msra.mxu0 %v1810
        %1876 = vmatprep.subr.mxu0 %v1813
        %1877 = vmatpush1.msra.mxu0 %v1812
        %1878 = vmatprep.subr.mxu0 %v1815
        %1879 = vmatpush1.msra.mxu0 %v1814
        %1880 = vmatprep.subr.mxu0 %v1817
        %1881 = vmatpush1.msra.mxu0 %v1816
        %1882 = vmatprep.subr.mxu0 %v1819
        %1883 = vmatpush1.msra.mxu0 %v1818
        %1884 = vmatprep.subr.mxu0 %v1821
        %1885 = vmatpush1.msra.mxu0 %v1820
        %1886 = vmatprep.subr.mxu0 %v1823
        %1887 = vmatpush1.msra.mxu0 %v1822
        %1888 = vmatprep.subr.mxu0 %v1825
        %1889 = vmatpush1.msra.mxu0 %v1824
        %1890 = vmatprep.subr.mxu0 %v1827
        %1891 = vmatpush1.msra.mxu0 %v1826
        %1892 = vmatprep.subr.mxu0 %v1829
        %1893 = vmatpush1.msra.mxu0 %v1828
        %1894 = vmatprep.subr.mxu0 %v1831
        %1895 = vmatpush1.msra.mxu0 %v1830
        %1896 = vmatprep.subr.mxu0 %v1833
        %1897 = vmatpush1.msra.mxu0 %v1832
        %1898 = vmatprep.subr.mxu0 %v1835
        %1899 = vmatpush1.msra.mxu0 %v1834
        %1900 = vmatprep.subr.mxu0 %v1837
        %1901 = vmatpush1.msra.mxu0 %v1836
        %1902 = vmatprep.subr.mxu0 %v1839
        %1903 = vmatpush1.msra.mxu0 %v1838
        %1904 = vmatprep.subr.mxu0 %v1841
        %1905 = vmatpush1.msra.mxu0 %v1840
        %1906 = vmatprep.subr.mxu0 %v1843
        %1907 = vmatpush1.msra.mxu0 %v1842
        %1908 = vmatprep.mubr.f32.mxu0 %v981
        %1909 = vmatmul.mubr.f32.gmra.mrb[0].mxu0 %v980
        %v1910 = vpop.f32.mrb[0].mxu0
        %v1911 = vadd.f32 0.0, %v1910
        %v1912 = vpop.f32.mrb[0].mxu0
        %v1913 = vadd.f32 0.0, %v1912
        %1914 = vmatprep.mubr.f32.mxu0 %v983
        %1915 = vmatmul.mubr.f32.gmra.mrb[0].mxu0 %v982
        %v1916 = vpop.f32.mrb[0].mxu0
        %v1917 = vadd.f32 0.0, %v1916
        %v1918 = vpop.f32.mrb[0].mxu0
        %v1919 = vadd.f32 0.0, %v1918
        %1920 = vmatprep.mubr.f32.mxu0 %v985
        %1921 = vmatmul.mubr.f32.gmra.mrb[0].mxu0 %v984
        %v1922 = vpop.f32.mrb[0].mxu0
        %v1923 = vadd.f32 0.0, %v1922
        %v1924 = vpop.f32.mrb[0].mxu0
        %v1925 = vadd.f32 0.0, %v1924
        %1926 = vmatprep.mubr.f32.mxu0 %v987
        %1927 = vmatmul.mubr.f32.gmra.mrb[0].mxu0 %v986
        %v1928 = vpop.f32.mrb[0].mxu0
        %v1929 = vadd.f32 0.0, %v1928
        %v1930 = vpop.f32.mrb[0].mxu0
        %v1931 = vadd.f32 0.0, %v1930
        %1932 = vdwg.mxu0
        %v1934 = vsel %vm830, %v1775, 0
        %v1937 = vsel %vm830, %v1776, 0
        %v1940 = vsel %vm830, %v1777, 0
        %v1943 = vsel %vm830, %v1778, 0
        %1945 = vmatprep.subr.mxu0 %v1913
        %1946 = vmatpush1.msra.mxu0 %v1911
        %1947 = vmatprep.subr.mxu0 %v1919
        %1948 = vmatpush1.msra.mxu0 %v1917
        %1949 = vmatprep.subr.mxu0 %v1925
        %1950 = vmatpush1.msra.mxu0 %v1923
        %1951 = vmatprep.subr.mxu0 %v1931
        %1952 = vmatpush1.msra.mxu0 %v1929
        %1953 = vmatprep.subr.mxu0 0.0
        %1954 = vmatpush1.msra.mxu0 0.0
        %1955 = vmatprep.subr.mxu0 0.0
        %1956 = vmatpush1.msra.mxu0 0.0
        %1957 = vmatprep.subr.mxu0 0.0
        %1958 = vmatpush1.msra.mxu0 0.0
        %1959 = vmatprep.subr.mxu0 0.0
        %1960 = vmatpush1.msra.mxu0 0.0
        %1961 = vmatprep.subr.mxu0 0.0
        %1962 = vmatpush1.msra.mxu0 0.0
        %1963 = vmatprep.subr.mxu0 0.0
        %1964 = vmatpush1.msra.mxu0 0.0
        %1965 = vmatprep.subr.mxu0 0.0
        %1966 = vmatpush1.msra.mxu0 0.0
        %1967 = vmatprep.subr.mxu0 0.0
        %1968 = vmatpush1.msra.mxu0 0.0
        %1969 = vmatprep.subr.mxu0 0.0
        %1970 = vmatpush1.msra.mxu0 0.0
        %1971 = vmatprep.subr.mxu0 0.0
        %1972 = vmatpush1.msra.mxu0 0.0
        %1973 = vmatprep.subr.mxu0 0.0
        %1974 = vmatpush1.msra.mxu0 0.0
        %1975 = vmatprep.subr.mxu0 0.0
        %1976 = vmatpush1.msra.mxu0 0.0
        %1977 = vmatprep.subr.mxu0 0.0
        %1978 = vmatpush1.msra.mxu0 0.0
        %1979 = vmatprep.subr.mxu0 0.0
        %1980 = vmatpush1.msra.mxu0 0.0
        %1981 = vmatprep.subr.mxu0 0.0
        %1982 = vmatpush1.msra.mxu0 0.0
        %1983 = vmatprep.subr.mxu0 0.0
        %1984 = vmatpush1.msra.mxu0 0.0
        %1985 = vmatprep.subr.mxu0 0.0
        %1986 = vmatpush1.msra.mxu0 0.0
        %1987 = vmatprep.subr.mxu0 0.0
        %1988 = vmatpush1.msra.mxu0 0.0
        %1989 = vmatprep.subr.mxu0 0.0
        %1990 = vmatpush1.msra.mxu0 0.0
        %1991 = vmatprep.subr.mxu0 0.0
        %1992 = vmatpush1.msra.mxu0 0.0
        %1993 = vmatprep.subr.mxu0 0.0
        %1994 = vmatpush1.msra.mxu0 0.0
        %1995 = vmatprep.subr.mxu0 0.0
        %1996 = vmatpush1.msra.mxu0 0.0
        %1997 = vmatprep.subr.mxu0 0.0
        %1998 = vmatpush1.msra.mxu0 0.0
        %1999 = vmatprep.subr.mxu0 0.0
        %2000 = vmatpush1.msra.mxu0 0.0
        %2001 = vmatprep.subr.mxu0 0.0
        %2002 = vmatpush1.msra.mxu0 0.0
        %2003 = vmatprep.subr.mxu0 0.0
        %2004 = vmatpush1.msra.mxu0 0.0
        %2005 = vmatprep.subr.mxu0 0.0
        %2006 = vmatpush1.msra.mxu0 0.0
        %2007 = vmatprep.subr.mxu0 0.0
        %2008 = vmatpush1.msra.mxu0 0.0
        %2009 = vmatprep.mubr.f32.mxu0 0.0
        %2010 = vmatmul.mubr.f32.gmra.mrb[0].mxu0 %v1934
        %v2011 = vpop.f32.mrb[0].mxu0
        %v2012 = vadd.f32 0.0, %v2011
        %v2013 = vpop.f32.mrb[0].mxu0
        %v2014 = vadd.f32 0.0, %v2013
        %2015 = vmatprep.mubr.f32.mxu0 0.0
        %2016 = vmatmul.mubr.f32.gmra.mrb[0].mxu0 %v1937
        %v2017 = vpop.f32.mrb[0].mxu0
        %v2018 = vadd.f32 0.0, %v2017
        %v2019 = vpop.f32.mrb[0].mxu0
        %v2020 = vadd.f32 0.0, %v2019
        %2021 = vmatprep.mubr.f32.mxu0 0.0
        %2022 = vmatmul.mubr.f32.gmra.mrb[0].mxu0 %v1940
        %v2023 = vpop.f32.mrb[0].mxu0
        %v2024 = vadd.f32 0.0, %v2023
        %v2025 = vpop.f32.mrb[0].mxu0
        %v2026 = vadd.f32 0.0, %v2025
        %2027 = vmatprep.mubr.f32.mxu0 0.0
        %2028 = vmatmul.mubr.f32.gmra.mrb[0].mxu0 %v1943
        %v2029 = vpop.f32.mrb[0].mxu0
        %v2030 = vadd.f32 0.0, %v2029
        %v2031 = vpop.f32.mrb[0].mxu0
        %v2032 = vadd.f32 0.0, %v2031
        %2033 = vdwg.mxu0
        %v2034 = vadd.f32 %v1766, %v2012
        %v2035 = vadd.f32 %v1767, %v2014
        %v2036 = vadd.f32 %v1768, %v2018
        %v2037 = vadd.f32 %v1769, %v2020
        %v2038 = vadd.f32 %v1770, %v2024
        %v2039 = vadd.f32 %v1771, %v2026
        %v2040 = vadd.f32 %v1772, %v2030
        %v2041 = vadd.f32 %v1773, %v2032
        %s2042 = scalar_lea.vmem [#allocation8], 128
        %v2043 = vld [vmem:[%s2042] sm:$0xff]
        %v2044 = vld [vmem:[%s2042 + $0x8] sm:$0xff]
        %v2045 = vld [vmem:[%s2042 + $0x10] sm:$0xff]
        %v2046 = vld [vmem:[%s2042 + $0x18] sm:$0xff]
        %s2047 = scalar_lea.vmem [#allocation13], 2048
        %v2048 = vld [vmem:[%s2047] sm:$0xff]
        %v2049 = vld [vmem:[%s2047 + $0x8] sm:$0xff]
        %v2050 = vld [vmem:[%s2047 + $0x10] sm:$0xff]
        %v2051 = vld [vmem:[%s2047 + $0x18] sm:$0xff]
        %v2052 = vld [vmem:[%s2047 + $0x20] sm:$0xff]
        %v2053 = vld [vmem:[%s2047 + $0x28] sm:$0xff]
        %v2054 = vld [vmem:[%s2047 + $0x30] sm:$0xff]
        %v2055 = vld [vmem:[%s2047 + $0x38] sm:$0xff]
        %v2056 = vld [vmem:[%s2047 + $0x40] sm:$0xff]
        %v2057 = vld [vmem:[%s2047 + $0x48] sm:$0xff]
        %v2058 = vld [vmem:[%s2047 + $0x50] sm:$0xff]
        %v2059 = vld [vmem:[%s2047 + $0x58] sm:$0xff]
        %v2060 = vld [vmem:[%s2047 + $0x60] sm:$0xff]
        %v2061 = vld [vmem:[%s2047 + $0x68] sm:$0xff]
        %v2062 = vld [vmem:[%s2047 + $0x70] sm:$0xff]
        %v2063 = vld [vmem:[%s2047 + $0x78] sm:$0xff]
        %v2064 = vld [vmem:[%s2047 + $0x80] sm:$0xff]
        %v2065 = vld [vmem:[%s2047 + $0x88] sm:$0xff]
        %v2066 = vld [vmem:[%s2047 + $0x90] sm:$0xff]
        %v2067 = vld [vmem:[%s2047 + $0x98] sm:$0xff]
        %v2068 = vld [vmem:[%s2047 + $0xa0] sm:$0xff]
        %v2069 = vld [vmem:[%s2047 + $0xa8] sm:$0xff]
        %v2070 = vld [vmem:[%s2047 + $0xb0] sm:$0xff]
        %v2071 = vld [vmem:[%s2047 + $0xb8] sm:$0xff]
        %v2072 = vld [vmem:[%s2047 + $0xc0] sm:$0xff]
        %v2073 = vld [vmem:[%s2047 + $0xc8] sm:$0xff]
        %v2074 = vld [vmem:[%s2047 + $0xd0] sm:$0xff]
        %v2075 = vld [vmem:[%s2047 + $0xd8] sm:$0xff]
        %v2076 = vld [vmem:[%s2047 + $0xe0] sm:$0xff]
        %v2077 = vld [vmem:[%s2047 + $0xe8] sm:$0xff]
        %v2078 = vld [vmem:[%s2047 + $0xf0] sm:$0xff]
        %v2079 = vld [vmem:[%s2047 + $0xf8] sm:$0xff]
        %v2080 = vld [vmem:[%s2047 + $0x100] sm:$0xff]
        %v2081 = vld [vmem:[%s2047 + $0x108] sm:$0xff]
        %v2082 = vld [vmem:[%s2047 + $0x110] sm:$0xff]
        %v2083 = vld [vmem:[%s2047 + $0x118] sm:$0xff]
        %v2084 = vld [vmem:[%s2047 + $0x120] sm:$0xff]
        %v2085 = vld [vmem:[%s2047 + $0x128] sm:$0xff]
        %v2086 = vld [vmem:[%s2047 + $0x130] sm:$0xff]
        %v2087 = vld [vmem:[%s2047 + $0x138] sm:$0xff]
        %v2088 = vld [vmem:[%s2047 + $0x140] sm:$0xff]
        %v2089 = vld [vmem:[%s2047 + $0x148] sm:$0xff]
        %v2090 = vld [vmem:[%s2047 + $0x150] sm:$0xff]
        %v2091 = vld [vmem:[%s2047 + $0x158] sm:$0xff]
        %v2092 = vld [vmem:[%s2047 + $0x160] sm:$0xff]
        %v2093 = vld [vmem:[%s2047 + $0x168] sm:$0xff]
        %v2094 = vld [vmem:[%s2047 + $0x170] sm:$0xff]
        %v2095 = vld [vmem:[%s2047 + $0x178] sm:$0xff]
        %v2096 = vld [vmem:[%s2047 + $0x180] sm:$0xff]
        %v2097 = vld [vmem:[%s2047 + $0x188] sm:$0xff]
        %v2098 = vld [vmem:[%s2047 + $0x190] sm:$0xff]
        %v2099 = vld [vmem:[%s2047 + $0x198] sm:$0xff]
        %v2100 = vld [vmem:[%s2047 + $0x1a0] sm:$0xff]
        %v2101 = vld [vmem:[%s2047 + $0x1a8] sm:$0xff]
        %v2102 = vld [vmem:[%s2047 + $0x1b0] sm:$0xff]
        %v2103 = vld [vmem:[%s2047 + $0x1b8] sm:$0xff]
        %v2104 = vld [vmem:[%s2047 + $0x1c0] sm:$0xff]
        %v2105 = vld [vmem:[%s2047 + $0x1c8] sm:$0xff]
        %v2106 = vld [vmem:[%s2047 + $0x1d0] sm:$0xff]
        %v2107 = vld [vmem:[%s2047 + $0x1d8] sm:$0xff]
        %v2108 = vld [vmem:[%s2047 + $0x1e0] sm:$0xff]
        %v2109 = vld [vmem:[%s2047 + $0x1e8] sm:$0xff]
        %v2110 = vld [vmem:[%s2047 + $0x1f0] sm:$0xff]
        %v2111 = vld [vmem:[%s2047 + $0x1f8] sm:$0xff]
        %2112 = vmatprep.subr.mxu0 %v2049
        %2113 = vmatpush1.msra.mxu0 %v2048
        %2114 = vmatprep.subr.mxu0 %v2051
        %2115 = vmatpush1.msra.mxu0 %v2050
        %2116 = vmatprep.subr.mxu0 %v2053
        %2117 = vmatpush1.msra.mxu0 %v2052
        %2118 = vmatprep.subr.mxu0 %v2055
        %2119 = vmatpush1.msra.mxu0 %v2054
        %2120 = vmatprep.subr.mxu0 %v2057
        %2121 = vmatpush1.msra.mxu0 %v2056
        %2122 = vmatprep.subr.mxu0 %v2059
        %2123 = vmatpush1.msra.mxu0 %v2058
        %2124 = vmatprep.subr.mxu0 %v2061
        %2125 = vmatpush1.msra.mxu0 %v2060
        %2126 = vmatprep.subr.mxu0 %v2063
        %2127 = vmatpush1.msra.mxu0 %v2062
        %2128 = vmatprep.subr.mxu0 %v2065
        %2129 = vmatpush1.msra.mxu0 %v2064
        %2130 = vmatprep.subr.mxu0 %v2067
        %2131 = vmatpush1.msra.mxu0 %v2066
        %2132 = vmatprep.subr.mxu0 %v2069
        %2133 = vmatpush1.msra.mxu0 %v2068
        %2134 = vmatprep.subr.mxu0 %v2071
        %2135 = vmatpush1.msra.mxu0 %v2070
        %2136 = vmatprep.subr.mxu0 %v2073
        %2137 = vmatpush1.msra.mxu0 %v2072
        %2138 = vmatprep.subr.mxu0 %v2075
        %2139 = vmatpush1.msra.mxu0 %v2074
        %2140 = vmatprep.subr.mxu0 %v2077
        %2141 = vmatpush1.msra.mxu0 %v2076
        %2142 = vmatprep.subr.mxu0 %v2079
        %2143 = vmatpush1.msra.mxu0 %v2078
        %2144 = vmatprep.subr.mxu0 %v2081
        %2145 = vmatpush1.msra.mxu0 %v2080
        %2146 = vmatprep.subr.mxu0 %v2083
        %2147 = vmatpush1.msra.mxu0 %v2082
        %2148 = vmatprep.subr.mxu0 %v2085
        %2149 = vmatpush1.msra.mxu0 %v2084
        %2150 = vmatprep.subr.mxu0 %v2087
        %2151 = vmatpush1.msra.mxu0 %v2086
        %2152 = vmatprep.subr.mxu0 %v2089
        %2153 = vmatpush1.msra.mxu0 %v2088
        %2154 = vmatprep.subr.mxu0 %v2091
        %2155 = vmatpush1.msra.mxu0 %v2090
        %2156 = vmatprep.subr.mxu0 %v2093
        %2157 = vmatpush1.msra.mxu0 %v2092
        %2158 = vmatprep.subr.mxu0 %v2095
        %2159 = vmatpush1.msra.mxu0 %v2094
        %2160 = vmatprep.subr.mxu0 %v2097
        %2161 = vmatpush1.msra.mxu0 %v2096
        %2162 = vmatprep.subr.mxu0 %v2099
        %2163 = vmatpush1.msra.mxu0 %v2098
        %2164 = vmatprep.subr.mxu0 %v2101
        %2165 = vmatpush1.msra.mxu0 %v2100
        %2166 = vmatprep.subr.mxu0 %v2103
        %2167 = vmatpush1.msra.mxu0 %v2102
        %2168 = vmatprep.subr.mxu0 %v2105
        %2169 = vmatpush1.msra.mxu0 %v2104
        %2170 = vmatprep.subr.mxu0 %v2107
        %2171 = vmatpush1.msra.mxu0 %v2106
        %2172 = vmatprep.subr.mxu0 %v2109
        %2173 = vmatpush1.msra.mxu0 %v2108
        %2174 = vmatprep.subr.mxu0 %v2111
        %2175 = vmatpush1.msra.mxu0 %v2110
        %2176 = vmatprep.mubr.f32.mxu0 %v981
        %2177 = vmatmul.mubr.f32.gmra.mrb[0].mxu0 %v980
        %v2178 = vpop.f32.mrb[0].mxu0
        %v2179 = vadd.f32 0.0, %v2178
        %v2180 = vpop.f32.mrb[0].mxu0
        %v2181 = vadd.f32 0.0, %v2180
        %2182 = vmatprep.mubr.f32.mxu0 %v983
        %2183 = vmatmul.mubr.f32.gmra.mrb[0].mxu0 %v982
        %v2184 = vpop.f32.mrb[0].mxu0
        %v2185 = vadd.f32 0.0, %v2184
        %v2186 = vpop.f32.mrb[0].mxu0
        %v2187 = vadd.f32 0.0, %v2186
        %2188 = vmatprep.mubr.f32.mxu0 %v985
        %2189 = vmatmul.mubr.f32.gmra.mrb[0].mxu0 %v984
        %v2190 = vpop.f32.mrb[0].mxu0
        %v2191 = vadd.f32 0.0, %v2190
        %v2192 = vpop.f32.mrb[0].mxu0
        %v2193 = vadd.f32 0.0, %v2192
        %2194 = vmatprep.mubr.f32.mxu0 %v987
        %2195 = vmatmul.mubr.f32.gmra.mrb[0].mxu0 %v986
        %v2196 = vpop.f32.mrb[0].mxu0
        %v2197 = vadd.f32 0.0, %v2196
        %v2198 = vpop.f32.mrb[0].mxu0
        %v2199 = vadd.f32 0.0, %v2198
        %2200 = vdwg.mxu0
        %v2202 = vsel %vm830, %v2043, 0
        %v2205 = vsel %vm830, %v2044, 0
        %v2208 = vsel %vm830, %v2045, 0
        %v2211 = vsel %vm830, %v2046, 0
        %2213 = vmatprep.subr.mxu0 %v2181
        %2214 = vmatpush1.msra.mxu0 %v2179
        %2215 = vmatprep.subr.mxu0 %v2187
        %2216 = vmatpush1.msra.mxu0 %v2185
        %2217 = vmatprep.subr.mxu0 %v2193
        %2218 = vmatpush1.msra.mxu0 %v2191
        %2219 = vmatprep.subr.mxu0 %v2199
        %2220 = vmatpush1.msra.mxu0 %v2197
        %2221 = vmatprep.subr.mxu0 0.0
        %2222 = vmatpush1.msra.mxu0 0.0
        %2223 = vmatprep.subr.mxu0 0.0
        %2224 = vmatpush1.msra.mxu0 0.0
        %2225 = vmatprep.subr.mxu0 0.0
        %2226 = vmatpush1.msra.mxu0 0.0
        %2227 = vmatprep.subr.mxu0 0.0
        %2228 = vmatpush1.msra.mxu0 0.0
        %2229 = vmatprep.subr.mxu0 0.0
        %2230 = vmatpush1.msra.mxu0 0.0
        %2231 = vmatprep.subr.mxu0 0.0
        %2232 = vmatpush1.msra.mxu0 0.0
        %2233 = vmatprep.subr.mxu0 0.0
        %2234 = vmatpush1.msra.mxu0 0.0
        %2235 = vmatprep.subr.mxu0 0.0
        %2236 = vmatpush1.msra.mxu0 0.0
        %2237 = vmatprep.subr.mxu0 0.0
        %2238 = vmatpush1.msra.mxu0 0.0
        %2239 = vmatprep.subr.mxu0 0.0
        %2240 = vmatpush1.msra.mxu0 0.0
        %2241 = vmatprep.subr.mxu0 0.0
        %2242 = vmatpush1.msra.mxu0 0.0
        %2243 = vmatprep.subr.mxu0 0.0
        %2244 = vmatpush1.msra.mxu0 0.0
        %2245 = vmatprep.subr.mxu0 0.0
        %2246 = vmatpush1.msra.mxu0 0.0
        %2247 = vmatprep.subr.mxu0 0.0
        %2248 = vmatpush1.msra.mxu0 0.0
        %2249 = vmatprep.subr.mxu0 0.0
        %2250 = vmatpush1.msra.mxu0 0.0
        %2251 = vmatprep.subr.mxu0 0.0
        %2252 = vmatpush1.msra.mxu0 0.0
        %2253 = vmatprep.subr.mxu0 0.0
        %2254 = vmatpush1.msra.mxu0 0.0
        %2255 = vmatprep.subr.mxu0 0.0
        %2256 = vmatpush1.msra.mxu0 0.0
        %2257 = vmatprep.subr.mxu0 0.0
        %2258 = vmatpush1.msra.mxu0 0.0
        %2259 = vmatprep.subr.mxu0 0.0
        %2260 = vmatpush1.msra.mxu0 0.0
        %2261 = vmatprep.subr.mxu0 0.0
        %2262 = vmatpush1.msra.mxu0 0.0
        %2263 = vmatprep.subr.mxu0 0.0
        %2264 = vmatpush1.msra.mxu0 0.0
        %2265 = vmatprep.subr.mxu0 0.0
        %2266 = vmatpush1.msra.mxu0 0.0
        %2267 = vmatprep.subr.mxu0 0.0
        %2268 = vmatpush1.msra.mxu0 0.0
        %2269 = vmatprep.subr.mxu0 0.0
        %2270 = vmatpush1.msra.mxu0 0.0
        %2271 = vmatprep.subr.mxu0 0.0
        %2272 = vmatpush1.msra.mxu0 0.0
        %2273 = vmatprep.subr.mxu0 0.0
        %2274 = vmatpush1.msra.mxu0 0.0
        %2275 = vmatprep.subr.mxu0 0.0
        %2276 = vmatpush1.msra.mxu0 0.0
        %2277 = vmatprep.mubr.f32.mxu0 0.0
        %2278 = vmatmul.mubr.f32.gmra.mrb[0].mxu0 %v2202
        %v2279 = vpop.f32.mrb[0].mxu0
        %v2280 = vadd.f32 0.0, %v2279
        %v2281 = vpop.f32.mrb[0].mxu0
        %v2282 = vadd.f32 0.0, %v2281
        %2283 = vmatprep.mubr.f32.mxu0 0.0
        %2284 = vmatmul.mubr.f32.gmra.mrb[0].mxu0 %v2205
        %v2285 = vpop.f32.mrb[0].mxu0
        %v2286 = vadd.f32 0.0, %v2285
        %v2287 = vpop.f32.mrb[0].mxu0
        %v2288 = vadd.f32 0.0, %v2287
        %2289 = vmatprep.mubr.f32.mxu0 0.0
        %2290 = vmatmul.mubr.f32.gmra.mrb[0].mxu0 %v2208
        %v2291 = vpop.f32.mrb[0].mxu0
        %v2292 = vadd.f32 0.0, %v2291
        %v2293 = vpop.f32.mrb[0].mxu0
        %v2294 = vadd.f32 0.0, %v2293
        %2295 = vmatprep.mubr.f32.mxu0 0.0
        %2296 = vmatmul.mubr.f32.gmra.mrb[0].mxu0 %v2211
        %v2297 = vpop.f32.mrb[0].mxu0
        %v2298 = vadd.f32 0.0, %v2297
        %v2299 = vpop.f32.mrb[0].mxu0
        %v2300 = vadd.f32 0.0, %v2299
        %2301 = vdwg.mxu0
        %v2302 = vadd.f32 %v2034, %v2280
        %v2303 = vadd.f32 %v2035, %v2282
        %v2304 = vadd.f32 %v2036, %v2286
        %v2305 = vadd.f32 %v2037, %v2288
        %v2306 = vadd.f32 %v2038, %v2292
        %v2307 = vadd.f32 %v2039, %v2294
        %v2308 = vadd.f32 %v2040, %v2298
        %v2309 = vadd.f32 %v2041, %v2300
        %s2310 = scalar_lea.vmem [#allocation8], 160
        %v2311 = vld [vmem:[%s2310] sm:$0xff]
        %v2312 = vld [vmem:[%s2310 + $0x8] sm:$0xff]
        %v2313 = vld [vmem:[%s2310 + $0x10] sm:$0xff]
        %v2314 = vld [vmem:[%s2310 + $0x18] sm:$0xff]
        %s2315 = scalar_lea.vmem [#allocation13], 2560
        %v2316 = vld [vmem:[%s2315] sm:$0xff]
        %v2317 = vld [vmem:[%s2315 + $0x8] sm:$0xff]
        %v2318 = vld [vmem:[%s2315 + $0x10] sm:$0xff]
        %v2319 = vld [vmem:[%s2315 + $0x18] sm:$0xff]
        %v2320 = vld [vmem:[%s2315 + $0x20] sm:$0xff]
        %v2321 = vld [vmem:[%s2315 + $0x28] sm:$0xff]
        %v2322 = vld [vmem:[%s2315 + $0x30] sm:$0xff]
        %v2323 = vld [vmem:[%s2315 + $0x38] sm:$0xff]
        %v2324 = vld [vmem:[%s2315 + $0x40] sm:$0xff]
        %v2325 = vld [vmem:[%s2315 + $0x48] sm:$0xff]
        %v2326 = vld [vmem:[%s2315 + $0x50] sm:$0xff]
        %v2327 = vld [vmem:[%s2315 + $0x58] sm:$0xff]
        %v2328 = vld [vmem:[%s2315 + $0x60] sm:$0xff]
        %v2329 = vld [vmem:[%s2315 + $0x68] sm:$0xff]
        %v2330 = vld [vmem:[%s2315 + $0x70] sm:$0xff]
        %v2331 = vld [vmem:[%s2315 + $0x78] sm:$0xff]
        %v2332 = vld [vmem:[%s2315 + $0x80] sm:$0xff]
        %v2333 = vld [vmem:[%s2315 + $0x88] sm:$0xff]
        %v2334 = vld [vmem:[%s2315 + $0x90] sm:$0xff]
        %v2335 = vld [vmem:[%s2315 + $0x98] sm:$0xff]
        %v2336 = vld [vmem:[%s2315 + $0xa0] sm:$0xff]
        %v2337 = vld [vmem:[%s2315 + $0xa8] sm:$0xff]
        %v2338 = vld [vmem:[%s2315 + $0xb0] sm:$0xff]
        %v2339 = vld [vmem:[%s2315 + $0xb8] sm:$0xff]
        %v2340 = vld [vmem:[%s2315 + $0xc0] sm:$0xff]
        %v2341 = vld [vmem:[%s2315 + $0xc8] sm:$0xff]
        %v2342 = vld [vmem:[%s2315 + $0xd0] sm:$0xff]
        %v2343 = vld [vmem:[%s2315 + $0xd8] sm:$0xff]
        %v2344 = vld [vmem:[%s2315 + $0xe0] sm:$0xff]
        %v2345 = vld [vmem:[%s2315 + $0xe8] sm:$0xff]
        %v2346 = vld [vmem:[%s2315 + $0xf0] sm:$0xff]
        %v2347 = vld [vmem:[%s2315 + $0xf8] sm:$0xff]
        %v2348 = vld [vmem:[%s2315 + $0x100] sm:$0xff]
        %v2349 = vld [vmem:[%s2315 + $0x108] sm:$0xff]
        %v2350 = vld [vmem:[%s2315 + $0x110] sm:$0xff]
        %v2351 = vld [vmem:[%s2315 + $0x118] sm:$0xff]
        %v2352 = vld [vmem:[%s2315 + $0x120] sm:$0xff]
        %v2353 = vld [vmem:[%s2315 + $0x128] sm:$0xff]
        %v2354 = vld [vmem:[%s2315 + $0x130] sm:$0xff]
        %v2355 = vld [vmem:[%s2315 + $0x138] sm:$0xff]
        %v2356 = vld [vmem:[%s2315 + $0x140] sm:$0xff]
        %v2357 = vld [vmem:[%s2315 + $0x148] sm:$0xff]
        %v2358 = vld [vmem:[%s2315 + $0x150] sm:$0xff]
        %v2359 = vld [vmem:[%s2315 + $0x158] sm:$0xff]
        %v2360 = vld [vmem:[%s2315 + $0x160] sm:$0xff]
        %v2361 = vld [vmem:[%s2315 + $0x168] sm:$0xff]
        %v2362 = vld [vmem:[%s2315 + $0x170] sm:$0xff]
        %v2363 = vld [vmem:[%s2315 + $0x178] sm:$0xff]
        %v2364 = vld [vmem:[%s2315 + $0x180] sm:$0xff]
        %v2365 = vld [vmem:[%s2315 + $0x188] sm:$0xff]
        %v2366 = vld [vmem:[%s2315 + $0x190] sm:$0xff]
        %v2367 = vld [vmem:[%s2315 + $0x198] sm:$0xff]
        %v2368 = vld [vmem:[%s2315 + $0x1a0] sm:$0xff]
        %v2369 = vld [vmem:[%s2315 + $0x1a8] sm:$0xff]
        %v2370 = vld [vmem:[%s2315 + $0x1b0] sm:$0xff]
        %v2371 = vld [vmem:[%s2315 + $0x1b8] sm:$0xff]
        %v2372 = vld [vmem:[%s2315 + $0x1c0] sm:$0xff]
        %v2373 = vld [vmem:[%s2315 + $0x1c8] sm:$0xff]
        %v2374 = vld [vmem:[%s2315 + $0x1d0] sm:$0xff]
        %v2375 = vld [vmem:[%s2315 + $0x1d8] sm:$0xff]
        %v2376 = vld [vmem:[%s2315 + $0x1e0] sm:$0xff]
        %v2377 = vld [vmem:[%s2315 + $0x1e8] sm:$0xff]
        %v2378 = vld [vmem:[%s2315 + $0x1f0] sm:$0xff]
        %v2379 = vld [vmem:[%s2315 + $0x1f8] sm:$0xff]
        %2380 = vmatprep.subr.mxu0 %v2317
        %2381 = vmatpush1.msra.mxu0 %v2316
        %2382 = vmatprep.subr.mxu0 %v2319
        %2383 = vmatpush1.msra.mxu0 %v2318
        %2384 = vmatprep.subr.mxu0 %v2321
        %2385 = vmatpush1.msra.mxu0 %v2320
        %2386 = vmatprep.subr.mxu0 %v2323
        %2387 = vmatpush1.msra.mxu0 %v2322
        %2388 = vmatprep.subr.mxu0 %v2325
        %2389 = vmatpush1.msra.mxu0 %v2324
        %2390 = vmatprep.subr.mxu0 %v2327
        %2391 = vmatpush1.msra.mxu0 %v2326
        %2392 = vmatprep.subr.mxu0 %v2329
        %2393 = vmatpush1.msra.mxu0 %v2328
        %2394 = vmatprep.subr.mxu0 %v2331
        %2395 = vmatpush1.msra.mxu0 %v2330
        %2396 = vmatprep.subr.mxu0 %v2333
        %2397 = vmatpush1.msra.mxu0 %v2332
        %2398 = vmatprep.subr.mxu0 %v2335
        %2399 = vmatpush1.msra.mxu0 %v2334
        %2400 = vmatprep.subr.mxu0 %v2337
        %2401 = vmatpush1.msra.mxu0 %v2336
        %2402 = vmatprep.subr.mxu0 %v2339
        %2403 = vmatpush1.msra.mxu0 %v2338
        %2404 = vmatprep.subr.mxu0 %v2341
        %2405 = vmatpush1.msra.mxu0 %v2340
        %2406 = vmatprep.subr.mxu0 %v2343
        %2407 = vmatpush1.msra.mxu0 %v2342
        %2408 = vmatprep.subr.mxu0 %v2345
        %2409 = vmatpush1.msra.mxu0 %v2344
        %2410 = vmatprep.subr.mxu0 %v2347
        %2411 = vmatpush1.msra.mxu0 %v2346
        %2412 = vmatprep.subr.mxu0 %v2349
        %2413 = vmatpush1.msra.mxu0 %v2348
        %2414 = vmatprep.subr.mxu0 %v2351
        %2415 = vmatpush1.msra.mxu0 %v2350
        %2416 = vmatprep.subr.mxu0 %v2353
        %2417 = vmatpush1.msra.mxu0 %v2352
        %2418 = vmatprep.subr.mxu0 %v2355
        %2419 = vmatpush1.msra.mxu0 %v2354
        %2420 = vmatprep.subr.mxu0 %v2357
        %2421 = vmatpush1.msra.mxu0 %v2356
        %2422 = vmatprep.subr.mxu0 %v2359
        %2423 = vmatpush1.msra.mxu0 %v2358
        %2424 = vmatprep.subr.mxu0 %v2361
        %2425 = vmatpush1.msra.mxu0 %v2360
        %2426 = vmatprep.subr.mxu0 %v2363
        %2427 = vmatpush1.msra.mxu0 %v2362
        %2428 = vmatprep.subr.mxu0 %v2365
        %2429 = vmatpush1.msra.mxu0 %v2364
        %2430 = vmatprep.subr.mxu0 %v2367
        %2431 = vmatpush1.msra.mxu0 %v2366
        %2432 = vmatprep.subr.mxu0 %v2369
        %2433 = vmatpush1.msra.mxu0 %v2368
        %2434 = vmatprep.subr.mxu0 %v2371
        %2435 = vmatpush1.msra.mxu0 %v2370
        %2436 = vmatprep.subr.mxu0 %v2373
        %2437 = vmatpush1.msra.mxu0 %v2372
        %2438 = vmatprep.subr.mxu0 %v2375
        %2439 = vmatpush1.msra.mxu0 %v2374
        %2440 = vmatprep.subr.mxu0 %v2377
        %2441 = vmatpush1.msra.mxu0 %v2376
        %2442 = vmatprep.subr.mxu0 %v2379
        %2443 = vmatpush1.msra.mxu0 %v2378
        %2444 = vmatprep.mubr.f32.mxu0 %v981
        %2445 = vmatmul.mubr.f32.gmra.mrb[0].mxu0 %v980
        %v2446 = vpop.f32.mrb[0].mxu0
        %v2447 = vadd.f32 0.0, %v2446
        %v2448 = vpop.f32.mrb[0].mxu0
        %v2449 = vadd.f32 0.0, %v2448
        %2450 = vmatprep.mubr.f32.mxu0 %v983
        %2451 = vmatmul.mubr.f32.gmra.mrb[0].mxu0 %v982
        %v2452 = vpop.f32.mrb[0].mxu0
        %v2453 = vadd.f32 0.0, %v2452
        %v2454 = vpop.f32.mrb[0].mxu0
        %v2455 = vadd.f32 0.0, %v2454
        %2456 = vmatprep.mubr.f32.mxu0 %v985
        %2457 = vmatmul.mubr.f32.gmra.mrb[0].mxu0 %v984
        %v2458 = vpop.f32.mrb[0].mxu0
        %v2459 = vadd.f32 0.0, %v2458
        %v2460 = vpop.f32.mrb[0].mxu0
        %v2461 = vadd.f32 0.0, %v2460
        %2462 = vmatprep.mubr.f32.mxu0 %v987
        %2463 = vmatmul.mubr.f32.gmra.mrb[0].mxu0 %v986
        %v2464 = vpop.f32.mrb[0].mxu0
        %v2465 = vadd.f32 0.0, %v2464
        %v2466 = vpop.f32.mrb[0].mxu0
        %v2467 = vadd.f32 0.0, %v2466
        %2468 = vdwg.mxu0
        %v2470 = vsel %vm830, %v2311, 0
        %v2473 = vsel %vm830, %v2312, 0
        %v2476 = vsel %vm830, %v2313, 0
        %v2479 = vsel %vm830, %v2314, 0
        %2481 = vmatprep.subr.mxu0 %v2449
        %2482 = vmatpush1.msra.mxu0 %v2447
        %2483 = vmatprep.subr.mxu0 %v2455
        %2484 = vmatpush1.msra.mxu0 %v2453
        %2485 = vmatprep.subr.mxu0 %v2461
        %2486 = vmatpush1.msra.mxu0 %v2459
        %2487 = vmatprep.subr.mxu0 %v2467
        %2488 = vmatpush1.msra.mxu0 %v2465
        %2489 = vmatprep.subr.mxu0 0.0
        %2490 = vmatpush1.msra.mxu0 0.0
        %2491 = vmatprep.subr.mxu0 0.0
        %2492 = vmatpush1.msra.mxu0 0.0
        %2493 = vmatprep.subr.mxu0 0.0
        %2494 = vmatpush1.msra.mxu0 0.0
        %2495 = vmatprep.subr.mxu0 0.0
        %2496 = vmatpush1.msra.mxu0 0.0
        %2497 = vmatprep.subr.mxu0 0.0
        %2498 = vmatpush1.msra.mxu0 0.0
        %2499 = vmatprep.subr.mxu0 0.0
        %2500 = vmatpush1.msra.mxu0 0.0
        %2501 = vmatprep.subr.mxu0 0.0
        %2502 = vmatpush1.msra.mxu0 0.0
        %2503 = vmatprep.subr.mxu0 0.0
        %2504 = vmatpush1.msra.mxu0 0.0
        %2505 = vmatprep.subr.mxu0 0.0
        %2506 = vmatpush1.msra.mxu0 0.0
        %2507 = vmatprep.subr.mxu0 0.0
        %2508 = vmatpush1.msra.mxu0 0.0
        %2509 = vmatprep.subr.mxu0 0.0
        %2510 = vmatpush1.msra.mxu0 0.0
        %2511 = vmatprep.subr.mxu0 0.0
        %2512 = vmatpush1.msra.mxu0 0.0
        %2513 = vmatprep.subr.mxu0 0.0
        %2514 = vmatpush1.msra.mxu0 0.0
        %2515 = vmatprep.subr.mxu0 0.0
        %2516 = vmatpush1.msra.mxu0 0.0
        %2517 = vmatprep.subr.mxu0 0.0
        %2518 = vmatpush1.msra.mxu0 0.0
        %2519 = vmatprep.subr.mxu0 0.0
        %2520 = vmatpush1.msra.mxu0 0.0
        %2521 = vmatprep.subr.mxu0 0.0
        %2522 = vmatpush1.msra.mxu0 0.0
        %2523 = vmatprep.subr.mxu0 0.0
        %2524 = vmatpush1.msra.mxu0 0.0
        %2525 = vmatprep.subr.mxu0 0.0
        %2526 = vmatpush1.msra.mxu0 0.0
        %2527 = vmatprep.subr.mxu0 0.0
        %2528 = vmatpush1.msra.mxu0 0.0
        %2529 = vmatprep.subr.mxu0 0.0
        %2530 = vmatpush1.msra.mxu0 0.0
        %2531 = vmatprep.subr.mxu0 0.0
        %2532 = vmatpush1.msra.mxu0 0.0
        %2533 = vmatprep.subr.mxu0 0.0
        %2534 = vmatpush1.msra.mxu0 0.0
        %2535 = vmatprep.subr.mxu0 0.0
        %2536 = vmatpush1.msra.mxu0 0.0
        %2537 = vmatprep.subr.mxu0 0.0
        %2538 = vmatpush1.msra.mxu0 0.0
        %2539 = vmatprep.subr.mxu0 0.0
        %2540 = vmatpush1.msra.mxu0 0.0
        %2541 = vmatprep.subr.mxu0 0.0
        %2542 = vmatpush1.msra.mxu0 0.0
        %2543 = vmatprep.subr.mxu0 0.0
        %2544 = vmatpush1.msra.mxu0 0.0
        %2545 = vmatprep.mubr.f32.mxu0 0.0
        %2546 = vmatmul.mubr.f32.gmra.mrb[0].mxu0 %v2470
        %v2547 = vpop.f32.mrb[0].mxu0
        %v2548 = vadd.f32 0.0, %v2547
        %v2549 = vpop.f32.mrb[0].mxu0
        %v2550 = vadd.f32 0.0, %v2549
        %2551 = vmatprep.mubr.f32.mxu0 0.0
        %2552 = vmatmul.mubr.f32.gmra.mrb[0].mxu0 %v2473
        %v2553 = vpop.f32.mrb[0].mxu0
        %v2554 = vadd.f32 0.0, %v2553
        %v2555 = vpop.f32.mrb[0].mxu0
        %v2556 = vadd.f32 0.0, %v2555
        %2557 = vmatprep.mubr.f32.mxu0 0.0
        %2558 = vmatmul.mubr.f32.gmra.mrb[0].mxu0 %v2476
        %v2559 = vpop.f32.mrb[0].mxu0
        %v2560 = vadd.f32 0.0, %v2559
        %v2561 = vpop.f32.mrb[0].mxu0
        %v2562 = vadd.f32 0.0, %v2561
        %2563 = vmatprep.mubr.f32.mxu0 0.0
        %2564 = vmatmul.mubr.f32.gmra.mrb[0].mxu0 %v2479
        %v2565 = vpop.f32.mrb[0].mxu0
        %v2566 = vadd.f32 0.0, %v2565
        %v2567 = vpop.f32.mrb[0].mxu0
        %v2568 = vadd.f32 0.0, %v2567
        %2569 = vdwg.mxu0
        %v2570 = vadd.f32 %v2302, %v2548
        %v2571 = vadd.f32 %v2303, %v2550
        %v2572 = vadd.f32 %v2304, %v2554
        %v2573 = vadd.f32 %v2305, %v2556
        %v2574 = vadd.f32 %v2306, %v2560
        %v2575 = vadd.f32 %v2307, %v2562
        %v2576 = vadd.f32 %v2308, %v2566
        %v2577 = vadd.f32 %v2309, %v2568
        %s2578 = scalar_lea.vmem [#allocation8], 192
        %v2579 = vld [vmem:[%s2578] sm:$0xff]
        %v2580 = vld [vmem:[%s2578 + $0x8] sm:$0xff]
        %v2581 = vld [vmem:[%s2578 + $0x10] sm:$0xff]
        %v2582 = vld [vmem:[%s2578 + $0x18] sm:$0xff]
        %s2583 = scalar_lea.vmem [#allocation13], 3072
        %v2584 = vld [vmem:[%s2583] sm:$0xff]
        %v2585 = vld [vmem:[%s2583 + $0x8] sm:$0xff]
        %v2586 = vld [vmem:[%s2583 + $0x10] sm:$0xff]
        %v2587 = vld [vmem:[%s2583 + $0x18] sm:$0xff]
        %v2588 = vld [vmem:[%s2583 + $0x20] sm:$0xff]
        %v2589 = vld [vmem:[%s2583 + $0x28] sm:$0xff]
        %v2590 = vld [vmem:[%s2583 + $0x30] sm:$0xff]
        %v2591 = vld [vmem:[%s2583 + $0x38] sm:$0xff]
        %v2592 = vld [vmem:[%s2583 + $0x40] sm:$0xff]
        %v2593 = vld [vmem:[%s2583 + $0x48] sm:$0xff]
        %v2594 = vld [vmem:[%s2583 + $0x50] sm:$0xff]
        %v2595 = vld [vmem:[%s2583 + $0x58] sm:$0xff]
        %v2596 = vld [vmem:[%s2583 + $0x60] sm:$0xff]
        %v2597 = vld [vmem:[%s2583 + $0x68] sm:$0xff]
        %v2598 = vld [vmem:[%s2583 + $0x70] sm:$0xff]
        %v2599 = vld [vmem:[%s2583 + $0x78] sm:$0xff]
        %v2600 = vld [vmem:[%s2583 + $0x80] sm:$0xff]
        %v2601 = vld [vmem:[%s2583 + $0x88] sm:$0xff]
        %v2602 = vld [vmem:[%s2583 + $0x90] sm:$0xff]
        %v2603 = vld [vmem:[%s2583 + $0x98] sm:$0xff]
        %v2604 = vld [vmem:[%s2583 + $0xa0] sm:$0xff]
        %v2605 = vld [vmem:[%s2583 + $0xa8] sm:$0xff]
        %v2606 = vld [vmem:[%s2583 + $0xb0] sm:$0xff]
        %v2607 = vld [vmem:[%s2583 + $0xb8] sm:$0xff]
        %v2608 = vld [vmem:[%s2583 + $0xc0] sm:$0xff]
        %v2609 = vld [vmem:[%s2583 + $0xc8] sm:$0xff]
        %v2610 = vld [vmem:[%s2583 + $0xd0] sm:$0xff]
        %v2611 = vld [vmem:[%s2583 + $0xd8] sm:$0xff]
        %v2612 = vld [vmem:[%s2583 + $0xe0] sm:$0xff]
        %v2613 = vld [vmem:[%s2583 + $0xe8] sm:$0xff]
        %v2614 = vld [vmem:[%s2583 + $0xf0] sm:$0xff]
        %v2615 = vld [vmem:[%s2583 + $0xf8] sm:$0xff]
        %v2616 = vld [vmem:[%s2583 + $0x100] sm:$0xff]
        %v2617 = vld [vmem:[%s2583 + $0x108] sm:$0xff]
        %v2618 = vld [vmem:[%s2583 + $0x110] sm:$0xff]
        %v2619 = vld [vmem:[%s2583 + $0x118] sm:$0xff]
        %v2620 = vld [vmem:[%s2583 + $0x120] sm:$0xff]
        %v2621 = vld [vmem:[%s2583 + $0x128] sm:$0xff]
        %v2622 = vld [vmem:[%s2583 + $0x130] sm:$0xff]
        %v2623 = vld [vmem:[%s2583 + $0x138] sm:$0xff]
        %v2624 = vld [vmem:[%s2583 + $0x140] sm:$0xff]
        %v2625 = vld [vmem:[%s2583 + $0x148] sm:$0xff]
        %v2626 = vld [vmem:[%s2583 + $0x150] sm:$0xff]
        %v2627 = vld [vmem:[%s2583 + $0x158] sm:$0xff]
        %v2628 = vld [vmem:[%s2583 + $0x160] sm:$0xff]
        %v2629 = vld [vmem:[%s2583 + $0x168] sm:$0xff]
        %v2630 = vld [vmem:[%s2583 + $0x170] sm:$0xff]
        %v2631 = vld [vmem:[%s2583 + $0x178] sm:$0xff]
        %v2632 = vld [vmem:[%s2583 + $0x180] sm:$0xff]
        %v2633 = vld [vmem:[%s2583 + $0x188] sm:$0xff]
        %v2634 = vld [vmem:[%s2583 + $0x190] sm:$0xff]
        %v2635 = vld [vmem:[%s2583 + $0x198] sm:$0xff]
        %v2636 = vld [vmem:[%s2583 + $0x1a0] sm:$0xff]
        %v2637 = vld [vmem:[%s2583 + $0x1a8] sm:$0xff]
        %v2638 = vld [vmem:[%s2583 + $0x1b0] sm:$0xff]
        %v2639 = vld [vmem:[%s2583 + $0x1b8] sm:$0xff]
        %v2640 = vld [vmem:[%s2583 + $0x1c0] sm:$0xff]
        %v2641 = vld [vmem:[%s2583 + $0x1c8] sm:$0xff]
        %v2642 = vld [vmem:[%s2583 + $0x1d0] sm:$0xff]
        %v2643 = vld [vmem:[%s2583 + $0x1d8] sm:$0xff]
        %v2644 = vld [vmem:[%s2583 + $0x1e0] sm:$0xff]
        %v2645 = vld [vmem:[%s2583 + $0x1e8] sm:$0xff]
        %v2646 = vld [vmem:[%s2583 + $0x1f0] sm:$0xff]
        %v2647 = vld [vmem:[%s2583 + $0x1f8] sm:$0xff]
        %2648 = vmatprep.subr.mxu0 %v2585
        %2649 = vmatpush1.msra.mxu0 %v2584
        %2650 = vmatprep.subr.mxu0 %v2587
        %2651 = vmatpush1.msra.mxu0 %v2586
        %2652 = vmatprep.subr.mxu0 %v2589
        %2653 = vmatpush1.msra.mxu0 %v2588
        %2654 = vmatprep.subr.mxu0 %v2591
        %2655 = vmatpush1.msra.mxu0 %v2590
        %2656 = vmatprep.subr.mxu0 %v2593
        %2657 = vmatpush1.msra.mxu0 %v2592
        %2658 = vmatprep.subr.mxu0 %v2595
        %2659 = vmatpush1.msra.mxu0 %v2594
        %2660 = vmatprep.subr.mxu0 %v2597
        %2661 = vmatpush1.msra.mxu0 %v2596
        %2662 = vmatprep.subr.mxu0 %v2599
        %2663 = vmatpush1.msra.mxu0 %v2598
        %2664 = vmatprep.subr.mxu0 %v2601
        %2665 = vmatpush1.msra.mxu0 %v2600
        %2666 = vmatprep.subr.mxu0 %v2603
        %2667 = vmatpush1.msra.mxu0 %v2602
        %2668 = vmatprep.subr.mxu0 %v2605
        %2669 = vmatpush1.msra.mxu0 %v2604
        %2670 = vmatprep.subr.mxu0 %v2607
        %2671 = vmatpush1.msra.mxu0 %v2606
        %2672 = vmatprep.subr.mxu0 %v2609
        %2673 = vmatpush1.msra.mxu0 %v2608
        %2674 = vmatprep.subr.mxu0 %v2611
        %2675 = vmatpush1.msra.mxu0 %v2610
        %2676 = vmatprep.subr.mxu0 %v2613
        %2677 = vmatpush1.msra.mxu0 %v2612
        %2678 = vmatprep.subr.mxu0 %v2615
        %2679 = vmatpush1.msra.mxu0 %v2614
        %2680 = vmatprep.subr.mxu0 %v2617
        %2681 = vmatpush1.msra.mxu0 %v2616
        %2682 = vmatprep.subr.mxu0 %v2619
        %2683 = vmatpush1.msra.mxu0 %v2618
        %2684 = vmatprep.subr.mxu0 %v2621
        %2685 = vmatpush1.msra.mxu0 %v2620
        %2686 = vmatprep.subr.mxu0 %v2623
        %2687 = vmatpush1.msra.mxu0 %v2622
        %2688 = vmatprep.subr.mxu0 %v2625
        %2689 = vmatpush1.msra.mxu0 %v2624
        %2690 = vmatprep.subr.mxu0 %v2627
        %2691 = vmatpush1.msra.mxu0 %v2626
        %2692 = vmatprep.subr.mxu0 %v2629
        %2693 = vmatpush1.msra.mxu0 %v2628
        %2694 = vmatprep.subr.mxu0 %v2631
        %2695 = vmatpush1.msra.mxu0 %v2630
        %2696 = vmatprep.subr.mxu0 %v2633
        %2697 = vmatpush1.msra.mxu0 %v2632
        %2698 = vmatprep.subr.mxu0 %v2635
        %2699 = vmatpush1.msra.mxu0 %v2634
        %2700 = vmatprep.subr.mxu0 %v2637
        %2701 = vmatpush1.msra.mxu0 %v2636
        %2702 = vmatprep.subr.mxu0 %v2639
        %2703 = vmatpush1.msra.mxu0 %v2638
        %2704 = vmatprep.subr.mxu0 %v2641
        %2705 = vmatpush1.msra.mxu0 %v2640
        %2706 = vmatprep.subr.mxu0 %v2643
        %2707 = vmatpush1.msra.mxu0 %v2642
        %2708 = vmatprep.subr.mxu0 %v2645
        %2709 = vmatpush1.msra.mxu0 %v2644
        %2710 = vmatprep.subr.mxu0 %v2647
        %2711 = vmatpush1.msra.mxu0 %v2646
        %2712 = vmatprep.mubr.f32.mxu0 %v981
        %2713 = vmatmul.mubr.f32.gmra.mrb[0].mxu0 %v980
        %v2714 = vpop.f32.mrb[0].mxu0
        %v2715 = vadd.f32 0.0, %v2714
        %v2716 = vpop.f32.mrb[0].mxu0
        %v2717 = vadd.f32 0.0, %v2716
        %2718 = vmatprep.mubr.f32.mxu0 %v983
        %2719 = vmatmul.mubr.f32.gmra.mrb[0].mxu0 %v982
        %v2720 = vpop.f32.mrb[0].mxu0
        %v2721 = vadd.f32 0.0, %v2720
        %v2722 = vpop.f32.mrb[0].mxu0
        %v2723 = vadd.f32 0.0, %v2722
        %2724 = vmatprep.mubr.f32.mxu0 %v985
        %2725 = vmatmul.mubr.f32.gmra.mrb[0].mxu0 %v984
        %v2726 = vpop.f32.mrb[0].mxu0
        %v2727 = vadd.f32 0.0, %v2726
        %v2728 = vpop.f32.mrb[0].mxu0
        %v2729 = vadd.f32 0.0, %v2728
        %2730 = vmatprep.mubr.f32.mxu0 %v987
        %2731 = vmatmul.mubr.f32.gmra.mrb[0].mxu0 %v986
        %v2732 = vpop.f32.mrb[0].mxu0
        %v2733 = vadd.f32 0.0, %v2732
        %v2734 = vpop.f32.mrb[0].mxu0
        %v2735 = vadd.f32 0.0, %v2734
        %2736 = vdwg.mxu0
        %v2738 = vsel %vm830, %v2579, 0
        %v2741 = vsel %vm830, %v2580, 0
        %v2744 = vsel %vm830, %v2581, 0
        %v2747 = vsel %vm830, %v2582, 0
        %2749 = vmatprep.subr.mxu0 %v2717
        %2750 = vmatpush1.msra.mxu0 %v2715
        %2751 = vmatprep.subr.mxu0 %v2723
        %2752 = vmatpush1.msra.mxu0 %v2721
        %2753 = vmatprep.subr.mxu0 %v2729
        %2754 = vmatpush1.msra.mxu0 %v2727
        %2755 = vmatprep.subr.mxu0 %v2735
        %2756 = vmatpush1.msra.mxu0 %v2733
        %2757 = vmatprep.subr.mxu0 0.0
        %2758 = vmatpush1.msra.mxu0 0.0
        %2759 = vmatprep.subr.mxu0 0.0
        %2760 = vmatpush1.msra.mxu0 0.0
        %2761 = vmatprep.subr.mxu0 0.0
        %2762 = vmatpush1.msra.mxu0 0.0
        %2763 = vmatprep.subr.mxu0 0.0
        %2764 = vmatpush1.msra.mxu0 0.0
        %2765 = vmatprep.subr.mxu0 0.0
        %2766 = vmatpush1.msra.mxu0 0.0
        %2767 = vmatprep.subr.mxu0 0.0
        %2768 = vmatpush1.msra.mxu0 0.0
        %2769 = vmatprep.subr.mxu0 0.0
        %2770 = vmatpush1.msra.mxu0 0.0
        %2771 = vmatprep.subr.mxu0 0.0
        %2772 = vmatpush1.msra.mxu0 0.0
        %2773 = vmatprep.subr.mxu0 0.0
        %2774 = vmatpush1.msra.mxu0 0.0
        %2775 = vmatprep.subr.mxu0 0.0
        %2776 = vmatpush1.msra.mxu0 0.0
        %2777 = vmatprep.subr.mxu0 0.0
        %2778 = vmatpush1.msra.mxu0 0.0
        %2779 = vmatprep.subr.mxu0 0.0
        %2780 = vmatpush1.msra.mxu0 0.0
        %2781 = vmatprep.subr.mxu0 0.0
        %2782 = vmatpush1.msra.mxu0 0.0
        %2783 = vmatprep.subr.mxu0 0.0
        %2784 = vmatpush1.msra.mxu0 0.0
        %2785 = vmatprep.subr.mxu0 0.0
        %2786 = vmatpush1.msra.mxu0 0.0
        %2787 = vmatprep.subr.mxu0 0.0
        %2788 = vmatpush1.msra.mxu0 0.0
        %2789 = vmatprep.subr.mxu0 0.0
        %2790 = vmatpush1.msra.mxu0 0.0
        %2791 = vmatprep.subr.mxu0 0.0
        %2792 = vmatpush1.msra.mxu0 0.0
        %2793 = vmatprep.subr.mxu0 0.0
        %2794 = vmatpush1.msra.mxu0 0.0
        %2795 = vmatprep.subr.mxu0 0.0
        %2796 = vmatpush1.msra.mxu0 0.0
        %2797 = vmatprep.subr.mxu0 0.0
        %2798 = vmatpush1.msra.mxu0 0.0
        %2799 = vmatprep.subr.mxu0 0.0
        %2800 = vmatpush1.msra.mxu0 0.0
        %2801 = vmatprep.subr.mxu0 0.0
        %2802 = vmatpush1.msra.mxu0 0.0
        %2803 = vmatprep.subr.mxu0 0.0
        %2804 = vmatpush1.msra.mxu0 0.0
        %2805 = vmatprep.subr.mxu0 0.0
        %2806 = vmatpush1.msra.mxu0 0.0
        %2807 = vmatprep.subr.mxu0 0.0
        %2808 = vmatpush1.msra.mxu0 0.0
        %2809 = vmatprep.subr.mxu0 0.0
        %2810 = vmatpush1.msra.mxu0 0.0
        %2811 = vmatprep.subr.mxu0 0.0
        %2812 = vmatpush1.msra.mxu0 0.0
        %2813 = vmatprep.mubr.f32.mxu0 0.0
        %2814 = vmatmul.mubr.f32.gmra.mrb[0].mxu0 %v2738
        %v2815 = vpop.f32.mrb[0].mxu0
        %v2816 = vadd.f32 0.0, %v2815
        %v2817 = vpop.f32.mrb[0].mxu0
        %v2818 = vadd.f32 0.0, %v2817
        %2819 = vmatprep.mubr.f32.mxu0 0.0
        %2820 = vmatmul.mubr.f32.gmra.mrb[0].mxu0 %v2741
        %v2821 = vpop.f32.mrb[0].mxu0
        %v2822 = vadd.f32 0.0, %v2821
        %v2823 = vpop.f32.mrb[0].mxu0
        %v2824 = vadd.f32 0.0, %v2823
        %2825 = vmatprep.mubr.f32.mxu0 0.0
        %2826 = vmatmul.mubr.f32.gmra.mrb[0].mxu0 %v2744
        %v2827 = vpop.f32.mrb[0].mxu0
        %v2828 = vadd.f32 0.0, %v2827
        %v2829 = vpop.f32.mrb[0].mxu0
        %v2830 = vadd.f32 0.0, %v2829
        %2831 = vmatprep.mubr.f32.mxu0 0.0
        %2832 = vmatmul.mubr.f32.gmra.mrb[0].mxu0 %v2747
        %v2833 = vpop.f32.mrb[0].mxu0
        %v2834 = vadd.f32 0.0, %v2833
        %v2835 = vpop.f32.mrb[0].mxu0
        %v2836 = vadd.f32 0.0, %v2835
        %2837 = vdwg.mxu0
        %v2838 = vadd.f32 %v2570, %v2816
        %v2839 = vadd.f32 %v2571, %v2818
        %v2840 = vadd.f32 %v2572, %v2822
        %v2841 = vadd.f32 %v2573, %v2824
        %v2842 = vadd.f32 %v2574, %v2828
        %v2843 = vadd.f32 %v2575, %v2830
        %v2844 = vadd.f32 %v2576, %v2834
        %v2845 = vadd.f32 %v2577, %v2836
        %s2846 = scalar_lea.vmem [#allocation8], 224
        %v2847 = vld [vmem:[%s2846] sm:$0xff]
        %v2848 = vld [vmem:[%s2846 + $0x8] sm:$0xff]
        %v2849 = vld [vmem:[%s2846 + $0x10] sm:$0xff]
        %v2850 = vld [vmem:[%s2846 + $0x18] sm:$0xff]
        %s2851 = scalar_lea.vmem [#allocation13], 3584
        %v2852 = vld [vmem:[%s2851] sm:$0xff]
        %v2853 = vld [vmem:[%s2851 + $0x8] sm:$0xff]
        %v2854 = vld [vmem:[%s2851 + $0x10] sm:$0xff]
        %v2855 = vld [vmem:[%s2851 + $0x18] sm:$0xff]
        %v2856 = vld [vmem:[%s2851 + $0x20] sm:$0xff]
        %v2857 = vld [vmem:[%s2851 + $0x28] sm:$0xff]
        %v2858 = vld [vmem:[%s2851 + $0x30] sm:$0xff]
        %v2859 = vld [vmem:[%s2851 + $0x38] sm:$0xff]
        %v2860 = vld [vmem:[%s2851 + $0x40] sm:$0xff]
        %v2861 = vld [vmem:[%s2851 + $0x48] sm:$0xff]
        %v2862 = vld [vmem:[%s2851 + $0x50] sm:$0xff]
        %v2863 = vld [vmem:[%s2851 + $0x58] sm:$0xff]
        %v2864 = vld [vmem:[%s2851 + $0x60] sm:$0xff]
        %v2865 = vld [vmem:[%s2851 + $0x68] sm:$0xff]
        %v2866 = vld [vmem:[%s2851 + $0x70] sm:$0xff]
        %v2867 = vld [vmem:[%s2851 + $0x78] sm:$0xff]
        %v2868 = vld [vmem:[%s2851 + $0x80] sm:$0xff]
        %v2869 = vld [vmem:[%s2851 + $0x88] sm:$0xff]
        %v2870 = vld [vmem:[%s2851 + $0x90] sm:$0xff]
        %v2871 = vld [vmem:[%s2851 + $0x98] sm:$0xff]
        %v2872 = vld [vmem:[%s2851 + $0xa0] sm:$0xff]
        %v2873 = vld [vmem:[%s2851 + $0xa8] sm:$0xff]
        %v2874 = vld [vmem:[%s2851 + $0xb0] sm:$0xff]
        %v2875 = vld [vmem:[%s2851 + $0xb8] sm:$0xff]
        %v2876 = vld [vmem:[%s2851 + $0xc0] sm:$0xff]
        %v2877 = vld [vmem:[%s2851 + $0xc8] sm:$0xff]
        %v2878 = vld [vmem:[%s2851 + $0xd0] sm:$0xff]
        %v2879 = vld [vmem:[%s2851 + $0xd8] sm:$0xff]
        %v2880 = vld [vmem:[%s2851 + $0xe0] sm:$0xff]
        %v2881 = vld [vmem:[%s2851 + $0xe8] sm:$0xff]
        %v2882 = vld [vmem:[%s2851 + $0xf0] sm:$0xff]
        %v2883 = vld [vmem:[%s2851 + $0xf8] sm:$0xff]
        %v2884 = vld [vmem:[%s2851 + $0x100] sm:$0xff]
        %v2885 = vld [vmem:[%s2851 + $0x108] sm:$0xff]
        %v2886 = vld [vmem:[%s2851 + $0x110] sm:$0xff]
        %v2887 = vld [vmem:[%s2851 + $0x118] sm:$0xff]
        %v2888 = vld [vmem:[%s2851 + $0x120] sm:$0xff]
        %v2889 = vld [vmem:[%s2851 + $0x128] sm:$0xff]
        %v2890 = vld [vmem:[%s2851 + $0x130] sm:$0xff]
        %v2891 = vld [vmem:[%s2851 + $0x138] sm:$0xff]
        %v2892 = vld [vmem:[%s2851 + $0x140] sm:$0xff]
        %v2893 = vld [vmem:[%s2851 + $0x148] sm:$0xff]
        %v2894 = vld [vmem:[%s2851 + $0x150] sm:$0xff]
        %v2895 = vld [vmem:[%s2851 + $0x158] sm:$0xff]
        %v2896 = vld [vmem:[%s2851 + $0x160] sm:$0xff]
        %v2897 = vld [vmem:[%s2851 + $0x168] sm:$0xff]
        %v2898 = vld [vmem:[%s2851 + $0x170] sm:$0xff]
        %v2899 = vld [vmem:[%s2851 + $0x178] sm:$0xff]
        %v2900 = vld [vmem:[%s2851 + $0x180] sm:$0xff]
        %v2901 = vld [vmem:[%s2851 + $0x188] sm:$0xff]
        %v2902 = vld [vmem:[%s2851 + $0x190] sm:$0xff]
        %v2903 = vld [vmem:[%s2851 + $0x198] sm:$0xff]
        %v2904 = vld [vmem:[%s2851 + $0x1a0] sm:$0xff]
        %v2905 = vld [vmem:[%s2851 + $0x1a8] sm:$0xff]
        %v2906 = vld [vmem:[%s2851 + $0x1b0] sm:$0xff]
        %v2907 = vld [vmem:[%s2851 + $0x1b8] sm:$0xff]
        %v2908 = vld [vmem:[%s2851 + $0x1c0] sm:$0xff]
        %v2909 = vld [vmem:[%s2851 + $0x1c8] sm:$0xff]
        %v2910 = vld [vmem:[%s2851 + $0x1d0] sm:$0xff]
        %v2911 = vld [vmem:[%s2851 + $0x1d8] sm:$0xff]
        %v2912 = vld [vmem:[%s2851 + $0x1e0] sm:$0xff]
        %v2913 = vld [vmem:[%s2851 + $0x1e8] sm:$0xff]
        %v2914 = vld [vmem:[%s2851 + $0x1f0] sm:$0xff]
        %v2915 = vld [vmem:[%s2851 + $0x1f8] sm:$0xff]
        %2916 = vmatprep.subr.mxu0 %v2853
        %2917 = vmatpush1.msra.mxu0 %v2852
        %2918 = vmatprep.subr.mxu0 %v2855
        %2919 = vmatpush1.msra.mxu0 %v2854
        %2920 = vmatprep.subr.mxu0 %v2857
        %2921 = vmatpush1.msra.mxu0 %v2856
        %2922 = vmatprep.subr.mxu0 %v2859
        %2923 = vmatpush1.msra.mxu0 %v2858
        %2924 = vmatprep.subr.mxu0 %v2861
        %2925 = vmatpush1.msra.mxu0 %v2860
        %2926 = vmatprep.subr.mxu0 %v2863
        %2927 = vmatpush1.msra.mxu0 %v2862
        %2928 = vmatprep.subr.mxu0 %v2865
        %2929 = vmatpush1.msra.mxu0 %v2864
        %2930 = vmatprep.subr.mxu0 %v2867
        %2931 = vmatpush1.msra.mxu0 %v2866
        %2932 = vmatprep.subr.mxu0 %v2869
        %2933 = vmatpush1.msra.mxu0 %v2868
        %2934 = vmatprep.subr.mxu0 %v2871
        %2935 = vmatpush1.msra.mxu0 %v2870
        %2936 = vmatprep.subr.mxu0 %v2873
        %2937 = vmatpush1.msra.mxu0 %v2872
        %2938 = vmatprep.subr.mxu0 %v2875
        %2939 = vmatpush1.msra.mxu0 %v2874
        %2940 = vmatprep.subr.mxu0 %v2877
        %2941 = vmatpush1.msra.mxu0 %v2876
        %2942 = vmatprep.subr.mxu0 %v2879
        %2943 = vmatpush1.msra.mxu0 %v2878
        %2944 = vmatprep.subr.mxu0 %v2881
        %2945 = vmatpush1.msra.mxu0 %v2880
        %2946 = vmatprep.subr.mxu0 %v2883
        %2947 = vmatpush1.msra.mxu0 %v2882
        %2948 = vmatprep.subr.mxu0 %v2885
        %2949 = vmatpush1.msra.mxu0 %v2884
        %2950 = vmatprep.subr.mxu0 %v2887
        %2951 = vmatpush1.msra.mxu0 %v2886
        %2952 = vmatprep.subr.mxu0 %v2889
        %2953 = vmatpush1.msra.mxu0 %v2888
        %2954 = vmatprep.subr.mxu0 %v2891
        %2955 = vmatpush1.msra.mxu0 %v2890
        %2956 = vmatprep.subr.mxu0 %v2893
        %2957 = vmatpush1.msra.mxu0 %v2892
        %2958 = vmatprep.subr.mxu0 %v2895
        %2959 = vmatpush1.msra.mxu0 %v2894
        %2960 = vmatprep.subr.mxu0 %v2897
        %2961 = vmatpush1.msra.mxu0 %v2896
        %2962 = vmatprep.subr.mxu0 %v2899
        %2963 = vmatpush1.msra.mxu0 %v2898
        %2964 = vmatprep.subr.mxu0 %v2901
        %2965 = vmatpush1.msra.mxu0 %v2900
        %2966 = vmatprep.subr.mxu0 %v2903
        %2967 = vmatpush1.msra.mxu0 %v2902
        %2968 = vmatprep.subr.mxu0 %v2905
        %2969 = vmatpush1.msra.mxu0 %v2904
        %2970 = vmatprep.subr.mxu0 %v2907
        %2971 = vmatpush1.msra.mxu0 %v2906
        %2972 = vmatprep.subr.mxu0 %v2909
        %2973 = vmatpush1.msra.mxu0 %v2908
        %2974 = vmatprep.subr.mxu0 %v2911
        %2975 = vmatpush1.msra.mxu0 %v2910
        %2976 = vmatprep.subr.mxu0 %v2913
        %2977 = vmatpush1.msra.mxu0 %v2912
        %2978 = vmatprep.subr.mxu0 %v2915
        %2979 = vmatpush1.msra.mxu0 %v2914
        %2980 = vmatprep.mubr.f32.mxu0 %v981
        %2981 = vmatmul.mubr.f32.gmra.mrb[0].mxu0 %v980
        %v2982 = vpop.f32.mrb[0].mxu0
        %v2983 = vadd.f32 0.0, %v2982
        %v2984 = vpop.f32.mrb[0].mxu0
        %v2985 = vadd.f32 0.0, %v2984
        %2986 = vmatprep.mubr.f32.mxu0 %v983
        %2987 = vmatmul.mubr.f32.gmra.mrb[0].mxu0 %v982
        %v2988 = vpop.f32.mrb[0].mxu0
        %v2989 = vadd.f32 0.0, %v2988
        %v2990 = vpop.f32.mrb[0].mxu0
        %v2991 = vadd.f32 0.0, %v2990
        %2992 = vmatprep.mubr.f32.mxu0 %v985
        %2993 = vmatmul.mubr.f32.gmra.mrb[0].mxu0 %v984
        %v2994 = vpop.f32.mrb[0].mxu0
        %v2995 = vadd.f32 0.0, %v2994
        %v2996 = vpop.f32.mrb[0].mxu0
        %v2997 = vadd.f32 0.0, %v2996
        %2998 = vmatprep.mubr.f32.mxu0 %v987
        %2999 = vmatmul.mubr.f32.gmra.mrb[0].mxu0 %v986
        %v3000 = vpop.f32.mrb[0].mxu0
        %v3001 = vadd.f32 0.0, %v3000
        %v3002 = vpop.f32.mrb[0].mxu0
        %v3003 = vadd.f32 0.0, %v3002
        %3004 = vdwg.mxu0
        %v3006 = vsel %vm830, %v2847, 0
        %v3009 = vsel %vm830, %v2848, 0
        %v3012 = vsel %vm830, %v2849, 0
        %v3015 = vsel %vm830, %v2850, 0
        %3017 = vmatprep.subr.mxu0 %v2985
        %3018 = vmatpush1.msra.mxu0 %v2983
        %3019 = vmatprep.subr.mxu0 %v2991
        %3020 = vmatpush1.msra.mxu0 %v2989
        %3021 = vmatprep.subr.mxu0 %v2997
        %3022 = vmatpush1.msra.mxu0 %v2995
        %3023 = vmatprep.subr.mxu0 %v3003
        %3024 = vmatpush1.msra.mxu0 %v3001
        %3025 = vmatprep.subr.mxu0 0.0
        %3026 = vmatpush1.msra.mxu0 0.0
        %3027 = vmatprep.subr.mxu0 0.0
        %3028 = vmatpush1.msra.mxu0 0.0
        %3029 = vmatprep.subr.mxu0 0.0
        %3030 = vmatpush1.msra.mxu0 0.0
        %3031 = vmatprep.subr.mxu0 0.0
        %3032 = vmatpush1.msra.mxu0 0.0
        %3033 = vmatprep.subr.mxu0 0.0
        %3034 = vmatpush1.msra.mxu0 0.0
        %3035 = vmatprep.subr.mxu0 0.0
        %3036 = vmatpush1.msra.mxu0 0.0
        %3037 = vmatprep.subr.mxu0 0.0
        %3038 = vmatpush1.msra.mxu0 0.0
        %3039 = vmatprep.subr.mxu0 0.0
        %3040 = vmatpush1.msra.mxu0 0.0
        %3041 = vmatprep.subr.mxu0 0.0
        %3042 = vmatpush1.msra.mxu0 0.0
        %3043 = vmatprep.subr.mxu0 0.0
        %3044 = vmatpush1.msra.mxu0 0.0
        %3045 = vmatprep.subr.mxu0 0.0
        %3046 = vmatpush1.msra.mxu0 0.0
        %3047 = vmatprep.subr.mxu0 0.0
        %3048 = vmatpush1.msra.mxu0 0.0
        %3049 = vmatprep.subr.mxu0 0.0
        %3050 = vmatpush1.msra.mxu0 0.0
        %3051 = vmatprep.subr.mxu0 0.0
        %3052 = vmatpush1.msra.mxu0 0.0
        %3053 = vmatprep.subr.mxu0 0.0
        %3054 = vmatpush1.msra.mxu0 0.0
        %3055 = vmatprep.subr.mxu0 0.0
        %3056 = vmatpush1.msra.mxu0 0.0
        %3057 = vmatprep.subr.mxu0 0.0
        %3058 = vmatpush1.msra.mxu0 0.0
        %3059 = vmatprep.subr.mxu0 0.0
        %3060 = vmatpush1.msra.mxu0 0.0
        %3061 = vmatprep.subr.mxu0 0.0
        %3062 = vmatpush1.msra.mxu0 0.0
        %3063 = vmatprep.subr.mxu0 0.0
        %3064 = vmatpush1.msra.mxu0 0.0
        %3065 = vmatprep.subr.mxu0 0.0
        %3066 = vmatpush1.msra.mxu0 0.0
        %3067 = vmatprep.subr.mxu0 0.0
        %3068 = vmatpush1.msra.mxu0 0.0
        %3069 = vmatprep.subr.mxu0 0.0
        %3070 = vmatpush1.msra.mxu0 0.0
        %3071 = vmatprep.subr.mxu0 0.0
        %3072 = vmatpush1.msra.mxu0 0.0
        %3073 = vmatprep.subr.mxu0 0.0
        %3074 = vmatpush1.msra.mxu0 0.0
        %3075 = vmatprep.subr.mxu0 0.0
        %3076 = vmatpush1.msra.mxu0 0.0
        %3077 = vmatprep.subr.mxu0 0.0
        %3078 = vmatpush1.msra.mxu0 0.0
        %3079 = vmatprep.subr.mxu0 0.0
        %3080 = vmatpush1.msra.mxu0 0.0
        %3081 = vmatprep.mubr.f32.mxu0 0.0
        %3082 = vmatmul.mubr.f32.gmra.mrb[0].mxu0 %v3006
        %v3083 = vpop.f32.mrb[0].mxu0
        %v3084 = vadd.f32 0.0, %v3083
        %v3085 = vpop.f32.mrb[0].mxu0
        %v3086 = vadd.f32 0.0, %v3085
        %3087 = vmatprep.mubr.f32.mxu0 0.0
        %3088 = vmatmul.mubr.f32.gmra.mrb[0].mxu0 %v3009
        %v3089 = vpop.f32.mrb[0].mxu0
        %v3090 = vadd.f32 0.0, %v3089
        %v3091 = vpop.f32.mrb[0].mxu0
        %v3092 = vadd.f32 0.0, %v3091
        %3093 = vmatprep.mubr.f32.mxu0 0.0
        %3094 = vmatmul.mubr.f32.gmra.mrb[0].mxu0 %v3012
        %v3095 = vpop.f32.mrb[0].mxu0
        %v3096 = vadd.f32 0.0, %v3095
        %v3097 = vpop.f32.mrb[0].mxu0
        %v3098 = vadd.f32 0.0, %v3097
        %3099 = vmatprep.mubr.f32.mxu0 0.0
        %3100 = vmatmul.mubr.f32.gmra.mrb[0].mxu0 %v3015
        %v3101 = vpop.f32.mrb[0].mxu0
        %v3102 = vadd.f32 0.0, %v3101
        %v3103 = vpop.f32.mrb[0].mxu0
        %v3104 = vadd.f32 0.0, %v3103
        %3105 = vdwg.mxu0
        %v3106 = vadd.f32 %v2838, %v3084
        %v3107 = vadd.f32 %v2839, %v3086
        %v3108 = vadd.f32 %v2840, %v3090
        %v3109 = vadd.f32 %v2841, %v3092
        %v3110 = vadd.f32 %v2842, %v3096
        %v3111 = vadd.f32 %v2843, %v3098
        %v3112 = vadd.f32 %v2844, %v3102
        %v3113 = vadd.f32 %v2845, %v3104
        %s3114 = scalar_lea.vmem [#allocation8], 256
        %v3115 = vld [vmem:[%s3114] sm:$0xff]
        %v3116 = vld [vmem:[%s3114 + $0x8] sm:$0xff]
        %v3117 = vld [vmem:[%s3114 + $0x10] sm:$0xff]
        %v3118 = vld [vmem:[%s3114 + $0x18] sm:$0xff]
        %s3119 = scalar_lea.vmem [#allocation13], 4096
        %v3120 = vld [vmem:[%s3119] sm:$0xff]
        %v3121 = vld [vmem:[%s3119 + $0x8] sm:$0xff]
        %v3122 = vld [vmem:[%s3119 + $0x10] sm:$0xff]
        %v3123 = vld [vmem:[%s3119 + $0x18] sm:$0xff]
        %v3124 = vld [vmem:[%s3119 + $0x20] sm:$0xff]
        %v3125 = vld [vmem:[%s3119 + $0x28] sm:$0xff]
        %v3126 = vld [vmem:[%s3119 + $0x30] sm:$0xff]
        %v3127 = vld [vmem:[%s3119 + $0x38] sm:$0xff]
        %v3128 = vld [vmem:[%s3119 + $0x40] sm:$0xff]
        %v3129 = vld [vmem:[%s3119 + $0x48] sm:$0xff]
        %v3130 = vld [vmem:[%s3119 + $0x50] sm:$0xff]
        %v3131 = vld [vmem:[%s3119 + $0x58] sm:$0xff]
        %v3132 = vld [vmem:[%s3119 + $0x60] sm:$0xff]
        %v3133 = vld [vmem:[%s3119 + $0x68] sm:$0xff]
        %v3134 = vld [vmem:[%s3119 + $0x70] sm:$0xff]
        %v3135 = vld [vmem:[%s3119 + $0x78] sm:$0xff]
        %v3136 = vld [vmem:[%s3119 + $0x80] sm:$0xff]
        %v3137 = vld [vmem:[%s3119 + $0x88] sm:$0xff]
        %v3138 = vld [vmem:[%s3119 + $0x90] sm:$0xff]
        %v3139 = vld [vmem:[%s3119 + $0x98] sm:$0xff]
        %v3140 = vld [vmem:[%s3119 + $0xa0] sm:$0xff]
        %v3141 = vld [vmem:[%s3119 + $0xa8] sm:$0xff]
        %v3142 = vld [vmem:[%s3119 + $0xb0] sm:$0xff]
        %v3143 = vld [vmem:[%s3119 + $0xb8] sm:$0xff]
        %v3144 = vld [vmem:[%s3119 + $0xc0] sm:$0xff]
        %v3145 = vld [vmem:[%s3119 + $0xc8] sm:$0xff]
        %v3146 = vld [vmem:[%s3119 + $0xd0] sm:$0xff]
        %v3147 = vld [vmem:[%s3119 + $0xd8] sm:$0xff]
        %v3148 = vld [vmem:[%s3119 + $0xe0] sm:$0xff]
        %v3149 = vld [vmem:[%s3119 + $0xe8] sm:$0xff]
        %v3150 = vld [vmem:[%s3119 + $0xf0] sm:$0xff]
        %v3151 = vld [vmem:[%s3119 + $0xf8] sm:$0xff]
        %v3152 = vld [vmem:[%s3119 + $0x100] sm:$0xff]
        %v3153 = vld [vmem:[%s3119 + $0x108] sm:$0xff]
        %v3154 = vld [vmem:[%s3119 + $0x110] sm:$0xff]
        %v3155 = vld [vmem:[%s3119 + $0x118] sm:$0xff]
        %v3156 = vld [vmem:[%s3119 + $0x120] sm:$0xff]
        %v3157 = vld [vmem:[%s3119 + $0x128] sm:$0xff]
        %v3158 = vld [vmem:[%s3119 + $0x130] sm:$0xff]
        %v3159 = vld [vmem:[%s3119 + $0x138] sm:$0xff]
        %v3160 = vld [vmem:[%s3119 + $0x140] sm:$0xff]
        %v3161 = vld [vmem:[%s3119 + $0x148] sm:$0xff]
        %v3162 = vld [vmem:[%s3119 + $0x150] sm:$0xff]
        %v3163 = vld [vmem:[%s3119 + $0x158] sm:$0xff]
        %v3164 = vld [vmem:[%s3119 + $0x160] sm:$0xff]
        %v3165 = vld [vmem:[%s3119 + $0x168] sm:$0xff]
        %v3166 = vld [vmem:[%s3119 + $0x170] sm:$0xff]
        %v3167 = vld [vmem:[%s3119 + $0x178] sm:$0xff]
        %v3168 = vld [vmem:[%s3119 + $0x180] sm:$0xff]
        %v3169 = vld [vmem:[%s3119 + $0x188] sm:$0xff]
        %v3170 = vld [vmem:[%s3119 + $0x190] sm:$0xff]
        %v3171 = vld [vmem:[%s3119 + $0x198] sm:$0xff]
        %v3172 = vld [vmem:[%s3119 + $0x1a0] sm:$0xff]
        %v3173 = vld [vmem:[%s3119 + $0x1a8] sm:$0xff]
        %v3174 = vld [vmem:[%s3119 + $0x1b0] sm:$0xff]
        %v3175 = vld [vmem:[%s3119 + $0x1b8] sm:$0xff]
        %v3176 = vld [vmem:[%s3119 + $0x1c0] sm:$0xff]
        %v3177 = vld [vmem:[%s3119 + $0x1c8] sm:$0xff]
        %v3178 = vld [vmem:[%s3119 + $0x1d0] sm:$0xff]
        %v3179 = vld [vmem:[%s3119 + $0x1d8] sm:$0xff]
        %v3180 = vld [vmem:[%s3119 + $0x1e0] sm:$0xff]
        %v3181 = vld [vmem:[%s3119 + $0x1e8] sm:$0xff]
        %v3182 = vld [vmem:[%s3119 + $0x1f0] sm:$0xff]
        %v3183 = vld [vmem:[%s3119 + $0x1f8] sm:$0xff]
        %3184 = vmatprep.subr.mxu0 %v3121
        %3185 = vmatpush1.msra.mxu0 %v3120
        %3186 = vmatprep.subr.mxu0 %v3123
        %3187 = vmatpush1.msra.mxu0 %v3122
        %3188 = vmatprep.subr.mxu0 %v3125
        %3189 = vmatpush1.msra.mxu0 %v3124
        %3190 = vmatprep.subr.mxu0 %v3127
        %3191 = vmatpush1.msra.mxu0 %v3126
        %3192 = vmatprep.subr.mxu0 %v3129
        %3193 = vmatpush1.msra.mxu0 %v3128
        %3194 = vmatprep.subr.mxu0 %v3131
        %3195 = vmatpush1.msra.mxu0 %v3130
        %3196 = vmatprep.subr.mxu0 %v3133
        %3197 = vmatpush1.msra.mxu0 %v3132
        %3198 = vmatprep.subr.mxu0 %v3135
        %3199 = vmatpush1.msra.mxu0 %v3134
        %3200 = vmatprep.subr.mxu0 %v3137
        %3201 = vmatpush1.msra.mxu0 %v3136
        %3202 = vmatprep.subr.mxu0 %v3139
        %3203 = vmatpush1.msra.mxu0 %v3138
        %3204 = vmatprep.subr.mxu0 %v3141
        %3205 = vmatpush1.msra.mxu0 %v3140
        %3206 = vmatprep.subr.mxu0 %v3143
        %3207 = vmatpush1.msra.mxu0 %v3142
        %3208 = vmatprep.subr.mxu0 %v3145
        %3209 = vmatpush1.msra.mxu0 %v3144
        %3210 = vmatprep.subr.mxu0 %v3147
        %3211 = vmatpush1.msra.mxu0 %v3146
        %3212 = vmatprep.subr.mxu0 %v3149
        %3213 = vmatpush1.msra.mxu0 %v3148
        %3214 = vmatprep.subr.mxu0 %v3151
        %3215 = vmatpush1.msra.mxu0 %v3150
        %3216 = vmatprep.subr.mxu0 %v3153
        %3217 = vmatpush1.msra.mxu0 %v3152
        %3218 = vmatprep.subr.mxu0 %v3155
        %3219 = vmatpush1.msra.mxu0 %v3154
        %3220 = vmatprep.subr.mxu0 %v3157
        %3221 = vmatpush1.msra.mxu0 %v3156
        %3222 = vmatprep.subr.mxu0 %v3159
        %3223 = vmatpush1.msra.mxu0 %v3158
        %3224 = vmatprep.subr.mxu0 %v3161
        %3225 = vmatpush1.msra.mxu0 %v3160
        %3226 = vmatprep.subr.mxu0 %v3163
        %3227 = vmatpush1.msra.mxu0 %v3162
        %3228 = vmatprep.subr.mxu0 %v3165
        %3229 = vmatpush1.msra.mxu0 %v3164
        %3230 = vmatprep.subr.mxu0 %v3167
        %3231 = vmatpush1.msra.mxu0 %v3166
        %3232 = vmatprep.subr.mxu0 %v3169
        %3233 = vmatpush1.msra.mxu0 %v3168
        %3234 = vmatprep.subr.mxu0 %v3171
        %3235 = vmatpush1.msra.mxu0 %v3170
        %3236 = vmatprep.subr.mxu0 %v3173
        %3237 = vmatpush1.msra.mxu0 %v3172
        %3238 = vmatprep.subr.mxu0 %v3175
        %3239 = vmatpush1.msra.mxu0 %v3174
        %3240 = vmatprep.subr.mxu0 %v3177
        %3241 = vmatpush1.msra.mxu0 %v3176
        %3242 = vmatprep.subr.mxu0 %v3179
        %3243 = vmatpush1.msra.mxu0 %v3178
        %3244 = vmatprep.subr.mxu0 %v3181
        %3245 = vmatpush1.msra.mxu0 %v3180
        %3246 = vmatprep.subr.mxu0 %v3183
        %3247 = vmatpush1.msra.mxu0 %v3182
        %3248 = vmatprep.mubr.f32.mxu0 %v981
        %3249 = vmatmul.mubr.f32.gmra.mrb[0].mxu0 %v980
        %v3250 = vpop.f32.mrb[0].mxu0
        %v3251 = vadd.f32 0.0, %v3250
        %v3252 = vpop.f32.mrb[0].mxu0
        %v3253 = vadd.f32 0.0, %v3252
        %3254 = vmatprep.mubr.f32.mxu0 %v983
        %3255 = vmatmul.mubr.f32.gmra.mrb[0].mxu0 %v982
        %v3256 = vpop.f32.mrb[0].mxu0
        %v3257 = vadd.f32 0.0, %v3256
        %v3258 = vpop.f32.mrb[0].mxu0
        %v3259 = vadd.f32 0.0, %v3258
        %3260 = vmatprep.mubr.f32.mxu0 %v985
        %3261 = vmatmul.mubr.f32.gmra.mrb[0].mxu0 %v984
        %v3262 = vpop.f32.mrb[0].mxu0
        %v3263 = vadd.f32 0.0, %v3262
        %v3264 = vpop.f32.mrb[0].mxu0
        %v3265 = vadd.f32 0.0, %v3264
        %3266 = vmatprep.mubr.f32.mxu0 %v987
        %3267 = vmatmul.mubr.f32.gmra.mrb[0].mxu0 %v986
        %v3268 = vpop.f32.mrb[0].mxu0
        %v3269 = vadd.f32 0.0, %v3268
        %v3270 = vpop.f32.mrb[0].mxu0
        %v3271 = vadd.f32 0.0, %v3270
        %3272 = vdwg.mxu0
        %v3274 = vsel %vm830, %v3115, 0
        %v3277 = vsel %vm830, %v3116, 0
        %v3280 = vsel %vm830, %v3117, 0
        %v3283 = vsel %vm830, %v3118, 0
        %3285 = vmatprep.subr.mxu0 %v3253
        %3286 = vmatpush1.msra.mxu0 %v3251
        %3287 = vmatprep.subr.mxu0 %v3259
        %3288 = vmatpush1.msra.mxu0 %v3257
        %3289 = vmatprep.subr.mxu0 %v3265
        %3290 = vmatpush1.msra.mxu0 %v3263
        %3291 = vmatprep.subr.mxu0 %v3271
        %3292 = vmatpush1.msra.mxu0 %v3269
        %3293 = vmatprep.subr.mxu0 0.0
        %3294 = vmatpush1.msra.mxu0 0.0
        %3295 = vmatprep.subr.mxu0 0.0
        %3296 = vmatpush1.msra.mxu0 0.0
        %3297 = vmatprep.subr.mxu0 0.0
        %3298 = vmatpush1.msra.mxu0 0.0
        %3299 = vmatprep.subr.mxu0 0.0
        %3300 = vmatpush1.msra.mxu0 0.0
        %3301 = vmatprep.subr.mxu0 0.0
        %3302 = vmatpush1.msra.mxu0 0.0
        %3303 = vmatprep.subr.mxu0 0.0
        %3304 = vmatpush1.msra.mxu0 0.0
        %3305 = vmatprep.subr.mxu0 0.0
        %3306 = vmatpush1.msra.mxu0 0.0
        %3307 = vmatprep.subr.mxu0 0.0
        %3308 = vmatpush1.msra.mxu0 0.0
        %3309 = vmatprep.subr.mxu0 0.0
        %3310 = vmatpush1.msra.mxu0 0.0
        %3311 = vmatprep.subr.mxu0 0.0
        %3312 = vmatpush1.msra.mxu0 0.0
        %3313 = vmatprep.subr.mxu0 0.0
        %3314 = vmatpush1.msra.mxu0 0.0
        %3315 = vmatprep.subr.mxu0 0.0
        %3316 = vmatpush1.msra.mxu0 0.0
        %3317 = vmatprep.subr.mxu0 0.0
        %3318 = vmatpush1.msra.mxu0 0.0
        %3319 = vmatprep.subr.mxu0 0.0
        %3320 = vmatpush1.msra.mxu0 0.0
        %3321 = vmatprep.subr.mxu0 0.0
        %3322 = vmatpush1.msra.mxu0 0.0
        %3323 = vmatprep.subr.mxu0 0.0
        %3324 = vmatpush1.msra.mxu0 0.0
        %3325 = vmatprep.subr.mxu0 0.0
        %3326 = vmatpush1.msra.mxu0 0.0
        %3327 = vmatprep.subr.mxu0 0.0
        %3328 = vmatpush1.msra.mxu0 0.0
        %3329 = vmatprep.subr.mxu0 0.0
        %3330 = vmatpush1.msra.mxu0 0.0
        %3331 = vmatprep.subr.mxu0 0.0
        %3332 = vmatpush1.msra.mxu0 0.0
        %3333 = vmatprep.subr.mxu0 0.0
        %3334 = vmatpush1.msra.mxu0 0.0
        %3335 = vmatprep.subr.mxu0 0.0
        %3336 = vmatpush1.msra.mxu0 0.0
        %3337 = vmatprep.subr.mxu0 0.0
        %3338 = vmatpush1.msra.mxu0 0.0
        %3339 = vmatprep.subr.mxu0 0.0
        %3340 = vmatpush1.msra.mxu0 0.0
        %3341 = vmatprep.subr.mxu0 0.0
        %3342 = vmatpush1.msra.mxu0 0.0
        %3343 = vmatprep.subr.mxu0 0.0
        %3344 = vmatpush1.msra.mxu0 0.0
        %3345 = vmatprep.subr.mxu0 0.0
        %3346 = vmatpush1.msra.mxu0 0.0
        %3347 = vmatprep.subr.mxu0 0.0
        %3348 = vmatpush1.msra.mxu0 0.0
        %3349 = vmatprep.mubr.f32.mxu0 0.0
        %3350 = vmatmul.mubr.f32.gmra.mrb[0].mxu0 %v3274
        %v3351 = vpop.f32.mrb[0].mxu0
        %v3352 = vadd.f32 0.0, %v3351
        %v3353 = vpop.f32.mrb[0].mxu0
        %v3354 = vadd.f32 0.0, %v3353
        %3355 = vmatprep.mubr.f32.mxu0 0.0
        %3356 = vmatmul.mubr.f32.gmra.mrb[0].mxu0 %v3277
        %v3357 = vpop.f32.mrb[0].mxu0
        %v3358 = vadd.f32 0.0, %v3357
        %v3359 = vpop.f32.mrb[0].mxu0
        %v3360 = vadd.f32 0.0, %v3359
        %3361 = vmatprep.mubr.f32.mxu0 0.0
        %3362 = vmatmul.mubr.f32.gmra.mrb[0].mxu0 %v3280
        %v3363 = vpop.f32.mrb[0].mxu0
        %v3364 = vadd.f32 0.0, %v3363
        %v3365 = vpop.f32.mrb[0].mxu0
        %v3366 = vadd.f32 0.0, %v3365
        %3367 = vmatprep.mubr.f32.mxu0 0.0
        %3368 = vmatmul.mubr.f32.gmra.mrb[0].mxu0 %v3283
        %v3369 = vpop.f32.mrb[0].mxu0
        %v3370 = vadd.f32 0.0, %v3369
        %v3371 = vpop.f32.mrb[0].mxu0
        %v3372 = vadd.f32 0.0, %v3371
        %3373 = vdwg.mxu0
        %v3374 = vadd.f32 %v3106, %v3352
        %v3375 = vadd.f32 %v3107, %v3354
        %v3376 = vadd.f32 %v3108, %v3358
        %v3377 = vadd.f32 %v3109, %v3360
        %v3378 = vadd.f32 %v3110, %v3364
        %v3379 = vadd.f32 %v3111, %v3366
        %v3380 = vadd.f32 %v3112, %v3370
        %v3381 = vadd.f32 %v3113, %v3372
        %v3382 = vld [vmem:[%s6] sm:$0xff]
        %v3383 = vld [vmem:[%s6 + $0x8] sm:$0xff]
        %v3384 = vld [vmem:[%s6 + $0x10] sm:$0xff]
        %v3385 = vld [vmem:[%s6 + $0x18] sm:$0xff]
        %3387 = vset.pattern.permute.xlu0 0
        %3388 = vperm.xlu0 %3387, %v3382
        %v3389 = vpop.permute.xlu0 %3388
        %3392 = vset.pattern.permute.xlu0 0
        %3393 = vperm.xlu0 %3392, %v3383
        %v3394 = vpop.permute.xlu0 %3393
        %3397 = vset.pattern.permute.xlu0 0
        %3398 = vperm.xlu0 %3397, %v3384
        %v3399 = vpop.permute.xlu0 %3398
        %3402 = vset.pattern.permute.xlu0 0
        %3403 = vperm.xlu0 %3402, %v3385
        %v3404 = vpop.permute.xlu0 %3403
        %v3406 = vadd.f32 %v3374, %v3389
        %v3407 = vadd.f32 %v3375, %v3389
        %v3408 = vadd.f32 %v3376, %v3394
        %v3409 = vadd.f32 %v3377, %v3394
        %v3410 = vadd.f32 %v3378, %v3399
        %v3411 = vadd.f32 %v3379, %v3399
        %v3412 = vadd.f32 %v3380, %v3404
        %v3413 = vadd.f32 %v3381, %v3404
        %v3414 = vxor.u32 %v3406, 2147483648
        %v3415 = vxor.u32 %v3407, 2147483648
        %v3416 = vxor.u32 %v3408, 2147483648
        %v3417 = vxor.u32 %v3409, 2147483648
        %v3418 = vxor.u32 %v3410, 2147483648
        %v3419 = vxor.u32 %v3411, 2147483648
        %v3420 = vxor.u32 %v3412, 2147483648
        %v3421 = vxor.u32 %v3413, 2147483648
        %v3422 = vmul.f32 %v3414, 1.442695
        %v3423 = vpow.pop %v3422
        %v3424 = vmul.f32 %v3415, 1.442695
        %v3425 = vpow.pop %v3424
        %v3426 = vmul.f32 %v3416, 1.442695
        %v3427 = vpow.pop %v3426
        %v3428 = vmul.f32 %v3417, 1.442695
        %v3429 = vpow.pop %v3428
        %v3430 = vmul.f32 %v3418, 1.442695
        %v3431 = vpow.pop %v3430
        %v3432 = vmul.f32 %v3419, 1.442695
        %v3433 = vpow.pop %v3432
        %v3434 = vmul.f32 %v3420, 1.442695
        %v3435 = vpow.pop %v3434
        %v3436 = vmul.f32 %v3421, 1.442695
        %v3437 = vpow.pop %v3436
        %v3438 = vadd.f32 %v3423, 1.0
        %v3439 = vadd.f32 %v3425, 1.0
        %v3440 = vadd.f32 %v3427, 1.0
        %v3441 = vadd.f32 %v3429, 1.0
        %v3442 = vadd.f32 %v3431, 1.0
        %v3443 = vadd.f32 %v3433, 1.0
        %v3444 = vadd.f32 %v3435, 1.0
        %v3445 = vadd.f32 %v3437, 1.0
        %v3446 = vrcp.pop %v3438
        %v3447 = vmul.f32 1.0, %v3446
        %v3448 = vrcp.pop %v3439
        %v3449 = vmul.f32 1.0, %v3448
        %v3450 = vrcp.pop %v3440
        %v3451 = vmul.f32 1.0, %v3450
        %v3452 = vrcp.pop %v3441
        %v3453 = vmul.f32 1.0, %v3452
        %v3454 = vrcp.pop %v3442
        %v3455 = vmul.f32 1.0, %v3454
        %v3456 = vrcp.pop %v3443
        %v3457 = vmul.f32 1.0, %v3456
        %v3458 = vrcp.pop %v3444
        %v3459 = vmul.f32 1.0, %v3458
        %v3460 = vrcp.pop %v3445
        %v3461 = vmul.f32 1.0, %v3460
        %v3462 = vmul.f32 %v3406, %v3447
        %v3463 = vmul.f32 %v3407, %v3449
        %v3464 = vmul.f32 %v3408, %v3451
        %v3465 = vmul.f32 %v3409, %v3453
        %v3466 = vmul.f32 %v3410, %v3455
        %v3467 = vmul.f32 %v3411, %v3457
        %v3468 = vmul.f32 %v3412, %v3459
        %v3469 = vmul.f32 %v3413, %v3461
        %v3470 = vadd.f32 %v794, %v3462
        %v3471 = vadd.f32 %v795, %v3463
        %v3472 = vadd.f32 %v796, %v3464
        %v3473 = vadd.f32 %v797, %v3465
        %v3474 = vadd.f32 %v798, %v3466
        %v3475 = vadd.f32 %v799, %v3467
        %v3476 = vadd.f32 %v800, %v3468
        %v3477 = vadd.f32 %v801, %v3469
        %s3478 = scalar_lea.vmem [#allocation7], 32
        %v3479 = vld [vmem:[%s3478] sm:$0xff]
        %v3480 = vld [vmem:[%s3478 + $0x8] sm:$0xff]
        %v3481 = vld [vmem:[%s3478 + $0x10] sm:$0xff]
        %v3482 = vld [vmem:[%s3478 + $0x18] sm:$0xff]
        %s3483 = scalar_lea.vmem %s4, 32
        %v3484 = vld [vmem:[%s3483] sm:$0xff]
        %v3485 = vld [vmem:[%s3483 + $0x8] sm:$0xff]
        %v3486 = vld [vmem:[%s3483 + $0x10] sm:$0xff]
        %v3487 = vld [vmem:[%s3483 + $0x18] sm:$0xff]
        %3489 = vset.pattern.permute.xlu0 0
        %3490 = vperm.xlu0 %3489, %v3484
        %v3491 = vpop.permute.xlu0 %3490
        %3494 = vset.pattern.permute.xlu0 0
        %3495 = vperm.xlu0 %3494, %v3485
        %v3496 = vpop.permute.xlu0 %3495
        %3499 = vset.pattern.permute.xlu0 0
        %3500 = vperm.xlu0 %3499, %v3486
        %v3501 = vpop.permute.xlu0 %3500
        %3504 = vset.pattern.permute.xlu0 0
        %3505 = vperm.xlu0 %3504, %v3487
        %v3506 = vpop.permute.xlu0 %3505
        %v3509 = vsel %vm830, %v3479, 0
        %v3512 = vsel %vm830, %v3480, 0
        %v3515 = vsel %vm830, %v3481, 0
        %v3518 = vsel %vm830, %v3482, 0
        %3520 = vmatprep.subr.mxu0 %v3471
        %3521 = vmatpush1.msra.mxu0 %v3470
        %3522 = vmatprep.subr.mxu0 %v3473
        %3523 = vmatpush1.msra.mxu0 %v3472
        %3524 = vmatprep.subr.mxu0 %v3475
        %3525 = vmatpush1.msra.mxu0 %v3474
        %3526 = vmatprep.subr.mxu0 %v3477
        %3527 = vmatpush1.msra.mxu0 %v3476
        %3528 = vmatprep.subr.mxu0 0.0
        %3529 = vmatpush1.msra.mxu0 0.0
        %3530 = vmatprep.subr.mxu0 0.0
        %3531 = vmatpush1.msra.mxu0 0.0
        %3532 = vmatprep.subr.mxu0 0.0
        %3533 = vmatpush1.msra.mxu0 0.0
        %3534 = vmatprep.subr.mxu0 0.0
        %3535 = vmatpush1.msra.mxu0 0.0
        %3536 = vmatprep.subr.mxu0 0.0
        %3537 = vmatpush1.msra.mxu0 0.0
        %3538 = vmatprep.subr.mxu0 0.0
        %3539 = vmatpush1.msra.mxu0 0.0
        %3540 = vmatprep.subr.mxu0 0.0
        %3541 = vmatpush1.msra.mxu0 0.0
        %3542 = vmatprep.subr.mxu0 0.0
        %3543 = vmatpush1.msra.mxu0 0.0
        %3544 = vmatprep.subr.mxu0 0.0
        %3545 = vmatpush1.msra.mxu0 0.0
        %3546 = vmatprep.subr.mxu0 0.0
        %3547 = vmatpush1.msra.mxu0 0.0
        %3548 = vmatprep.subr.mxu0 0.0
        %3549 = vmatpush1.msra.mxu0 0.0
        %3550 = vmatprep.subr.mxu0 0.0
        %3551 = vmatpush1.msra.mxu0 0.0
        %3552 = vmatprep.subr.mxu0 0.0
        %3553 = vmatpush1.msra.mxu0 0.0
        %3554 = vmatprep.subr.mxu0 0.0
        %3555 = vmatpush1.msra.mxu0 0.0
        %3556 = vmatprep.subr.mxu0 0.0
        %3557 = vmatpush1.msra.mxu0 0.0
        %3558 = vmatprep.subr.mxu0 0.0
        %3559 = vmatpush1.msra.mxu0 0.0
        %3560 = vmatprep.subr.mxu0 0.0
        %3561 = vmatpush1.msra.mxu0 0.0
        %3562 = vmatprep.subr.mxu0 0.0
        %3563 = vmatpush1.msra.mxu0 0.0
        %3564 = vmatprep.subr.mxu0 0.0
        %3565 = vmatpush1.msra.mxu0 0.0
        %3566 = vmatprep.subr.mxu0 0.0
        %3567 = vmatpush1.msra.mxu0 0.0
        %3568 = vmatprep.subr.mxu0 0.0
        %3569 = vmatpush1.msra.mxu0 0.0
        %3570 = vmatprep.subr.mxu0 0.0
        %3571 = vmatpush1.msra.mxu0 0.0
        %3572 = vmatprep.subr.mxu0 0.0
        %3573 = vmatpush1.msra.mxu0 0.0
        %3574 = vmatprep.subr.mxu0 0.0
        %3575 = vmatpush1.msra.mxu0 0.0
        %3576 = vmatprep.subr.mxu0 0.0
        %3577 = vmatpush1.msra.mxu0 0.0
        %3578 = vmatprep.subr.mxu0 0.0
        %3579 = vmatpush1.msra.mxu0 0.0
        %3580 = vmatprep.subr.mxu0 0.0
        %3581 = vmatpush1.msra.mxu0 0.0
        %3582 = vmatprep.subr.mxu0 0.0
        %3583 = vmatpush1.msra.mxu0 0.0
        %3584 = vmatprep.mubr.f32.mxu0 0.0
        %3585 = vmatmul.mubr.f32.gmra.mrb[0].mxu0 %v3509
        %v3586 = vpop.f32.mrb[0].mxu0
        %v3587 = vadd.f32 %v3491, %v3586
        %v3588 = vpop.f32.mrb[0].mxu0
        %v3589 = vadd.f32 %v3491, %v3588
        %3590 = vmatprep.mubr.f32.mxu0 0.0
        %3591 = vmatmul.mubr.f32.gmra.mrb[0].mxu0 %v3512
        %v3592 = vpop.f32.mrb[0].mxu0
        %v3593 = vadd.f32 %v3496, %v3592
        %v3594 = vpop.f32.mrb[0].mxu0
        %v3595 = vadd.f32 %v3496, %v3594
        %3596 = vmatprep.mubr.f32.mxu0 0.0
        %3597 = vmatmul.mubr.f32.gmra.mrb[0].mxu0 %v3515
        %v3598 = vpop.f32.mrb[0].mxu0
        %v3599 = vadd.f32 %v3501, %v3598
        %v3600 = vpop.f32.mrb[0].mxu0
        %v3601 = vadd.f32 %v3501, %v3600
        %3602 = vmatprep.mubr.f32.mxu0 0.0
        %3603 = vmatmul.mubr.f32.gmra.mrb[0].mxu0 %v3518
        %v3604 = vpop.f32.mrb[0].mxu0
        %v3605 = vadd.f32 %v3506, %v3604
        %v3606 = vpop.f32.mrb[0].mxu0
        %v3607 = vadd.f32 %v3506, %v3606
        %3608 = vdwg.mxu0
        %v3609 = vxor.u32 %v3587, 2147483648
        %v3610 = vxor.u32 %v3589, 2147483648
        %v3611 = vxor.u32 %v3593, 2147483648
        %v3612 = vxor.u32 %v3595, 2147483648
        %v3613 = vxor.u32 %v3599, 2147483648
        %v3614 = vxor.u32 %v3601, 2147483648
        %v3615 = vxor.u32 %v3605, 2147483648
        %v3616 = vxor.u32 %v3607, 2147483648
        %v3617 = vmul.f32 %v3609, 1.442695
        %v3618 = vpow.pop %v3617
        %v3619 = vmul.f32 %v3610, 1.442695
        %v3620 = vpow.pop %v3619
        %v3621 = vmul.f32 %v3611, 1.442695
        %v3622 = vpow.pop %v3621
        %v3623 = vmul.f32 %v3612, 1.442695
        %v3624 = vpow.pop %v3623
        %v3625 = vmul.f32 %v3613, 1.442695
        %v3626 = vpow.pop %v3625
        %v3627 = vmul.f32 %v3614, 1.442695
        %v3628 = vpow.pop %v3627
        %v3629 = vmul.f32 %v3615, 1.442695
        %v3630 = vpow.pop %v3629
        %v3631 = vmul.f32 %v3616, 1.442695
        %v3632 = vpow.pop %v3631
        %v3633 = vadd.f32 %v3618, 1.0
        %v3634 = vadd.f32 %v3620, 1.0
        %v3635 = vadd.f32 %v3622, 1.0
        %v3636 = vadd.f32 %v3624, 1.0
        %v3637 = vadd.f32 %v3626, 1.0
        %v3638 = vadd.f32 %v3628, 1.0
        %v3639 = vadd.f32 %v3630, 1.0
        %v3640 = vadd.f32 %v3632, 1.0
        %v3641 = vrcp.pop %v3633
        %v3642 = vmul.f32 1.0, %v3641
        %v3643 = vrcp.pop %v3634
        %v3644 = vmul.f32 1.0, %v3643
        %v3645 = vrcp.pop %v3635
        %v3646 = vmul.f32 1.0, %v3645
        %v3647 = vrcp.pop %v3636
        %v3648 = vmul.f32 1.0, %v3647
        %v3649 = vrcp.pop %v3637
        %v3650 = vmul.f32 1.0, %v3649
        %v3651 = vrcp.pop %v3638
        %v3652 = vmul.f32 1.0, %v3651
        %v3653 = vrcp.pop %v3639
        %v3654 = vmul.f32 1.0, %v3653
        %v3655 = vrcp.pop %v3640
        %v3656 = vmul.f32 1.0, %v3655
        %v3657 = vmul.f32 %v3587, %v3642
        %v3658 = vmul.f32 %v3589, %v3644
        %v3659 = vmul.f32 %v3593, %v3646
        %v3660 = vmul.f32 %v3595, %v3648
        %v3661 = vmul.f32 %v3599, %v3650
        %v3662 = vmul.f32 %v3601, %v3652
        %v3663 = vmul.f32 %v3605, %v3654
        %v3664 = vmul.f32 %v3607, %v3656
        %s3665 = scalar_lea.vmem [#allocation8], 288
        %v3666 = vld [vmem:[%s3665] sm:$0xff]
        %v3667 = vld [vmem:[%s3665 + $0x8] sm:$0xff]
        %v3668 = vld [vmem:[%s3665 + $0x10] sm:$0xff]
        %v3669 = vld [vmem:[%s3665 + $0x18] sm:$0xff]
        %3670 = vmatprep.subr.mxu0 %v993
        %3671 = vmatpush1.msra.mxu0 %v992
        %3672 = vmatprep.subr.mxu0 %v995
        %3673 = vmatpush1.msra.mxu0 %v994
        %3674 = vmatprep.subr.mxu0 %v997
        %3675 = vmatpush1.msra.mxu0 %v996
        %3676 = vmatprep.subr.mxu0 %v999
        %3677 = vmatpush1.msra.mxu0 %v998
        %3678 = vmatprep.subr.mxu0 %v1001
        %3679 = vmatpush1.msra.mxu0 %v1000
        %3680 = vmatprep.subr.mxu0 %v1003
        %3681 = vmatpush1.msra.mxu0 %v1002
        %3682 = vmatprep.subr.mxu0 %v1005
        %3683 = vmatpush1.msra.mxu0 %v1004
        %3684 = vmatprep.subr.mxu0 %v1007
        %3685 = vmatpush1.msra.mxu0 %v1006
        %3686 = vmatprep.subr.mxu0 %v1009
        %3687 = vmatpush1.msra.mxu0 %v1008
        %3688 = vmatprep.subr.mxu0 %v1011
        %3689 = vmatpush1.msra.mxu0 %v1010
        %3690 = vmatprep.subr.mxu0 %v1013
        %3691 = vmatpush1.msra.mxu0 %v1012
        %3692 = vmatprep.subr.mxu0 %v1015
        %3693 = vmatpush1.msra.mxu0 %v1014
        %3694 = vmatprep.subr.mxu0 %v1017
        %3695 = vmatpush1.msra.mxu0 %v1016
        %3696 = vmatprep.subr.mxu0 %v1019
        %3697 = vmatpush1.msra.mxu0 %v1018
        %3698 = vmatprep.subr.mxu0 %v1021
        %3699 = vmatpush1.msra.mxu0 %v1020
        %3700 = vmatprep.subr.mxu0 %v1023
        %3701 = vmatpush1.msra.mxu0 %v1022
        %3702 = vmatprep.subr.mxu0 %v1025
        %3703 = vmatpush1.msra.mxu0 %v1024
        %3704 = vmatprep.subr.mxu0 %v1027
        %3705 = vmatpush1.msra.mxu0 %v1026
        %3706 = vmatprep.subr.mxu0 %v1029
        %3707 = vmatpush1.msra.mxu0 %v1028
        %3708 = vmatprep.subr.mxu0 %v1031
        %3709 = vmatpush1.msra.mxu0 %v1030
        %3710 = vmatprep.subr.mxu0 %v1033
        %3711 = vmatpush1.msra.mxu0 %v1032
        %3712 = vmatprep.subr.mxu0 %v1035
        %3713 = vmatpush1.msra.mxu0 %v1034
        %3714 = vmatprep.subr.mxu0 %v1037
        %3715 = vmatpush1.msra.mxu0 %v1036
        %3716 = vmatprep.subr.mxu0 %v1039
        %3717 = vmatpush1.msra.mxu0 %v1038
        %3718 = vmatprep.subr.mxu0 %v1041
        %3719 = vmatpush1.msra.mxu0 %v1040
        %3720 = vmatprep.subr.mxu0 %v1043
        %3721 = vmatpush1.msra.mxu0 %v1042
        %3722 = vmatprep.subr.mxu0 %v1045
        %3723 = vmatpush1.msra.mxu0 %v1044
        %3724 = vmatprep.subr.mxu0 %v1047
        %3725 = vmatpush1.msra.mxu0 %v1046
        %3726 = vmatprep.subr.mxu0 %v1049
        %3727 = vmatpush1.msra.mxu0 %v1048
        %3728 = vmatprep.subr.mxu0 %v1051
        %3729 = vmatpush1.msra.mxu0 %v1050
        %3730 = vmatprep.subr.mxu0 %v1053
        %3731 = vmatpush1.msra.mxu0 %v1052
        %3732 = vmatprep.subr.mxu0 %v1055
        %3733 = vmatpush1.msra.mxu0 %v1054
        %3734 = vmatprep.mubr.f32.mxu0 %v3658
        %3735 = vmatmul.mubr.f32.gmra.mrb[0].mxu0 %v3657
        %v3736 = vpop.f32.mrb[0].mxu0
        %v3737 = vadd.f32 0.0, %v3736
        %v3738 = vpop.f32.mrb[0].mxu0
        %v3739 = vadd.f32 0.0, %v3738
        %3740 = vmatprep.mubr.f32.mxu0 %v3660
        %3741 = vmatmul.mubr.f32.gmra.mrb[0].mxu0 %v3659
        %v3742 = vpop.f32.mrb[0].mxu0
        %v3743 = vadd.f32 0.0, %v3742
        %v3744 = vpop.f32.mrb[0].mxu0
        %v3745 = vadd.f32 0.0, %v3744
        %3746 = vmatprep.mubr.f32.mxu0 %v3662
        %3747 = vmatmul.mubr.f32.gmra.mrb[0].mxu0 %v3661
        %v3748 = vpop.f32.mrb[0].mxu0
        %v3749 = vadd.f32 0.0, %v3748
        %v3750 = vpop.f32.mrb[0].mxu0
        %v3751 = vadd.f32 0.0, %v3750
        %3752 = vmatprep.mubr.f32.mxu0 %v3664
        %3753 = vmatmul.mubr.f32.gmra.mrb[0].mxu0 %v3663
        %v3754 = vpop.f32.mrb[0].mxu0
        %v3755 = vadd.f32 0.0, %v3754
        %v3756 = vpop.f32.mrb[0].mxu0
        %v3757 = vadd.f32 0.0, %v3756
        %3758 = vdwg.mxu0
        %s3759 = scalar_lea.vmem [#allocation8], 320
        %v3760 = vld [vmem:[%s3759] sm:$0xff]
        %v3761 = vld [vmem:[%s3759 + $0x8] sm:$0xff]
        %v3762 = vld [vmem:[%s3759 + $0x10] sm:$0xff]
        %v3763 = vld [vmem:[%s3759 + $0x18] sm:$0xff]
        %3764 = vmatprep.subr.mxu0 %v1152
        %3765 = vmatpush1.msra.mxu0 %v1151
        %3766 = vmatprep.subr.mxu0 %v1154
        %3767 = vmatpush1.msra.mxu0 %v1153
        %3768 = vmatprep.subr.mxu0 %v1156
        %3769 = vmatpush1.msra.mxu0 %v1155
        %3770 = vmatprep.subr.mxu0 %v1158
        %3771 = vmatpush1.msra.mxu0 %v1157
        %3772 = vmatprep.subr.mxu0 %v1160
        %3773 = vmatpush1.msra.mxu0 %v1159
        %3774 = vmatprep.subr.mxu0 %v1162
        %3775 = vmatpush1.msra.mxu0 %v1161
        %3776 = vmatprep.subr.mxu0 %v1164
        %3777 = vmatpush1.msra.mxu0 %v1163
        %3778 = vmatprep.subr.mxu0 %v1166
        %3779 = vmatpush1.msra.mxu0 %v1165
        %3780 = vmatprep.subr.mxu0 %v1168
        %3781 = vmatpush1.msra.mxu0 %v1167
        %3782 = vmatprep.subr.mxu0 %v1170
        %3783 = vmatpush1.msra.mxu0 %v1169
        %3784 = vmatprep.subr.mxu0 %v1172
        %3785 = vmatpush1.msra.mxu0 %v1171
        %3786 = vmatprep.subr.mxu0 %v1174
        %3787 = vmatpush1.msra.mxu0 %v1173
        %3788 = vmatprep.subr.mxu0 %v1176
        %3789 = vmatpush1.msra.mxu0 %v1175
        %3790 = vmatprep.subr.mxu0 %v1178
        %3791 = vmatpush1.msra.mxu0 %v1177
        %3792 = vmatprep.subr.mxu0 %v1180
        %3793 = vmatpush1.msra.mxu0 %v1179
        %3794 = vmatprep.subr.mxu0 %v1182
        %3795 = vmatpush1.msra.mxu0 %v1181
        %3796 = vmatprep.subr.mxu0 %v1184
        %3797 = vmatpush1.msra.mxu0 %v1183
        %3798 = vmatprep.subr.mxu0 %v1186
        %3799 = vmatpush1.msra.mxu0 %v1185
        %3800 = vmatprep.subr.mxu0 %v1188
        %3801 = vmatpush1.msra.mxu0 %v1187
        %3802 = vmatprep.subr.mxu0 %v1190
        %3803 = vmatpush1.msra.mxu0 %v1189
        %3804 = vmatprep.subr.mxu0 %v1192
        %3805 = vmatpush1.msra.mxu0 %v1191
        %3806 = vmatprep.subr.mxu0 %v1194
        %3807 = vmatpush1.msra.mxu0 %v1193
        %3808 = vmatprep.subr.mxu0 %v1196
        %3809 = vmatpush1.msra.mxu0 %v1195
        %3810 = vmatprep.subr.mxu0 %v1198
        %3811 = vmatpush1.msra.mxu0 %v1197
        %3812 = vmatprep.subr.mxu0 %v1200
        %3813 = vmatpush1.msra.mxu0 %v1199
        %3814 = vmatprep.subr.mxu0 %v1202
        %3815 = vmatpush1.msra.mxu0 %v1201
        %3816 = vmatprep.subr.mxu0 %v1204
        %3817 = vmatpush1.msra.mxu0 %v1203
        %3818 = vmatprep.subr.mxu0 %v1206
        %3819 = vmatpush1.msra.mxu0 %v1205
        %3820 = vmatprep.subr.mxu0 %v1208
        %3821 = vmatpush1.msra.mxu0 %v1207
        %3822 = vmatprep.subr.mxu0 %v1210
        %3823 = vmatpush1.msra.mxu0 %v1209
        %3824 = vmatprep.subr.mxu0 %v1212
        %3825 = vmatpush1.msra.mxu0 %v1211
        %3826 = vmatprep.subr.mxu0 %v1214
        %3827 = vmatpush1.msra.mxu0 %v1213
        %3828 = vmatprep.mubr.f32.mxu0 %v3658
        %3829 = vmatmul.mubr.f32.gmra.mrb[0].mxu0 %v3657
        %v3830 = vpop.f32.mrb[0].mxu0
        %v3831 = vadd.f32 0.0, %v3830
        %v3832 = vpop.f32.mrb[0].mxu0
        %v3833 = vadd.f32 0.0, %v3832
        %3834 = vmatprep.mubr.f32.mxu0 %v3660
        %3835 = vmatmul.mubr.f32.gmra.mrb[0].mxu0 %v3659
        %v3836 = vpop.f32.mrb[0].mxu0
        %v3837 = vadd.f32 0.0, %v3836
        %v3838 = vpop.f32.mrb[0].mxu0
        %v3839 = vadd.f32 0.0, %v3838
        %3840 = vmatprep.mubr.f32.mxu0 %v3662
        %3841 = vmatmul.mubr.f32.gmra.mrb[0].mxu0 %v3661
        %v3842 = vpop.f32.mrb[0].mxu0
        %v3843 = vadd.f32 0.0, %v3842
        %v3844 = vpop.f32.mrb[0].mxu0
        %v3845 = vadd.f32 0.0, %v3844
        %3846 = vmatprep.mubr.f32.mxu0 %v3664
        %3847 = vmatmul.mubr.f32.gmra.mrb[0].mxu0 %v3663
        %v3848 = vpop.f32.mrb[0].mxu0
        %v3849 = vadd.f32 0.0, %v3848
        %v3850 = vpop.f32.mrb[0].mxu0
        %v3851 = vadd.f32 0.0, %v3850
        %3852 = vdwg.mxu0
        %v3854 = vsel %vm830, %v3760, 0
        %v3857 = vsel %vm830, %v3761, 0
        %v3860 = vsel %vm830, %v3762, 0
        %v3863 = vsel %vm830, %v3763, 0
        %3865 = vmatprep.subr.mxu0 %v3833
        %3866 = vmatpush1.msra.mxu0 %v3831
        %3867 = vmatprep.subr.mxu0 %v3839
        %3868 = vmatpush1.msra.mxu0 %v3837
        %3869 = vmatprep.subr.mxu0 %v3845
        %3870 = vmatpush1.msra.mxu0 %v3843
        %3871 = vmatprep.subr.mxu0 %v3851
        %3872 = vmatpush1.msra.mxu0 %v3849
        %3873 = vmatprep.subr.mxu0 0.0
        %3874 = vmatpush1.msra.mxu0 0.0
        %3875 = vmatprep.subr.mxu0 0.0
        %3876 = vmatpush1.msra.mxu0 0.0
        %3877 = vmatprep.subr.mxu0 0.0
        %3878 = vmatpush1.msra.mxu0 0.0
        %3879 = vmatprep.subr.mxu0 0.0
        %3880 = vmatpush1.msra.mxu0 0.0
        %3881 = vmatprep.subr.mxu0 0.0
        %3882 = vmatpush1.msra.mxu0 0.0
        %3883 = vmatprep.subr.mxu0 0.0
        %3884 = vmatpush1.msra.mxu0 0.0
        %3885 = vmatprep.subr.mxu0 0.0
        %3886 = vmatpush1.msra.mxu0 0.0
        %3887 = vmatprep.subr.mxu0 0.0
        %3888 = vmatpush1.msra.mxu0 0.0
        %3889 = vmatprep.subr.mxu0 0.0
        %3890 = vmatpush1.msra.mxu0 0.0
        %3891 = vmatprep.subr.mxu0 0.0
        %3892 = vmatpush1.msra.mxu0 0.0
        %3893 = vmatprep.subr.mxu0 0.0
        %3894 = vmatpush1.msra.mxu0 0.0
        %3895 = vmatprep.subr.mxu0 0.0
        %3896 = vmatpush1.msra.mxu0 0.0
        %3897 = vmatprep.subr.mxu0 0.0
        %3898 = vmatpush1.msra.mxu0 0.0
        %3899 = vmatprep.subr.mxu0 0.0
        %3900 = vmatpush1.msra.mxu0 0.0
        %3901 = vmatprep.subr.mxu0 0.0
        %3902 = vmatpush1.msra.mxu0 0.0
        %3903 = vmatprep.subr.mxu0 0.0
        %3904 = vmatpush1.msra.mxu0 0.0
        %3905 = vmatprep.subr.mxu0 0.0
        %3906 = vmatpush1.msra.mxu0 0.0
        %3907 = vmatprep.subr.mxu0 0.0
        %3908 = vmatpush1.msra.mxu0 0.0
        %3909 = vmatprep.subr.mxu0 0.0
        %3910 = vmatpush1.msra.mxu0 0.0
        %3911 = vmatprep.subr.mxu0 0.0
        %3912 = vmatpush1.msra.mxu0 0.0
        %3913 = vmatprep.subr.mxu0 0.0
        %3914 = vmatpush1.msra.mxu0 0.0
        %3915 = vmatprep.subr.mxu0 0.0
        %3916 = vmatpush1.msra.mxu0 0.0
        %3917 = vmatprep.subr.mxu0 0.0
        %3918 = vmatpush1.msra.mxu0 0.0
        %3919 = vmatprep.subr.mxu0 0.0
        %3920 = vmatpush1.msra.mxu0 0.0
        %3921 = vmatprep.subr.mxu0 0.0
        %3922 = vmatpush1.msra.mxu0 0.0
        %3923 = vmatprep.subr.mxu0 0.0
        %3924 = vmatpush1.msra.mxu0 0.0
        %3925 = vmatprep.subr.mxu0 0.0
        %3926 = vmatpush1.msra.mxu0 0.0
        %3927 = vmatprep.subr.mxu0 0.0
        %3928 = vmatpush1.msra.mxu0 0.0
        %3929 = vmatprep.mubr.f32.mxu0 0.0
        %3930 = vmatmul.mubr.f32.gmra.mrb[0].mxu0 %v3854
        %v3931 = vpop.f32.mrb[0].mxu0
        %v3932 = vadd.f32 0.0, %v3931
        %v3933 = vpop.f32.mrb[0].mxu0
        %v3934 = vadd.f32 0.0, %v3933
        %3935 = vmatprep.mubr.f32.mxu0 0.0
        %3936 = vmatmul.mubr.f32.gmra.mrb[0].mxu0 %v3857
        %v3937 = vpop.f32.mrb[0].mxu0
        %v3938 = vadd.f32 0.0, %v3937
        %v3939 = vpop.f32.mrb[0].mxu0
        %v3940 = vadd.f32 0.0, %v3939
        %3941 = vmatprep.mubr.f32.mxu0 0.0
        %3942 = vmatmul.mubr.f32.gmra.mrb[0].mxu0 %v3860
        %v3943 = vpop.f32.mrb[0].mxu0
        %v3944 = vadd.f32 0.0, %v3943
        %v3945 = vpop.f32.mrb[0].mxu0
        %v3946 = vadd.f32 0.0, %v3945
        %3947 = vmatprep.mubr.f32.mxu0 0.0
        %3948 = vmatmul.mubr.f32.gmra.mrb[0].mxu0 %v3863
        %v3949 = vpop.f32.mrb[0].mxu0
        %v3950 = vadd.f32 0.0, %v3949
        %v3951 = vpop.f32.mrb[0].mxu0
        %v3952 = vadd.f32 0.0, %v3951
        %3953 = vdwg.mxu0
        %v3955 = vsel %vm830, %v3666, 0
        %v3958 = vsel %vm830, %v3667, 0
        %v3961 = vsel %vm830, %v3668, 0
        %v3964 = vsel %vm830, %v3669, 0
        %3966 = vmatprep.subr.mxu0 %v3739
        %3967 = vmatpush1.msra.mxu0 %v3737
        %3968 = vmatprep.subr.mxu0 %v3745
        %3969 = vmatpush1.msra.mxu0 %v3743
        %3970 = vmatprep.subr.mxu0 %v3751
        %3971 = vmatpush1.msra.mxu0 %v3749
        %3972 = vmatprep.subr.mxu0 %v3757
        %3973 = vmatpush1.msra.mxu0 %v3755
        %3974 = vmatprep.subr.mxu0 0.0
        %3975 = vmatpush1.msra.mxu0 0.0
        %3976 = vmatprep.subr.mxu0 0.0
        %3977 = vmatpush1.msra.mxu0 0.0
        %3978 = vmatprep.subr.mxu0 0.0
        %3979 = vmatpush1.msra.mxu0 0.0
        %3980 = vmatprep.subr.mxu0 0.0
        %3981 = vmatpush1.msra.mxu0 0.0
        %3982 = vmatprep.subr.mxu0 0.0
        %3983 = vmatpush1.msra.mxu0 0.0
        %3984 = vmatprep.subr.mxu0 0.0
        %3985 = vmatpush1.msra.mxu0 0.0
        %3986 = vmatprep.subr.mxu0 0.0
        %3987 = vmatpush1.msra.mxu0 0.0
        %3988 = vmatprep.subr.mxu0 0.0
        %3989 = vmatpush1.msra.mxu0 0.0
        %3990 = vmatprep.subr.mxu0 0.0
        %3991 = vmatpush1.msra.mxu0 0.0
        %3992 = vmatprep.subr.mxu0 0.0
        %3993 = vmatpush1.msra.mxu0 0.0
        %3994 = vmatprep.subr.mxu0 0.0
        %3995 = vmatpush1.msra.mxu0 0.0
        %3996 = vmatprep.subr.mxu0 0.0
        %3997 = vmatpush1.msra.mxu0 0.0
        %3998 = vmatprep.subr.mxu0 0.0
        %3999 = vmatpush1.msra.mxu0 0.0
        %4000 = vmatprep.subr.mxu0 0.0
        %4001 = vmatpush1.msra.mxu0 0.0
        %4002 = vmatprep.subr.mxu0 0.0
        %4003 = vmatpush1.msra.mxu0 0.0
        %4004 = vmatprep.subr.mxu0 0.0
        %4005 = vmatpush1.msra.mxu0 0.0
        %4006 = vmatprep.subr.mxu0 0.0
        %4007 = vmatpush1.msra.mxu0 0.0
        %4008 = vmatprep.subr.mxu0 0.0
        %4009 = vmatpush1.msra.mxu0 0.0
        %4010 = vmatprep.subr.mxu0 0.0
        %4011 = vmatpush1.msra.mxu0 0.0
        %4012 = vmatprep.subr.mxu0 0.0
        %4013 = vmatpush1.msra.mxu0 0.0
        %4014 = vmatprep.subr.mxu0 0.0
        %4015 = vmatpush1.msra.mxu0 0.0
        %4016 = vmatprep.subr.mxu0 0.0
        %4017 = vmatpush1.msra.mxu0 0.0
        %4018 = vmatprep.subr.mxu0 0.0
        %4019 = vmatpush1.msra.mxu0 0.0
        %4020 = vmatprep.subr.mxu0 0.0
        %4021 = vmatpush1.msra.mxu0 0.0
        %4022 = vmatprep.subr.mxu0 0.0
        %4023 = vmatpush1.msra.mxu0 0.0
        %4024 = vmatprep.subr.mxu0 0.0
        %4025 = vmatpush1.msra.mxu0 0.0
        %4026 = vmatprep.subr.mxu0 0.0
        %4027 = vmatpush1.msra.mxu0 0.0
        %4028 = vmatprep.subr.mxu0 0.0
        %4029 = vmatpush1.msra.mxu0 0.0
        %4030 = vmatprep.mubr.f32.mxu0 0.0
        %4031 = vmatmul.mubr.f32.gmra.mrb[0].mxu0 %v3955
        %v4032 = vpop.f32.mrb[0].mxu0
        %v4033 = vadd.f32 %v3932, %v4032
        %v4034 = vpop.f32.mrb[0].mxu0
        %v4035 = vadd.f32 %v3934, %v4034
        %4036 = vmatprep.mubr.f32.mxu0 0.0
        %4037 = vmatmul.mubr.f32.gmra.mrb[0].mxu0 %v3958
        %v4038 = vpop.f32.mrb[0].mxu0
        %v4039 = vadd.f32 %v3938, %v4038
        %v4040 = vpop.f32.mrb[0].mxu0
        %v4041 = vadd.f32 %v3940, %v4040
        %4042 = vmatprep.mubr.f32.mxu0 0.0
        %4043 = vmatmul.mubr.f32.gmra.mrb[0].mxu0 %v3961
        %v4044 = vpop.f32.mrb[0].mxu0
        %v4045 = vadd.f32 %v3944, %v4044
        %v4046 = vpop.f32.mrb[0].mxu0
        %v4047 = vadd.f32 %v3946, %v4046
        %4048 = vmatprep.mubr.f32.mxu0 0.0
        %4049 = vmatmul.mubr.f32.gmra.mrb[0].mxu0 %v3964
        %v4050 = vpop.f32.mrb[0].mxu0
        %v4051 = vadd.f32 %v3950, %v4050
        %v4052 = vpop.f32.mrb[0].mxu0
        %v4053 = vadd.f32 %v3952, %v4052
        %4054 = vdwg.mxu0
        %s4055 = scalar_lea.vmem [#allocation8], 352
        %v4056 = vld [vmem:[%s4055] sm:$0xff]
        %v4057 = vld [vmem:[%s4055 + $0x8] sm:$0xff]
        %v4058 = vld [vmem:[%s4055 + $0x10] sm:$0xff]
        %v4059 = vld [vmem:[%s4055 + $0x18] sm:$0xff]
        %4060 = vmatprep.subr.mxu0 %v1513
        %4061 = vmatpush1.msra.mxu0 %v1512
        %4062 = vmatprep.subr.mxu0 %v1515
        %4063 = vmatpush1.msra.mxu0 %v1514
        %4064 = vmatprep.subr.mxu0 %v1517
        %4065 = vmatpush1.msra.mxu0 %v1516
        %4066 = vmatprep.subr.mxu0 %v1519
        %4067 = vmatpush1.msra.mxu0 %v1518
        %4068 = vmatprep.subr.mxu0 %v1521
        %4069 = vmatpush1.msra.mxu0 %v1520
        %4070 = vmatprep.subr.mxu0 %v1523
        %4071 = vmatpush1.msra.mxu0 %v1522
        %4072 = vmatprep.subr.mxu0 %v1525
        %4073 = vmatpush1.msra.mxu0 %v1524
        %4074 = vmatprep.subr.mxu0 %v1527
        %4075 = vmatpush1.msra.mxu0 %v1526
        %4076 = vmatprep.subr.mxu0 %v1529
        %4077 = vmatpush1.msra.mxu0 %v1528
        %4078 = vmatprep.subr.mxu0 %v1531
        %4079 = vmatpush1.msra.mxu0 %v1530
        %4080 = vmatprep.subr.mxu0 %v1533
        %4081 = vmatpush1.msra.mxu0 %v1532
        %4082 = vmatprep.subr.mxu0 %v1535
        %4083 = vmatpush1.msra.mxu0 %v1534
        %4084 = vmatprep.subr.mxu0 %v1537
        %4085 = vmatpush1.msra.mxu0 %v1536
        %4086 = vmatprep.subr.mxu0 %v1539
        %4087 = vmatpush1.msra.mxu0 %v1538
        %4088 = vmatprep.subr.mxu0 %v1541
        %4089 = vmatpush1.msra.mxu0 %v1540
        %4090 = vmatprep.subr.mxu0 %v1543
        %4091 = vmatpush1.msra.mxu0 %v1542
        %4092 = vmatprep.subr.mxu0 %v1545
        %4093 = vmatpush1.msra.mxu0 %v1544
        %4094 = vmatprep.subr.mxu0 %v1547
        %4095 = vmatpush1.msra.mxu0 %v1546
        %4096 = vmatprep.subr.mxu0 %v1549
        %4097 = vmatpush1.msra.mxu0 %v1548
        %4098 = vmatprep.subr.mxu0 %v1551
        %4099 = vmatpush1.msra.mxu0 %v1550
        %4100 = vmatprep.subr.mxu0 %v1553
        %4101 = vmatpush1.msra.mxu0 %v1552
        %4102 = vmatprep.subr.mxu0 %v1555
        %4103 = vmatpush1.msra.mxu0 %v1554
        %4104 = vmatprep.subr.mxu0 %v1557
        %4105 = vmatpush1.msra.mxu0 %v1556
        %4106 = vmatprep.subr.mxu0 %v1559
        %4107 = vmatpush1.msra.mxu0 %v1558
        %4108 = vmatprep.subr.mxu0 %v1561
        %4109 = vmatpush1.msra.mxu0 %v1560
        %4110 = vmatprep.subr.mxu0 %v1563
        %4111 = vmatpush1.msra.mxu0 %v1562
        %4112 = vmatprep.subr.mxu0 %v1565
        %4113 = vmatpush1.msra.mxu0 %v1564
        %4114 = vmatprep.subr.mxu0 %v1567
        %4115 = vmatpush1.msra.mxu0 %v1566
        %4116 = vmatprep.subr.mxu0 %v1569
        %4117 = vmatpush1.msra.mxu0 %v1568
        %4118 = vmatprep.subr.mxu0 %v1571
        %4119 = vmatpush1.msra.mxu0 %v1570
        %4120 = vmatprep.subr.mxu0 %v1573
        %4121 = vmatpush1.msra.mxu0 %v1572
        %4122 = vmatprep.subr.mxu0 %v1575
        %4123 = vmatpush1.msra.mxu0 %v1574
        %4124 = vmatprep.mubr.f32.mxu0 %v3658
        %4125 = vmatmul.mubr.f32.gmra.mrb[0].mxu0 %v3657
        %v4126 = vpop.f32.mrb[0].mxu0
        %v4127 = vadd.f32 0.0, %v4126
        %v4128 = vpop.f32.mrb[0].mxu0
        %v4129 = vadd.f32 0.0, %v4128
        %4130 = vmatprep.mubr.f32.mxu0 %v3660
        %4131 = vmatmul.mubr.f32.gmra.mrb[0].mxu0 %v3659
        %v4132 = vpop.f32.mrb[0].mxu0
        %v4133 = vadd.f32 0.0, %v4132
        %v4134 = vpop.f32.mrb[0].mxu0
        %v4135 = vadd.f32 0.0, %v4134
        %4136 = vmatprep.mubr.f32.mxu0 %v3662
        %4137 = vmatmul.mubr.f32.gmra.mrb[0].mxu0 %v3661
        %v4138 = vpop.f32.mrb[0].mxu0
        %v4139 = vadd.f32 0.0, %v4138
        %v4140 = vpop.f32.mrb[0].mxu0
        %v4141 = vadd.f32 0.0, %v4140
        %4142 = vmatprep.mubr.f32.mxu0 %v3664
        %4143 = vmatmul.mubr.f32.gmra.mrb[0].mxu0 %v3663
        %v4144 = vpop.f32.mrb[0].mxu0
        %v4145 = vadd.f32 0.0, %v4144
        %v4146 = vpop.f32.mrb[0].mxu0
        %v4147 = vadd.f32 0.0, %v4146
        %4148 = vdwg.mxu0
        %v4150 = vsel %vm830, %v4056, 0
        %v4153 = vsel %vm830, %v4057, 0
        %v4156 = vsel %vm830, %v4058, 0
        %v4159 = vsel %vm830, %v4059, 0
        %4161 = vmatprep.subr.mxu0 %v4129
        %4162 = vmatpush1.msra.mxu0 %v4127
        %4163 = vmatprep.subr.mxu0 %v4135
        %4164 = vmatpush1.msra.mxu0 %v4133
        %4165 = vmatprep.subr.mxu0 %v4141
        %4166 = vmatpush1.msra.mxu0 %v4139
        %4167 = vmatprep.subr.mxu0 %v4147
        %4168 = vmatpush1.msra.mxu0 %v4145
        %4169 = vmatprep.subr.mxu0 0.0
        %4170 = vmatpush1.msra.mxu0 0.0
        %4171 = vmatprep.subr.mxu0 0.0
        %4172 = vmatpush1.msra.mxu0 0.0
        %4173 = vmatprep.subr.mxu0 0.0
        %4174 = vmatpush1.msra.mxu0 0.0
        %4175 = vmatprep.subr.mxu0 0.0
        %4176 = vmatpush1.msra.mxu0 0.0
        %4177 = vmatprep.subr.mxu0 0.0
        %4178 = vmatpush1.msra.mxu0 0.0
        %4179 = vmatprep.subr.mxu0 0.0
        %4180 = vmatpush1.msra.mxu0 0.0
        %4181 = vmatprep.subr.mxu0 0.0
        %4182 = vmatpush1.msra.mxu0 0.0
        %4183 = vmatprep.subr.mxu0 0.0
        %4184 = vmatpush1.msra.mxu0 0.0
        %4185 = vmatprep.subr.mxu0 0.0
        %4186 = vmatpush1.msra.mxu0 0.0
        %4187 = vmatprep.subr.mxu0 0.0
        %4188 = vmatpush1.msra.mxu0 0.0
        %4189 = vmatprep.subr.mxu0 0.0
        %4190 = vmatpush1.msra.mxu0 0.0
        %4191 = vmatprep.subr.mxu0 0.0
        %4192 = vmatpush1.msra.mxu0 0.0
        %4193 = vmatprep.subr.mxu0 0.0
        %4194 = vmatpush1.msra.mxu0 0.0
        %4195 = vmatprep.subr.mxu0 0.0
        %4196 = vmatpush1.msra.mxu0 0.0
        %4197 = vmatprep.subr.mxu0 0.0
        %4198 = vmatpush1.msra.mxu0 0.0
        %4199 = vmatprep.subr.mxu0 0.0
        %4200 = vmatpush1.msra.mxu0 0.0
        %4201 = vmatprep.subr.mxu0 0.0
        %4202 = vmatpush1.msra.mxu0 0.0
        %4203 = vmatprep.subr.mxu0 0.0
        %4204 = vmatpush1.msra.mxu0 0.0
        %4205 = vmatprep.subr.mxu0 0.0
        %4206 = vmatpush1.msra.mxu0 0.0
        %4207 = vmatprep.subr.mxu0 0.0
        %4208 = vmatpush1.msra.mxu0 0.0
        %4209 = vmatprep.subr.mxu0 0.0
        %4210 = vmatpush1.msra.mxu0 0.0
        %4211 = vmatprep.subr.mxu0 0.0
        %4212 = vmatpush1.msra.mxu0 0.0
        %4213 = vmatprep.subr.mxu0 0.0
        %4214 = vmatpush1.msra.mxu0 0.0
        %4215 = vmatprep.subr.mxu0 0.0
        %4216 = vmatpush1.msra.mxu0 0.0
        %4217 = vmatprep.subr.mxu0 0.0
        %4218 = vmatpush1.msra.mxu0 0.0
        %4219 = vmatprep.subr.mxu0 0.0
        %4220 = vmatpush1.msra.mxu0 0.0
        %4221 = vmatprep.subr.mxu0 0.0
        %4222 = vmatpush1.msra.mxu0 0.0
        %4223 = vmatprep.subr.mxu0 0.0
        %4224 = vmatpush1.msra.mxu0 0.0
        %4225 = vmatprep.mubr.f32.mxu0 0.0
        %4226 = vmatmul.mubr.f32.gmra.mrb[0].mxu0 %v4150
        %v4227 = vpop.f32.mrb[0].mxu0
        %v4228 = vadd.f32 0.0, %v4227
        %v4229 = vpop.f32.mrb[0].mxu0
        %v4230 = vadd.f32 0.0, %v4229
        %4231 = vmatprep.mubr.f32.mxu0 0.0
        %4232 = vmatmul.mubr.f32.gmra.mrb[0].mxu0 %v4153
        %v4233 = vpop.f32.mrb[0].mxu0
        %v4234 = vadd.f32 0.0, %v4233
        %v4235 = vpop.f32.mrb[0].mxu0
        %v4236 = vadd.f32 0.0, %v4235
        %4237 = vmatprep.mubr.f32.mxu0 0.0
        %4238 = vmatmul.mubr.f32.gmra.mrb[0].mxu0 %v4156
        %v4239 = vpop.f32.mrb[0].mxu0
        %v4240 = vadd.f32 0.0, %v4239
        %v4241 = vpop.f32.mrb[0].mxu0
        %v4242 = vadd.f32 0.0, %v4241
        %4243 = vmatprep.mubr.f32.mxu0 0.0
        %4244 = vmatmul.mubr.f32.gmra.mrb[0].mxu0 %v4159
        %v4245 = vpop.f32.mrb[0].mxu0
        %v4246 = vadd.f32 0.0, %v4245
        %v4247 = vpop.f32.mrb[0].mxu0
        %v4248 = vadd.f32 0.0, %v4247
        %4249 = vdwg.mxu0
        %v4250 = vadd.f32 %v4033, %v4228
        %v4251 = vadd.f32 %v4035, %v4230
        %v4252 = vadd.f32 %v4039, %v4234
        %v4253 = vadd.f32 %v4041, %v4236
        %v4254 = vadd.f32 %v4045, %v4240
        %v4255 = vadd.f32 %v4047, %v4242
        %v4256 = vadd.f32 %v4051, %v4246
        %v4257 = vadd.f32 %v4053, %v4248
        %s4258 = scalar_lea.vmem [#allocation8], 384
        %v4259 = vld [vmem:[%s4258] sm:$0xff]
        %v4260 = vld [vmem:[%s4258 + $0x8] sm:$0xff]
        %v4261 = vld [vmem:[%s4258 + $0x10] sm:$0xff]
        %v4262 = vld [vmem:[%s4258 + $0x18] sm:$0xff]
        %4263 = vmatprep.subr.mxu0 %v1781
        %4264 = vmatpush1.msra.mxu0 %v1780
        %4265 = vmatprep.subr.mxu0 %v1783
        %4266 = vmatpush1.msra.mxu0 %v1782
        %4267 = vmatprep.subr.mxu0 %v1785
        %4268 = vmatpush1.msra.mxu0 %v1784
        %4269 = vmatprep.subr.mxu0 %v1787
        %4270 = vmatpush1.msra.mxu0 %v1786
        %4271 = vmatprep.subr.mxu0 %v1789
        %4272 = vmatpush1.msra.mxu0 %v1788
        %4273 = vmatprep.subr.mxu0 %v1791
        %4274 = vmatpush1.msra.mxu0 %v1790
        %4275 = vmatprep.subr.mxu0 %v1793
        %4276 = vmatpush1.msra.mxu0 %v1792
        %4277 = vmatprep.subr.mxu0 %v1795
        %4278 = vmatpush1.msra.mxu0 %v1794
        %4279 = vmatprep.subr.mxu0 %v1797
        %4280 = vmatpush1.msra.mxu0 %v1796
        %4281 = vmatprep.subr.mxu0 %v1799
        %4282 = vmatpush1.msra.mxu0 %v1798
        %4283 = vmatprep.subr.mxu0 %v1801
        %4284 = vmatpush1.msra.mxu0 %v1800
        %4285 = vmatprep.subr.mxu0 %v1803
        %4286 = vmatpush1.msra.mxu0 %v1802
        %4287 = vmatprep.subr.mxu0 %v1805
        %4288 = vmatpush1.msra.mxu0 %v1804
        %4289 = vmatprep.subr.mxu0 %v1807
        %4290 = vmatpush1.msra.mxu0 %v1806
        %4291 = vmatprep.subr.mxu0 %v1809
        %4292 = vmatpush1.msra.mxu0 %v1808
        %4293 = vmatprep.subr.mxu0 %v1811
        %4294 = vmatpush1.msra.mxu0 %v1810
        %4295 = vmatprep.subr.mxu0 %v1813
        %4296 = vmatpush1.msra.mxu0 %v1812
        %4297 = vmatprep.subr.mxu0 %v1815
        %4298 = vmatpush1.msra.mxu0 %v1814
        %4299 = vmatprep.subr.mxu0 %v1817
        %4300 = vmatpush1.msra.mxu0 %v1816
        %4301 = vmatprep.subr.mxu0 %v1819
        %4302 = vmatpush1.msra.mxu0 %v1818
        %4303 = vmatprep.subr.mxu0 %v1821
        %4304 = vmatpush1.msra.mxu0 %v1820
        %4305 = vmatprep.subr.mxu0 %v1823
        %4306 = vmatpush1.msra.mxu0 %v1822
        %4307 = vmatprep.subr.mxu0 %v1825
        %4308 = vmatpush1.msra.mxu0 %v1824
        %4309 = vmatprep.subr.mxu0 %v1827
        %4310 = vmatpush1.msra.mxu0 %v1826
        %4311 = vmatprep.subr.mxu0 %v1829
        %4312 = vmatpush1.msra.mxu0 %v1828
        %4313 = vmatprep.subr.mxu0 %v1831
        %4314 = vmatpush1.msra.mxu0 %v1830
        %4315 = vmatprep.subr.mxu0 %v1833
        %4316 = vmatpush1.msra.mxu0 %v1832
        %4317 = vmatprep.subr.mxu0 %v1835
        %4318 = vmatpush1.msra.mxu0 %v1834
        %4319 = vmatprep.subr.mxu0 %v1837
        %4320 = vmatpush1.msra.mxu0 %v1836
        %4321 = vmatprep.subr.mxu0 %v1839
        %4322 = vmatpush1.msra.mxu0 %v1838
        %4323 = vmatprep.subr.mxu0 %v1841
        %4324 = vmatpush1.msra.mxu0 %v1840
        %4325 = vmatprep.subr.mxu0 %v1843
        %4326 = vmatpush1.msra.mxu0 %v1842
        %4327 = vmatprep.mubr.f32.mxu0 %v3658
        %4328 = vmatmul.mubr.f32.gmra.mrb[0].mxu0 %v3657
        %v4329 = vpop.f32.mrb[0].mxu0
        %v4330 = vadd.f32 0.0, %v4329
        %v4331 = vpop.f32.mrb[0].mxu0
        %v4332 = vadd.f32 0.0, %v4331
        %4333 = vmatprep.mubr.f32.mxu0 %v3660
        %4334 = vmatmul.mubr.f32.gmra.mrb[0].mxu0 %v3659
        %v4335 = vpop.f32.mrb[0].mxu0
        %v4336 = vadd.f32 0.0, %v4335
        %v4337 = vpop.f32.mrb[0].mxu0
        %v4338 = vadd.f32 0.0, %v4337
        %4339 = vmatprep.mubr.f32.mxu0 %v3662
        %4340 = vmatmul.mubr.f32.gmra.mrb[0].mxu0 %v3661
        %v4341 = vpop.f32.mrb[0].mxu0
        %v4342 = vadd.f32 0.0, %v4341
        %v4343 = vpop.f32.mrb[0].mxu0
        %v4344 = vadd.f32 0.0, %v4343
        %4345 = vmatprep.mubr.f32.mxu0 %v3664
        %4346 = vmatmul.mubr.f32.gmra.mrb[0].mxu0 %v3663
        %v4347 = vpop.f32.mrb[0].mxu0
        %v4348 = vadd.f32 0.0, %v4347
        %v4349 = vpop.f32.mrb[0].mxu0
        %v4350 = vadd.f32 0.0, %v4349
        %4351 = vdwg.mxu0
        %v4353 = vsel %vm830, %v4259, 0
        %v4356 = vsel %vm830, %v4260, 0
        %v4359 = vsel %vm830, %v4261, 0
        %v4362 = vsel %vm830, %v4262, 0
        %4364 = vmatprep.subr.mxu0 %v4332
        %4365 = vmatpush1.msra.mxu0 %v4330
        %4366 = vmatprep.subr.mxu0 %v4338
        %4367 = vmatpush1.msra.mxu0 %v4336
        %4368 = vmatprep.subr.mxu0 %v4344
        %4369 = vmatpush1.msra.mxu0 %v4342
        %4370 = vmatprep.subr.mxu0 %v4350
        %4371 = vmatpush1.msra.mxu0 %v4348
        %4372 = vmatprep.subr.mxu0 0.0
        %4373 = vmatpush1.msra.mxu0 0.0
        %4374 = vmatprep.subr.mxu0 0.0
        %4375 = vmatpush1.msra.mxu0 0.0
        %4376 = vmatprep.subr.mxu0 0.0
        %4377 = vmatpush1.msra.mxu0 0.0
        %4378 = vmatprep.subr.mxu0 0.0
        %4379 = vmatpush1.msra.mxu0 0.0
        %4380 = vmatprep.subr.mxu0 0.0
        %4381 = vmatpush1.msra.mxu0 0.0
        %4382 = vmatprep.subr.mxu0 0.0
        %4383 = vmatpush1.msra.mxu0 0.0
        %4384 = vmatprep.subr.mxu0 0.0
        %4385 = vmatpush1.msra.mxu0 0.0
        %4386 = vmatprep.subr.mxu0 0.0
        %4387 = vmatpush1.msra.mxu0 0.0
        %4388 = vmatprep.subr.mxu0 0.0
        %4389 = vmatpush1.msra.mxu0 0.0
        %4390 = vmatprep.subr.mxu0 0.0
        %4391 = vmatpush1.msra.mxu0 0.0
        %4392 = vmatprep.subr.mxu0 0.0
        %4393 = vmatpush1.msra.mxu0 0.0
        %4394 = vmatprep.subr.mxu0 0.0
        %4395 = vmatpush1.msra.mxu0 0.0
        %4396 = vmatprep.subr.mxu0 0.0
        %4397 = vmatpush1.msra.mxu0 0.0
        %4398 = vmatprep.subr.mxu0 0.0
        %4399 = vmatpush1.msra.mxu0 0.0
        %4400 = vmatprep.subr.mxu0 0.0
        %4401 = vmatpush1.msra.mxu0 0.0
        %4402 = vmatprep.subr.mxu0 0.0
        %4403 = vmatpush1.msra.mxu0 0.0
        %4404 = vmatprep.subr.mxu0 0.0
        %4405 = vmatpush1.msra.mxu0 0.0
        %4406 = vmatprep.subr.mxu0 0.0
        %4407 = vmatpush1.msra.mxu0 0.0
        %4408 = vmatprep.subr.mxu0 0.0
        %4409 = vmatpush1.msra.mxu0 0.0
        %4410 = vmatprep.subr.mxu0 0.0
        %4411 = vmatpush1.msra.mxu0 0.0
        %4412 = vmatprep.subr.mxu0 0.0
        %4413 = vmatpush1.msra.mxu0 0.0
        %4414 = vmatprep.subr.mxu0 0.0
        %4415 = vmatpush1.msra.mxu0 0.0
        %4416 = vmatprep.subr.mxu0 0.0
        %4417 = vmatpush1.msra.mxu0 0.0
        %4418 = vmatprep.subr.mxu0 0.0
        %4419 = vmatpush1.msra.mxu0 0.0
        %4420 = vmatprep.subr.mxu0 0.0
        %4421 = vmatpush1.msra.mxu0 0.0
        %4422 = vmatprep.subr.mxu0 0.0
        %4423 = vmatpush1.msra.mxu0 0.0
        %4424 = vmatprep.subr.mxu0 0.0
        %4425 = vmatpush1.msra.mxu0 0.0
        %4426 = vmatprep.subr.mxu0 0.0
        %4427 = vmatpush1.msra.mxu0 0.0
        %4428 = vmatprep.mubr.f32.mxu0 0.0
        %4429 = vmatmul.mubr.f32.gmra.mrb[0].mxu0 %v4353
        %v4430 = vpop.f32.mrb[0].mxu0
        %v4431 = vadd.f32 0.0, %v4430
        %v4432 = vpop.f32.mrb[0].mxu0
        %v4433 = vadd.f32 0.0, %v4432
        %4434 = vmatprep.mubr.f32.mxu0 0.0
        %4435 = vmatmul.mubr.f32.gmra.mrb[0].mxu0 %v4356
        %v4436 = vpop.f32.mrb[0].mxu0
        %v4437 = vadd.f32 0.0, %v4436
        %v4438 = vpop.f32.mrb[0].mxu0
        %v4439 = vadd.f32 0.0, %v4438
        %4440 = vmatprep.mubr.f32.mxu0 0.0
        %4441 = vmatmul.mubr.f32.gmra.mrb[0].mxu0 %v4359
        %v4442 = vpop.f32.mrb[0].mxu0
        %v4443 = vadd.f32 0.0, %v4442
        %v4444 = vpop.f32.mrb[0].mxu0
        %v4445 = vadd.f32 0.0, %v4444
        %4446 = vmatprep.mubr.f32.mxu0 0.0
        %4447 = vmatmul.mubr.f32.gmra.mrb[0].mxu0 %v4362
        %v4448 = vpop.f32.mrb[0].mxu0
        %v4449 = vadd.f32 0.0, %v4448
        %v4450 = vpop.f32.mrb[0].mxu0
        %v4451 = vadd.f32 0.0, %v4450
        %4452 = vdwg.mxu0
        %v4453 = vadd.f32 %v4250, %v4431
        %v4454 = vadd.f32 %v4251, %v4433
        %v4455 = vadd.f32 %v4252, %v4437
        %v4456 = vadd.f32 %v4253, %v4439
        %v4457 = vadd.f32 %v4254, %v4443
        %v4458 = vadd.f32 %v4255, %v4445
        %v4459 = vadd.f32 %v4256, %v4449
        %v4460 = vadd.f32 %v4257, %v4451
        %s4461 = scalar_lea.vmem [#allocation8], 416
        %v4462 = vld [vmem:[%s4461] sm:$0xff]
        %v4463 = vld [vmem:[%s4461 + $0x8] sm:$0xff]
        %v4464 = vld [vmem:[%s4461 + $0x10] sm:$0xff]
        %v4465 = vld [vmem:[%s4461 + $0x18] sm:$0xff]
        %4466 = vmatprep.subr.mxu0 %v2049
        %4467 = vmatpush1.msra.mxu0 %v2048
        %4468 = vmatprep.subr.mxu0 %v2051
        %4469 = vmatpush1.msra.mxu0 %v2050
        %4470 = vmatprep.subr.mxu0 %v2053
        %4471 = vmatpush1.msra.mxu0 %v2052
        %4472 = vmatprep.subr.mxu0 %v2055
        %4473 = vmatpush1.msra.mxu0 %v2054
        %4474 = vmatprep.subr.mxu0 %v2057
        %4475 = vmatpush1.msra.mxu0 %v2056
        %4476 = vmatprep.subr.mxu0 %v2059
        %4477 = vmatpush1.msra.mxu0 %v2058
        %4478 = vmatprep.subr.mxu0 %v2061
        %4479 = vmatpush1.msra.mxu0 %v2060
        %4480 = vmatprep.subr.mxu0 %v2063
        %4481 = vmatpush1.msra.mxu0 %v2062
        %4482 = vmatprep.subr.mxu0 %v2065
        %4483 = vmatpush1.msra.mxu0 %v2064
        %4484 = vmatprep.subr.mxu0 %v2067
        %4485 = vmatpush1.msra.mxu0 %v2066
        %4486 = vmatprep.subr.mxu0 %v2069
        %4487 = vmatpush1.msra.mxu0 %v2068
        %4488 = vmatprep.subr.mxu0 %v2071
        %4489 = vmatpush1.msra.mxu0 %v2070
        %4490 = vmatprep.subr.mxu0 %v2073
        %4491 = vmatpush1.msra.mxu0 %v2072
        %4492 = vmatprep.subr.mxu0 %v2075
        %4493 = vmatpush1.msra.mxu0 %v2074
        %4494 = vmatprep.subr.mxu0 %v2077
        %4495 = vmatpush1.msra.mxu0 %v2076
        %4496 = vmatprep.subr.mxu0 %v2079
        %4497 = vmatpush1.msra.mxu0 %v2078
        %4498 = vmatprep.subr.mxu0 %v2081
        %4499 = vmatpush1.msra.mxu0 %v2080
        %4500 = vmatprep.subr.mxu0 %v2083
        %4501 = vmatpush1.msra.mxu0 %v2082
        %4502 = vmatprep.subr.mxu0 %v2085
        %4503 = vmatpush1.msra.mxu0 %v2084
        %4504 = vmatprep.subr.mxu0 %v2087
        %4505 = vmatpush1.msra.mxu0 %v2086
        %4506 = vmatprep.subr.mxu0 %v2089
        %4507 = vmatpush1.msra.mxu0 %v2088
        %4508 = vmatprep.subr.mxu0 %v2091
        %4509 = vmatpush1.msra.mxu0 %v2090
        %4510 = vmatprep.subr.mxu0 %v2093
        %4511 = vmatpush1.msra.mxu0 %v2092
        %4512 = vmatprep.subr.mxu0 %v2095
        %4513 = vmatpush1.msra.mxu0 %v2094
        %4514 = vmatprep.subr.mxu0 %v2097
        %4515 = vmatpush1.msra.mxu0 %v2096
        %4516 = vmatprep.subr.mxu0 %v2099
        %4517 = vmatpush1.msra.mxu0 %v2098
        %4518 = vmatprep.subr.mxu0 %v2101
        %4519 = vmatpush1.msra.mxu0 %v2100
        %4520 = vmatprep.subr.mxu0 %v2103
        %4521 = vmatpush1.msra.mxu0 %v2102
        %4522 = vmatprep.subr.mxu0 %v2105
        %4523 = vmatpush1.msra.mxu0 %v2104
        %4524 = vmatprep.subr.mxu0 %v2107
        %4525 = vmatpush1.msra.mxu0 %v2106
        %4526 = vmatprep.subr.mxu0 %v2109
        %4527 = vmatpush1.msra.mxu0 %v2108
        %4528 = vmatprep.subr.mxu0 %v2111
        %4529 = vmatpush1.msra.mxu0 %v2110
        %4530 = vmatprep.mubr.f32.mxu0 %v3658
        %4531 = vmatmul.mubr.f32.gmra.mrb[0].mxu0 %v3657
        %v4532 = vpop.f32.mrb[0].mxu0
        %v4533 = vadd.f32 0.0, %v4532
        %v4534 = vpop.f32.mrb[0].mxu0
        %v4535 = vadd.f32 0.0, %v4534
        %4536 = vmatprep.mubr.f32.mxu0 %v3660
        %4537 = vmatmul.mubr.f32.gmra.mrb[0].mxu0 %v3659
        %v4538 = vpop.f32.mrb[0].mxu0
        %v4539 = vadd.f32 0.0, %v4538
        %v4540 = vpop.f32.mrb[0].mxu0
        %v4541 = vadd.f32 0.0, %v4540
        %4542 = vmatprep.mubr.f32.mxu0 %v3662
        %4543 = vmatmul.mubr.f32.gmra.mrb[0].mxu0 %v3661
        %v4544 = vpop.f32.mrb[0].mxu0
        %v4545 = vadd.f32 0.0, %v4544
        %v4546 = vpop.f32.mrb[0].mxu0
        %v4547 = vadd.f32 0.0, %v4546
        %4548 = vmatprep.mubr.f32.mxu0 %v3664
        %4549 = vmatmul.mubr.f32.gmra.mrb[0].mxu0 %v3663
        %v4550 = vpop.f32.mrb[0].mxu0
        %v4551 = vadd.f32 0.0, %v4550
        %v4552 = vpop.f32.mrb[0].mxu0
        %v4553 = vadd.f32 0.0, %v4552
        %4554 = vdwg.mxu0
        %v4556 = vsel %vm830, %v4462, 0
        %v4559 = vsel %vm830, %v4463, 0
        %v4562 = vsel %vm830, %v4464, 0
        %v4565 = vsel %vm830, %v4465, 0
        %4567 = vmatprep.subr.mxu0 %v4535
        %4568 = vmatpush1.msra.mxu0 %v4533
        %4569 = vmatprep.subr.mxu0 %v4541
        %4570 = vmatpush1.msra.mxu0 %v4539
        %4571 = vmatprep.subr.mxu0 %v4547
        %4572 = vmatpush1.msra.mxu0 %v4545
        %4573 = vmatprep.subr.mxu0 %v4553
        %4574 = vmatpush1.msra.mxu0 %v4551
        %4575 = vmatprep.subr.mxu0 0.0
        %4576 = vmatpush1.msra.mxu0 0.0
        %4577 = vmatprep.subr.mxu0 0.0
        %4578 = vmatpush1.msra.mxu0 0.0
        %4579 = vmatprep.subr.mxu0 0.0
        %4580 = vmatpush1.msra.mxu0 0.0
        %4581 = vmatprep.subr.mxu0 0.0
        %4582 = vmatpush1.msra.mxu0 0.0
        %4583 = vmatprep.subr.mxu0 0.0
        %4584 = vmatpush1.msra.mxu0 0.0
        %4585 = vmatprep.subr.mxu0 0.0
        %4586 = vmatpush1.msra.mxu0 0.0
        %4587 = vmatprep.subr.mxu0 0.0
        %4588 = vmatpush1.msra.mxu0 0.0
        %4589 = vmatprep.subr.mxu0 0.0
        %4590 = vmatpush1.msra.mxu0 0.0
        %4591 = vmatprep.subr.mxu0 0.0
        %4592 = vmatpush1.msra.mxu0 0.0
        %4593 = vmatprep.subr.mxu0 0.0
        %4594 = vmatpush1.msra.mxu0 0.0
        %4595 = vmatprep.subr.mxu0 0.0
        %4596 = vmatpush1.msra.mxu0 0.0
        %4597 = vmatprep.subr.mxu0 0.0
        %4598 = vmatpush1.msra.mxu0 0.0
        %4599 = vmatprep.subr.mxu0 0.0
        %4600 = vmatpush1.msra.mxu0 0.0
        %4601 = vmatprep.subr.mxu0 0.0
        %4602 = vmatpush1.msra.mxu0 0.0
        %4603 = vmatprep.subr.mxu0 0.0
        %4604 = vmatpush1.msra.mxu0 0.0
        %4605 = vmatprep.subr.mxu0 0.0
        %4606 = vmatpush1.msra.mxu0 0.0
        %4607 = vmatprep.subr.mxu0 0.0
        %4608 = vmatpush1.msra.mxu0 0.0
        %4609 = vmatprep.subr.mxu0 0.0
        %4610 = vmatpush1.msra.mxu0 0.0
        %4611 = vmatprep.subr.mxu0 0.0
        %4612 = vmatpush1.msra.mxu0 0.0
        %4613 = vmatprep.subr.mxu0 0.0
        %4614 = vmatpush1.msra.mxu0 0.0
        %4615 = vmatprep.subr.mxu0 0.0
        %4616 = vmatpush1.msra.mxu0 0.0
        %4617 = vmatprep.subr.mxu0 0.0
        %4618 = vmatpush1.msra.mxu0 0.0
        %4619 = vmatprep.subr.mxu0 0.0
        %4620 = vmatpush1.msra.mxu0 0.0
        %4621 = vmatprep.subr.mxu0 0.0
        %4622 = vmatpush1.msra.mxu0 0.0
        %4623 = vmatprep.subr.mxu0 0.0
        %4624 = vmatpush1.msra.mxu0 0.0
        %4625 = vmatprep.subr.mxu0 0.0
        %4626 = vmatpush1.msra.mxu0 0.0
        %4627 = vmatprep.subr.mxu0 0.0
        %4628 = vmatpush1.msra.mxu0 0.0
        %4629 = vmatprep.subr.mxu0 0.0
        %4630 = vmatpush1.msra.mxu0 0.0
        %4631 = vmatprep.mubr.f32.mxu0 0.0
        %4632 = vmatmul.mubr.f32.gmra.mrb[0].mxu0 %v4556
        %v4633 = vpop.f32.mrb[0].mxu0
        %v4634 = vadd.f32 0.0, %v4633
        %v4635 = vpop.f32.mrb[0].mxu0
        %v4636 = vadd.f32 0.0, %v4635
        %4637 = vmatprep.mubr.f32.mxu0 0.0
        %4638 = vmatmul.mubr.f32.gmra.mrb[0].mxu0 %v4559
        %v4639 = vpop.f32.mrb[0].mxu0
        %v4640 = vadd.f32 0.0, %v4639
        %v4641 = vpop.f32.mrb[0].mxu0
        %v4642 = vadd.f32 0.0, %v4641
        %4643 = vmatprep.mubr.f32.mxu0 0.0
        %4644 = vmatmul.mubr.f32.gmra.mrb[0].mxu0 %v4562
        %v4645 = vpop.f32.mrb[0].mxu0
        %v4646 = vadd.f32 0.0, %v4645
        %v4647 = vpop.f32.mrb[0].mxu0
        %v4648 = vadd.f32 0.0, %v4647
        %4649 = vmatprep.mubr.f32.mxu0 0.0
        %4650 = vmatmul.mubr.f32.gmra.mrb[0].mxu0 %v4565
        %v4651 = vpop.f32.mrb[0].mxu0
        %v4652 = vadd.f32 0.0, %v4651
        %v4653 = vpop.f32.mrb[0].mxu0
        %v4654 = vadd.f32 0.0, %v4653
        %4655 = vdwg.mxu0
        %v4656 = vadd.f32 %v4453, %v4634
        %v4657 = vadd.f32 %v4454, %v4636
        %v4658 = vadd.f32 %v4455, %v4640
        %v4659 = vadd.f32 %v4456, %v4642
        %v4660 = vadd.f32 %v4457, %v4646
        %v4661 = vadd.f32 %v4458, %v4648
        %v4662 = vadd.f32 %v4459, %v4652
        %v4663 = vadd.f32 %v4460, %v4654
        %s4664 = scalar_lea.vmem [#allocation8], 448
        %v4665 = vld [vmem:[%s4664] sm:$0xff]
        %v4666 = vld [vmem:[%s4664 + $0x8] sm:$0xff]
        %v4667 = vld [vmem:[%s4664 + $0x10] sm:$0xff]
        %v4668 = vld [vmem:[%s4664 + $0x18] sm:$0xff]
        %4669 = vmatprep.subr.mxu0 %v2317
        %4670 = vmatpush1.msra.mxu0 %v2316
        %4671 = vmatprep.subr.mxu0 %v2319
        %4672 = vmatpush1.msra.mxu0 %v2318
        %4673 = vmatprep.subr.mxu0 %v2321
        %4674 = vmatpush1.msra.mxu0 %v2320
        %4675 = vmatprep.subr.mxu0 %v2323
        %4676 = vmatpush1.msra.mxu0 %v2322
        %4677 = vmatprep.subr.mxu0 %v2325
        %4678 = vmatpush1.msra.mxu0 %v2324
        %4679 = vmatprep.subr.mxu0 %v2327
        %4680 = vmatpush1.msra.mxu0 %v2326
        %4681 = vmatprep.subr.mxu0 %v2329
        %4682 = vmatpush1.msra.mxu0 %v2328
        %4683 = vmatprep.subr.mxu0 %v2331
        %4684 = vmatpush1.msra.mxu0 %v2330
        %4685 = vmatprep.subr.mxu0 %v2333
        %4686 = vmatpush1.msra.mxu0 %v2332
        %4687 = vmatprep.subr.mxu0 %v2335
        %4688 = vmatpush1.msra.mxu0 %v2334
        %4689 = vmatprep.subr.mxu0 %v2337
        %4690 = vmatpush1.msra.mxu0 %v2336
        %4691 = vmatprep.subr.mxu0 %v2339
        %4692 = vmatpush1.msra.mxu0 %v2338
        %4693 = vmatprep.subr.mxu0 %v2341
        %4694 = vmatpush1.msra.mxu0 %v2340
        %4695 = vmatprep.subr.mxu0 %v2343
        %4696 = vmatpush1.msra.mxu0 %v2342
        %4697 = vmatprep.subr.mxu0 %v2345
        %4698 = vmatpush1.msra.mxu0 %v2344
        %4699 = vmatprep.subr.mxu0 %v2347
        %4700 = vmatpush1.msra.mxu0 %v2346
        %4701 = vmatprep.subr.mxu0 %v2349
        %4702 = vmatpush1.msra.mxu0 %v2348
        %4703 = vmatprep.subr.mxu0 %v2351
        %4704 = vmatpush1.msra.mxu0 %v2350
        %4705 = vmatprep.subr.mxu0 %v2353
        %4706 = vmatpush1.msra.mxu0 %v2352
        %4707 = vmatprep.subr.mxu0 %v2355
        %4708 = vmatpush1.msra.mxu0 %v2354
        %4709 = vmatprep.subr.mxu0 %v2357
        %4710 = vmatpush1.msra.mxu0 %v2356
        %4711 = vmatprep.subr.mxu0 %v2359
        %4712 = vmatpush1.msra.mxu0 %v2358
        %4713 = vmatprep.subr.mxu0 %v2361
        %4714 = vmatpush1.msra.mxu0 %v2360
        %4715 = vmatprep.subr.mxu0 %v2363
        %4716 = vmatpush1.msra.mxu0 %v2362
        %4717 = vmatprep.subr.mxu0 %v2365
        %4718 = vmatpush1.msra.mxu0 %v2364
        %4719 = vmatprep.subr.mxu0 %v2367
        %4720 = vmatpush1.msra.mxu0 %v2366
        %4721 = vmatprep.subr.mxu0 %v2369
        %4722 = vmatpush1.msra.mxu0 %v2368
        %4723 = vmatprep.subr.mxu0 %v2371
        %4724 = vmatpush1.msra.mxu0 %v2370
        %4725 = vmatprep.subr.mxu0 %v2373
        %4726 = vmatpush1.msra.mxu0 %v2372
        %4727 = vmatprep.subr.mxu0 %v2375
        %4728 = vmatpush1.msra.mxu0 %v2374
        %4729 = vmatprep.subr.mxu0 %v2377
        %4730 = vmatpush1.msra.mxu0 %v2376
        %4731 = vmatprep.subr.mxu0 %v2379
        %4732 = vmatpush1.msra.mxu0 %v2378
        %4733 = vmatprep.mubr.f32.mxu0 %v3658
        %4734 = vmatmul.mubr.f32.gmra.mrb[0].mxu0 %v3657
        %v4735 = vpop.f32.mrb[0].mxu0
        %v4736 = vadd.f32 0.0, %v4735
        %v4737 = vpop.f32.mrb[0].mxu0
        %v4738 = vadd.f32 0.0, %v4737
        %4739 = vmatprep.mubr.f32.mxu0 %v3660
        %4740 = vmatmul.mubr.f32.gmra.mrb[0].mxu0 %v3659
        %v4741 = vpop.f32.mrb[0].mxu0
        %v4742 = vadd.f32 0.0, %v4741
        %v4743 = vpop.f32.mrb[0].mxu0
        %v4744 = vadd.f32 0.0, %v4743
        %4745 = vmatprep.mubr.f32.mxu0 %v3662
        %4746 = vmatmul.mubr.f32.gmra.mrb[0].mxu0 %v3661
        %v4747 = vpop.f32.mrb[0].mxu0
        %v4748 = vadd.f32 0.0, %v4747
        %v4749 = vpop.f32.mrb[0].mxu0
        %v4750 = vadd.f32 0.0, %v4749
        %4751 = vmatprep.mubr.f32.mxu0 %v3664
        %4752 = vmatmul.mubr.f32.gmra.mrb[0].mxu0 %v3663
        %v4753 = vpop.f32.mrb[0].mxu0
        %v4754 = vadd.f32 0.0, %v4753
        %v4755 = vpop.f32.mrb[0].mxu0
        %v4756 = vadd.f32 0.0, %v4755
        %4757 = vdwg.mxu0
        %v4759 = vsel %vm830, %v4665, 0
        %v4762 = vsel %vm830, %v4666, 0
        %v4765 = vsel %vm830, %v4667, 0
        %v4768 = vsel %vm830, %v4668, 0
        %4770 = vmatprep.subr.mxu0 %v4738
        %4771 = vmatpush1.msra.mxu0 %v4736
        %4772 = vmatprep.subr.mxu0 %v4744
        %4773 = vmatpush1.msra.mxu0 %v4742
        %4774 = vmatprep.subr.mxu0 %v4750
        %4775 = vmatpush1.msra.mxu0 %v4748
        %4776 = vmatprep.subr.mxu0 %v4756
        %4777 = vmatpush1.msra.mxu0 %v4754
        %4778 = vmatprep.subr.mxu0 0.0
        %4779 = vmatpush1.msra.mxu0 0.0
        %4780 = vmatprep.subr.mxu0 0.0
        %4781 = vmatpush1.msra.mxu0 0.0
        %4782 = vmatprep.subr.mxu0 0.0
        %4783 = vmatpush1.msra.mxu0 0.0
        %4784 = vmatprep.subr.mxu0 0.0
        %4785 = vmatpush1.msra.mxu0 0.0
        %4786 = vmatprep.subr.mxu0 0.0
        %4787 = vmatpush1.msra.mxu0 0.0
        %4788 = vmatprep.subr.mxu0 0.0
        %4789 = vmatpush1.msra.mxu0 0.0
        %4790 = vmatprep.subr.mxu0 0.0
        %4791 = vmatpush1.msra.mxu0 0.0
        %4792 = vmatprep.subr.mxu0 0.0
        %4793 = vmatpush1.msra.mxu0 0.0
        %4794 = vmatprep.subr.mxu0 0.0
        %4795 = vmatpush1.msra.mxu0 0.0
        %4796 = vmatprep.subr.mxu0 0.0
        %4797 = vmatpush1.msra.mxu0 0.0
        %4798 = vmatprep.subr.mxu0 0.0
        %4799 = vmatpush1.msra.mxu0 0.0
        %4800 = vmatprep.subr.mxu0 0.0
        %4801 = vmatpush1.msra.mxu0 0.0
        %4802 = vmatprep.subr.mxu0 0.0
        %4803 = vmatpush1.msra.mxu0 0.0
        %4804 = vmatprep.subr.mxu0 0.0
        %4805 = vmatpush1.msra.mxu0 0.0
        %4806 = vmatprep.subr.mxu0 0.0
        %4807 = vmatpush1.msra.mxu0 0.0
        %4808 = vmatprep.subr.mxu0 0.0
        %4809 = vmatpush1.msra.mxu0 0.0
        %4810 = vmatprep.subr.mxu0 0.0
        %4811 = vmatpush1.msra.mxu0 0.0
        %4812 = vmatprep.subr.mxu0 0.0
        %4813 = vmatpush1.msra.mxu0 0.0
        %4814 = vmatprep.subr.mxu0 0.0
        %4815 = vmatpush1.msra.mxu0 0.0
        %4816 = vmatprep.subr.mxu0 0.0
        %4817 = vmatpush1.msra.mxu0 0.0
        %4818 = vmatprep.subr.mxu0 0.0
        %4819 = vmatpush1.msra.mxu0 0.0
        %4820 = vmatprep.subr.mxu0 0.0
        %4821 = vmatpush1.msra.mxu0 0.0
        %4822 = vmatprep.subr.mxu0 0.0
        %4823 = vmatpush1.msra.mxu0 0.0
        %4824 = vmatprep.subr.mxu0 0.0
        %4825 = vmatpush1.msra.mxu0 0.0
        %4826 = vmatprep.subr.mxu0 0.0
        %4827 = vmatpush1.msra.mxu0 0.0
        %4828 = vmatprep.subr.mxu0 0.0
        %4829 = vmatpush1.msra.mxu0 0.0
        %4830 = vmatprep.subr.mxu0 0.0
        %4831 = vmatpush1.msra.mxu0 0.0
        %4832 = vmatprep.subr.mxu0 0.0
        %4833 = vmatpush1.msra.mxu0 0.0
        %4834 = vmatprep.mubr.f32.mxu0 0.0
        %4835 = vmatmul.mubr.f32.gmra.mrb[0].mxu0 %v4759
        %v4836 = vpop.f32.mrb[0].mxu0
        %v4837 = vadd.f32 0.0, %v4836
        %v4838 = vpop.f32.mrb[0].mxu0
        %v4839 = vadd.f32 0.0, %v4838
        %4840 = vmatprep.mubr.f32.mxu0 0.0
        %4841 = vmatmul.mubr.f32.gmra.mrb[0].mxu0 %v4762
        %v4842 = vpop.f32.mrb[0].mxu0
        %v4843 = vadd.f32 0.0, %v4842
        %v4844 = vpop.f32.mrb[0].mxu0
        %v4845 = vadd.f32 0.0, %v4844
        %4846 = vmatprep.mubr.f32.mxu0 0.0
        %4847 = vmatmul.mubr.f32.gmra.mrb[0].mxu0 %v4765
        %v4848 = vpop.f32.mrb[0].mxu0
        %v4849 = vadd.f32 0.0, %v4848
        %v4850 = vpop.f32.mrb[0].mxu0
        %v4851 = vadd.f32 0.0, %v4850
        %4852 = vmatprep.mubr.f32.mxu0 0.0
        %4853 = vmatmul.mubr.f32.gmra.mrb[0].mxu0 %v4768
        %v4854 = vpop.f32.mrb[0].mxu0
        %v4855 = vadd.f32 0.0, %v4854
        %v4856 = vpop.f32.mrb[0].mxu0
        %v4857 = vadd.f32 0.0, %v4856
        %4858 = vdwg.mxu0
        %v4859 = vadd.f32 %v4656, %v4837
        %v4860 = vadd.f32 %v4657, %v4839
        %v4861 = vadd.f32 %v4658, %v4843
        %v4862 = vadd.f32 %v4659, %v4845
        %v4863 = vadd.f32 %v4660, %v4849
        %v4864 = vadd.f32 %v4661, %v4851
        %v4865 = vadd.f32 %v4662, %v4855
        %v4866 = vadd.f32 %v4663, %v4857
        %s4867 = scalar_lea.vmem [#allocation8], 480
        %v4868 = vld [vmem:[%s4867] sm:$0xff]
        %v4869 = vld [vmem:[%s4867 + $0x8] sm:$0xff]
        %v4870 = vld [vmem:[%s4867 + $0x10] sm:$0xff]
        %v4871 = vld [vmem:[%s4867 + $0x18] sm:$0xff]
        %4872 = vmatprep.subr.mxu0 %v2585
        %4873 = vmatpush1.msra.mxu0 %v2584
        %4874 = vmatprep.subr.mxu0 %v2587
        %4875 = vmatpush1.msra.mxu0 %v2586
        %4876 = vmatprep.subr.mxu0 %v2589
        %4877 = vmatpush1.msra.mxu0 %v2588
        %4878 = vmatprep.subr.mxu0 %v2591
        %4879 = vmatpush1.msra.mxu0 %v2590
        %4880 = vmatprep.subr.mxu0 %v2593
        %4881 = vmatpush1.msra.mxu0 %v2592
        %4882 = vmatprep.subr.mxu0 %v2595
        %4883 = vmatpush1.msra.mxu0 %v2594
        %4884 = vmatprep.subr.mxu0 %v2597
        %4885 = vmatpush1.msra.mxu0 %v2596
        %4886 = vmatprep.subr.mxu0 %v2599
        %4887 = vmatpush1.msra.mxu0 %v2598
        %4888 = vmatprep.subr.mxu0 %v2601
        %4889 = vmatpush1.msra.mxu0 %v2600
        %4890 = vmatprep.subr.mxu0 %v2603
        %4891 = vmatpush1.msra.mxu0 %v2602
        %4892 = vmatprep.subr.mxu0 %v2605
        %4893 = vmatpush1.msra.mxu0 %v2604
        %4894 = vmatprep.subr.mxu0 %v2607
        %4895 = vmatpush1.msra.mxu0 %v2606
        %4896 = vmatprep.subr.mxu0 %v2609
        %4897 = vmatpush1.msra.mxu0 %v2608
        %4898 = vmatprep.subr.mxu0 %v2611
        %4899 = vmatpush1.msra.mxu0 %v2610
        %4900 = vmatprep.subr.mxu0 %v2613
        %4901 = vmatpush1.msra.mxu0 %v2612
        %4902 = vmatprep.subr.mxu0 %v2615
        %4903 = vmatpush1.msra.mxu0 %v2614
        %4904 = vmatprep.subr.mxu0 %v2617
        %4905 = vmatpush1.msra.mxu0 %v2616
        %4906 = vmatprep.subr.mxu0 %v2619
        %4907 = vmatpush1.msra.mxu0 %v2618
        %4908 = vmatprep.subr.mxu0 %v2621
        %4909 = vmatpush1.msra.mxu0 %v2620
        %4910 = vmatprep.subr.mxu0 %v2623
        %4911 = vmatpush1.msra.mxu0 %v2622
        %4912 = vmatprep.subr.mxu0 %v2625
        %4913 = vmatpush1.msra.mxu0 %v2624
        %4914 = vmatprep.subr.mxu0 %v2627
        %4915 = vmatpush1.msra.mxu0 %v2626
        %4916 = vmatprep.subr.mxu0 %v2629
        %4917 = vmatpush1.msra.mxu0 %v2628
        %4918 = vmatprep.subr.mxu0 %v2631
        %4919 = vmatpush1.msra.mxu0 %v2630
        %4920 = vmatprep.subr.mxu0 %v2633
        %4921 = vmatpush1.msra.mxu0 %v2632
        %4922 = vmatprep.subr.mxu0 %v2635
        %4923 = vmatpush1.msra.mxu0 %v2634
        %4924 = vmatprep.subr.mxu0 %v2637
        %4925 = vmatpush1.msra.mxu0 %v2636
        %4926 = vmatprep.subr.mxu0 %v2639
        %4927 = vmatpush1.msra.mxu0 %v2638
        %4928 = vmatprep.subr.mxu0 %v2641
        %4929 = vmatpush1.msra.mxu0 %v2640
        %4930 = vmatprep.subr.mxu0 %v2643
        %4931 = vmatpush1.msra.mxu0 %v2642
        %4932 = vmatprep.subr.mxu0 %v2645
        %4933 = vmatpush1.msra.mxu0 %v2644
        %4934 = vmatprep.subr.mxu0 %v2647
        %4935 = vmatpush1.msra.mxu0 %v2646
        %4936 = vmatprep.mubr.f32.mxu0 %v3658
        %4937 = vmatmul.mubr.f32.gmra.mrb[0].mxu0 %v3657
        %v4938 = vpop.f32.mrb[0].mxu0
        %v4939 = vadd.f32 0.0, %v4938
        %v4940 = vpop.f32.mrb[0].mxu0
        %v4941 = vadd.f32 0.0, %v4940
        %4942 = vmatprep.mubr.f32.mxu0 %v3660
        %4943 = vmatmul.mubr.f32.gmra.mrb[0].mxu0 %v3659
        %v4944 = vpop.f32.mrb[0].mxu0
        %v4945 = vadd.f32 0.0, %v4944
        %v4946 = vpop.f32.mrb[0].mxu0
        %v4947 = vadd.f32 0.0, %v4946
        %4948 = vmatprep.mubr.f32.mxu0 %v3662
        %4949 = vmatmul.mubr.f32.gmra.mrb[0].mxu0 %v3661
        %v4950 = vpop.f32.mrb[0].mxu0
        %v4951 = vadd.f32 0.0, %v4950
        %v4952 = vpop.f32.mrb[0].mxu0
        %v4953 = vadd.f32 0.0, %v4952
        %4954 = vmatprep.mubr.f32.mxu0 %v3664
        %4955 = vmatmul.mubr.f32.gmra.mrb[0].mxu0 %v3663
        %v4956 = vpop.f32.mrb[0].mxu0
        %v4957 = vadd.f32 0.0, %v4956
        %v4958 = vpop.f32.mrb[0].mxu0
        %v4959 = vadd.f32 0.0, %v4958
        %4960 = vdwg.mxu0
        %v4962 = vsel %vm830, %v4868, 0
        %v4965 = vsel %vm830, %v4869, 0
        %v4968 = vsel %vm830, %v4870, 0
        %v4971 = vsel %vm830, %v4871, 0
        %4973 = vmatprep.subr.mxu0 %v4941
        %4974 = vmatpush1.msra.mxu0 %v4939
        %4975 = vmatprep.subr.mxu0 %v4947
        %4976 = vmatpush1.msra.mxu0 %v4945
        %4977 = vmatprep.subr.mxu0 %v4953
        %4978 = vmatpush1.msra.mxu0 %v4951
        %4979 = vmatprep.subr.mxu0 %v4959
        %4980 = vmatpush1.msra.mxu0 %v4957
        %4981 = vmatprep.subr.mxu0 0.0
        %4982 = vmatpush1.msra.mxu0 0.0
        %4983 = vmatprep.subr.mxu0 0.0
        %4984 = vmatpush1.msra.mxu0 0.0
        %4985 = vmatprep.subr.mxu0 0.0
        %4986 = vmatpush1.msra.mxu0 0.0
        %4987 = vmatprep.subr.mxu0 0.0
        %4988 = vmatpush1.msra.mxu0 0.0
        %4989 = vmatprep.subr.mxu0 0.0
        %4990 = vmatpush1.msra.mxu0 0.0
        %4991 = vmatprep.subr.mxu0 0.0
        %4992 = vmatpush1.msra.mxu0 0.0
        %4993 = vmatprep.subr.mxu0 0.0
        %4994 = vmatpush1.msra.mxu0 0.0
        %4995 = vmatprep.subr.mxu0 0.0
        %4996 = vmatpush1.msra.mxu0 0.0
        %4997 = vmatprep.subr.mxu0 0.0
        %4998 = vmatpush1.msra.mxu0 0.0
        %4999 = vmatprep.subr.mxu0 0.0
        %5000 = vmatpush1.msra.mxu0 0.0
        %5001 = vmatprep.subr.mxu0 0.0
        %5002 = vmatpush1.msra.mxu0 0.0
        %5003 = vmatprep.subr.mxu0 0.0
        %5004 = vmatpush1.msra.mxu0 0.0
        %5005 = vmatprep.subr.mxu0 0.0
        %5006 = vmatpush1.msra.mxu0 0.0
        %5007 = vmatprep.subr.mxu0 0.0
        %5008 = vmatpush1.msra.mxu0 0.0
        %5009 = vmatprep.subr.mxu0 0.0
        %5010 = vmatpush1.msra.mxu0 0.0
        %5011 = vmatprep.subr.mxu0 0.0
        %5012 = vmatpush1.msra.mxu0 0.0
        %5013 = vmatprep.subr.mxu0 0.0
        %5014 = vmatpush1.msra.mxu0 0.0
        %5015 = vmatprep.subr.mxu0 0.0
        %5016 = vmatpush1.msra.mxu0 0.0
        %5017 = vmatprep.subr.mxu0 0.0
        %5018 = vmatpush1.msra.mxu0 0.0
        %5019 = vmatprep.subr.mxu0 0.0
        %5020 = vmatpush1.msra.mxu0 0.0
        %5021 = vmatprep.subr.mxu0 0.0
        %5022 = vmatpush1.msra.mxu0 0.0
        %5023 = vmatprep.subr.mxu0 0.0
        %5024 = vmatpush1.msra.mxu0 0.0
        %5025 = vmatprep.subr.mxu0 0.0
        %5026 = vmatpush1.msra.mxu0 0.0
        %5027 = vmatprep.subr.mxu0 0.0
        %5028 = vmatpush1.msra.mxu0 0.0
        %5029 = vmatprep.subr.mxu0 0.0
        %5030 = vmatpush1.msra.mxu0 0.0
        %5031 = vmatprep.subr.mxu0 0.0
        %5032 = vmatpush1.msra.mxu0 0.0
        %5033 = vmatprep.subr.mxu0 0.0
        %5034 = vmatpush1.msra.mxu0 0.0
        %5035 = vmatprep.subr.mxu0 0.0
        %5036 = vmatpush1.msra.mxu0 0.0
        %5037 = vmatprep.mubr.f32.mxu0 0.0
        %5038 = vmatmul.mubr.f32.gmra.mrb[0].mxu0 %v4962
        %v5039 = vpop.f32.mrb[0].mxu0
        %v5040 = vadd.f32 0.0, %v5039
        %v5041 = vpop.f32.mrb[0].mxu0
        %v5042 = vadd.f32 0.0, %v5041
        %5043 = vmatprep.mubr.f32.mxu0 0.0
        %5044 = vmatmul.mubr.f32.gmra.mrb[0].mxu0 %v4965
        %v5045 = vpop.f32.mrb[0].mxu0
        %v5046 = vadd.f32 0.0, %v5045
        %v5047 = vpop.f32.mrb[0].mxu0
        %v5048 = vadd.f32 0.0, %v5047
        %5049 = vmatprep.mubr.f32.mxu0 0.0
        %5050 = vmatmul.mubr.f32.gmra.mrb[0].mxu0 %v4968
        %v5051 = vpop.f32.mrb[0].mxu0
        %v5052 = vadd.f32 0.0, %v5051
        %v5053 = vpop.f32.mrb[0].mxu0
        %v5054 = vadd.f32 0.0, %v5053
        %5055 = vmatprep.mubr.f32.mxu0 0.0
        %5056 = vmatmul.mubr.f32.gmra.mrb[0].mxu0 %v4971
        %v5057 = vpop.f32.mrb[0].mxu0
        %v5058 = vadd.f32 0.0, %v5057
        %v5059 = vpop.f32.mrb[0].mxu0
        %v5060 = vadd.f32 0.0, %v5059
        %5061 = vdwg.mxu0
        %v5062 = vadd.f32 %v4859, %v5040
        %v5063 = vadd.f32 %v4860, %v5042
        %v5064 = vadd.f32 %v4861, %v5046
        %v5065 = vadd.f32 %v4862, %v5048
        %v5066 = vadd.f32 %v4863, %v5052
        %v5067 = vadd.f32 %v4864, %v5054
        %v5068 = vadd.f32 %v4865, %v5058
        %v5069 = vadd.f32 %v4866, %v5060
        %s5070 = scalar_lea.vmem [#allocation8], 512
        %v5071 = vld [vmem:[%s5070] sm:$0xff]
        %v5072 = vld [vmem:[%s5070 + $0x8] sm:$0xff]
        %v5073 = vld [vmem:[%s5070 + $0x10] sm:$0xff]
        %v5074 = vld [vmem:[%s5070 + $0x18] sm:$0xff]
        %5075 = vmatprep.subr.mxu0 %v2853
        %5076 = vmatpush1.msra.mxu0 %v2852
        %5077 = vmatprep.subr.mxu0 %v2855
        %5078 = vmatpush1.msra.mxu0 %v2854
        %5079 = vmatprep.subr.mxu0 %v2857
        %5080 = vmatpush1.msra.mxu0 %v2856
        %5081 = vmatprep.subr.mxu0 %v2859
        %5082 = vmatpush1.msra.mxu0 %v2858
        %5083 = vmatprep.subr.mxu0 %v2861
        %5084 = vmatpush1.msra.mxu0 %v2860
        %5085 = vmatprep.subr.mxu0 %v2863
        %5086 = vmatpush1.msra.mxu0 %v2862
        %5087 = vmatprep.subr.mxu0 %v2865
        %5088 = vmatpush1.msra.mxu0 %v2864
        %5089 = vmatprep.subr.mxu0 %v2867
        %5090 = vmatpush1.msra.mxu0 %v2866
        %5091 = vmatprep.subr.mxu0 %v2869
        %5092 = vmatpush1.msra.mxu0 %v2868
        %5093 = vmatprep.subr.mxu0 %v2871
        %5094 = vmatpush1.msra.mxu0 %v2870
        %5095 = vmatprep.subr.mxu0 %v2873
        %5096 = vmatpush1.msra.mxu0 %v2872
        %5097 = vmatprep.subr.mxu0 %v2875
        %5098 = vmatpush1.msra.mxu0 %v2874
        %5099 = vmatprep.subr.mxu0 %v2877
        %5100 = vmatpush1.msra.mxu0 %v2876
        %5101 = vmatprep.subr.mxu0 %v2879
        %5102 = vmatpush1.msra.mxu0 %v2878
        %5103 = vmatprep.subr.mxu0 %v2881
        %5104 = vmatpush1.msra.mxu0 %v2880
        %5105 = vmatprep.subr.mxu0 %v2883
        %5106 = vmatpush1.msra.mxu0 %v2882
        %5107 = vmatprep.subr.mxu0 %v2885
        %5108 = vmatpush1.msra.mxu0 %v2884
        %5109 = vmatprep.subr.mxu0 %v2887
        %5110 = vmatpush1.msra.mxu0 %v2886
        %5111 = vmatprep.subr.mxu0 %v2889
        %5112 = vmatpush1.msra.mxu0 %v2888
        %5113 = vmatprep.subr.mxu0 %v2891
        %5114 = vmatpush1.msra.mxu0 %v2890
        %5115 = vmatprep.subr.mxu0 %v2893
        %5116 = vmatpush1.msra.mxu0 %v2892
        %5117 = vmatprep.subr.mxu0 %v2895
        %5118 = vmatpush1.msra.mxu0 %v2894
        %5119 = vmatprep.subr.mxu0 %v2897
        %5120 = vmatpush1.msra.mxu0 %v2896
        %5121 = vmatprep.subr.mxu0 %v2899
        %5122 = vmatpush1.msra.mxu0 %v2898
        %5123 = vmatprep.subr.mxu0 %v2901
        %5124 = vmatpush1.msra.mxu0 %v2900
        %5125 = vmatprep.subr.mxu0 %v2903
        %5126 = vmatpush1.msra.mxu0 %v2902
        %5127 = vmatprep.subr.mxu0 %v2905
        %5128 = vmatpush1.msra.mxu0 %v2904
        %5129 = vmatprep.subr.mxu0 %v2907
        %5130 = vmatpush1.msra.mxu0 %v2906
        %5131 = vmatprep.subr.mxu0 %v2909
        %5132 = vmatpush1.msra.mxu0 %v2908
        %5133 = vmatprep.subr.mxu0 %v2911
        %5134 = vmatpush1.msra.mxu0 %v2910
        %5135 = vmatprep.subr.mxu0 %v2913
        %5136 = vmatpush1.msra.mxu0 %v2912
        %5137 = vmatprep.subr.mxu0 %v2915
        %5138 = vmatpush1.msra.mxu0 %v2914
        %5139 = vmatprep.mubr.f32.mxu0 %v3658
        %5140 = vmatmul.mubr.f32.gmra.mrb[0].mxu0 %v3657
        %v5141 = vpop.f32.mrb[0].mxu0
        %v5142 = vadd.f32 0.0, %v5141
        %v5143 = vpop.f32.mrb[0].mxu0
        %v5144 = vadd.f32 0.0, %v5143
        %5145 = vmatprep.mubr.f32.mxu0 %v3660
        %5146 = vmatmul.mubr.f32.gmra.mrb[0].mxu0 %v3659
        %v5147 = vpop.f32.mrb[0].mxu0
        %v5148 = vadd.f32 0.0, %v5147
        %v5149 = vpop.f32.mrb[0].mxu0
        %v5150 = vadd.f32 0.0, %v5149
        %5151 = vmatprep.mubr.f32.mxu0 %v3662
        %5152 = vmatmul.mubr.f32.gmra.mrb[0].mxu0 %v3661
        %v5153 = vpop.f32.mrb[0].mxu0
        %v5154 = vadd.f32 0.0, %v5153
        %v5155 = vpop.f32.mrb[0].mxu0
        %v5156 = vadd.f32 0.0, %v5155
        %5157 = vmatprep.mubr.f32.mxu0 %v3664
        %5158 = vmatmul.mubr.f32.gmra.mrb[0].mxu0 %v3663
        %v5159 = vpop.f32.mrb[0].mxu0
        %v5160 = vadd.f32 0.0, %v5159
        %v5161 = vpop.f32.mrb[0].mxu0
        %v5162 = vadd.f32 0.0, %v5161
        %5163 = vdwg.mxu0
        %v5165 = vsel %vm830, %v5071, 0
        %v5168 = vsel %vm830, %v5072, 0
        %v5171 = vsel %vm830, %v5073, 0
        %v5174 = vsel %vm830, %v5074, 0
        %5176 = vmatprep.subr.mxu0 %v5144
        %5177 = vmatpush1.msra.mxu0 %v5142
        %5178 = vmatprep.subr.mxu0 %v5150
        %5179 = vmatpush1.msra.mxu0 %v5148
        %5180 = vmatprep.subr.mxu0 %v5156
        %5181 = vmatpush1.msra.mxu0 %v5154
        %5182 = vmatprep.subr.mxu0 %v5162
        %5183 = vmatpush1.msra.mxu0 %v5160
        %5184 = vmatprep.subr.mxu0 0.0
        %5185 = vmatpush1.msra.mxu0 0.0
        %5186 = vmatprep.subr.mxu0 0.0
        %5187 = vmatpush1.msra.mxu0 0.0
        %5188 = vmatprep.subr.mxu0 0.0
        %5189 = vmatpush1.msra.mxu0 0.0
        %5190 = vmatprep.subr.mxu0 0.0
        %5191 = vmatpush1.msra.mxu0 0.0
        %5192 = vmatprep.subr.mxu0 0.0
        %5193 = vmatpush1.msra.mxu0 0.0
        %5194 = vmatprep.subr.mxu0 0.0
        %5195 = vmatpush1.msra.mxu0 0.0
        %5196 = vmatprep.subr.mxu0 0.0
        %5197 = vmatpush1.msra.mxu0 0.0
        %5198 = vmatprep.subr.mxu0 0.0
        %5199 = vmatpush1.msra.mxu0 0.0
        %5200 = vmatprep.subr.mxu0 0.0
        %5201 = vmatpush1.msra.mxu0 0.0
        %5202 = vmatprep.subr.mxu0 0.0
        %5203 = vmatpush1.msra.mxu0 0.0
        %5204 = vmatprep.subr.mxu0 0.0
        %5205 = vmatpush1.msra.mxu0 0.0
        %5206 = vmatprep.subr.mxu0 0.0
        %5207 = vmatpush1.msra.mxu0 0.0
        %5208 = vmatprep.subr.mxu0 0.0
        %5209 = vmatpush1.msra.mxu0 0.0
        %5210 = vmatprep.subr.mxu0 0.0
        %5211 = vmatpush1.msra.mxu0 0.0
        %5212 = vmatprep.subr.mxu0 0.0
        %5213 = vmatpush1.msra.mxu0 0.0
        %5214 = vmatprep.subr.mxu0 0.0
        %5215 = vmatpush1.msra.mxu0 0.0
        %5216 = vmatprep.subr.mxu0 0.0
        %5217 = vmatpush1.msra.mxu0 0.0
        %5218 = vmatprep.subr.mxu0 0.0
        %5219 = vmatpush1.msra.mxu0 0.0
        %5220 = vmatprep.subr.mxu0 0.0
        %5221 = vmatpush1.msra.mxu0 0.0
        %5222 = vmatprep.subr.mxu0 0.0
        %5223 = vmatpush1.msra.mxu0 0.0
        %5224 = vmatprep.subr.mxu0 0.0
        %5225 = vmatpush1.msra.mxu0 0.0
        %5226 = vmatprep.subr.mxu0 0.0
        %5227 = vmatpush1.msra.mxu0 0.0
        %5228 = vmatprep.subr.mxu0 0.0
        %5229 = vmatpush1.msra.mxu0 0.0
        %5230 = vmatprep.subr.mxu0 0.0
        %5231 = vmatpush1.msra.mxu0 0.0
        %5232 = vmatprep.subr.mxu0 0.0
        %5233 = vmatpush1.msra.mxu0 0.0
        %5234 = vmatprep.subr.mxu0 0.0
        %5235 = vmatpush1.msra.mxu0 0.0
        %5236 = vmatprep.subr.mxu0 0.0
        %5237 = vmatpush1.msra.mxu0 0.0
        %5238 = vmatprep.subr.mxu0 0.0
        %5239 = vmatpush1.msra.mxu0 0.0
        %5240 = vmatprep.mubr.f32.mxu0 0.0
        %5241 = vmatmul.mubr.f32.gmra.mrb[0].mxu0 %v5165
        %v5242 = vpop.f32.mrb[0].mxu0
        %v5243 = vadd.f32 0.0, %v5242
        %v5244 = vpop.f32.mrb[0].mxu0
        %v5245 = vadd.f32 0.0, %v5244
        %5246 = vmatprep.mubr.f32.mxu0 0.0
        %5247 = vmatmul.mubr.f32.gmra.mrb[0].mxu0 %v5168
        %v5248 = vpop.f32.mrb[0].mxu0
        %v5249 = vadd.f32 0.0, %v5248
        %v5250 = vpop.f32.mrb[0].mxu0
        %v5251 = vadd.f32 0.0, %v5250
        %5252 = vmatprep.mubr.f32.mxu0 0.0
        %5253 = vmatmul.mubr.f32.gmra.mrb[0].mxu0 %v5171
        %v5254 = vpop.f32.mrb[0].mxu0
        %v5255 = vadd.f32 0.0, %v5254
        %v5256 = vpop.f32.mrb[0].mxu0
        %v5257 = vadd.f32 0.0, %v5256
        %5258 = vmatprep.mubr.f32.mxu0 0.0
        %5259 = vmatmul.mubr.f32.gmra.mrb[0].mxu0 %v5174
        %v5260 = vpop.f32.mrb[0].mxu0
        %v5261 = vadd.f32 0.0, %v5260
        %v5262 = vpop.f32.mrb[0].mxu0
        %v5263 = vadd.f32 0.0, %v5262
        %5264 = vdwg.mxu0
        %v5265 = vadd.f32 %v5062, %v5243
        %v5266 = vadd.f32 %v5063, %v5245
        %v5267 = vadd.f32 %v5064, %v5249
        %v5268 = vadd.f32 %v5065, %v5251
        %v5269 = vadd.f32 %v5066, %v5255
        %v5270 = vadd.f32 %v5067, %v5257
        %v5271 = vadd.f32 %v5068, %v5261
        %v5272 = vadd.f32 %v5069, %v5263
        %s5273 = scalar_lea.vmem [#allocation8], 544
        %v5274 = vld [vmem:[%s5273] sm:$0xff]
        %v5275 = vld [vmem:[%s5273 + $0x8] sm:$0xff]
        %v5276 = vld [vmem:[%s5273 + $0x10] sm:$0xff]
        %v5277 = vld [vmem:[%s5273 + $0x18] sm:$0xff]
        %5278 = vmatprep.subr.mxu0 %v3121
        %5279 = vmatpush1.msra.mxu0 %v3120
        %5280 = vmatprep.subr.mxu0 %v3123
        %5281 = vmatpush1.msra.mxu0 %v3122
        %5282 = vmatprep.subr.mxu0 %v3125
        %5283 = vmatpush1.msra.mxu0 %v3124
        %5284 = vmatprep.subr.mxu0 %v3127
        %5285 = vmatpush1.msra.mxu0 %v3126
        %5286 = vmatprep.subr.mxu0 %v3129
        %5287 = vmatpush1.msra.mxu0 %v3128
        %5288 = vmatprep.subr.mxu0 %v3131
        %5289 = vmatpush1.msra.mxu0 %v3130
        %5290 = vmatprep.subr.mxu0 %v3133
        %5291 = vmatpush1.msra.mxu0 %v3132
        %5292 = vmatprep.subr.mxu0 %v3135
        %5293 = vmatpush1.msra.mxu0 %v3134
        %5294 = vmatprep.subr.mxu0 %v3137
        %5295 = vmatpush1.msra.mxu0 %v3136
        %5296 = vmatprep.subr.mxu0 %v3139
        %5297 = vmatpush1.msra.mxu0 %v3138
        %5298 = vmatprep.subr.mxu0 %v3141
        %5299 = vmatpush1.msra.mxu0 %v3140
        %5300 = vmatprep.subr.mxu0 %v3143
        %5301 = vmatpush1.msra.mxu0 %v3142
        %5302 = vmatprep.subr.mxu0 %v3145
        %5303 = vmatpush1.msra.mxu0 %v3144
        %5304 = vmatprep.subr.mxu0 %v3147
        %5305 = vmatpush1.msra.mxu0 %v3146
        %5306 = vmatprep.subr.mxu0 %v3149
        %5307 = vmatpush1.msra.mxu0 %v3148
        %5308 = vmatprep.subr.mxu0 %v3151
        %5309 = vmatpush1.msra.mxu0 %v3150
        %5310 = vmatprep.subr.mxu0 %v3153
        %5311 = vmatpush1.msra.mxu0 %v3152
        %5312 = vmatprep.subr.mxu0 %v3155
        %5313 = vmatpush1.msra.mxu0 %v3154
        %5314 = vmatprep.subr.mxu0 %v3157
        %5315 = vmatpush1.msra.mxu0 %v3156
        %5316 = vmatprep.subr.mxu0 %v3159
        %5317 = vmatpush1.msra.mxu0 %v3158
        %5318 = vmatprep.subr.mxu0 %v3161
        %5319 = vmatpush1.msra.mxu0 %v3160
        %5320 = vmatprep.subr.mxu0 %v3163
        %5321 = vmatpush1.msra.mxu0 %v3162
        %5322 = vmatprep.subr.mxu0 %v3165
        %5323 = vmatpush1.msra.mxu0 %v3164
        %5324 = vmatprep.subr.mxu0 %v3167
        %5325 = vmatpush1.msra.mxu0 %v3166
        %5326 = vmatprep.subr.mxu0 %v3169
        %5327 = vmatpush1.msra.mxu0 %v3168
        %5328 = vmatprep.subr.mxu0 %v3171
        %5329 = vmatpush1.msra.mxu0 %v3170
        %5330 = vmatprep.subr.mxu0 %v3173
        %5331 = vmatpush1.msra.mxu0 %v3172
        %5332 = vmatprep.subr.mxu0 %v3175
        %5333 = vmatpush1.msra.mxu0 %v3174
        %5334 = vmatprep.subr.mxu0 %v3177
        %5335 = vmatpush1.msra.mxu0 %v3176
        %5336 = vmatprep.subr.mxu0 %v3179
        %5337 = vmatpush1.msra.mxu0 %v3178
        %5338 = vmatprep.subr.mxu0 %v3181
        %5339 = vmatpush1.msra.mxu0 %v3180
        %5340 = vmatprep.subr.mxu0 %v3183
        %5341 = vmatpush1.msra.mxu0 %v3182
        %5342 = vmatprep.mubr.f32.mxu0 %v3658
        %5343 = vmatmul.mubr.f32.gmra.mrb[0].mxu0 %v3657
        %v5344 = vpop.f32.mrb[0].mxu0
        %v5345 = vadd.f32 0.0, %v5344
        %v5346 = vpop.f32.mrb[0].mxu0
        %v5347 = vadd.f32 0.0, %v5346
        %5348 = vmatprep.mubr.f32.mxu0 %v3660
        %5349 = vmatmul.mubr.f32.gmra.mrb[0].mxu0 %v3659
        %v5350 = vpop.f32.mrb[0].mxu0
        %v5351 = vadd.f32 0.0, %v5350
        %v5352 = vpop.f32.mrb[0].mxu0
        %v5353 = vadd.f32 0.0, %v5352
        %5354 = vmatprep.mubr.f32.mxu0 %v3662
        %5355 = vmatmul.mubr.f32.gmra.mrb[0].mxu0 %v3661
        %v5356 = vpop.f32.mrb[0].mxu0
        %v5357 = vadd.f32 0.0, %v5356
        %v5358 = vpop.f32.mrb[0].mxu0
        %v5359 = vadd.f32 0.0, %v5358
        %5360 = vmatprep.mubr.f32.mxu0 %v3664
        %5361 = vmatmul.mubr.f32.gmra.mrb[0].mxu0 %v3663
        %v5362 = vpop.f32.mrb[0].mxu0
        %v5363 = vadd.f32 0.0, %v5362
        %v5364 = vpop.f32.mrb[0].mxu0
        %v5365 = vadd.f32 0.0, %v5364
        %5366 = vdwg.mxu0
        %v5368 = vsel %vm830, %v5274, 0
        %v5371 = vsel %vm830, %v5275, 0
        %v5374 = vsel %vm830, %v5276, 0
        %v5377 = vsel %vm830, %v5277, 0
        %5379 = vmatprep.subr.mxu0 %v5347
        %5380 = vmatpush1.msra.mxu0 %v5345
        %5381 = vmatprep.subr.mxu0 %v5353
        %5382 = vmatpush1.msra.mxu0 %v5351
        %5383 = vmatprep.subr.mxu0 %v5359
        %5384 = vmatpush1.msra.mxu0 %v5357
        %5385 = vmatprep.subr.mxu0 %v5365
        %5386 = vmatpush1.msra.mxu0 %v5363
        %5387 = vmatprep.subr.mxu0 0.0
        %5388 = vmatpush1.msra.mxu0 0.0
        %5389 = vmatprep.subr.mxu0 0.0
        %5390 = vmatpush1.msra.mxu0 0.0
        %5391 = vmatprep.subr.mxu0 0.0
        %5392 = vmatpush1.msra.mxu0 0.0
        %5393 = vmatprep.subr.mxu0 0.0
        %5394 = vmatpush1.msra.mxu0 0.0
        %5395 = vmatprep.subr.mxu0 0.0
        %5396 = vmatpush1.msra.mxu0 0.0
        %5397 = vmatprep.subr.mxu0 0.0
        %5398 = vmatpush1.msra.mxu0 0.0
        %5399 = vmatprep.subr.mxu0 0.0
        %5400 = vmatpush1.msra.mxu0 0.0
        %5401 = vmatprep.subr.mxu0 0.0
        %5402 = vmatpush1.msra.mxu0 0.0
        %5403 = vmatprep.subr.mxu0 0.0
        %5404 = vmatpush1.msra.mxu0 0.0
        %5405 = vmatprep.subr.mxu0 0.0
        %5406 = vmatpush1.msra.mxu0 0.0
        %5407 = vmatprep.subr.mxu0 0.0
        %5408 = vmatpush1.msra.mxu0 0.0
        %5409 = vmatprep.subr.mxu0 0.0
        %5410 = vmatpush1.msra.mxu0 0.0
        %5411 = vmatprep.subr.mxu0 0.0
        %5412 = vmatpush1.msra.mxu0 0.0
        %5413 = vmatprep.subr.mxu0 0.0
        %5414 = vmatpush1.msra.mxu0 0.0
        %5415 = vmatprep.subr.mxu0 0.0
        %5416 = vmatpush1.msra.mxu0 0.0
        %5417 = vmatprep.subr.mxu0 0.0
        %5418 = vmatpush1.msra.mxu0 0.0
        %5419 = vmatprep.subr.mxu0 0.0
        %5420 = vmatpush1.msra.mxu0 0.0
        %5421 = vmatprep.subr.mxu0 0.0
        %5422 = vmatpush1.msra.mxu0 0.0
        %5423 = vmatprep.subr.mxu0 0.0
        %5424 = vmatpush1.msra.mxu0 0.0
        %5425 = vmatprep.subr.mxu0 0.0
        %5426 = vmatpush1.msra.mxu0 0.0
        %5427 = vmatprep.subr.mxu0 0.0
        %5428 = vmatpush1.msra.mxu0 0.0
        %5429 = vmatprep.subr.mxu0 0.0
        %5430 = vmatpush1.msra.mxu0 0.0
        %5431 = vmatprep.subr.mxu0 0.0
        %5432 = vmatpush1.msra.mxu0 0.0
        %5433 = vmatprep.subr.mxu0 0.0
        %5434 = vmatpush1.msra.mxu0 0.0
        %5435 = vmatprep.subr.mxu0 0.0
        %5436 = vmatpush1.msra.mxu0 0.0
        %5437 = vmatprep.subr.mxu0 0.0
        %5438 = vmatpush1.msra.mxu0 0.0
        %5439 = vmatprep.subr.mxu0 0.0
        %5440 = vmatpush1.msra.mxu0 0.0
        %5441 = vmatprep.subr.mxu0 0.0
        %5442 = vmatpush1.msra.mxu0 0.0
        %5443 = vmatprep.mubr.f32.mxu0 0.0
        %5444 = vmatmul.mubr.f32.gmra.mrb[0].mxu0 %v5368
        %v5445 = vpop.f32.mrb[0].mxu0
        %v5446 = vadd.f32 0.0, %v5445
        %v5447 = vpop.f32.mrb[0].mxu0
        %v5448 = vadd.f32 0.0, %v5447
        %5449 = vmatprep.mubr.f32.mxu0 0.0
        %5450 = vmatmul.mubr.f32.gmra.mrb[0].mxu0 %v5371
        %v5451 = vpop.f32.mrb[0].mxu0
        %v5452 = vadd.f32 0.0, %v5451
        %v5453 = vpop.f32.mrb[0].mxu0
        %v5454 = vadd.f32 0.0, %v5453
        %5455 = vmatprep.mubr.f32.mxu0 0.0
        %5456 = vmatmul.mubr.f32.gmra.mrb[0].mxu0 %v5374
        %v5457 = vpop.f32.mrb[0].mxu0
        %v5458 = vadd.f32 0.0, %v5457
        %v5459 = vpop.f32.mrb[0].mxu0
        %v5460 = vadd.f32 0.0, %v5459
        %5461 = vmatprep.mubr.f32.mxu0 0.0
        %5462 = vmatmul.mubr.f32.gmra.mrb[0].mxu0 %v5377
        %v5463 = vpop.f32.mrb[0].mxu0
        %v5464 = vadd.f32 0.0, %v5463
        %v5465 = vpop.f32.mrb[0].mxu0
        %v5466 = vadd.f32 0.0, %v5465
        %5467 = vdwg.mxu0
        %v5468 = vadd.f32 %v5265, %v5446
        %v5469 = vadd.f32 %v5266, %v5448
        %v5470 = vadd.f32 %v5267, %v5452
        %v5471 = vadd.f32 %v5268, %v5454
        %v5472 = vadd.f32 %v5269, %v5458
        %v5473 = vadd.f32 %v5270, %v5460
        %v5474 = vadd.f32 %v5271, %v5464
        %v5475 = vadd.f32 %v5272, %v5466
        %s5476 = scalar_lea.vmem %s6, 32
        %v5477 = vld [vmem:[%s5476] sm:$0xff]
        %v5478 = vld [vmem:[%s5476 + $0x8] sm:$0xff]
        %v5479 = vld [vmem:[%s5476 + $0x10] sm:$0xff]
        %v5480 = vld [vmem:[%s5476 + $0x18] sm:$0xff]
        %5482 = vset.pattern.permute.xlu0 0
        %5483 = vperm.xlu0 %5482, %v5477
        %v5484 = vpop.permute.xlu0 %5483
        %5487 = vset.pattern.permute.xlu0 0
        %5488 = vperm.xlu0 %5487, %v5478
        %v5489 = vpop.permute.xlu0 %5488
        %5492 = vset.pattern.permute.xlu0 0
        %5493 = vperm.xlu0 %5492, %v5479
        %v5494 = vpop.permute.xlu0 %5493
        %5497 = vset.pattern.permute.xlu0 0
        %5498 = vperm.xlu0 %5497, %v5480
        %v5499 = vpop.permute.xlu0 %5498
        %v5501 = vadd.f32 %v5468, %v5484
        %v5502 = vadd.f32 %v5469, %v5484
        %v5503 = vadd.f32 %v5470, %v5489
        %v5504 = vadd.f32 %v5471, %v5489
        %v5505 = vadd.f32 %v5472, %v5494
        %v5506 = vadd.f32 %v5473, %v5494
        %v5507 = vadd.f32 %v5474, %v5499
        %v5508 = vadd.f32 %v5475, %v5499
        %v5509 = vxor.u32 %v5501, 2147483648
        %v5510 = vxor.u32 %v5502, 2147483648
        %v5511 = vxor.u32 %v5503, 2147483648
        %v5512 = vxor.u32 %v5504, 2147483648
        %v5513 = vxor.u32 %v5505, 2147483648
        %v5514 = vxor.u32 %v5506, 2147483648
        %v5515 = vxor.u32 %v5507, 2147483648
        %v5516 = vxor.u32 %v5508, 2147483648
        %v5517 = vmul.f32 %v5509, 1.442695
        %v5518 = vpow.pop %v5517
        %v5519 = vmul.f32 %v5510, 1.442695
        %v5520 = vpow.pop %v5519
        %v5521 = vmul.f32 %v5511, 1.442695
        %v5522 = vpow.pop %v5521
        %v5523 = vmul.f32 %v5512, 1.442695
        %v5524 = vpow.pop %v5523
        %v5525 = vmul.f32 %v5513, 1.442695
        %v5526 = vpow.pop %v5525
        %v5527 = vmul.f32 %v5514, 1.442695
        %v5528 = vpow.pop %v5527
        %v5529 = vmul.f32 %v5515, 1.442695
        %v5530 = vpow.pop %v5529
        %v5531 = vmul.f32 %v5516, 1.442695
        %v5532 = vpow.pop %v5531
        %v5533 = vadd.f32 %v5518, 1.0
        %v5534 = vadd.f32 %v5520, 1.0
        %v5535 = vadd.f32 %v5522, 1.0
        %v5536 = vadd.f32 %v5524, 1.0
        %v5537 = vadd.f32 %v5526, 1.0
        %v5538 = vadd.f32 %v5528, 1.0
        %v5539 = vadd.f32 %v5530, 1.0
        %v5540 = vadd.f32 %v5532, 1.0
        %v5541 = vrcp.pop %v5533
        %v5542 = vmul.f32 1.0, %v5541
        %v5543 = vrcp.pop %v5534
        %v5544 = vmul.f32 1.0, %v5543
        %v5545 = vrcp.pop %v5535
        %v5546 = vmul.f32 1.0, %v5545
        %v5547 = vrcp.pop %v5536
        %v5548 = vmul.f32 1.0, %v5547
        %v5549 = vrcp.pop %v5537
        %v5550 = vmul.f32 1.0, %v5549
        %v5551 = vrcp.pop %v5538
        %v5552 = vmul.f32 1.0, %v5551
        %v5553 = vrcp.pop %v5539
        %v5554 = vmul.f32 1.0, %v5553
        %v5555 = vrcp.pop %v5540
        %v5556 = vmul.f32 1.0, %v5555
        %v5557 = vmul.f32 %v5501, %v5542
        %v5558 = vmul.f32 %v5502, %v5544
        %v5559 = vmul.f32 %v5503, %v5546
        %v5560 = vmul.f32 %v5504, %v5548
        %v5561 = vmul.f32 %v5505, %v5550
        %v5562 = vmul.f32 %v5506, %v5552
        %v5563 = vmul.f32 %v5507, %v5554
        %v5564 = vmul.f32 %v5508, %v5556
        %v5565 = vadd.f32 %v3470, %v5557
        %v5566 = vadd.f32 %v3471, %v5558
        %v5567 = vadd.f32 %v3472, %v5559
        %v5568 = vadd.f32 %v3473, %v5560
        %v5569 = vadd.f32 %v3474, %v5561
        %v5570 = vadd.f32 %v3475, %v5562
        %v5571 = vadd.f32 %v3476, %v5563
        %v5572 = vadd.f32 %v3477, %v5564
        %v5573 = vld [vmem:[#allocation10] sm:$0xff]
        %v5574 = vld [vmem:[#allocation10 + $0x8] sm:$0xff]
        %v5575 = vld [vmem:[#allocation10 + $0x10] sm:$0xff]
        %v5576 = vld [vmem:[#allocation10 + $0x18] sm:$0xff]
        %v5577 = vld [vmem:[%s8] sm:$0xff]
        %v5578 = vld [vmem:[%s8 + $0x8] sm:$0xff]
        %v5579 = vld [vmem:[%s8 + $0x10] sm:$0xff]
        %v5580 = vld [vmem:[%s8 + $0x18] sm:$0xff]
        %5582 = vset.pattern.permute.xlu0 0
        %5583 = vperm.xlu0 %5582, %v5577
        %v5584 = vpop.permute.xlu0 %5583
        %5587 = vset.pattern.permute.xlu0 0
        %5588 = vperm.xlu0 %5587, %v5578
        %v5589 = vpop.permute.xlu0 %5588
        %5592 = vset.pattern.permute.xlu0 0
        %5593 = vperm.xlu0 %5592, %v5579
        %v5594 = vpop.permute.xlu0 %5593
        %5597 = vset.pattern.permute.xlu0 0
        %5598 = vperm.xlu0 %5597, %v5580
        %v5599 = vpop.permute.xlu0 %5598
        %v5602 = vsel %vm830, %v5573, 0
        %v5605 = vsel %vm830, %v5574, 0
        %v5608 = vsel %vm830, %v5575, 0
        %v5611 = vsel %vm830, %v5576, 0
        %5613 = vmatprep.subr.mxu0 %v5566
        %5614 = vmatpush1.msra.mxu0 %v5565
        %5615 = vmatprep.subr.mxu0 %v5568
        %5616 = vmatpush1.msra.mxu0 %v5567
        %5617 = vmatprep.subr.mxu0 %v5570
        %5618 = vmatpush1.msra.mxu0 %v5569
        %5619 = vmatprep.subr.mxu0 %v5572
        %5620 = vmatpush1.msra.mxu0 %v5571
        %5621 = vmatprep.subr.mxu0 0.0
        %5622 = vmatpush1.msra.mxu0 0.0
        %5623 = vmatprep.subr.mxu0 0.0
        %5624 = vmatpush1.msra.mxu0 0.0
        %5625 = vmatprep.subr.mxu0 0.0
        %5626 = vmatpush1.msra.mxu0 0.0
        %5627 = vmatprep.subr.mxu0 0.0
        %5628 = vmatpush1.msra.mxu0 0.0
        %5629 = vmatprep.subr.mxu0 0.0
        %5630 = vmatpush1.msra.mxu0 0.0
        %5631 = vmatprep.subr.mxu0 0.0
        %5632 = vmatpush1.msra.mxu0 0.0
        %5633 = vmatprep.subr.mxu0 0.0
        %5634 = vmatpush1.msra.mxu0 0.0
        %5635 = vmatprep.subr.mxu0 0.0
        %5636 = vmatpush1.msra.mxu0 0.0
        %5637 = vmatprep.subr.mxu0 0.0
        %5638 = vmatpush1.msra.mxu0 0.0
        %5639 = vmatprep.subr.mxu0 0.0
        %5640 = vmatpush1.msra.mxu0 0.0
        %5641 = vmatprep.subr.mxu0 0.0
        %5642 = vmatpush1.msra.mxu0 0.0
        %5643 = vmatprep.subr.mxu0 0.0
        %5644 = vmatpush1.msra.mxu0 0.0
        %5645 = vmatprep.subr.mxu0 0.0
        %5646 = vmatpush1.msra.mxu0 0.0
        %5647 = vmatprep.subr.mxu0 0.0
        %5648 = vmatpush1.msra.mxu0 0.0
        %5649 = vmatprep.subr.mxu0 0.0
        %5650 = vmatpush1.msra.mxu0 0.0
        %5651 = vmatprep.subr.mxu0 0.0
        %5652 = vmatpush1.msra.mxu0 0.0
        %5653 = vmatprep.subr.mxu0 0.0
        %5654 = vmatpush1.msra.mxu0 0.0
        %5655 = vmatprep.subr.mxu0 0.0
        %5656 = vmatpush1.msra.mxu0 0.0
        %5657 = vmatprep.subr.mxu0 0.0
        %5658 = vmatpush1.msra.mxu0 0.0
        %5659 = vmatprep.subr.mxu0 0.0
        %5660 = vmatpush1.msra.mxu0 0.0
        %5661 = vmatprep.subr.mxu0 0.0
        %5662 = vmatpush1.msra.mxu0 0.0
        %5663 = vmatprep.subr.mxu0 0.0
        %5664 = vmatpush1.msra.mxu0 0.0
        %5665 = vmatprep.subr.mxu0 0.0
        %5666 = vmatpush1.msra.mxu0 0.0
        %5667 = vmatprep.subr.mxu0 0.0
        %5668 = vmatpush1.msra.mxu0 0.0
        %5669 = vmatprep.subr.mxu0 0.0
        %5670 = vmatpush1.msra.mxu0 0.0
        %5671 = vmatprep.subr.mxu0 0.0
        %5672 = vmatpush1.msra.mxu0 0.0
        %5673 = vmatprep.subr.mxu0 0.0
        %5674 = vmatpush1.msra.mxu0 0.0
        %5675 = vmatprep.subr.mxu0 0.0
        %5676 = vmatpush1.msra.mxu0 0.0
        %5677 = vmatprep.mubr.f32.mxu0 0.0
        %5678 = vmatmul.mubr.f32.gmra.mrb[0].mxu0 %v5602
        %v5679 = vpop.f32.mrb[0].mxu0
        %v5680 = vadd.f32 %v5584, %v5679
        %v5681 = vpop.f32.mrb[0].mxu0
        %v5682 = vadd.f32 %v5584, %v5681
        %5683 = vmatprep.mubr.f32.mxu0 0.0
        %5684 = vmatmul.mubr.f32.gmra.mrb[0].mxu0 %v5605
        %v5685 = vpop.f32.mrb[0].mxu0
        %v5686 = vadd.f32 %v5589, %v5685
        %v5687 = vpop.f32.mrb[0].mxu0
        %v5688 = vadd.f32 %v5589, %v5687
        %5689 = vmatprep.mubr.f32.mxu0 0.0
        %5690 = vmatmul.mubr.f32.gmra.mrb[0].mxu0 %v5608
        %v5691 = vpop.f32.mrb[0].mxu0
        %v5692 = vadd.f32 %v5594, %v5691
        %v5693 = vpop.f32.mrb[0].mxu0
        %v5694 = vadd.f32 %v5594, %v5693
        %5695 = vmatprep.mubr.f32.mxu0 0.0
        %5696 = vmatmul.mubr.f32.gmra.mrb[0].mxu0 %v5611
        %v5697 = vpop.f32.mrb[0].mxu0
        %v5698 = vadd.f32 %v5599, %v5697
        %v5699 = vpop.f32.mrb[0].mxu0
        %v5700 = vadd.f32 %v5599, %v5699
        %5701 = vdwg.mxu0
        %v5702 = vmul.f32 %v5680, 0.1
        %v5703 = vmul.f32 %v5682, 0.1
        %v5704 = vmul.f32 %v5686, 0.1
        %v5705 = vmul.f32 %v5688, 0.1
        %v5706 = vmul.f32 %v5692, 0.1
        %v5707 = vmul.f32 %v5694, 0.1
        %v5708 = vmul.f32 %v5698, 0.1
        %v5709 = vmul.f32 %v5700, 0.1
        %v5710 = vmax.f32 %v5680, %v5702
        %v5711 = vmax.f32 %v5682, %v5703
        %v5712 = vmax.f32 %v5686, %v5704
        %v5713 = vmax.f32 %v5688, %v5705
        %v5714 = vmax.f32 %v5692, %v5706
        %v5715 = vmax.f32 %v5694, %v5707
        %v5716 = vmax.f32 %v5698, %v5708
        %v5717 = vmax.f32 %v5700, %v5709
        %v5718 = vld [vmem:[#allocation11] sm:$0xff]
        %v5719 = vld [vmem:[#allocation11 + $0x8] sm:$0xff]
        %v5720 = vld [vmem:[#allocation11 + $0x10] sm:$0xff]
        %v5721 = vld [vmem:[#allocation11 + $0x18] sm:$0xff]
        %v5722 = vld [vmem:[%s10] sm:$0xff]
        %v5723 = vld [vmem:[%s10 + $0x8] sm:$0xff]
        %v5724 = vld [vmem:[%s10 + $0x10] sm:$0xff]
        %v5725 = vld [vmem:[%s10 + $0x18] sm:$0xff]
        %5727 = vset.pattern.permute.xlu0 0
        %5728 = vperm.xlu0 %5727, %v5722
        %v5729 = vpop.permute.xlu0 %5728
        %5732 = vset.pattern.permute.xlu0 0
        %5733 = vperm.xlu0 %5732, %v5723
        %v5734 = vpop.permute.xlu0 %5733
        %5737 = vset.pattern.permute.xlu0 0
        %5738 = vperm.xlu0 %5737, %v5724
        %v5739 = vpop.permute.xlu0 %5738
        %5742 = vset.pattern.permute.xlu0 0
        %5743 = vperm.xlu0 %5742, %v5725
        %v5744 = vpop.permute.xlu0 %5743
        %v5747 = vsel %vm644, %v5718, 0
        %v5750 = vsel %vm644, %v5719, 0
        %v5753 = vsel %vm644, %v5720, 0
        %v5756 = vsel %vm644, %v5721, 0
        %5758 = vmatprep.subr.mxu0 %v601
        %5759 = vmatpush1.msra.mxu0 %v600
        %5760 = vmatprep.subr.mxu0 %v603
        %5761 = vmatpush1.msra.mxu0 %v602
        %5762 = vmatprep.subr.mxu0 %v605
        %5763 = vmatpush1.msra.mxu0 %v604
        %5764 = vmatprep.subr.mxu0 %v607
        %5765 = vmatpush1.msra.mxu0 %v606
        %5766 = vmatprep.subr.mxu0 %v609
        %5767 = vmatpush1.msra.mxu0 %v608
        %5768 = vmatprep.subr.mxu0 %v611
        %5769 = vmatpush1.msra.mxu0 %v610
        %5770 = vmatprep.subr.mxu0 %v613
        %5771 = vmatpush1.msra.mxu0 %v612
        %5772 = vmatprep.subr.mxu0 %v615
        %5773 = vmatpush1.msra.mxu0 %v614
        %5774 = vmatprep.subr.mxu0 0.0
        %5775 = vmatpush1.msra.mxu0 0.0
        %5776 = vmatprep.subr.mxu0 0.0
        %5777 = vmatpush1.msra.mxu0 0.0
        %5778 = vmatprep.subr.mxu0 0.0
        %5779 = vmatpush1.msra.mxu0 0.0
        %5780 = vmatprep.subr.mxu0 0.0
        %5781 = vmatpush1.msra.mxu0 0.0
        %5782 = vmatprep.subr.mxu0 0.0
        %5783 = vmatpush1.msra.mxu0 0.0
        %5784 = vmatprep.subr.mxu0 0.0
        %5785 = vmatpush1.msra.mxu0 0.0
        %5786 = vmatprep.subr.mxu0 0.0
        %5787 = vmatpush1.msra.mxu0 0.0
        %5788 = vmatprep.subr.mxu0 0.0
        %5789 = vmatpush1.msra.mxu0 0.0
        %5790 = vmatprep.subr.mxu0 0.0
        %5791 = vmatpush1.msra.mxu0 0.0
        %5792 = vmatprep.subr.mxu0 0.0
        %5793 = vmatpush1.msra.mxu0 0.0
        %5794 = vmatprep.subr.mxu0 0.0
        %5795 = vmatpush1.msra.mxu0 0.0
        %5796 = vmatprep.subr.mxu0 0.0
        %5797 = vmatpush1.msra.mxu0 0.0
        %5798 = vmatprep.subr.mxu0 0.0
        %5799 = vmatpush1.msra.mxu0 0.0
        %5800 = vmatprep.subr.mxu0 0.0
        %5801 = vmatpush1.msra.mxu0 0.0
        %5802 = vmatprep.subr.mxu0 0.0
        %5803 = vmatpush1.msra.mxu0 0.0
        %5804 = vmatprep.subr.mxu0 0.0
        %5805 = vmatpush1.msra.mxu0 0.0
        %5806 = vmatprep.subr.mxu0 0.0
        %5807 = vmatpush1.msra.mxu0 0.0
        %5808 = vmatprep.subr.mxu0 0.0
        %5809 = vmatpush1.msra.mxu0 0.0
        %5810 = vmatprep.subr.mxu0 0.0
        %5811 = vmatpush1.msra.mxu0 0.0
        %5812 = vmatprep.subr.mxu0 0.0
        %5813 = vmatpush1.msra.mxu0 0.0
        %5814 = vmatprep.subr.mxu0 0.0
        %5815 = vmatpush1.msra.mxu0 0.0
        %5816 = vmatprep.subr.mxu0 0.0
        %5817 = vmatpush1.msra.mxu0 0.0
        %5818 = vmatprep.subr.mxu0 0.0
        %5819 = vmatpush1.msra.mxu0 0.0
        %5820 = vmatprep.subr.mxu0 0.0
        %5821 = vmatpush1.msra.mxu0 0.0
        %5822 = vmatprep.mubr.f32.mxu0 0.0
        %5823 = vmatmul.mubr.f32.gmra.mrb[0].mxu0 %v5747
        %v5824 = vpop.f32.mrb[0].mxu0
        %v5825 = vadd.f32 %v5729, %v5824
        %v5826 = vpop.f32.mrb[0].mxu0
        %v5827 = vadd.f32 %v5729, %v5826
        %5828 = vmatprep.mubr.f32.mxu0 0.0
        %5829 = vmatmul.mubr.f32.gmra.mrb[0].mxu0 %v5750
        %v5830 = vpop.f32.mrb[0].mxu0
        %v5831 = vadd.f32 %v5734, %v5830
        %v5832 = vpop.f32.mrb[0].mxu0
        %v5833 = vadd.f32 %v5734, %v5832
        %5834 = vmatprep.mubr.f32.mxu0 0.0
        %5835 = vmatmul.mubr.f32.gmra.mrb[0].mxu0 %v5753
        %v5836 = vpop.f32.mrb[0].mxu0
        %v5837 = vadd.f32 %v5739, %v5836
        %v5838 = vpop.f32.mrb[0].mxu0
        %v5839 = vadd.f32 %v5739, %v5838
        %5840 = vmatprep.mubr.f32.mxu0 0.0
        %5841 = vmatmul.mubr.f32.gmra.mrb[0].mxu0 %v5756
        %v5842 = vpop.f32.mrb[0].mxu0
        %v5843 = vadd.f32 %v5744, %v5842
        %v5844 = vpop.f32.mrb[0].mxu0
        %v5845 = vadd.f32 %v5744, %v5844
        %5846 = vdwg.mxu0
        %v5847 = vmul.f32 %v5825, 0.1
        %v5848 = vmul.f32 %v5827, 0.1
        %v5849 = vmul.f32 %v5831, 0.1
        %v5850 = vmul.f32 %v5833, 0.1
        %v5851 = vmul.f32 %v5837, 0.1
        %v5852 = vmul.f32 %v5839, 0.1
        %v5853 = vmul.f32 %v5843, 0.1
        %v5854 = vmul.f32 %v5845, 0.1
        %v5855 = vmax.f32 %v5825, %v5847
        %v5856 = vmax.f32 %v5827, %v5848
        %v5857 = vmax.f32 %v5831, %v5849
        %v5858 = vmax.f32 %v5833, %v5850
        %v5859 = vmax.f32 %v5837, %v5851
        %v5860 = vmax.f32 %v5839, %v5852
        %v5861 = vmax.f32 %v5843, %v5853
        %v5862 = vmax.f32 %v5845, %v5854
        %v5863 = vld [vmem:[%s11] sm:$0xff]
        %v5864 = vld [vmem:[%s11 + $0x8] sm:$0xff]
        %v5865 = vld [vmem:[%s11 + $0x10] sm:$0xff]
        %v5866 = vld [vmem:[%s11 + $0x18] sm:$0xff]
        %v5867 = vld [vmem:[%s11 + $0x20] sm:$0xff]
        %v5868 = vld [vmem:[%s11 + $0x28] sm:$0xff]
        %v5869 = vld [vmem:[%s11 + $0x30] sm:$0xff]
        %v5870 = vld [vmem:[%s11 + $0x38] sm:$0xff]
        %v5871 = vld [vmem:[%s12] sm:$0xff]
        %v5872 = vld [vmem:[%s12 + $0x8] sm:$0xff]
        %v5873 = vld [vmem:[%s12 + $0x10] sm:$0xff]
        %v5874 = vld [vmem:[%s12 + $0x18] sm:$0xff]
        %v5875 = vld [vmem:[%s12 + $0x20] sm:$0xff]
        %v5876 = vld [vmem:[%s12 + $0x28] sm:$0xff]
        %v5877 = vld [vmem:[%s12 + $0x30] sm:$0xff]
        %v5878 = vld [vmem:[%s12 + $0x38] sm:$0xff]
        %v5880 = vsel %vm830, %v5871, 0
        %v5883 = vsel %vm830, %v5872, 0
        %v5886 = vsel %vm830, %v5873, 0
        %v5889 = vsel %vm830, %v5874, 0
        %v5892 = vsel %vm830, %v5875, 0
        %v5895 = vsel %vm830, %v5876, 0
        %v5898 = vsel %vm830, %v5877, 0
        %v5901 = vsel %vm830, %v5878, 0
        %5903 = vmatprep.subr.mxu0 %v5856
        %5904 = vmatpush1.msra.mxu0 %v5855
        %5905 = vmatprep.subr.mxu0 %v5858
        %5906 = vmatpush1.msra.mxu0 %v5857
        %5907 = vmatprep.subr.mxu0 %v5860
        %5908 = vmatpush1.msra.mxu0 %v5859
        %5909 = vmatprep.subr.mxu0 %v5862
        %5910 = vmatpush1.msra.mxu0 %v5861
        %5911 = vmatprep.subr.mxu0 0.0
        %5912 = vmatpush1.msra.mxu0 0.0
        %5913 = vmatprep.subr.mxu0 0.0
        %5914 = vmatpush1.msra.mxu0 0.0
        %5915 = vmatprep.subr.mxu0 0.0
        %5916 = vmatpush1.msra.mxu0 0.0
        %5917 = vmatprep.subr.mxu0 0.0
        %5918 = vmatpush1.msra.mxu0 0.0
        %5919 = vmatprep.subr.mxu0 0.0
        %5920 = vmatpush1.msra.mxu0 0.0
        %5921 = vmatprep.subr.mxu0 0.0
        %5922 = vmatpush1.msra.mxu0 0.0
        %5923 = vmatprep.subr.mxu0 0.0
        %5924 = vmatpush1.msra.mxu0 0.0
        %5925 = vmatprep.subr.mxu0 0.0
        %5926 = vmatpush1.msra.mxu0 0.0
        %5927 = vmatprep.subr.mxu0 0.0
        %5928 = vmatpush1.msra.mxu0 0.0
        %5929 = vmatprep.subr.mxu0 0.0
        %5930 = vmatpush1.msra.mxu0 0.0
        %5931 = vmatprep.subr.mxu0 0.0
        %5932 = vmatpush1.msra.mxu0 0.0
        %5933 = vmatprep.subr.mxu0 0.0
        %5934 = vmatpush1.msra.mxu0 0.0
        %5935 = vmatprep.subr.mxu0 0.0
        %5936 = vmatpush1.msra.mxu0 0.0
        %5937 = vmatprep.subr.mxu0 0.0
        %5938 = vmatpush1.msra.mxu0 0.0
        %5939 = vmatprep.subr.mxu0 0.0
        %5940 = vmatpush1.msra.mxu0 0.0
        %5941 = vmatprep.subr.mxu0 0.0
        %5942 = vmatpush1.msra.mxu0 0.0
        %5943 = vmatprep.subr.mxu0 0.0
        %5944 = vmatpush1.msra.mxu0 0.0
        %5945 = vmatprep.subr.mxu0 0.0
        %5946 = vmatpush1.msra.mxu0 0.0
        %5947 = vmatprep.subr.mxu0 0.0
        %5948 = vmatpush1.msra.mxu0 0.0
        %5949 = vmatprep.subr.mxu0 0.0
        %5950 = vmatpush1.msra.mxu0 0.0
        %5951 = vmatprep.subr.mxu0 0.0
        %5952 = vmatpush1.msra.mxu0 0.0
        %5953 = vmatprep.subr.mxu0 0.0
        %5954 = vmatpush1.msra.mxu0 0.0
        %5955 = vmatprep.subr.mxu0 0.0
        %5956 = vmatpush1.msra.mxu0 0.0
        %5957 = vmatprep.subr.mxu0 0.0
        %5958 = vmatpush1.msra.mxu0 0.0
        %5959 = vmatprep.subr.mxu0 0.0
        %5960 = vmatpush1.msra.mxu0 0.0
        %5961 = vmatprep.subr.mxu0 0.0
        %5962 = vmatpush1.msra.mxu0 0.0
        %5963 = vmatprep.subr.mxu0 0.0
        %5964 = vmatpush1.msra.mxu0 0.0
        %5965 = vmatprep.subr.mxu0 0.0
        %5966 = vmatpush1.msra.mxu0 0.0
        %5967 = vmatprep.mubr.f32.mxu0 0.0
        %5968 = vmatmul.mubr.f32.gmra.mrb[0].mxu0 %v5880
        %v5969 = vpop.f32.mrb[0].mxu0
        %v5970 = vadd.f32 0.0, %v5969
        %v5971 = vpop.f32.mrb[0].mxu0
        %v5972 = vadd.f32 0.0, %v5971
        %5973 = vmatprep.mubr.f32.mxu0 0.0
        %5974 = vmatmul.mubr.f32.gmra.mrb[0].mxu0 %v5883
        %v5975 = vpop.f32.mrb[0].mxu0
        %v5976 = vadd.f32 0.0, %v5975
        %v5977 = vpop.f32.mrb[0].mxu0
        %v5978 = vadd.f32 0.0, %v5977
        %5979 = vmatprep.mubr.f32.mxu0 0.0
        %5980 = vmatmul.mubr.f32.gmra.mrb[0].mxu0 %v5886
        %v5981 = vpop.f32.mrb[0].mxu0
        %v5982 = vadd.f32 0.0, %v5981
        %v5983 = vpop.f32.mrb[0].mxu0
        %v5984 = vadd.f32 0.0, %v5983
        %5985 = vmatprep.mubr.f32.mxu0 0.0
        %5986 = vmatmul.mubr.f32.gmra.mrb[0].mxu0 %v5889
        %v5987 = vpop.f32.mrb[0].mxu0
        %v5988 = vadd.f32 0.0, %v5987
        %v5989 = vpop.f32.mrb[0].mxu0
        %v5990 = vadd.f32 0.0, %v5989
        %5991 = vmatprep.mubr.f32.mxu0 0.0
        %5992 = vmatmul.mubr.f32.gmra.mrb[0].mxu0 %v5892
        %v5993 = vpop.f32.mrb[0].mxu0
        %v5994 = vadd.f32 0.0, %v5993
        %v5995 = vpop.f32.mrb[0].mxu0
        %v5996 = vadd.f32 0.0, %v5995
        %5997 = vmatprep.mubr.f32.mxu0 0.0
        %5998 = vmatmul.mubr.f32.gmra.mrb[0].mxu0 %v5895
        %v5999 = vpop.f32.mrb[0].mxu0
        %v6000 = vadd.f32 0.0, %v5999
        %v6001 = vpop.f32.mrb[0].mxu0
        %v6002 = vadd.f32 0.0, %v6001
        %6003 = vmatprep.mubr.f32.mxu0 0.0
        %6004 = vmatmul.mubr.f32.gmra.mrb[0].mxu0 %v5898
        %v6005 = vpop.f32.mrb[0].mxu0
        %v6006 = vadd.f32 0.0, %v6005
        %v6007 = vpop.f32.mrb[0].mxu0
        %v6008 = vadd.f32 0.0, %v6007
        %6009 = vmatprep.mubr.f32.mxu0 0.0
        %6010 = vmatmul.mubr.f32.gmra.mrb[0].mxu0 %v5901
        %v6011 = vpop.f32.mrb[0].mxu0
        %v6012 = vadd.f32 0.0, %v6011
        %v6013 = vpop.f32.mrb[0].mxu0
        %v6014 = vadd.f32 0.0, %v6013
        %6015 = vdwg.mxu0
        %v6017 = vsel %vm830, %v5863, 0
        %v6020 = vsel %vm830, %v5864, 0
        %v6023 = vsel %vm830, %v5865, 0
        %v6026 = vsel %vm830, %v5866, 0
        %v6029 = vsel %vm830, %v5867, 0
        %v6032 = vsel %vm830, %v5868, 0
        %v6035 = vsel %vm830, %v5869, 0
        %v6038 = vsel %vm830, %v5870, 0
        %6040 = vmatprep.subr.mxu0 %v5711
        %6041 = vmatpush1.msra.mxu0 %v5710
        %6042 = vmatprep.subr.mxu0 %v5713
        %6043 = vmatpush1.msra.mxu0 %v5712
        %6044 = vmatprep.subr.mxu0 %v5715
        %6045 = vmatpush1.msra.mxu0 %v5714
        %6046 = vmatprep.subr.mxu0 %v5717
        %6047 = vmatpush1.msra.mxu0 %v5716
        %6048 = vmatprep.subr.mxu0 0.0
        %6049 = vmatpush1.msra.mxu0 0.0
        %6050 = vmatprep.subr.mxu0 0.0
        %6051 = vmatpush1.msra.mxu0 0.0
        %6052 = vmatprep.subr.mxu0 0.0
        %6053 = vmatpush1.msra.mxu0 0.0
        %6054 = vmatprep.subr.mxu0 0.0
        %6055 = vmatpush1.msra.mxu0 0.0
        %6056 = vmatprep.subr.mxu0 0.0
        %6057 = vmatpush1.msra.mxu0 0.0
        %6058 = vmatprep.subr.mxu0 0.0
        %6059 = vmatpush1.msra.mxu0 0.0
        %6060 = vmatprep.subr.mxu0 0.0
        %6061 = vmatpush1.msra.mxu0 0.0
        %6062 = vmatprep.subr.mxu0 0.0
        %6063 = vmatpush1.msra.mxu0 0.0
        %6064 = vmatprep.subr.mxu0 0.0
        %6065 = vmatpush1.msra.mxu0 0.0
        %6066 = vmatprep.subr.mxu0 0.0
        %6067 = vmatpush1.msra.mxu0 0.0
        %6068 = vmatprep.subr.mxu0 0.0
        %6069 = vmatpush1.msra.mxu0 0.0
        %6070 = vmatprep.subr.mxu0 0.0
        %6071 = vmatpush1.msra.mxu0 0.0
        %6072 = vmatprep.subr.mxu0 0.0
        %6073 = vmatpush1.msra.mxu0 0.0
        %6074 = vmatprep.subr.mxu0 0.0
        %6075 = vmatpush1.msra.mxu0 0.0
        %6076 = vmatprep.subr.mxu0 0.0
        %6077 = vmatpush1.msra.mxu0 0.0
        %6078 = vmatprep.subr.mxu0 0.0
        %6079 = vmatpush1.msra.mxu0 0.0
        %6080 = vmatprep.subr.mxu0 0.0
        %6081 = vmatpush1.msra.mxu0 0.0
        %6082 = vmatprep.subr.mxu0 0.0
        %6083 = vmatpush1.msra.mxu0 0.0
        %6084 = vmatprep.subr.mxu0 0.0
        %6085 = vmatpush1.msra.mxu0 0.0
        %6086 = vmatprep.subr.mxu0 0.0
        %6087 = vmatpush1.msra.mxu0 0.0
        %6088 = vmatprep.subr.mxu0 0.0
        %6089 = vmatpush1.msra.mxu0 0.0
        %6090 = vmatprep.subr.mxu0 0.0
        %6091 = vmatpush1.msra.mxu0 0.0
        %6092 = vmatprep.subr.mxu0 0.0
        %6093 = vmatpush1.msra.mxu0 0.0
        %6094 = vmatprep.subr.mxu0 0.0
        %6095 = vmatpush1.msra.mxu0 0.0
        %6096 = vmatprep.subr.mxu0 0.0
        %6097 = vmatpush1.msra.mxu0 0.0
        %6098 = vmatprep.subr.mxu0 0.0
        %6099 = vmatpush1.msra.mxu0 0.0
        %6100 = vmatprep.subr.mxu0 0.0
        %6101 = vmatpush1.msra.mxu0 0.0
        %6102 = vmatprep.subr.mxu0 0.0
        %6103 = vmatpush1.msra.mxu0 0.0
        %6104 = vmatprep.mubr.f32.mxu0 0.0
        %6105 = vmatmul.mubr.f32.gmra.mrb[0].mxu0 %v6017
        %v6106 = vpop.f32.mrb[0].mxu0
        %v6107 = vadd.f32 %v5970, %v6106
        %v6108 = vpop.f32.mrb[0].mxu0
        %v6109 = vadd.f32 %v5972, %v6108
        %6110 = vmatprep.mubr.f32.mxu0 0.0
        %6111 = vmatmul.mubr.f32.gmra.mrb[0].mxu0 %v6020
        %v6112 = vpop.f32.mrb[0].mxu0
        %v6113 = vadd.f32 %v5976, %v6112
        %v6114 = vpop.f32.mrb[0].mxu0
        %v6115 = vadd.f32 %v5978, %v6114
        %6116 = vmatprep.mubr.f32.mxu0 0.0
        %6117 = vmatmul.mubr.f32.gmra.mrb[0].mxu0 %v6023
        %v6118 = vpop.f32.mrb[0].mxu0
        %v6119 = vadd.f32 %v5982, %v6118
        %v6120 = vpop.f32.mrb[0].mxu0
        %v6121 = vadd.f32 %v5984, %v6120
        %6122 = vmatprep.mubr.f32.mxu0 0.0
        %6123 = vmatmul.mubr.f32.gmra.mrb[0].mxu0 %v6026
        %v6124 = vpop.f32.mrb[0].mxu0
        %v6125 = vadd.f32 %v5988, %v6124
        %v6126 = vpop.f32.mrb[0].mxu0
        %v6127 = vadd.f32 %v5990, %v6126
        %6128 = vmatprep.mubr.f32.mxu0 0.0
        %6129 = vmatmul.mubr.f32.gmra.mrb[0].mxu0 %v6029
        %v6130 = vpop.f32.mrb[0].mxu0
        %v6131 = vadd.f32 %v5994, %v6130
        %v6132 = vpop.f32.mrb[0].mxu0
        %v6133 = vadd.f32 %v5996, %v6132
        %6134 = vmatprep.mubr.f32.mxu0 0.0
        %6135 = vmatmul.mubr.f32.gmra.mrb[0].mxu0 %v6032
        %v6136 = vpop.f32.mrb[0].mxu0
        %v6137 = vadd.f32 %v6000, %v6136
        %v6138 = vpop.f32.mrb[0].mxu0
        %v6139 = vadd.f32 %v6002, %v6138
        %6140 = vmatprep.mubr.f32.mxu0 0.0
        %6141 = vmatmul.mubr.f32.gmra.mrb[0].mxu0 %v6035
        %v6142 = vpop.f32.mrb[0].mxu0
        %v6143 = vadd.f32 %v6006, %v6142
        %v6144 = vpop.f32.mrb[0].mxu0
        %v6145 = vadd.f32 %v6008, %v6144
        %6146 = vmatprep.mubr.f32.mxu0 0.0
        %6147 = vmatmul.mubr.f32.gmra.mrb[0].mxu0 %v6038
        %v6148 = vpop.f32.mrb[0].mxu0
        %v6149 = vadd.f32 %v6012, %v6148
        %v6150 = vpop.f32.mrb[0].mxu0
        %v6151 = vadd.f32 %v6014, %v6150
        %6152 = vdwg.mxu0
        %v6153 = vld [vmem:[%s13] sm:$0xff]
        %v6154 = vld [vmem:[%s13 + $0x8] sm:$0xff]
        %v6155 = vld [vmem:[%s13 + $0x10] sm:$0xff]
        %v6156 = vld [vmem:[%s13 + $0x18] sm:$0xff]
        %v6157 = vld [vmem:[%s13 + $0x20] sm:$0xff]
        %v6158 = vld [vmem:[%s13 + $0x28] sm:$0xff]
        %v6159 = vld [vmem:[%s13 + $0x30] sm:$0xff]
        %v6160 = vld [vmem:[%s13 + $0x38] sm:$0xff]
        %6162 = vset.pattern.permute.xlu0 0
        %6163 = vperm.xlu0 %6162, %v6153
        %v6164 = vpop.permute.xlu0 %6163
        %6167 = vset.pattern.permute.xlu0 0
        %6168 = vperm.xlu0 %6167, %v6154
        %v6169 = vpop.permute.xlu0 %6168
        %6172 = vset.pattern.permute.xlu0 0
        %6173 = vperm.xlu0 %6172, %v6155
        %v6174 = vpop.permute.xlu0 %6173
        %6177 = vset.pattern.permute.xlu0 0
        %6178 = vperm.xlu0 %6177, %v6156
        %v6179 = vpop.permute.xlu0 %6178
        %6182 = vset.pattern.permute.xlu0 0
        %6183 = vperm.xlu0 %6182, %v6157
        %v6184 = vpop.permute.xlu0 %6183
        %6187 = vset.pattern.permute.xlu0 0
        %6188 = vperm.xlu0 %6187, %v6158
        %v6189 = vpop.permute.xlu0 %6188
        %6192 = vset.pattern.permute.xlu0 0
        %6193 = vperm.xlu0 %6192, %v6159
        %v6194 = vpop.permute.xlu0 %6193
        %6197 = vset.pattern.permute.xlu0 0
        %6198 = vperm.xlu0 %6197, %v6160
        %v6199 = vpop.permute.xlu0 %6198
        %v6201 = vadd.f32 %v6107, %v6164
        %v6202 = vadd.f32 %v6109, %v6164
        %v6203 = vadd.f32 %v6113, %v6169
        %v6204 = vadd.f32 %v6115, %v6169
        %v6205 = vadd.f32 %v6119, %v6174
        %v6206 = vadd.f32 %v6121, %v6174
        %v6207 = vadd.f32 %v6125, %v6179
        %v6208 = vadd.f32 %v6127, %v6179
        %v6209 = vadd.f32 %v6131, %v6184
        %v6210 = vadd.f32 %v6133, %v6184
        %v6211 = vadd.f32 %v6137, %v6189
        %v6212 = vadd.f32 %v6139, %v6189
        %v6213 = vadd.f32 %v6143, %v6194
        %v6214 = vadd.f32 %v6145, %v6194
        %v6215 = vadd.f32 %v6149, %v6199
        %v6216 = vadd.f32 %v6151, %v6199
        %v6217 = vxor.u32 %v6201, 2147483648
        %v6218 = vxor.u32 %v6202, 2147483648
        %v6219 = vxor.u32 %v6203, 2147483648
        %v6220 = vxor.u32 %v6204, 2147483648
        %v6221 = vxor.u32 %v6205, 2147483648
        %v6222 = vxor.u32 %v6206, 2147483648
        %v6223 = vxor.u32 %v6207, 2147483648
        %v6224 = vxor.u32 %v6208, 2147483648
        %v6225 = vxor.u32 %v6209, 2147483648
        %v6226 = vxor.u32 %v6210, 2147483648
        %v6227 = vxor.u32 %v6211, 2147483648
        %v6228 = vxor.u32 %v6212, 2147483648
        %v6229 = vxor.u32 %v6213, 2147483648
        %v6230 = vxor.u32 %v6214, 2147483648
        %v6231 = vxor.u32 %v6215, 2147483648
        %v6232 = vxor.u32 %v6216, 2147483648
        %v6233 = vmul.f32 %v6217, 1.442695
        %v6234 = vpow.pop %v6233
        %v6235 = vmul.f32 %v6218, 1.442695
        %v6236 = vpow.pop %v6235
        %v6237 = vmul.f32 %v6219, 1.442695
        %v6238 = vpow.pop %v6237
        %v6239 = vmul.f32 %v6220, 1.442695
        %v6240 = vpow.pop %v6239
        %v6241 = vmul.f32 %v6221, 1.442695
        %v6242 = vpow.pop %v6241
        %v6243 = vmul.f32 %v6222, 1.442695
        %v6244 = vpow.pop %v6243
        %v6245 = vmul.f32 %v6223, 1.442695
        %v6246 = vpow.pop %v6245
        %v6247 = vmul.f32 %v6224, 1.442695
        %v6248 = vpow.pop %v6247
        %v6249 = vmul.f32 %v6225, 1.442695
        %v6250 = vpow.pop %v6249
        %v6251 = vmul.f32 %v6226, 1.442695
        %v6252 = vpow.pop %v6251
        %v6253 = vmul.f32 %v6227, 1.442695
        %v6254 = vpow.pop %v6253
        %v6255 = vmul.f32 %v6228, 1.442695
        %v6256 = vpow.pop %v6255
        %v6257 = vmul.f32 %v6229, 1.442695
        %v6258 = vpow.pop %v6257
        %v6259 = vmul.f32 %v6230, 1.442695
        %v6260 = vpow.pop %v6259
        %v6261 = vmul.f32 %v6231, 1.442695
        %v6262 = vpow.pop %v6261
        %v6263 = vmul.f32 %v6232, 1.442695
        %v6264 = vpow.pop %v6263
        %v6265 = vadd.f32 %v6234, 1.0
        %v6266 = vadd.f32 %v6236, 1.0
        %v6267 = vadd.f32 %v6238, 1.0
        %v6268 = vadd.f32 %v6240, 1.0
        %v6269 = vadd.f32 %v6242, 1.0
        %v6270 = vadd.f32 %v6244, 1.0
        %v6271 = vadd.f32 %v6246, 1.0
        %v6272 = vadd.f32 %v6248, 1.0
        %v6273 = vadd.f32 %v6250, 1.0
        %v6274 = vadd.f32 %v6252, 1.0
        %v6275 = vadd.f32 %v6254, 1.0
        %v6276 = vadd.f32 %v6256, 1.0
        %v6277 = vadd.f32 %v6258, 1.0
        %v6278 = vadd.f32 %v6260, 1.0
        %v6279 = vadd.f32 %v6262, 1.0
        %v6280 = vadd.f32 %v6264, 1.0
        %v6281 = vrcp.pop %v6265
        %v6282 = vmul.f32 1.0, %v6281
        %v6283 = vrcp.pop %v6266
        %v6284 = vmul.f32 1.0, %v6283
        %v6285 = vrcp.pop %v6267
        %v6286 = vmul.f32 1.0, %v6285
        %v6287 = vrcp.pop %v6268
        %v6288 = vmul.f32 1.0, %v6287
        %v6289 = vrcp.pop %v6269
        %v6290 = vmul.f32 1.0, %v6289
        %v6291 = vrcp.pop %v6270
        %v6292 = vmul.f32 1.0, %v6291
        %v6293 = vrcp.pop %v6271
        %v6294 = vmul.f32 1.0, %v6293
        %v6295 = vrcp.pop %v6272
        %v6296 = vmul.f32 1.0, %v6295
        %v6297 = vrcp.pop %v6273
        %v6298 = vmul.f32 1.0, %v6297
        %v6299 = vrcp.pop %v6274
        %v6300 = vmul.f32 1.0, %v6299
        %v6301 = vrcp.pop %v6275
        %v6302 = vmul.f32 1.0, %v6301
        %v6303 = vrcp.pop %v6276
        %v6304 = vmul.f32 1.0, %v6303
        %v6305 = vrcp.pop %v6277
        %v6306 = vmul.f32 1.0, %v6305
        %v6307 = vrcp.pop %v6278
        %v6308 = vmul.f32 1.0, %v6307
        %v6309 = vrcp.pop %v6279
        %v6310 = vmul.f32 1.0, %v6309
        %v6311 = vrcp.pop %v6280
        %v6312 = vmul.f32 1.0, %v6311
        %v6313 = vmul.f32 %v6201, %v6282
        %v6314 = vmul.f32 %v6202, %v6284
        %v6315 = vmul.f32 %v6203, %v6286
        %v6316 = vmul.f32 %v6204, %v6288
        %v6317 = vmul.f32 %v6205, %v6290
        %v6318 = vmul.f32 %v6206, %v6292
        %v6319 = vmul.f32 %v6207, %v6294
        %v6320 = vmul.f32 %v6208, %v6296
        %v6321 = vmul.f32 %v6209, %v6298
        %v6322 = vmul.f32 %v6210, %v6300
        %v6323 = vmul.f32 %v6211, %v6302
        %v6324 = vmul.f32 %v6212, %v6304
        %v6325 = vmul.f32 %v6213, %v6306
        %v6326 = vmul.f32 %v6214, %v6308
        %v6327 = vmul.f32 %v6215, %v6310
        %v6328 = vmul.f32 %v6216, %v6312
        %6329 = vst [vmem:[%s599] sm:$0xff] %v6313
        %6330 = vst [vmem:[%s599 + $0x8] sm:$0xff] %v6314
        %6331 = vst [vmem:[%s599 + $0x10] sm:$0xff] %v6315
        %6332 = vst [vmem:[%s599 + $0x18] sm:$0xff] %v6316
        %6333 = vst [vmem:[%s599 + $0x20] sm:$0xff] %v6317
        %6334 = vst [vmem:[%s599 + $0x28] sm:$0xff] %v6318
        %6335 = vst [vmem:[%s599 + $0x30] sm:$0xff] %v6319
        %6336 = vst [vmem:[%s599 + $0x38] sm:$0xff] %v6320
        %6337 = vst [vmem:[%s599 + $0x40] sm:$0xff] %v6321
        %6338 = vst [vmem:[%s599 + $0x48] sm:$0xff] %v6322
        %6339 = vst [vmem:[%s599 + $0x50] sm:$0xff] %v6323
        %6340 = vst [vmem:[%s599 + $0x58] sm:$0xff] %v6324
        %6341 = vst [vmem:[%s599 + $0x60] sm:$0xff] %v6325
        %6342 = vst [vmem:[%s599 + $0x68] sm:$0xff] %v6326
        %6343 = vst [vmem:[%s599 + $0x70] sm:$0xff] %v6327
        %6344 = vst [vmem:[%s599 + $0x78] sm:$0xff] %v6328
        %s6345 = sand.u32 %s363, 1
        %s6346 = scalar_lea.sflag [#allocation4], %s6345
        %s6347 = sand.u32 %s363, 1
        %s6348 = smul.addr %s6347, 128
        %s6349 = scalar_lea.vmem [#allocation14], %s6348
        // Predicated region
        $region109: #{tpu_custom_call.1} parent=79 // pred_check
          %p6350 = pneg %p373
        $region110: #{tpu_custom_call.1} parent=79 // pred_check_branch
          %6352 = sbr.rel (%p6350) target = $region112
        $region111: #{tpu_custom_call.1} parent=79 // pred_region
          %s6354 = ssub.s32 2048, 2048
          %6355 = vsyncadd %s6346, %s6354
          %s6356 = smul.addr %s35, 16
          %s6357 = smul.addr %s6356, 128
          %s6358 = scalar_lea.hbm %s15, %s6357
          %s6359 = sshll.u32 %s6349, 4
          %s6360 = int_to_ptr.vmem [resolvable:$true] %s6359
          %6365 = dma.vmem_to_hbm [thread:$0]  %s6360, 2048, %s6358, %s6346, 256, 256, 16
        $region112: #{tpu_custom_call.1} parent=79 // pred_fallthru
          _
      $region80: #{tpu_custom_call.1} parent=5 // pred_fallthru
        _
      %p6366 = scmp.le.s32.totalorder 2, %s30
      // Predicated region
      $region113: #{tpu_custom_call.1} parent=5 // pred_check
        %p6367 = pneg %p6366
      $region114: #{tpu_custom_call.1} parent=5 // pred_check_branch
        %6369 = sbr.rel (%p6367) target = $region116
      $region115: #{tpu_custom_call.1} parent=5 // pred_region
        %s6370 = ssub.s32 %s30, 2
        // Predicated region
        $region117: #{tpu_custom_call.1} parent=115 // pred_check
          %p6371 = pneg %p379
        $region118: #{tpu_custom_call.1} parent=115 // pred_check_branch
          %6373 = sbr.rel (%p6371) target = $region120
        $region119: #{tpu_custom_call.1} parent=115 // pred_region
          %s6374 = sand.u32 %s364, 1
          %s6375 = scalar_lea.sflag [#allocation4], %s6374
          %s6376 = sand.u32 %s364, 1
          %s6377 = smul.addr %s6376, 128
          %s6378 = scalar_lea.vmem [#allocation14], %s6377
          %6379 = dma.done %s6375, 2048
        $region120: #{tpu_custom_call.1} parent=115 // pred_fallthru
          _
      $region116: #{tpu_custom_call.1} parent=5 // pred_fallthru
        _
    $region6: #{tpu_custom_call.1} parent=1 // loop_footer
      %s34 = sadd.s32 1, %s30
    $region7: #{tpu_custom_call.1} parent=1 // loop_footer_branch
      %29 = sbr.rel target = $region3
    $region8: #{tpu_custom_call.1} parent=1 // loop_exit
      _
    %6380 = vsyncpa [#allocation3], 1
    %s6381 = scalar_lea.sflag [#allocation3], 1
    %6382 = vsyncpa %s6381, 1
    %6383 = vsyncpa [#allocation6], 1
    %6384 = vsyncpa [#allocation9], 1
    %6385 = vsyncpa [#allocation12], 1
    %6386 = vsyncpa [#allocation4], 1
    %s6387 = scalar_lea.sflag [#allocation4], 1
    %6388 = vsyncpa %s6387, 1

</llo_original>
